<compile_context>
chip_gen: v6e
topology: v6e:2x2x1
jax: 0.10.0
libtpu: 0.0.40
codegen_flags: <defaults>
</compile_context>

<pallas_src>
import jax
import jax.numpy as jnp
import numpy as np
from jax.experimental import pallas as pl
from jax.experimental.pallas import tpu as pltpu

EPS = 1e-5
LANE = 128


def _round_up(v, m):
    return (v + m - 1) // m * m


# ---------------------------------------------------------------------------
# In-kernel helpers
# ---------------------------------------------------------------------------
def _bn_train(y, gamma, beta):
    """Training-mode BatchNorm2d on an (M, C) channels-last block.

    One pass: per-channel sum and sum-of-squares -> mean / biased variance.
    Scale/shift are hoisted into a single fused multiply-add per element.
    Padded (all-zero) channels map to exactly zero (gamma = beta = 0 there).
    """
    m = y.shape[0]
    inv_m = 1.0 / m
    s = jnp.sum(y, axis=0, keepdims=True)                    # (1, C)
    ss = jnp.sum(y * y, axis=0, keepdims=True)               # (1, C)
    mean = s * inv_m
    var = jnp.maximum(ss * inv_m - mean * mean, 0.0)         # biased variance
    scale = gamma * jax.lax.rsqrt(var + EPS)                 # (1, C)
    shift = beta - mean * scale
    return y * scale + shift


# ---------------------------------------------------------------------------
# Fused Bottleneck kernel
# ---------------------------------------------------------------------------
def _bottleneck_kernel(x_ref, w1_ref, g1_ref, b1_ref,
                       w2_ref, g2_ref, b2_ref,
                       w3_ref, g3_ref, b3_ref,
                       o_ref, ypad_ref):
    N, H, W, Cp = x_ref.shape            # Cp = lane-padded inplanes
    Pp = w1_ref.shape[1]                 # Pp = lane-padded planes
    M = N * H * W
    cdt = w1_ref.dtype                   # MXU operand dtype (bf16)

    # ---- stage 1: 1x1 conv (MXU, bf16 in / f32 acc) + BN + ReLU -----------
    x1 = x_ref[...].reshape(M, Cp).astype(cdt)
    y1 = jnp.dot(x1, w1_ref[...], preferred_element_type=jnp.float32)  # (M,Pp)
    y1 = jnp.maximum(_bn_train(y1, g1_ref[...], b1_ref[...]), 0.0)

    # ---- H-halo scratch (padding=1 along H only): zero ONLY the two border
    #      rows, then one aligned interior store. W stays unpadded. ----------
    zrow = jnp.zeros((N, 1, W, Pp), ypad_ref.dtype)
    ypad_ref[:, 0:1, :, :] = zrow
    ypad_ref[:, H + 1:H + 2, :, :] = zrow
    ypad_ref[:, 1:H + 1, :, :] = y1.reshape(N, H, W, Pp)

    # ---- stage 2: 3x3 conv as 9 accumulating MXU matmuls --------------------
    # W (kw = +/-1) shifts via XLU roll along the sublane axis + border mask;
    # H (kh) shifts are cheap non-minor-dim slices of the halo scratch.
    w_idx = jax.lax.broadcasted_iota(jnp.int32, (N, H, W, Pp), 2)
    mask_l = w_idx != 0                  # zero column w=0   (kw == 0 tap)
    mask_r = w_idx != (W - 1)            # zero column w=W-1 (kw == 2 tap)
    ztap = jnp.zeros((N, H, W, Pp), ypad_ref.dtype)

    acc2 = jnp.zeros((M, Pp), jnp.float32)
    for kh in range(3):
        tap_h = ypad_ref[:, kh:kh + H, :, :]                 # (N,H,W,Pp) f32
        for kw in range(3):
            if kw == 1:
                tap = tap_h
            else:
                # tap[w] = tap_h[w + kw - 1], zero outside [0, W)
                rolled = pltpu.roll(tap_h, (1 - kw) % W, axis=2)
                tap = jnp.where(mask_l if kw == 0 else mask_r, rolled, ztap)
            acc2 = acc2 + jnp.dot(tap.reshape(M, Pp).astype(cdt),
                                  w2_ref[kh, kw],
                                  preferred_element_type=jnp.float32)
    y2 = jnp.maximum(_bn_train(acc2, g2_ref[...], b2_ref[...]), 0.0)

    # ---- stage 3: 1x1 conv + BN + residual add + ReLU ----------------------
    y3 = jnp.dot(y2.astype(cdt), w3_ref[...],
                 preferred_element_type=jnp.float32)         # (M, Cp)
    y3 = _bn_train(y3, g3_ref[...], b3_ref[...])
    y3 = jnp.maximum(y3 + x_ref[...].reshape(M, Cp), 0.0)

    o_ref[...] = y3.reshape(N, H, W, Cp).astype(o_ref.dtype)


# ---------------------------------------------------------------------------
# Wrapper: NCHW in/out (PyTorch contract), single fused pallas_call
# ---------------------------------------------------------------------------
def _vmem_spec():
    return pl.BlockSpec(memory_space=pltpu.MemorySpace.VMEM)


def bottleneck_forward(x_nchw, params):
    N, C, H, W = x_nchw.shape
    planes = params["w1"].shape[1]
    assert C == 4 * planes, "identity residual requires inplanes == 4*planes"

    Cp = _round_up(C, LANE)         # padded inplanes / output channels
    Pp = _round_up(planes, LANE)    # padded bottleneck width

    # NCHW -> NHWC + zero-pad channels to 128 lanes (zero channels stay exactly
    # zero through conv/BN/relu/residual and are sliced off at the end).
    x_nhwc = jnp.transpose(x_nchw, (0, 2, 3, 1))
    x_p = jnp.pad(x_nhwc, ((0, 0), (0, 0), (0, 0), (0, Cp - C)))

    bf16 = jnp.bfloat16
    w1 = jnp.pad(params["w1"], ((0, Cp - C), (0, Pp - planes))).astype(bf16)
    w2 = jnp.pad(params["w2"],
                 ((0, 0), (0, 0), (0, Pp - planes), (0, Pp - planes))
                 ).astype(bf16)                              # (3,3,Pp,Pp)
    w3 = jnp.pad(params["w3"], ((0, Pp - planes), (0, Cp - C))).astype(bf16)

    def pad_vec(v, n):
        return jnp.pad(v, (0, n - v.shape[0])).reshape(1, n).astype(jnp.float32)

    g1, b1 = pad_vec(params["g1"], Pp), pad_vec(params["b1"], Pp)
    g2, b2 = pad_vec(params["g2"], Pp), pad_vec(params["b2"], Pp)
    g3, b3 = pad_vec(params["g3"], Cp), pad_vec(params["b3"], Cp)

    out = pl.pallas_call(
        _bottleneck_kernel,
        out_shape=jax.ShapeDtypeStruct((N, H, W, Cp), x_nchw.dtype),
        in_specs=[_vmem_spec()] * 10,
        out_specs=_vmem_spec(),
        scratch_shapes=[pltpu.VMEM((N, H + 2, W, Pp), jnp.float32)],
        compiler_params=pltpu.CompilerParams(
            vmem_limit_bytes=32 * 1024 * 1024),
    )(x_p, w1, g1, b1, w2, g2, b2, w3, g3, b3)

    out = out[..., :C]
    return jnp.transpose(out, (0, 3, 1, 2))      # NHWC -> NCHW


# ---------------------------------------------------------------------------
# Pure-JAX reference (same training-mode BN semantics) for validation
# ---------------------------------------------------------------------------
def reference_forward(x, params):
    def bn(y, g, b):
        mean = jnp.mean(y, axis=(0, 2, 3), keepdims=True)
        var = jnp.mean((y - mean) ** 2, axis=(0, 2, 3), keepdims=True)
        return ((y - mean) * jax.lax.rsqrt(var + EPS)
                * g.reshape(1, -1, 1, 1) + b.reshape(1, -1, 1, 1))

    def conv(x, w_oihw, pad):
        return jax.lax.conv_general_dilated(
            x, w_oihw, (1, 1), pad,
            dimension_numbers=("NCHW", "OIHW", "NCHW"),
            precision=jax.lax.Precision.HIGHEST)

    w1 = jnp.transpose(params["w1"], (1, 0))[:, :, None, None]        # OIHW
    w2 = jnp.transpose(params["w2"], (3, 2, 0, 1))                     # OIHW
    w3 = jnp.transpose(params["w3"], (1, 0))[:, :, None, None]         # OIHW

    out = jax.nn.relu(bn(conv(x, w1, [(0, 0), (0, 0)]), params["g1"], params["b1"]))
    out = jax.nn.relu(bn(conv(out, w2, [(1, 1), (1, 1)]), params["g2"], params["b2"]))
    out = bn(conv(out, w3, [(0, 0), (0, 0)]), params["g3"], params["b3"])
    return jax.nn.relu(out + x)


# ---------------------------------------------------------------------------
# Deterministic parameter init
# ---------------------------------------------------------------------------
def init_params(key, inplanes, planes):
    ks = jax.random.split(key, 9)

    def w(k, shape, fan_in):
        return jax.random.normal(k, shape, jnp.float32) / np.sqrt(fan_in)

    return {
        "w1": w(ks[0], (inplanes, planes), inplanes),            # conv1 1x1
        "g1": 0.5 + jax.random.uniform(ks[1], (planes,), jnp.float32),
        "b1": 0.1 * jax.random.normal(ks[2], (planes,), jnp.float32),
        "w2": w(ks[3], (3, 3, planes, planes), 9 * planes),      # conv2 3x3 HWIO
        "g2": 0.5 + jax.random.uniform(ks[4], (planes,), jnp.float32),
        "b2": 0.1 * jax.random.normal(ks[5], (planes,), jnp.float32),
        "w3": w(ks[6], (planes, planes * 4), planes),            # conv3 1x1
        "g3": 0.5 + jax.random.uniform(ks[7], (planes * 4,), jnp.float32),
        "b3": 0.1 * jax.random.normal(ks[8], (planes * 4,), jnp.float32),
    }


if __name__ == "__main__":
    key = jax.random.PRNGKey(0)
    k_x, k_p = jax.random.split(key)

    N, planes, H, W = 2, 4, 16, 16
    inplanes = planes * 4                        # 16 -> identity residual works
    x = jax.random.normal(k_x, (N, inplanes, H, W), jnp.float32)   # NCHW input
    params = init_params(k_p, inplanes, planes)

    out = jax.block_until_ready(jax.jit(bottleneck_forward)(x, params))

    ref = jax.block_until_ready(reference_forward(x, params))
    out_np, ref_np = np.asarray(out), np.asarray(ref)
    # bf16 MXU operands vs. f32 Precision.HIGHEST reference across three
    # BN-normalized stages -> max-abs check at bf16-level drift, plus a
    # tighter mean-abs check that catches structural bugs without being
    # sensitive to bf16 rounding tails.
    np.testing.assert_allclose(out_np, ref_np, rtol=1e-1, atol=1e-1)
    assert float(np.mean(np.abs(out_np - ref_np))) < 2.5e-2
    assert out.shape == x.shape and out.dtype == x.dtype

    print("KERNEL_OK")
</pallas_src>

<mosaic_0001>
module attributes {stable_mosaic.version = 11 : i64} {
  func.func @_bottleneck_kernel(%arg0: memref<2x16x16x128xf32, #tpu.memory_space<vmem>>, %arg1: memref<128x128xbf16, #tpu.memory_space<vmem>>, %arg2: memref<1x128xf32, #tpu.memory_space<vmem>>, %arg3: memref<1x128xf32, #tpu.memory_space<vmem>>, %arg4: memref<3x3x128x128xbf16, #tpu.memory_space<vmem>>, %arg5: memref<1x128xf32, #tpu.memory_space<vmem>>, %arg6: memref<1x128xf32, #tpu.memory_space<vmem>>, %arg7: memref<128x128xbf16, #tpu.memory_space<vmem>>, %arg8: memref<1x128xf32, #tpu.memory_space<vmem>>, %arg9: memref<1x128xf32, #tpu.memory_space<vmem>>, %arg10: memref<2x16x16x128xf32, #tpu.memory_space<vmem>>, %arg11: memref<2x18x16x128xf32, #tpu.memory_space<vmem>>) attributes {dimension_semantics = [], scalar_prefetch = 0 : i64, scratch_operands = 1 : i64, tpu.core_type = #tpu.core_type<tc>} {
    %c0 = arith.constant 0 : index
    %c0_0 = arith.constant 0 : index
    %c0_1 = arith.constant 0 : index
    %c0_2 = arith.constant 0 : index
    %0 = vector.load %arg0[%c0, %c0_0, %c0_1, %c0_2] : memref<2x16x16x128xf32, #tpu.memory_space<vmem>>, vector<2x16x16x128xf32>
    %1 = vector.shape_cast %0 : vector<2x16x16x128xf32> to vector<512x128xf32>
    %2 = arith.truncf %1 : vector<512x128xf32> to vector<512x128xbf16>
    %c0_3 = arith.constant 0 : index
    %c0_4 = arith.constant 0 : index
    %3 = vector.load %arg1[%c0_3, %c0_4] : memref<128x128xbf16, #tpu.memory_space<vmem>>, vector<128x128xbf16>
    %cst = arith.constant dense<0.000000e+00> : vector<512x128xf32>
    %4 = tpu.matmul %2, %3, %cst {dimension_numbers = #tpu.dot_dimension_numbers<[1], [0], [0], [1], [0, 0, 1, 1], [], []>} : vector<512x128xbf16>, vector<128x128xbf16>, vector<512x128xf32> -> vector<512x128xf32>
    %c0_5 = arith.constant 0 : index
    %c0_6 = arith.constant 0 : index
    %5 = vector.load %arg2[%c0_5, %c0_6] : memref<1x128xf32, #tpu.memory_space<vmem>>, vector<1x128xf32>
    %c0_7 = arith.constant 0 : index
    %c0_8 = arith.constant 0 : index
    %6 = vector.load %arg3[%c0_7, %c0_8] : memref<1x128xf32, #tpu.memory_space<vmem>>, vector<1x128xf32>
    %cst_9 = arith.constant dense<0.000000e+00> : vector<128xf32>
    %7 = vector.multi_reduction <add>, %4, %cst_9 [0] : vector<512x128xf32> to vector<128xf32>
    %8 = vector.shape_cast %7 : vector<128xf32> to vector<1x128xf32>
    %9 = arith.mulf %4, %4 : vector<512x128xf32>
    %cst_10 = arith.constant dense<0.000000e+00> : vector<128xf32>
    %10 = vector.multi_reduction <add>, %9, %cst_10 [0] : vector<512x128xf32> to vector<128xf32>
    %11 = vector.shape_cast %10 : vector<128xf32> to vector<1x128xf32>
    %cst_11 = arith.constant 0.001953125 : f32
    %12 = vector.broadcast %cst_11 : f32 to vector<1x128xf32>
    %13 = arith.mulf %8, %12 : vector<1x128xf32>
    %cst_12 = arith.constant 0.001953125 : f32
    %14 = vector.broadcast %cst_12 : f32 to vector<1x128xf32>
    %15 = arith.mulf %11, %14 : vector<1x128xf32>
    %16 = arith.mulf %13, %13 : vector<1x128xf32>
    %17 = arith.subf %15, %16 : vector<1x128xf32>
    %cst_13 = arith.constant 0.000000e+00 : f32
    %18 = vector.broadcast %cst_13 : f32 to vector<1x128xf32>
    %19 = arith.maximumf %17, %18 : vector<1x128xf32>
    %cst_14 = arith.constant 9.99999974E-6 : f32
    %20 = vector.broadcast %cst_14 : f32 to vector<1x128xf32>
    %21 = arith.addf %19, %20 : vector<1x128xf32>
    %22 = math.rsqrt %21 : vector<1x128xf32>
    %23 = arith.mulf %5, %22 : vector<1x128xf32>
    %24 = arith.mulf %13, %23 : vector<1x128xf32>
    %25 = arith.subf %6, %24 : vector<1x128xf32>
    %26 = vector.broadcast %23 : vector<1x128xf32> to vector<512x128xf32>
    %27 = arith.mulf %4, %26 : vector<512x128xf32>
    %28 = vector.broadcast %25 : vector<1x128xf32> to vector<512x128xf32>
    %29 = arith.addf %27, %28 : vector<512x128xf32>
    %cst_15 = arith.constant 0.000000e+00 : f32
    %30 = vector.broadcast %cst_15 : f32 to vector<512x128xf32>
    %31 = arith.maximumf %29, %30 : vector<512x128xf32>
    %cst_16 = arith.constant 0.000000e+00 : f32
    %32 = vector.broadcast %cst_16 : f32 to vector<2x1x16x128xf32>
    %c0_17 = arith.constant 0 : index
    %c0_18 = arith.constant 0 : index
    %c0_19 = arith.constant 0 : index
    %c0_20 = arith.constant 0 : index
    %33 = vector.load %arg11[%c0_17, %c0_18, %c0_19, %c0_20] : memref<2x18x16x128xf32, #tpu.memory_space<vmem>>, vector<2x1x16x128xf32>
    tpu.vector_store %arg11[%c0_17, %c0_18, %c0_19, %c0_20], %32 {strides = array<i32>} : memref<2x18x16x128xf32, #tpu.memory_space<vmem>>, vector<2x1x16x128xf32>,
    %c0_21 = arith.constant 0 : index
    %c17 = arith.constant 17 : index
    %c0_22 = arith.constant 0 : index
    %c0_23 = arith.constant 0 : index
    %34 = vector.load %arg11[%c0_21, %c17, %c0_22, %c0_23] : memref<2x18x16x128xf32, #tpu.memory_space<vmem>>, vector<2x1x16x128xf32>
    tpu.vector_store %arg11[%c0_21, %c17, %c0_22, %c0_23], %32 {strides = array<i32>} : memref<2x18x16x128xf32, #tpu.memory_space<vmem>>, vector<2x1x16x128xf32>,
    %35 = vector.shape_cast %31 : vector<512x128xf32> to vector<2x16x16x128xf32>
    %c0_24 = arith.constant 0 : index
    %c1 = arith.constant 1 : index
    %c0_25 = arith.constant 0 : index
    %c0_26 = arith.constant 0 : index
    %36 = vector.load %arg11[%c0_24, %c1, %c0_25, %c0_26] : memref<2x18x16x128xf32, #tpu.memory_space<vmem>>, vector<2x16x16x128xf32>
    tpu.vector_store %arg11[%c0_24, %c1, %c0_25, %c0_26], %35 {strides = array<i32>} : memref<2x18x16x128xf32, #tpu.memory_space<vmem>>, vector<2x16x16x128xf32>,
    %37 = tpu.iota {dimensions = array<i32: 2>} : vector<2x16x16x128xi32>
    %c0_i32 = arith.constant 0 : i32
    %38 = vector.broadcast %c0_i32 : i32 to vector<2x16x16x128xi32>
    %39 = arith.cmpi ne, %37, %38 : vector<2x16x16x128xi32>
    %c15_i32 = arith.constant 15 : i32
    %40 = vector.broadcast %c15_i32 : i32 to vector<2x16x16x128xi32>
    %41 = arith.cmpi ne, %37, %40 : vector<2x16x16x128xi32>
    %cst_27 = arith.constant 0.000000e+00 : f32
    %42 = vector.broadcast %cst_27 : f32 to vector<2x16x16x128xf32>
    %cst_28 = arith.constant 0.000000e+00 : f32
    %43 = vector.broadcast %cst_28 : f32 to vector<512x128xf32>
    %c0_29 = arith.constant 0 : index
    %c0_30 = arith.constant 0 : index
    %c0_31 = arith.constant 0 : index
    %c0_32 = arith.constant 0 : index
    %44 = vector.load %arg11[%c0_29, %c0_30, %c0_31, %c0_32] : memref<2x18x16x128xf32, #tpu.memory_space<vmem>>, vector<2x16x16x128xf32>
    %c1_i32 = arith.constant 1 : i32
    %45 = tpu.dynamic_rotate %44 by %c1_i32 dim 2 : vector<2x16x16x128xf32>, i32 -> vector<2x16x16x128xf32>
    %46 = arith.select %39, %45, %42 : vector<2x16x16x128xi1>, vector<2x16x16x128xf32>
    %47 = vector.shape_cast %46 : vector<2x16x16x128xf32> to vector<512x128xf32>
    %48 = arith.truncf %47 : vector<512x128xf32> to vector<512x128xbf16>
    %c0_33 = arith.constant 0 : index
    %c0_34 = arith.constant 0 : index
    %c0_35 = arith.constant 0 : index
    %c0_36 = arith.constant 0 : index
    %49 = vector.load %arg4[%c0_33, %c0_34, %c0_35, %c0_36] : memref<3x3x128x128xbf16, #tpu.memory_space<vmem>>, vector<1x1x128x128xbf16>
    %50 = vector.shape_cast %49 : vector<1x1x128x128xbf16> to vector<128x128xbf16>
    %cst_37 = arith.constant dense<0.000000e+00> : vector<512x128xf32>
    %51 = tpu.matmul %48, %50, %cst_37 {dimension_numbers = #tpu.dot_dimension_numbers<[1], [0], [0], [1], [0, 0, 1, 1], [], []>} : vector<512x128xbf16>, vector<128x128xbf16>, vector<512x128xf32> -> vector<512x128xf32>
    %52 = arith.addf %43, %51 : vector<512x128xf32>
    %53 = vector.shape_cast %44 : vector<2x16x16x128xf32> to vector<512x128xf32>
    %54 = arith.truncf %53 : vector<512x128xf32> to vector<512x128xbf16>
    %c0_38 = arith.constant 0 : index
    %c1_39 = arith.constant 1 : index
    %c0_40 = arith.constant 0 : index
    %c0_41 = arith.constant 0 : index
    %55 = vector.load %arg4[%c0_38, %c1_39, %c0_40, %c0_41] : memref<3x3x128x128xbf16, #tpu.memory_space<vmem>>, vector<1x1x128x128xbf16>
    %56 = vector.shape_cast %55 : vector<1x1x128x128xbf16> to vector<128x128xbf16>
    %cst_42 = arith.constant dense<0.000000e+00> : vector<512x128xf32>
    %57 = tpu.matmul %54, %56, %cst_42 {dimension_numbers = #tpu.dot_dimension_numbers<[1], [0], [0], [1], [0, 0, 1, 1], [], []>} : vector<512x128xbf16>, vector<128x128xbf16>, vector<512x128xf32> -> vector<512x128xf32>
    %58 = arith.addf %52, %57 : vector<512x128xf32>
    %c15_i32_43 = arith.constant 15 : i32
    %59 = tpu.dynamic_rotate %44 by %c15_i32_43 dim 2 : vector<2x16x16x128xf32>, i32 -> vector<2x16x16x128xf32>
    %60 = arith.select %41, %59, %42 : vector<2x16x16x128xi1>, vector<2x16x16x128xf32>
    %61 = vector.shape_cast %60 : vector<2x16x16x128xf32> to vector<512x128xf32>
    %62 = arith.truncf %61 : vector<512x128xf32> to vector<512x128xbf16>
    %c0_44 = arith.constant 0 : index
    %c2 = arith.constant 2 : index
    %c0_45 = arith.constant 0 : index
    %c0_46 = arith.constant 0 : index
    %63 = vector.load %arg4[%c0_44, %c2, %c0_45, %c0_46] : memref<3x3x128x128xbf16, #tpu.memory_space<vmem>>, vector<1x1x128x128xbf16>
    %64 = vector.shape_cast %63 : vector<1x1x128x128xbf16> to vector<128x128xbf16>
    %cst_47 = arith.constant dense<0.000000e+00> : vector<512x128xf32>
    %65 = tpu.matmul %62, %64, %cst_47 {dimension_numbers = #tpu.dot_dimension_numbers<[1], [0], [0], [1], [0, 0, 1, 1], [], []>} : vector<512x128xbf16>, vector<128x128xbf16>, vector<512x128xf32> -> vector<512x128xf32>
    %66 = arith.addf %58, %65 : vector<512x128xf32>
    %c0_48 = arith.constant 0 : index
    %c1_49 = arith.constant 1 : index
    %c0_50 = arith.constant 0 : index
    %c0_51 = arith.constant 0 : index
    %67 = vector.load %arg11[%c0_48, %c1_49, %c0_50, %c0_51] : memref<2x18x16x128xf32, #tpu.memory_space<vmem>>, vector<2x16x16x128xf32>
    %c1_i32_52 = arith.constant 1 : i32
    %68 = tpu.dynamic_rotate %67 by %c1_i32_52 dim 2 : vector<2x16x16x128xf32>, i32 -> vector<2x16x16x128xf32>
    %69 = arith.select %39, %68, %42 : vector<2x16x16x128xi1>, vector<2x16x16x128xf32>
    %70 = vector.shape_cast %69 : vector<2x16x16x128xf32> to vector<512x128xf32>
    %71 = arith.truncf %70 : vector<512x128xf32> to vector<512x128xbf16>
    %c1_53 = arith.constant 1 : index
    %c0_54 = arith.constant 0 : index
    %c0_55 = arith.constant 0 : index
    %c0_56 = arith.constant 0 : index
    %72 = vector.load %arg4[%c1_53, %c0_54, %c0_55, %c0_56] : memref<3x3x128x128xbf16, #tpu.memory_space<vmem>>, vector<1x1x128x128xbf16>
    %73 = vector.shape_cast %72 : vector<1x1x128x128xbf16> to vector<128x128xbf16>
    %cst_57 = arith.constant dense<0.000000e+00> : vector<512x128xf32>
    %74 = tpu.matmul %71, %73, %cst_57 {dimension_numbers = #tpu.dot_dimension_numbers<[1], [0], [0], [1], [0, 0, 1, 1], [], []>} : vector<512x128xbf16>, vector<128x128xbf16>, vector<512x128xf32> -> vector<512x128xf32>
    %75 = arith.addf %66, %74 : vector<512x128xf32>
    %76 = vector.shape_cast %67 : vector<2x16x16x128xf32> to vector<512x128xf32>
    %77 = arith.truncf %76 : vector<512x128xf32> to vector<512x128xbf16>
    %c1_58 = arith.constant 1 : index
    %c1_59 = arith.constant 1 : index
    %c0_60 = arith.constant 0 : index
    %c0_61 = arith.constant 0 : index
    %78 = vector.load %arg4[%c1_58, %c1_59, %c0_60, %c0_61] : memref<3x3x128x128xbf16, #tpu.memory_space<vmem>>, vector<1x1x128x128xbf16>
    %79 = vector.shape_cast %78 : vector<1x1x128x128xbf16> to vector<128x128xbf16>
    %cst_62 = arith.constant dense<0.000000e+00> : vector<512x128xf32>
    %80 = tpu.matmul %77, %79, %cst_62 {dimension_numbers = #tpu.dot_dimension_numbers<[1], [0], [0], [1], [0, 0, 1, 1], [], []>} : vector<512x128xbf16>, vector<128x128xbf16>, vector<512x128xf32> -> vector<512x128xf32>
    %81 = arith.addf %75, %80 : vector<512x128xf32>
    %c15_i32_63 = arith.constant 15 : i32
    %82 = tpu.dynamic_rotate %67 by %c15_i32_63 dim 2 : vector<2x16x16x128xf32>, i32 -> vector<2x16x16x128xf32>
    %83 = arith.select %41, %82, %42 : vector<2x16x16x128xi1>, vector<2x16x16x128xf32>
    %84 = vector.shape_cast %83 : vector<2x16x16x128xf32> to vector<512x128xf32>
    %85 = arith.truncf %84 : vector<512x128xf32> to vector<512x128xbf16>
    %c1_64 = arith.constant 1 : index
    %c2_65 = arith.constant 2 : index
    %c0_66 = arith.constant 0 : index
    %c0_67 = arith.constant 0 : index
    %86 = vector.load %arg4[%c1_64, %c2_65, %c0_66, %c0_67] : memref<3x3x128x128xbf16, #tpu.memory_space<vmem>>, vector<1x1x128x128xbf16>
    %87 = vector.shape_cast %86 : vector<1x1x128x128xbf16> to vector<128x128xbf16>
    %cst_68 = arith.constant dense<0.000000e+00> : vector<512x128xf32>
    %88 = tpu.matmul %85, %87, %cst_68 {dimension_numbers = #tpu.dot_dimension_numbers<[1], [0], [0], [1], [0, 0, 1, 1], [], []>} : vector<512x128xbf16>, vector<128x128xbf16>, vector<512x128xf32> -> vector<512x128xf32>
    %89 = arith.addf %81, %88 : vector<512x128xf32>
    %c0_69 = arith.constant 0 : index
    %c2_70 = arith.constant 2 : index
    %c0_71 = arith.constant 0 : index
    %c0_72 = arith.constant 0 : index
    %90 = vector.load %arg11[%c0_69, %c2_70, %c0_71, %c0_72] : memref<2x18x16x128xf32, #tpu.memory_space<vmem>>, vector<2x16x16x128xf32>
    %c1_i32_73 = arith.constant 1 : i32
    %91 = tpu.dynamic_rotate %90 by %c1_i32_73 dim 2 : vector<2x16x16x128xf32>, i32 -> vector<2x16x16x128xf32>
    %92 = arith.select %39, %91, %42 : vector<2x16x16x128xi1>, vector<2x16x16x128xf32>
    %93 = vector.shape_cast %92 : vector<2x16x16x128xf32> to vector<512x128xf32>
    %94 = arith.truncf %93 : vector<512x128xf32> to vector<512x128xbf16>
    %c2_74 = arith.constant 2 : index
    %c0_75 = arith.constant 0 : index
    %c0_76 = arith.constant 0 : index
    %c0_77 = arith.constant 0 : index
    %95 = vector.load %arg4[%c2_74, %c0_75, %c0_76, %c0_77] : memref<3x3x128x128xbf16, #tpu.memory_space<vmem>>, vector<1x1x128x128xbf16>
    %96 = vector.shape_cast %95 : vector<1x1x128x128xbf16> to vector<128x128xbf16>
    %cst_78 = arith.constant dense<0.000000e+00> : vector<512x128xf32>
    %97 = tpu.matmul %94, %96, %cst_78 {dimension_numbers = #tpu.dot_dimension_numbers<[1], [0], [0], [1], [0, 0, 1, 1], [], []>} : vector<512x128xbf16>, vector<128x128xbf16>, vector<512x128xf32> -> vector<512x128xf32>
    %98 = arith.addf %89, %97 : vector<512x128xf32>
    %99 = vector.shape_cast %90 : vector<2x16x16x128xf32> to vector<512x128xf32>
    %100 = arith.truncf %99 : vector<512x128xf32> to vector<512x128xbf16>
    %c2_79 = arith.constant 2 : index
    %c1_80 = arith.constant 1 : index
    %c0_81 = arith.constant 0 : index
    %c0_82 = arith.constant 0 : index
    %101 = vector.load %arg4[%c2_79, %c1_80, %c0_81, %c0_82] : memref<3x3x128x128xbf16, #tpu.memory_space<vmem>>, vector<1x1x128x128xbf16>
    %102 = vector.shape_cast %101 : vector<1x1x128x128xbf16> to vector<128x128xbf16>
    %cst_83 = arith.constant dense<0.000000e+00> : vector<512x128xf32>
    %103 = tpu.matmul %100, %102, %cst_83 {dimension_numbers = #tpu.dot_dimension_numbers<[1], [0], [0], [1], [0, 0, 1, 1], [], []>} : vector<512x128xbf16>, vector<128x128xbf16>, vector<512x128xf32> -> vector<512x128xf32>
    %104 = arith.addf %98, %103 : vector<512x128xf32>
    %c15_i32_84 = arith.constant 15 : i32
    %105 = tpu.dynamic_rotate %90 by %c15_i32_84 dim 2 : vector<2x16x16x128xf32>, i32 -> vector<2x16x16x128xf32>
    %106 = arith.select %41, %105, %42 : vector<2x16x16x128xi1>, vector<2x16x16x128xf32>
    %107 = vector.shape_cast %106 : vector<2x16x16x128xf32> to vector<512x128xf32>
    %108 = arith.truncf %107 : vector<512x128xf32> to vector<512x128xbf16>
    %c2_85 = arith.constant 2 : index
    %c2_86 = arith.constant 2 : index
    %c0_87 = arith.constant 0 : index
    %c0_88 = arith.constant 0 : index
    %109 = vector.load %arg4[%c2_85, %c2_86, %c0_87, %c0_88] : memref<3x3x128x128xbf16, #tpu.memory_space<vmem>>, vector<1x1x128x128xbf16>
    %110 = vector.shape_cast %109 : vector<1x1x128x128xbf16> to vector<128x128xbf16>
    %cst_89 = arith.constant dense<0.000000e+00> : vector<512x128xf32>
    %111 = tpu.matmul %108, %110, %cst_89 {dimension_numbers = #tpu.dot_dimension_numbers<[1], [0], [0], [1], [0, 0, 1, 1], [], []>} : vector<512x128xbf16>, vector<128x128xbf16>, vector<512x128xf32> -> vector<512x128xf32>
    %112 = arith.addf %104, %111 : vector<512x128xf32>
    %c0_90 = arith.constant 0 : index
    %c0_91 = arith.constant 0 : index
    %113 = vector.load %arg5[%c0_90, %c0_91] : memref<1x128xf32, #tpu.memory_space<vmem>>, vector<1x128xf32>
    %c0_92 = arith.constant 0 : index
    %c0_93 = arith.constant 0 : index
    %114 = vector.load %arg6[%c0_92, %c0_93] : memref<1x128xf32, #tpu.memory_space<vmem>>, vector<1x128xf32>
    %cst_94 = arith.constant dense<0.000000e+00> : vector<128xf32>
    %115 = vector.multi_reduction <add>, %112, %cst_94 [0] : vector<512x128xf32> to vector<128xf32>
    %116 = vector.shape_cast %115 : vector<128xf32> to vector<1x128xf32>
    %117 = arith.mulf %112, %112 : vector<512x128xf32>
    %cst_95 = arith.constant dense<0.000000e+00> : vector<128xf32>
    %118 = vector.multi_reduction <add>, %117, %cst_95 [0] : vector<512x128xf32> to vector<128xf32>
    %119 = vector.shape_cast %118 : vector<128xf32> to vector<1x128xf32>
    %cst_96 = arith.constant 0.001953125 : f32
    %120 = vector.broadcast %cst_96 : f32 to vector<1x128xf32>
    %121 = arith.mulf %116, %120 : vector<1x128xf32>
    %cst_97 = arith.constant 0.001953125 : f32
    %122 = vector.broadcast %cst_97 : f32 to vector<1x128xf32>
    %123 = arith.mulf %119, %122 : vector<1x128xf32>
    %124 = arith.mulf %121, %121 : vector<1x128xf32>
    %125 = arith.subf %123, %124 : vector<1x128xf32>
    %cst_98 = arith.constant 0.000000e+00 : f32
    %126 = vector.broadcast %cst_98 : f32 to vector<1x128xf32>
    %127 = arith.maximumf %125, %126 : vector<1x128xf32>
    %cst_99 = arith.constant 9.99999974E-6 : f32
    %128 = vector.broadcast %cst_99 : f32 to vector<1x128xf32>
    %129 = arith.addf %127, %128 : vector<1x128xf32>
    %130 = math.rsqrt %129 : vector<1x128xf32>
    %131 = arith.mulf %113, %130 : vector<1x128xf32>
    %132 = arith.mulf %121, %131 : vector<1x128xf32>
    %133 = arith.subf %114, %132 : vector<1x128xf32>
    %134 = vector.broadcast %131 : vector<1x128xf32> to vector<512x128xf32>
    %135 = arith.mulf %112, %134 : vector<512x128xf32>
    %136 = vector.broadcast %133 : vector<1x128xf32> to vector<512x128xf32>
    %137 = arith.addf %135, %136 : vector<512x128xf32>
    %cst_100 = arith.constant 0.000000e+00 : f32
    %138 = vector.broadcast %cst_100 : f32 to vector<512x128xf32>
    %139 = arith.maximumf %137, %138 : vector<512x128xf32>
    %140 = arith.truncf %139 : vector<512x128xf32> to vector<512x128xbf16>
    %c0_101 = arith.constant 0 : index
    %c0_102 = arith.constant 0 : index
    %141 = vector.load %arg7[%c0_101, %c0_102] : memref<128x128xbf16, #tpu.memory_space<vmem>>, vector<128x128xbf16>
    %cst_103 = arith.constant dense<0.000000e+00> : vector<512x128xf32>
    %142 = tpu.matmul %140, %141, %cst_103 {dimension_numbers = #tpu.dot_dimension_numbers<[1], [0], [0], [1], [0, 0, 1, 1], [], []>} : vector<512x128xbf16>, vector<128x128xbf16>, vector<512x128xf32> -> vector<512x128xf32>
    %c0_104 = arith.constant 0 : index
    %c0_105 = arith.constant 0 : index
    %143 = vector.load %arg8[%c0_104, %c0_105] : memref<1x128xf32, #tpu.memory_space<vmem>>, vector<1x128xf32>
    %c0_106 = arith.constant 0 : index
    %c0_107 = arith.constant 0 : index
    %144 = vector.load %arg9[%c0_106, %c0_107] : memref<1x128xf32, #tpu.memory_space<vmem>>, vector<1x128xf32>
    %cst_108 = arith.constant dense<0.000000e+00> : vector<128xf32>
    %145 = vector.multi_reduction <add>, %142, %cst_108 [0] : vector<512x128xf32> to vector<128xf32>
    %146 = vector.shape_cast %145 : vector<128xf32> to vector<1x128xf32>
    %147 = arith.mulf %142, %142 : vector<512x128xf32>
    %cst_109 = arith.constant dense<0.000000e+00> : vector<128xf32>
    %148 = vector.multi_reduction <add>, %147, %cst_109 [0] : vector<512x128xf32> to vector<128xf32>
    %149 = vector.shape_cast %148 : vector<128xf32> to vector<1x128xf32>
    %cst_110 = arith.constant 0.001953125 : f32
    %150 = vector.broadcast %cst_110 : f32 to vector<1x128xf32>
    %151 = arith.mulf %146, %150 : vector<1x128xf32>
    %cst_111 = arith.constant 0.001953125 : f32
    %152 = vector.broadcast %cst_111 : f32 to vector<1x128xf32>
    %153 = arith.mulf %149, %152 : vector<1x128xf32>
    %154 = arith.mulf %151, %151 : vector<1x128xf32>
    %155 = arith.subf %153, %154 : vector<1x128xf32>
    %cst_112 = arith.constant 0.000000e+00 : f32
    %156 = vector.broadcast %cst_112 : f32 to vector<1x128xf32>
    %157 = arith.maximumf %155, %156 : vector<1x128xf32>
    %cst_113 = arith.constant 9.99999974E-6 : f32
    %158 = vector.broadcast %cst_113 : f32 to vector<1x128xf32>
    %159 = arith.addf %157, %158 : vector<1x128xf32>
    %160 = math.rsqrt %159 : vector<1x128xf32>
    %161 = arith.mulf %143, %160 : vector<1x128xf32>
    %162 = arith.mulf %151, %161 : vector<1x128xf32>
    %163 = arith.subf %144, %162 : vector<1x128xf32>
    %164 = vector.broadcast %161 : vector<1x128xf32> to vector<512x128xf32>
    %165 = arith.mulf %142, %164 : vector<512x128xf32>
    %166 = vector.broadcast %163 : vector<1x128xf32> to vector<512x128xf32>
    %167 = arith.addf %165, %166 : vector<512x128xf32>
    %c0_114 = arith.constant 0 : index
    %c0_115 = arith.constant 0 : index
    %c0_116 = arith.constant 0 : index
    %c0_117 = arith.constant 0 : index
    %168 = vector.load %arg0[%c0_114, %c0_115, %c0_116, %c0_117] : memref<2x16x16x128xf32, #tpu.memory_space<vmem>>, vector<2x16x16x128xf32>
    %169 = vector.shape_cast %168 : vector<2x16x16x128xf32> to vector<512x128xf32>
    %170 = arith.addf %167, %169 : vector<512x128xf32>
    %cst_118 = arith.constant 0.000000e+00 : f32
    %171 = vector.broadcast %cst_118 : f32 to vector<512x128xf32>
    %172 = arith.maximumf %170, %171 : vector<512x128xf32>
    %173 = vector.shape_cast %172 : vector<512x128xf32> to vector<2x16x16x128xf32>
    %c0_119 = arith.constant 0 : index
    %c0_120 = arith.constant 0 : index
    %c0_121 = arith.constant 0 : index
    %c0_122 = arith.constant 0 : index
    %174 = vector.load %arg10[%c0_119, %c0_120, %c0_121, %c0_122] : memref<2x16x16x128xf32, #tpu.memory_space<vmem>>, vector<2x16x16x128xf32>
    tpu.vector_store %arg10[%c0_119, %c0_120, %c0_121, %c0_122], %173 {strides = array<i32>} : memref<2x16x16x128xf32, #tpu.memory_space<vmem>>, vector<2x16x16x128xf32>,
    return
  }
}

</mosaic_0001>

<llo_original>
// kernel: bottleneck_forward.1
$region0: #{bottleneck_forward.1}
  #allocation0 [shape = 'u32[]', space=smem, size = 0x4, offset = 0x4, fixed_abs, tag = 'smem constant byte address 0x4 - core index']
  #allocation1 [shape = 'u32[144,128]{1,0:T(1,128)}', space=vmem, size = 0x12000, scoped, tag = 'internal scratch']
  #allocation2 [shape = 'f32[2,18,16,128]{3,2,1,0:T(8,128)}', space=vmem, size = 0x48000, scoped, tag = 'scratch operand']
  %s0 = inlined_call_operand.vmem [shape: f32[2,16,16,128], index: 0, kind: input, shape index: {}]
  %s1 = inlined_call_operand.vmem [shape: bf16[128,128], index: 1, kind: input, shape index: {}]
  %s2 = inlined_call_operand.vmem [shape: f32[1,128], index: 2, kind: input, shape index: {}]
  %s3 = inlined_call_operand.vmem [shape: f32[1,128], index: 3, kind: input, shape index: {}]
  %s4 = inlined_call_operand.vmem [shape: bf16[3,3,128,128], index: 4, kind: input, shape index: {}]
  %s5 = inlined_call_operand.vmem [shape: f32[1,128], index: 5, kind: input, shape index: {}]
  %s6 = inlined_call_operand.vmem [shape: f32[1,128], index: 6, kind: input, shape index: {}]
  %s7 = inlined_call_operand.vmem [shape: bf16[128,128], index: 7, kind: input, shape index: {}]
  %s8 = inlined_call_operand.vmem [shape: f32[1,128], index: 8, kind: input, shape index: {}]
  %s9 = inlined_call_operand.vmem [shape: f32[1,128], index: 9, kind: input, shape index: {}]
  %s10 = inlined_call_operand.vmem [shape: f32[2,16,16,128], index: 10, kind: output, shape index: {}]
  %s11 = sld [smem:[#allocation0]]
  $region50: #{bottleneck_forward.1} parent=0
    _
  %s13 = ssub.s32 1, %s11
  %s14 = scalar_select 0, %s13, %s11
  // Predicated region
  $region2: #{bottleneck_forward.1} parent=0 // pred_check
    _
  $region3: #{bottleneck_forward.1} parent=0 // pred_check_branch
    %16 = sbr.rel (0) target = $region5
  $region4: #{bottleneck_forward.1} parent=0 // pred_region
    _
  $region5: #{bottleneck_forward.1} parent=0 // pred_fallthru
    _
  // Predicated region
  $region6: #{bottleneck_forward.1} parent=0 // pred_check
    _
  $region7: #{bottleneck_forward.1} parent=0 // pred_check_branch
    %18 = sbr.rel (0) target = $region9
  $region8: #{bottleneck_forward.1} parent=0 // pred_region
    _
  $region9: #{bottleneck_forward.1} parent=0 // pred_fallthru
    _
  // Predicated region
  $region10: #{bottleneck_forward.1} parent=0 // pred_check
    _
  $region11: #{bottleneck_forward.1} parent=0 // pred_check_branch
    %20 = sbr.rel (0) target = $region13
  $region12: #{bottleneck_forward.1} parent=0 // pred_region
    _
  $region13: #{bottleneck_forward.1} parent=0 // pred_fallthru
    _
  // Predicated region
  $region14: #{bottleneck_forward.1} parent=0 // pred_check
    _
  $region15: #{bottleneck_forward.1} parent=0 // pred_check_branch
    %22 = sbr.rel (0) target = $region17
  $region16: #{bottleneck_forward.1} parent=0 // pred_region
    _
  $region17: #{bottleneck_forward.1} parent=0 // pred_fallthru
    _
  // Predicated region
  $region18: #{bottleneck_forward.1} parent=0 // pred_check
    _
  $region19: #{bottleneck_forward.1} parent=0 // pred_check_branch
    %24 = sbr.rel (0) target = $region21
  $region20: #{bottleneck_forward.1} parent=0 // pred_region
    _
  $region21: #{bottleneck_forward.1} parent=0 // pred_fallthru
    _
  // Predicated region
  $region22: #{bottleneck_forward.1} parent=0 // pred_check
    _
  $region23: #{bottleneck_forward.1} parent=0 // pred_check_branch
    %26 = sbr.rel (0) target = $region25
  $region24: #{bottleneck_forward.1} parent=0 // pred_region
    _
  $region25: #{bottleneck_forward.1} parent=0 // pred_fallthru
    _
  // Predicated region
  $region26: #{bottleneck_forward.1} parent=0 // pred_check
    _
  $region27: #{bottleneck_forward.1} parent=0 // pred_check_branch
    %28 = sbr.rel (0) target = $region29
  $region28: #{bottleneck_forward.1} parent=0 // pred_region
    _
  $region29: #{bottleneck_forward.1} parent=0 // pred_fallthru
    _
  // Predicated region
  $region30: #{bottleneck_forward.1} parent=0 // pred_check
    _
  $region31: #{bottleneck_forward.1} parent=0 // pred_check_branch
    %30 = sbr.rel (0) target = $region33
  $region32: #{bottleneck_forward.1} parent=0 // pred_region
    _
  $region33: #{bottleneck_forward.1} parent=0 // pred_fallthru
    _
  // Predicated region
  $region34: #{bottleneck_forward.1} parent=0 // pred_check
    _
  $region35: #{bottleneck_forward.1} parent=0 // pred_check_branch
    %32 = sbr.rel (0) target = $region37
  $region36: #{bottleneck_forward.1} parent=0 // pred_region
    _
  $region37: #{bottleneck_forward.1} parent=0 // pred_fallthru
    _
  // Predicated region
  $region38: #{bottleneck_forward.1} parent=0 // pred_check
    _
  $region39: #{bottleneck_forward.1} parent=0 // pred_check_branch
    %34 = sbr.rel (0) target = $region41
  $region40: #{bottleneck_forward.1} parent=0 // pred_region
    _
  $region41: #{bottleneck_forward.1} parent=0 // pred_fallthru
    _
  %v36 = vld [vmem:[%s0] sm:$0xff]
  %v37 = vld [vmem:[%s0 + $0x8] sm:$0xff]
  %v38 = vld [vmem:[%s0 + $0x10] sm:$0xff]
  %v39 = vld [vmem:[%s0 + $0x18] sm:$0xff]
  %v40 = vld [vmem:[%s0 + $0x20] sm:$0xff]
  %v41 = vld [vmem:[%s0 + $0x28] sm:$0xff]
  %v42 = vld [vmem:[%s0 + $0x30] sm:$0xff]
  %v43 = vld [vmem:[%s0 + $0x38] sm:$0xff]
  %v44 = vld [vmem:[%s0 + $0x40] sm:$0xff]
  %v45 = vld [vmem:[%s0 + $0x48] sm:$0xff]
  %v46 = vld [vmem:[%s0 + $0x50] sm:$0xff]
  %v47 = vld [vmem:[%s0 + $0x58] sm:$0xff]
  %v48 = vld [vmem:[%s0 + $0x60] sm:$0xff]
  %v49 = vld [vmem:[%s0 + $0x68] sm:$0xff]
  %v50 = vld [vmem:[%s0 + $0x70] sm:$0xff]
  %v51 = vld [vmem:[%s0 + $0x78] sm:$0xff]
  %v52 = vld [vmem:[%s0 + $0x80] sm:$0xff]
  %v53 = vld [vmem:[%s0 + $0x88] sm:$0xff]
  %v54 = vld [vmem:[%s0 + $0x90] sm:$0xff]
  %v55 = vld [vmem:[%s0 + $0x98] sm:$0xff]
  %v56 = vld [vmem:[%s0 + $0xa0] sm:$0xff]
  %v57 = vld [vmem:[%s0 + $0xa8] sm:$0xff]
  %v58 = vld [vmem:[%s0 + $0xb0] sm:$0xff]
  %v59 = vld [vmem:[%s0 + $0xb8] sm:$0xff]
  %v60 = vld [vmem:[%s0 + $0xc0] sm:$0xff]
  %v61 = vld [vmem:[%s0 + $0xc8] sm:$0xff]
  %v62 = vld [vmem:[%s0 + $0xd0] sm:$0xff]
  %v63 = vld [vmem:[%s0 + $0xd8] sm:$0xff]
  %v64 = vld [vmem:[%s0 + $0xe0] sm:$0xff]
  %v65 = vld [vmem:[%s0 + $0xe8] sm:$0xff]
  %v66 = vld [vmem:[%s0 + $0xf0] sm:$0xff]
  %v67 = vld [vmem:[%s0 + $0xf8] sm:$0xff]
  %v68 = vld [vmem:[%s0 + $0x100] sm:$0xff]
  %v69 = vld [vmem:[%s0 + $0x108] sm:$0xff]
  %v70 = vld [vmem:[%s0 + $0x110] sm:$0xff]
  %v71 = vld [vmem:[%s0 + $0x118] sm:$0xff]
  %v72 = vld [vmem:[%s0 + $0x120] sm:$0xff]
  %v73 = vld [vmem:[%s0 + $0x128] sm:$0xff]
  %v74 = vld [vmem:[%s0 + $0x130] sm:$0xff]
  %v75 = vld [vmem:[%s0 + $0x138] sm:$0xff]
  %v76 = vld [vmem:[%s0 + $0x140] sm:$0xff]
  %v77 = vld [vmem:[%s0 + $0x148] sm:$0xff]
  %v78 = vld [vmem:[%s0 + $0x150] sm:$0xff]
  %v79 = vld [vmem:[%s0 + $0x158] sm:$0xff]
  %v80 = vld [vmem:[%s0 + $0x160] sm:$0xff]
  %v81 = vld [vmem:[%s0 + $0x168] sm:$0xff]
  %v82 = vld [vmem:[%s0 + $0x170] sm:$0xff]
  %v83 = vld [vmem:[%s0 + $0x178] sm:$0xff]
  %v84 = vld [vmem:[%s0 + $0x180] sm:$0xff]
  %v85 = vld [vmem:[%s0 + $0x188] sm:$0xff]
  %v86 = vld [vmem:[%s0 + $0x190] sm:$0xff]
  %v87 = vld [vmem:[%s0 + $0x198] sm:$0xff]
  %v88 = vld [vmem:[%s0 + $0x1a0] sm:$0xff]
  %v89 = vld [vmem:[%s0 + $0x1a8] sm:$0xff]
  %v90 = vld [vmem:[%s0 + $0x1b0] sm:$0xff]
  %v91 = vld [vmem:[%s0 + $0x1b8] sm:$0xff]
  %v92 = vld [vmem:[%s0 + $0x1c0] sm:$0xff]
  %v93 = vld [vmem:[%s0 + $0x1c8] sm:$0xff]
  %v94 = vld [vmem:[%s0 + $0x1d0] sm:$0xff]
  %v95 = vld [vmem:[%s0 + $0x1d8] sm:$0xff]
  %v96 = vld [vmem:[%s0 + $0x1e0] sm:$0xff]
  %v97 = vld [vmem:[%s0 + $0x1e8] sm:$0xff]
  %v98 = vld [vmem:[%s0 + $0x1f0] sm:$0xff]
  %v99 = vld [vmem:[%s0 + $0x1f8] sm:$0xff]
  %v100 = vpack.c.bf16 %v37, %v36
  %v101 = vpack.c.bf16 %v39, %v38
  %v102 = vpack.c.bf16 %v41, %v40
  %v103 = vpack.c.bf16 %v43, %v42
  %v104 = vpack.c.bf16 %v45, %v44
  %v105 = vpack.c.bf16 %v47, %v46
  %v106 = vpack.c.bf16 %v49, %v48
  %v107 = vpack.c.bf16 %v51, %v50
  %v108 = vpack.c.bf16 %v53, %v52
  %v109 = vpack.c.bf16 %v55, %v54
  %v110 = vpack.c.bf16 %v57, %v56
  %v111 = vpack.c.bf16 %v59, %v58
  %v112 = vpack.c.bf16 %v61, %v60
  %v113 = vpack.c.bf16 %v63, %v62
  %v114 = vpack.c.bf16 %v65, %v64
  %v115 = vpack.c.bf16 %v67, %v66
  %v116 = vpack.c.bf16 %v69, %v68
  %v117 = vpack.c.bf16 %v71, %v70
  %v118 = vpack.c.bf16 %v73, %v72
  %v119 = vpack.c.bf16 %v75, %v74
  %v120 = vpack.c.bf16 %v77, %v76
  %v121 = vpack.c.bf16 %v79, %v78
  %v122 = vpack.c.bf16 %v81, %v80
  %v123 = vpack.c.bf16 %v83, %v82
  %v124 = vpack.c.bf16 %v85, %v84
  %v125 = vpack.c.bf16 %v87, %v86
  %v126 = vpack.c.bf16 %v89, %v88
  %v127 = vpack.c.bf16 %v91, %v90
  %v128 = vpack.c.bf16 %v93, %v92
  %v129 = vpack.c.bf16 %v95, %v94
  %v130 = vpack.c.bf16 %v97, %v96
  %v131 = vpack.c.bf16 %v99, %v98
  %v132 = vld [vmem:[%s1] sm:$0xf]
  %v133 = vld [vmem:[%s1 + $0x4] sm:$0xf]
  %v134 = vld [vmem:[%s1 + $0x8] sm:$0xf]
  %v135 = vld [vmem:[%s1 + $0xc] sm:$0xf]
  %v136 = vld [vmem:[%s1 + $0x10] sm:$0xf]
  %v137 = vld [vmem:[%s1 + $0x14] sm:$0xf]
  %v138 = vld [vmem:[%s1 + $0x18] sm:$0xf]
  %v139 = vld [vmem:[%s1 + $0x1c] sm:$0xf]
  %v140 = vld [vmem:[%s1 + $0x20] sm:$0xf]
  %v141 = vld [vmem:[%s1 + $0x24] sm:$0xf]
  %v142 = vld [vmem:[%s1 + $0x28] sm:$0xf]
  %v143 = vld [vmem:[%s1 + $0x2c] sm:$0xf]
  %v144 = vld [vmem:[%s1 + $0x30] sm:$0xf]
  %v145 = vld [vmem:[%s1 + $0x34] sm:$0xf]
  %v146 = vld [vmem:[%s1 + $0x38] sm:$0xf]
  %v147 = vld [vmem:[%s1 + $0x3c] sm:$0xf]
  %v164 = vunpack.c.l.b16 %v132
  %v165 = vunpack.c.l.b16 %v133
  %v166 = vunpack.c.l.b16 %v134
  %v167 = vunpack.c.l.b16 %v135
  %v168 = vunpack.c.l.b16 %v136
  %v169 = vunpack.c.l.b16 %v137
  %v170 = vunpack.c.l.b16 %v138
  %v171 = vunpack.c.l.b16 %v139
  %v172 = vunpack.c.l.b16 %v140
  %v173 = vunpack.c.l.b16 %v141
  %v174 = vunpack.c.l.b16 %v142
  %v175 = vunpack.c.l.b16 %v143
  %v176 = vunpack.c.l.b16 %v144
  %v177 = vunpack.c.l.b16 %v145
  %v178 = vunpack.c.l.b16 %v146
  %v179 = vunpack.c.l.b16 %v147
  %v180 = vpack.c.b16 %v165, %v164
  %v181 = vpack.c.b16 %v167, %v166
  %v182 = vpack.c.b16 %v169, %v168
  %v183 = vpack.c.b16 %v171, %v170
  %v184 = vpack.c.b16 %v173, %v172
  %v185 = vpack.c.b16 %v175, %v174
  %v186 = vpack.c.b16 %v177, %v176
  %v187 = vpack.c.b16 %v179, %v178
  %196 = vmatprep.subr.bf16.mxu0 0
  %197 = vmatpush1.bf16.msra.mxu0 %v187
  %198 = vmatprep.subr.bf16.mxu0 0
  %199 = vmatpush1.bf16.msra.mxu0 %v186
  %200 = vmatprep.subr.bf16.mxu0 0
  %201 = vmatpush1.bf16.msra.mxu0 %v185
  %202 = vmatprep.subr.bf16.mxu0 0
  %203 = vmatpush1.bf16.msra.mxu0 %v184
  %204 = vmatprep.subr.bf16.mxu0 0
  %205 = vmatpush1.bf16.msra.mxu0 %v183
  %206 = vmatprep.subr.bf16.mxu0 0
  %207 = vmatpush1.bf16.msra.mxu0 %v182
  %208 = vmatprep.subr.bf16.mxu0 0
  %209 = vmatpush1.bf16.msra.mxu0 %v181
  %210 = vmatprep.subr.bf16.mxu0 0
  %211 = vmatpush1.bf16.msra.mxu0 %v180
  %212 = vmatprep.subr.bf16.mxu0 0
  %213 = vmatpush2.bf16.msra.mxu0 0
  %214 = vmatprep.subr.bf16.mxu0 0
  %215 = vmatpush2.bf16.msra.mxu0 0
  %216 = vmatprep.subr.bf16.mxu0 0
  %217 = vmatpush2.bf16.msra.mxu0 0
  %218 = vmatprep.subr.bf16.mxu0 0
  %219 = vmatpush2.bf16.msra.mxu0 0
  %220 = vmatprep.subr.bf16.mxu0 0
  %221 = vmatpush2.bf16.msra.mxu0 0
  %222 = vmatprep.subr.bf16.mxu0 0
  %223 = vmatpush2.bf16.msra.mxu0 0
  %224 = vmatprep.subr.bf16.mxu0 0
  %225 = vmatpush2.bf16.msra.mxu0 0
  %226 = vmatprep.subr.bf16.mxu0 0
  %227 = vmatpush2.bf16.msra.mxu0 0
  %228 = vmatprep.mubr.bf16.mxu0 0
  %229 = vmatmul.mubr.bf16.gmra.mxu0 %v100
  %v230 = vpop.f32.mrf.mxu0
  %v231 = vadd.f32 0.0, %v230
  %v232 = vpop.f32.mrf.mxu0
  %v233 = vpop.f32.mrf.mxu0
  %v234 = vadd.f32 0.0, %v233
  %v235 = vpop.f32.mrf.mxu0
  %236 = vmatprep.mubr.bf16.mxu0 0
  %237 = vmatmul.mubr.bf16.gmra.mxu0 %v101
  %v238 = vpop.f32.mrf.mxu0
  %v239 = vadd.f32 0.0, %v238
  %v240 = vpop.f32.mrf.mxu0
  %v241 = vpop.f32.mrf.mxu0
  %v242 = vadd.f32 0.0, %v241
  %v243 = vpop.f32.mrf.mxu0
  %244 = vmatprep.mubr.bf16.mxu0 0
  %245 = vmatmul.mubr.bf16.gmra.mxu0 %v102
  %v246 = vpop.f32.mrf.mxu0
  %v247 = vadd.f32 0.0, %v246
  %v248 = vpop.f32.mrf.mxu0
  %v249 = vpop.f32.mrf.mxu0
  %v250 = vadd.f32 0.0, %v249
  %v251 = vpop.f32.mrf.mxu0
  %252 = vmatprep.mubr.bf16.mxu0 0
  %253 = vmatmul.mubr.bf16.gmra.mxu0 %v103
  %v254 = vpop.f32.mrf.mxu0
  %v255 = vadd.f32 0.0, %v254
  %v256 = vpop.f32.mrf.mxu0
  %v257 = vpop.f32.mrf.mxu0
  %v258 = vadd.f32 0.0, %v257
  %v259 = vpop.f32.mrf.mxu0
  %260 = vmatprep.mubr.bf16.mxu0 0
  %261 = vmatmul.mubr.bf16.gmra.mxu0 %v104
  %v262 = vpop.f32.mrf.mxu0
  %v263 = vadd.f32 0.0, %v262
  %v264 = vpop.f32.mrf.mxu0
  %v265 = vpop.f32.mrf.mxu0
  %v266 = vadd.f32 0.0, %v265
  %v267 = vpop.f32.mrf.mxu0
  %268 = vmatprep.mubr.bf16.mxu0 0
  %269 = vmatmul.mubr.bf16.gmra.mxu0 %v105
  %v270 = vpop.f32.mrf.mxu0
  %v271 = vadd.f32 0.0, %v270
  %v272 = vpop.f32.mrf.mxu0
  %v273 = vpop.f32.mrf.mxu0
  %v274 = vadd.f32 0.0, %v273
  %v275 = vpop.f32.mrf.mxu0
  %276 = vmatprep.mubr.bf16.mxu0 0
  %277 = vmatmul.mubr.bf16.gmra.mxu0 %v106
  %v278 = vpop.f32.mrf.mxu0
  %v279 = vadd.f32 0.0, %v278
  %v280 = vpop.f32.mrf.mxu0
  %v281 = vpop.f32.mrf.mxu0
  %v282 = vadd.f32 0.0, %v281
  %v283 = vpop.f32.mrf.mxu0
  %284 = vmatprep.mubr.bf16.mxu0 0
  %285 = vmatmul.mubr.bf16.gmra.mxu0 %v107
  %v286 = vpop.f32.mrf.mxu0
  %v287 = vadd.f32 0.0, %v286
  %v288 = vpop.f32.mrf.mxu0
  %v289 = vpop.f32.mrf.mxu0
  %v290 = vadd.f32 0.0, %v289
  %v291 = vpop.f32.mrf.mxu0
  %292 = vmatprep.mubr.bf16.mxu0 0
  %293 = vmatmul.mubr.bf16.gmra.mxu0 %v108
  %v294 = vpop.f32.mrf.mxu0
  %v295 = vadd.f32 0.0, %v294
  %v296 = vpop.f32.mrf.mxu0
  %v297 = vpop.f32.mrf.mxu0
  %v298 = vadd.f32 0.0, %v297
  %v299 = vpop.f32.mrf.mxu0
  %300 = vmatprep.mubr.bf16.mxu0 0
  %301 = vmatmul.mubr.bf16.gmra.mxu0 %v109
  %v302 = vpop.f32.mrf.mxu0
  %v303 = vadd.f32 0.0, %v302
  %v304 = vpop.f32.mrf.mxu0
  %v305 = vpop.f32.mrf.mxu0
  %v306 = vadd.f32 0.0, %v305
  %v307 = vpop.f32.mrf.mxu0
  %308 = vmatprep.mubr.bf16.mxu0 0
  %309 = vmatmul.mubr.bf16.gmra.mxu0 %v110
  %v310 = vpop.f32.mrf.mxu0
  %v311 = vadd.f32 0.0, %v310
  %v312 = vpop.f32.mrf.mxu0
  %v313 = vpop.f32.mrf.mxu0
  %v314 = vadd.f32 0.0, %v313
  %v315 = vpop.f32.mrf.mxu0
  %316 = vmatprep.mubr.bf16.mxu0 0
  %317 = vmatmul.mubr.bf16.gmra.mxu0 %v111
  %v318 = vpop.f32.mrf.mxu0
  %v319 = vadd.f32 0.0, %v318
  %v320 = vpop.f32.mrf.mxu0
  %v321 = vpop.f32.mrf.mxu0
  %v322 = vadd.f32 0.0, %v321
  %v323 = vpop.f32.mrf.mxu0
  %324 = vmatprep.mubr.bf16.mxu0 0
  %325 = vmatmul.mubr.bf16.gmra.mxu0 %v112
  %v326 = vpop.f32.mrf.mxu0
  %v327 = vadd.f32 0.0, %v326
  %v328 = vpop.f32.mrf.mxu0
  %v329 = vpop.f32.mrf.mxu0
  %v330 = vadd.f32 0.0, %v329
  %v331 = vpop.f32.mrf.mxu0
  %332 = vmatprep.mubr.bf16.mxu0 0
  %333 = vmatmul.mubr.bf16.gmra.mxu0 %v113
  %v334 = vpop.f32.mrf.mxu0
  %v335 = vadd.f32 0.0, %v334
  %v336 = vpop.f32.mrf.mxu0
  %v337 = vpop.f32.mrf.mxu0
  %v338 = vadd.f32 0.0, %v337
  %v339 = vpop.f32.mrf.mxu0
  %340 = vmatprep.mubr.bf16.mxu0 0
  %341 = vmatmul.mubr.bf16.gmra.mxu0 %v114
  %v342 = vpop.f32.mrf.mxu0
  %v343 = vadd.f32 0.0, %v342
  %v344 = vpop.f32.mrf.mxu0
  %v345 = vpop.f32.mrf.mxu0
  %v346 = vadd.f32 0.0, %v345
  %v347 = vpop.f32.mrf.mxu0
  %348 = vmatprep.mubr.bf16.mxu0 0
  %349 = vmatmul.mubr.bf16.gmra.mxu0 %v115
  %v350 = vpop.f32.mrf.mxu0
  %v351 = vadd.f32 0.0, %v350
  %v352 = vpop.f32.mrf.mxu0
  %v353 = vpop.f32.mrf.mxu0
  %v354 = vadd.f32 0.0, %v353
  %v355 = vpop.f32.mrf.mxu0
  %356 = vmatprep.mubr.bf16.mxu0 0
  %357 = vmatmul.mubr.bf16.gmra.mxu0 %v116
  %v358 = vpop.f32.mrf.mxu0
  %v359 = vadd.f32 0.0, %v358
  %v360 = vpop.f32.mrf.mxu0
  %v361 = vpop.f32.mrf.mxu0
  %v362 = vadd.f32 0.0, %v361
  %v363 = vpop.f32.mrf.mxu0
  %364 = vmatprep.mubr.bf16.mxu0 0
  %365 = vmatmul.mubr.bf16.gmra.mxu0 %v117
  %v366 = vpop.f32.mrf.mxu0
  %v367 = vadd.f32 0.0, %v366
  %v368 = vpop.f32.mrf.mxu0
  %v369 = vpop.f32.mrf.mxu0
  %v370 = vadd.f32 0.0, %v369
  %v371 = vpop.f32.mrf.mxu0
  %372 = vmatprep.mubr.bf16.mxu0 0
  %373 = vmatmul.mubr.bf16.gmra.mxu0 %v118
  %v374 = vpop.f32.mrf.mxu0
  %v375 = vadd.f32 0.0, %v374
  %v376 = vpop.f32.mrf.mxu0
  %v377 = vpop.f32.mrf.mxu0
  %v378 = vadd.f32 0.0, %v377
  %v379 = vpop.f32.mrf.mxu0
  %380 = vmatprep.mubr.bf16.mxu0 0
  %381 = vmatmul.mubr.bf16.gmra.mxu0 %v119
  %v382 = vpop.f32.mrf.mxu0
  %v383 = vadd.f32 0.0, %v382
  %v384 = vpop.f32.mrf.mxu0
  %v385 = vpop.f32.mrf.mxu0
  %v386 = vadd.f32 0.0, %v385
  %v387 = vpop.f32.mrf.mxu0
  %388 = vmatprep.mubr.bf16.mxu0 0
  %389 = vmatmul.mubr.bf16.gmra.mxu0 %v120
  %v390 = vpop.f32.mrf.mxu0
  %v391 = vadd.f32 0.0, %v390
  %v392 = vpop.f32.mrf.mxu0
  %v393 = vpop.f32.mrf.mxu0
  %v394 = vadd.f32 0.0, %v393
  %v395 = vpop.f32.mrf.mxu0
  %396 = vmatprep.mubr.bf16.mxu0 0
  %397 = vmatmul.mubr.bf16.gmra.mxu0 %v121
  %v398 = vpop.f32.mrf.mxu0
  %v399 = vadd.f32 0.0, %v398
  %v400 = vpop.f32.mrf.mxu0
  %v401 = vpop.f32.mrf.mxu0
  %v402 = vadd.f32 0.0, %v401
  %v403 = vpop.f32.mrf.mxu0
  %404 = vmatprep.mubr.bf16.mxu0 0
  %405 = vmatmul.mubr.bf16.gmra.mxu0 %v122
  %v406 = vpop.f32.mrf.mxu0
  %v407 = vadd.f32 0.0, %v406
  %v408 = vpop.f32.mrf.mxu0
  %v409 = vpop.f32.mrf.mxu0
  %v410 = vadd.f32 0.0, %v409
  %v411 = vpop.f32.mrf.mxu0
  %412 = vmatprep.mubr.bf16.mxu0 0
  %413 = vmatmul.mubr.bf16.gmra.mxu0 %v123
  %v414 = vpop.f32.mrf.mxu0
  %v415 = vadd.f32 0.0, %v414
  %v416 = vpop.f32.mrf.mxu0
  %v417 = vpop.f32.mrf.mxu0
  %v418 = vadd.f32 0.0, %v417
  %v419 = vpop.f32.mrf.mxu0
  %420 = vmatprep.mubr.bf16.mxu0 0
  %421 = vmatmul.mubr.bf16.gmra.mxu0 %v124
  %v422 = vpop.f32.mrf.mxu0
  %v423 = vadd.f32 0.0, %v422
  %v424 = vpop.f32.mrf.mxu0
  %v425 = vpop.f32.mrf.mxu0
  %v426 = vadd.f32 0.0, %v425
  %v427 = vpop.f32.mrf.mxu0
  %428 = vmatprep.mubr.bf16.mxu0 0
  %429 = vmatmul.mubr.bf16.gmra.mxu0 %v125
  %v430 = vpop.f32.mrf.mxu0
  %v431 = vadd.f32 0.0, %v430
  %v432 = vpop.f32.mrf.mxu0
  %v433 = vpop.f32.mrf.mxu0
  %v434 = vadd.f32 0.0, %v433
  %v435 = vpop.f32.mrf.mxu0
  %436 = vmatprep.mubr.bf16.mxu0 0
  %437 = vmatmul.mubr.bf16.gmra.mxu0 %v126
  %v438 = vpop.f32.mrf.mxu0
  %v439 = vadd.f32 0.0, %v438
  %v440 = vpop.f32.mrf.mxu0
  %v441 = vpop.f32.mrf.mxu0
  %v442 = vadd.f32 0.0, %v441
  %v443 = vpop.f32.mrf.mxu0
  %444 = vmatprep.mubr.bf16.mxu0 0
  %445 = vmatmul.mubr.bf16.gmra.mxu0 %v127
  %v446 = vpop.f32.mrf.mxu0
  %v447 = vadd.f32 0.0, %v446
  %v448 = vpop.f32.mrf.mxu0
  %v449 = vpop.f32.mrf.mxu0
  %v450 = vadd.f32 0.0, %v449
  %v451 = vpop.f32.mrf.mxu0
  %452 = vmatprep.mubr.bf16.mxu0 0
  %453 = vmatmul.mubr.bf16.gmra.mxu0 %v128
  %v454 = vpop.f32.mrf.mxu0
  %v455 = vadd.f32 0.0, %v454
  %v456 = vpop.f32.mrf.mxu0
  %v457 = vpop.f32.mrf.mxu0
  %v458 = vadd.f32 0.0, %v457
  %v459 = vpop.f32.mrf.mxu0
  %460 = vmatprep.mubr.bf16.mxu0 0
  %461 = vmatmul.mubr.bf16.gmra.mxu0 %v129
  %v462 = vpop.f32.mrf.mxu0
  %v463 = vadd.f32 0.0, %v462
  %v464 = vpop.f32.mrf.mxu0
  %v465 = vpop.f32.mrf.mxu0
  %v466 = vadd.f32 0.0, %v465
  %v467 = vpop.f32.mrf.mxu0
  %468 = vmatprep.mubr.bf16.mxu0 0
  %469 = vmatmul.mubr.bf16.gmra.mxu0 %v130
  %v470 = vpop.f32.mrf.mxu0
  %v471 = vadd.f32 0.0, %v470
  %v472 = vpop.f32.mrf.mxu0
  %v473 = vpop.f32.mrf.mxu0
  %v474 = vadd.f32 0.0, %v473
  %v475 = vpop.f32.mrf.mxu0
  %476 = vmatprep.mubr.bf16.mxu0 0
  %477 = vmatmul.mubr.bf16.gmra.mxu0 %v131
  %v478 = vpop.f32.mrf.mxu0
  %v479 = vadd.f32 0.0, %v478
  %v480 = vpop.f32.mrf.mxu0
  %v481 = vpop.f32.mrf.mxu0
  %v482 = vadd.f32 0.0, %v481
  %v483 = vpop.f32.mrf.mxu0
  %484 = vdwg.mxu0
  %v485 = vld [vmem:[%s2] sm:$0x1]
  %v486 = vld [vmem:[%s3] sm:$0x1]
  %v487 = vadd.f32 %v231, %v234
  %v488 = vadd.f32 %v487, %v239
  %v489 = vadd.f32 %v488, %v242
  %v490 = vadd.f32 %v489, %v247
  %v491 = vadd.f32 %v490, %v250
  %v492 = vadd.f32 %v491, %v255
  %v493 = vadd.f32 %v492, %v258
  %v494 = vadd.f32 %v493, %v263
  %v495 = vadd.f32 %v494, %v266
  %v496 = vadd.f32 %v495, %v271
  %v497 = vadd.f32 %v496, %v274
  %v498 = vadd.f32 %v497, %v279
  %v499 = vadd.f32 %v498, %v282
  %v500 = vadd.f32 %v499, %v287
  %v501 = vadd.f32 %v500, %v290
  %v502 = vadd.f32 %v501, %v295
  %v503 = vadd.f32 %v502, %v298
  %v504 = vadd.f32 %v503, %v303
  %v505 = vadd.f32 %v504, %v306
  %v506 = vadd.f32 %v505, %v311
  %v507 = vadd.f32 %v506, %v314
  %v508 = vadd.f32 %v507, %v319
  %v509 = vadd.f32 %v508, %v322
  %v510 = vadd.f32 %v509, %v327
  %v511 = vadd.f32 %v510, %v330
  %v512 = vadd.f32 %v511, %v335
  %v513 = vadd.f32 %v512, %v338
  %v514 = vadd.f32 %v513, %v343
  %v515 = vadd.f32 %v514, %v346
  %v516 = vadd.f32 %v515, %v351
  %v517 = vadd.f32 %v516, %v354
  %v518 = vadd.f32 %v517, %v359
  %v519 = vadd.f32 %v518, %v362
  %v520 = vadd.f32 %v519, %v367
  %v521 = vadd.f32 %v520, %v370
  %v522 = vadd.f32 %v521, %v375
  %v523 = vadd.f32 %v522, %v378
  %v524 = vadd.f32 %v523, %v383
  %v525 = vadd.f32 %v524, %v386
  %v526 = vadd.f32 %v525, %v391
  %v527 = vadd.f32 %v526, %v394
  %v528 = vadd.f32 %v527, %v399
  %v529 = vadd.f32 %v528, %v402
  %v530 = vadd.f32 %v529, %v407
  %v531 = vadd.f32 %v530, %v410
  %v532 = vadd.f32 %v531, %v415
  %v533 = vadd.f32 %v532, %v418
  %v534 = vadd.f32 %v533, %v423
  %v535 = vadd.f32 %v534, %v426
  %v536 = vadd.f32 %v535, %v431
  %v537 = vadd.f32 %v536, %v434
  %v538 = vadd.f32 %v537, %v439
  %v539 = vadd.f32 %v538, %v442
  %v540 = vadd.f32 %v539, %v447
  %v541 = vadd.f32 %v540, %v450
  %v542 = vadd.f32 %v541, %v455
  %v543 = vadd.f32 %v542, %v458
  %v544 = vadd.f32 %v543, %v463
  %v545 = vadd.f32 %v544, %v466
  %v546 = vadd.f32 %v545, %v471
  %v547 = vadd.f32 %v546, %v474
  %v548 = vadd.f32 %v547, %v479
  %v549 = vadd.f32 %v548, %v482
  %v550 = vrot.slane %v549, 4
  %v551 = vadd.f32 %v549, %v550
  %v552 = vrot.slane %v551, 2
  %v553 = vadd.f32 %v551, %v552
  %v554 = vrot.slane %v553, 1
  %v555 = vadd.f32 %v553, %v554
  %v556 = vmul.f32 %v231, %v231
  %v557 = vmul.f32 %v234, %v234
  %v558 = vmul.f32 %v239, %v239
  %v559 = vmul.f32 %v242, %v242
  %v560 = vmul.f32 %v247, %v247
  %v561 = vmul.f32 %v250, %v250
  %v562 = vmul.f32 %v255, %v255
  %v563 = vmul.f32 %v258, %v258
  %v564 = vmul.f32 %v263, %v263
  %v565 = vmul.f32 %v266, %v266
  %v566 = vmul.f32 %v271, %v271
  %v567 = vmul.f32 %v274, %v274
  %v568 = vmul.f32 %v279, %v279
  %v569 = vmul.f32 %v282, %v282
  %v570 = vmul.f32 %v287, %v287
  %v571 = vmul.f32 %v290, %v290
  %v572 = vmul.f32 %v295, %v295
  %v573 = vmul.f32 %v298, %v298
  %v574 = vmul.f32 %v303, %v303
  %v575 = vmul.f32 %v306, %v306
  %v576 = vmul.f32 %v311, %v311
  %v577 = vmul.f32 %v314, %v314
  %v578 = vmul.f32 %v319, %v319
  %v579 = vmul.f32 %v322, %v322
  %v580 = vmul.f32 %v327, %v327
  %v581 = vmul.f32 %v330, %v330
  %v582 = vmul.f32 %v335, %v335
  %v583 = vmul.f32 %v338, %v338
  %v584 = vmul.f32 %v343, %v343
  %v585 = vmul.f32 %v346, %v346
  %v586 = vmul.f32 %v351, %v351
  %v587 = vmul.f32 %v354, %v354
  %v588 = vmul.f32 %v359, %v359
  %v589 = vmul.f32 %v362, %v362
  %v590 = vmul.f32 %v367, %v367
  %v591 = vmul.f32 %v370, %v370
  %v592 = vmul.f32 %v375, %v375
  %v593 = vmul.f32 %v378, %v378
  %v594 = vmul.f32 %v383, %v383
  %v595 = vmul.f32 %v386, %v386
  %v596 = vmul.f32 %v391, %v391
  %v597 = vmul.f32 %v394, %v394
  %v598 = vmul.f32 %v399, %v399
  %v599 = vmul.f32 %v402, %v402
  %v600 = vmul.f32 %v407, %v407
  %v601 = vmul.f32 %v410, %v410
  %v602 = vmul.f32 %v415, %v415
  %v603 = vmul.f32 %v418, %v418
  %v604 = vmul.f32 %v423, %v423
  %v605 = vmul.f32 %v426, %v426
  %v606 = vmul.f32 %v431, %v431
  %v607 = vmul.f32 %v434, %v434
  %v608 = vmul.f32 %v439, %v439
  %v609 = vmul.f32 %v442, %v442
  %v610 = vmul.f32 %v447, %v447
  %v611 = vmul.f32 %v450, %v450
  %v612 = vmul.f32 %v455, %v455
  %v613 = vmul.f32 %v458, %v458
  %v614 = vmul.f32 %v463, %v463
  %v615 = vmul.f32 %v466, %v466
  %v616 = vmul.f32 %v471, %v471
  %v617 = vmul.f32 %v474, %v474
  %v618 = vmul.f32 %v479, %v479
  %v619 = vmul.f32 %v482, %v482
  %v620 = vadd.f32 %v556, %v557
  %v621 = vadd.f32 %v620, %v558
  %v622 = vadd.f32 %v621, %v559
  %v623 = vadd.f32 %v622, %v560
  %v624 = vadd.f32 %v623, %v561
  %v625 = vadd.f32 %v624, %v562
  %v626 = vadd.f32 %v625, %v563
  %v627 = vadd.f32 %v626, %v564
  %v628 = vadd.f32 %v627, %v565
  %v629 = vadd.f32 %v628, %v566
  %v630 = vadd.f32 %v629, %v567
  %v631 = vadd.f32 %v630, %v568
  %v632 = vadd.f32 %v631, %v569
  %v633 = vadd.f32 %v632, %v570
  %v634 = vadd.f32 %v633, %v571
  %v635 = vadd.f32 %v634, %v572
  %v636 = vadd.f32 %v635, %v573
  %v637 = vadd.f32 %v636, %v574
  %v638 = vadd.f32 %v637, %v575
  %v639 = vadd.f32 %v638, %v576
  %v640 = vadd.f32 %v639, %v577
  %v641 = vadd.f32 %v640, %v578
  %v642 = vadd.f32 %v641, %v579
  %v643 = vadd.f32 %v642, %v580
  %v644 = vadd.f32 %v643, %v581
  %v645 = vadd.f32 %v644, %v582
  %v646 = vadd.f32 %v645, %v583
  %v647 = vadd.f32 %v646, %v584
  %v648 = vadd.f32 %v647, %v585
  %v649 = vadd.f32 %v648, %v586
  %v650 = vadd.f32 %v649, %v587
  %v651 = vadd.f32 %v650, %v588
  %v652 = vadd.f32 %v651, %v589
  %v653 = vadd.f32 %v652, %v590
  %v654 = vadd.f32 %v653, %v591
  %v655 = vadd.f32 %v654, %v592
  %v656 = vadd.f32 %v655, %v593
  %v657 = vadd.f32 %v656, %v594
  %v658 = vadd.f32 %v657, %v595
  %v659 = vadd.f32 %v658, %v596
  %v660 = vadd.f32 %v659, %v597
  %v661 = vadd.f32 %v660, %v598
  %v662 = vadd.f32 %v661, %v599
  %v663 = vadd.f32 %v662, %v600
  %v664 = vadd.f32 %v663, %v601
  %v665 = vadd.f32 %v664, %v602
  %v666 = vadd.f32 %v665, %v603
  %v667 = vadd.f32 %v666, %v604
  %v668 = vadd.f32 %v667, %v605
  %v669 = vadd.f32 %v668, %v606
  %v670 = vadd.f32 %v669, %v607
  %v671 = vadd.f32 %v670, %v608
  %v672 = vadd.f32 %v671, %v609
  %v673 = vadd.f32 %v672, %v610
  %v674 = vadd.f32 %v673, %v611
  %v675 = vadd.f32 %v674, %v612
  %v676 = vadd.f32 %v675, %v613
  %v677 = vadd.f32 %v676, %v614
  %v678 = vadd.f32 %v677, %v615
  %v679 = vadd.f32 %v678, %v616
  %v680 = vadd.f32 %v679, %v617
  %v681 = vadd.f32 %v680, %v618
  %v682 = vadd.f32 %v681, %v619
  %v683 = vrot.slane %v682, 4
  %v684 = vadd.f32 %v682, %v683
  %v685 = vrot.slane %v684, 2
  %v686 = vadd.f32 %v684, %v685
  %v687 = vrot.slane %v686, 1
  %v688 = vadd.f32 %v686, %v687
  %v689 = vmul.f32 %v555, 0.001953125
  %v690 = vmul.f32 %v688, 0.001953125
  %v691 = vmul.f32 %v689, %v689
  %v692 = vsub.f32 %v690, %v691
  %v693 = vmax.f32 %v692, 0.0
  %v694 = vadd.f32 %v693, 1e-05
  %v695 = vrsqrt.pop %v694
  %v696 = vmul.f32 %v485, %v695
  %v697 = vmul.f32 %v689, %v696
  %v698 = vsub.f32 %v486, %v697
  %v700 = vlaneseq
  %v701 = vshrl.u32 %v700, 7
  %v702 = vsub.s32 0, %v701
  %v703 = vrot.slane %v696, %v702
  %v705 = vmul.f32 %v231, %v703
  %v706 = vmul.f32 %v234, %v703
  %v707 = vmul.f32 %v239, %v703
  %v708 = vmul.f32 %v242, %v703
  %v709 = vmul.f32 %v247, %v703
  %v710 = vmul.f32 %v250, %v703
  %v711 = vmul.f32 %v255, %v703
  %v712 = vmul.f32 %v258, %v703
  %v713 = vmul.f32 %v263, %v703
  %v714 = vmul.f32 %v266, %v703
  %v715 = vmul.f32 %v271, %v703
  %v716 = vmul.f32 %v274, %v703
  %v717 = vmul.f32 %v279, %v703
  %v718 = vmul.f32 %v282, %v703
  %v719 = vmul.f32 %v287, %v703
  %v720 = vmul.f32 %v290, %v703
  %v721 = vmul.f32 %v295, %v703
  %v722 = vmul.f32 %v298, %v703
  %v723 = vmul.f32 %v303, %v703
  %v724 = vmul.f32 %v306, %v703
  %v725 = vmul.f32 %v311, %v703
  %v726 = vmul.f32 %v314, %v703
  %v727 = vmul.f32 %v319, %v703
  %v728 = vmul.f32 %v322, %v703
  %v729 = vmul.f32 %v327, %v703
  %v730 = vmul.f32 %v330, %v703
  %v731 = vmul.f32 %v335, %v703
  %v732 = vmul.f32 %v338, %v703
  %v733 = vmul.f32 %v343, %v703
  %v734 = vmul.f32 %v346, %v703
  %v735 = vmul.f32 %v351, %v703
  %v736 = vmul.f32 %v354, %v703
  %v737 = vmul.f32 %v359, %v703
  %v738 = vmul.f32 %v362, %v703
  %v739 = vmul.f32 %v367, %v703
  %v740 = vmul.f32 %v370, %v703
  %v741 = vmul.f32 %v375, %v703
  %v742 = vmul.f32 %v378, %v703
  %v743 = vmul.f32 %v383, %v703
  %v744 = vmul.f32 %v386, %v703
  %v745 = vmul.f32 %v391, %v703
  %v746 = vmul.f32 %v394, %v703
  %v747 = vmul.f32 %v399, %v703
  %v748 = vmul.f32 %v402, %v703
  %v749 = vmul.f32 %v407, %v703
  %v750 = vmul.f32 %v410, %v703
  %v751 = vmul.f32 %v415, %v703
  %v752 = vmul.f32 %v418, %v703
  %v753 = vmul.f32 %v423, %v703
  %v754 = vmul.f32 %v426, %v703
  %v755 = vmul.f32 %v431, %v703
  %v756 = vmul.f32 %v434, %v703
  %v757 = vmul.f32 %v439, %v703
  %v758 = vmul.f32 %v442, %v703
  %v759 = vmul.f32 %v447, %v703
  %v760 = vmul.f32 %v450, %v703
  %v761 = vmul.f32 %v455, %v703
  %v762 = vmul.f32 %v458, %v703
  %v763 = vmul.f32 %v463, %v703
  %v764 = vmul.f32 %v466, %v703
  %v765 = vmul.f32 %v471, %v703
  %v766 = vmul.f32 %v474, %v703
  %v767 = vmul.f32 %v479, %v703
  %v768 = vmul.f32 %v482, %v703
  %v770 = vlaneseq
  %v771 = vshrl.u32 %v770, 7
  %v772 = vsub.s32 0, %v771
  %v773 = vrot.slane %v698, %v772
  %v775 = vadd.f32 %v705, %v773
  %v776 = vadd.f32 %v706, %v773
  %v777 = vadd.f32 %v707, %v773
  %v778 = vadd.f32 %v708, %v773
  %v779 = vadd.f32 %v709, %v773
  %v780 = vadd.f32 %v710, %v773
  %v781 = vadd.f32 %v711, %v773
  %v782 = vadd.f32 %v712, %v773
  %v783 = vadd.f32 %v713, %v773
  %v784 = vadd.f32 %v714, %v773
  %v785 = vadd.f32 %v715, %v773
  %v786 = vadd.f32 %v716, %v773
  %v787 = vadd.f32 %v717, %v773
  %v788 = vadd.f32 %v718, %v773
  %v789 = vadd.f32 %v719, %v773
  %v790 = vadd.f32 %v720, %v773
  %v791 = vadd.f32 %v721, %v773
  %v792 = vadd.f32 %v722, %v773
  %v793 = vadd.f32 %v723, %v773
  %v794 = vadd.f32 %v724, %v773
  %v795 = vadd.f32 %v725, %v773
  %v796 = vadd.f32 %v726, %v773
  %v797 = vadd.f32 %v727, %v773
  %v798 = vadd.f32 %v728, %v773
  %v799 = vadd.f32 %v729, %v773
  %v800 = vadd.f32 %v730, %v773
  %v801 = vadd.f32 %v731, %v773
  %v802 = vadd.f32 %v732, %v773
  %v803 = vadd.f32 %v733, %v773
  %v804 = vadd.f32 %v734, %v773
  %v805 = vadd.f32 %v735, %v773
  %v806 = vadd.f32 %v736, %v773
  %v807 = vadd.f32 %v737, %v773
  %v808 = vadd.f32 %v738, %v773
  %v809 = vadd.f32 %v739, %v773
  %v810 = vadd.f32 %v740, %v773
  %v811 = vadd.f32 %v741, %v773
  %v812 = vadd.f32 %v742, %v773
  %v813 = vadd.f32 %v743, %v773
  %v814 = vadd.f32 %v744, %v773
  %v815 = vadd.f32 %v745, %v773
  %v816 = vadd.f32 %v746, %v773
  %v817 = vadd.f32 %v747, %v773
  %v818 = vadd.f32 %v748, %v773
  %v819 = vadd.f32 %v749, %v773
  %v820 = vadd.f32 %v750, %v773
  %v821 = vadd.f32 %v751, %v773
  %v822 = vadd.f32 %v752, %v773
  %v823 = vadd.f32 %v753, %v773
  %v824 = vadd.f32 %v754, %v773
  %v825 = vadd.f32 %v755, %v773
  %v826 = vadd.f32 %v756, %v773
  %v827 = vadd.f32 %v757, %v773
  %v828 = vadd.f32 %v758, %v773
  %v829 = vadd.f32 %v759, %v773
  %v830 = vadd.f32 %v760, %v773
  %v831 = vadd.f32 %v761, %v773
  %v832 = vadd.f32 %v762, %v773
  %v833 = vadd.f32 %v763, %v773
  %v834 = vadd.f32 %v764, %v773
  %v835 = vadd.f32 %v765, %v773
  %v836 = vadd.f32 %v766, %v773
  %v837 = vadd.f32 %v767, %v773
  %v838 = vadd.f32 %v768, %v773
  %v839 = vmax.f32 %v775, 0.0
  %v840 = vmax.f32 %v776, 0.0
  %v841 = vmax.f32 %v777, 0.0
  %v842 = vmax.f32 %v778, 0.0
  %v843 = vmax.f32 %v779, 0.0
  %v844 = vmax.f32 %v780, 0.0
  %v845 = vmax.f32 %v781, 0.0
  %v846 = vmax.f32 %v782, 0.0
  %v847 = vmax.f32 %v783, 0.0
  %v848 = vmax.f32 %v784, 0.0
  %v849 = vmax.f32 %v785, 0.0
  %v850 = vmax.f32 %v786, 0.0
  %v851 = vmax.f32 %v787, 0.0
  %v852 = vmax.f32 %v788, 0.0
  %v853 = vmax.f32 %v789, 0.0
  %v854 = vmax.f32 %v790, 0.0
  %v855 = vmax.f32 %v791, 0.0
  %v856 = vmax.f32 %v792, 0.0
  %v857 = vmax.f32 %v793, 0.0
  %v858 = vmax.f32 %v794, 0.0
  %v859 = vmax.f32 %v795, 0.0
  %v860 = vmax.f32 %v796, 0.0
  %v861 = vmax.f32 %v797, 0.0
  %v862 = vmax.f32 %v798, 0.0
  %v863 = vmax.f32 %v799, 0.0
  %v864 = vmax.f32 %v800, 0.0
  %v865 = vmax.f32 %v801, 0.0
  %v866 = vmax.f32 %v802, 0.0
  %v867 = vmax.f32 %v803, 0.0
  %v868 = vmax.f32 %v804, 0.0
  %v869 = vmax.f32 %v805, 0.0
  %v870 = vmax.f32 %v806, 0.0
  %v871 = vmax.f32 %v807, 0.0
  %v872 = vmax.f32 %v808, 0.0
  %v873 = vmax.f32 %v809, 0.0
  %v874 = vmax.f32 %v810, 0.0
  %v875 = vmax.f32 %v811, 0.0
  %v876 = vmax.f32 %v812, 0.0
  %v877 = vmax.f32 %v813, 0.0
  %v878 = vmax.f32 %v814, 0.0
  %v879 = vmax.f32 %v815, 0.0
  %v880 = vmax.f32 %v816, 0.0
  %v881 = vmax.f32 %v817, 0.0
  %v882 = vmax.f32 %v818, 0.0
  %v883 = vmax.f32 %v819, 0.0
  %v884 = vmax.f32 %v820, 0.0
  %v885 = vmax.f32 %v821, 0.0
  %v886 = vmax.f32 %v822, 0.0
  %v887 = vmax.f32 %v823, 0.0
  %v888 = vmax.f32 %v824, 0.0
  %v889 = vmax.f32 %v825, 0.0
  %v890 = vmax.f32 %v826, 0.0
  %v891 = vmax.f32 %v827, 0.0
  %v892 = vmax.f32 %v828, 0.0
  %v893 = vmax.f32 %v829, 0.0
  %v894 = vmax.f32 %v830, 0.0
  %v895 = vmax.f32 %v831, 0.0
  %v896 = vmax.f32 %v832, 0.0
  %v897 = vmax.f32 %v833, 0.0
  %v898 = vmax.f32 %v834, 0.0
  %v899 = vmax.f32 %v835, 0.0
  %v900 = vmax.f32 %v836, 0.0
  %v901 = vmax.f32 %v837, 0.0
  %v902 = vmax.f32 %v838, 0.0
  %903 = vst [vmem:[#allocation2] sm:$0xff] 0.0
  %904 = vst [vmem:[#allocation2 + $0x8] sm:$0xff] 0.0
  %905 = vst [vmem:[#allocation2 + $0x120] sm:$0xff] 0.0
  %906 = vst [vmem:[#allocation2 + $0x128] sm:$0xff] 0.0
  %s907 = scalar_lea.vmem [#allocation2], 272
  %908 = vst [vmem:[%s907] sm:$0xff] 0.0
  %909 = vst [vmem:[%s907 + $0x8] sm:$0xff] 0.0
  %910 = vst [vmem:[%s907 + $0x120] sm:$0xff] 0.0
  %911 = vst [vmem:[%s907 + $0x128] sm:$0xff] 0.0
  %s912 = scalar_lea.vmem [#allocation2], 16
  %913 = vst [vmem:[%s912] sm:$0xff] %v839
  %914 = vst [vmem:[%s912 + $0x8] sm:$0xff] %v840
  %915 = vst [vmem:[%s912 + $0x10] sm:$0xff] %v841
  %916 = vst [vmem:[%s912 + $0x18] sm:$0xff] %v842
  %917 = vst [vmem:[%s912 + $0x20] sm:$0xff] %v843
  %918 = vst [vmem:[%s912 + $0x28] sm:$0xff] %v844
  %919 = vst [vmem:[%s912 + $0x30] sm:$0xff] %v845
  %920 = vst [vmem:[%s912 + $0x38] sm:$0xff] %v846
  %921 = vst [vmem:[%s912 + $0x40] sm:$0xff] %v847
  %922 = vst [vmem:[%s912 + $0x48] sm:$0xff] %v848
  %923 = vst [vmem:[%s912 + $0x50] sm:$0xff] %v849
  %924 = vst [vmem:[%s912 + $0x58] sm:$0xff] %v850
  %925 = vst [vmem:[%s912 + $0x60] sm:$0xff] %v851
  %926 = vst [vmem:[%s912 + $0x68] sm:$0xff] %v852
  %927 = vst [vmem:[%s912 + $0x70] sm:$0xff] %v853
  %928 = vst [vmem:[%s912 + $0x78] sm:$0xff] %v854
  %929 = vst [vmem:[%s912 + $0x80] sm:$0xff] %v855
  %930 = vst [vmem:[%s912 + $0x88] sm:$0xff] %v856
  %931 = vst [vmem:[%s912 + $0x90] sm:$0xff] %v857
  %932 = vst [vmem:[%s912 + $0x98] sm:$0xff] %v858
  %933 = vst [vmem:[%s912 + $0xa0] sm:$0xff] %v859
  %934 = vst [vmem:[%s912 + $0xa8] sm:$0xff] %v860
  %935 = vst [vmem:[%s912 + $0xb0] sm:$0xff] %v861
  %936 = vst [vmem:[%s912 + $0xb8] sm:$0xff] %v862
  %937 = vst [vmem:[%s912 + $0xc0] sm:$0xff] %v863
  %938 = vst [vmem:[%s912 + $0xc8] sm:$0xff] %v864
  %939 = vst [vmem:[%s912 + $0xd0] sm:$0xff] %v865
  %940 = vst [vmem:[%s912 + $0xd8] sm:$0xff] %v866
  %941 = vst [vmem:[%s912 + $0xe0] sm:$0xff] %v867
  %942 = vst [vmem:[%s912 + $0xe8] sm:$0xff] %v868
  %943 = vst [vmem:[%s912 + $0xf0] sm:$0xff] %v869
  %944 = vst [vmem:[%s912 + $0xf8] sm:$0xff] %v870
  %945 = vst [vmem:[%s912 + $0x120] sm:$0xff] %v871
  %946 = vst [vmem:[%s912 + $0x128] sm:$0xff] %v872
  %947 = vst [vmem:[%s912 + $0x130] sm:$0xff] %v873
  %948 = vst [vmem:[%s912 + $0x138] sm:$0xff] %v874
  %949 = vst [vmem:[%s912 + $0x140] sm:$0xff] %v875
  %950 = vst [vmem:[%s912 + $0x148] sm:$0xff] %v876
  %951 = vst [vmem:[%s912 + $0x150] sm:$0xff] %v877
  %952 = vst [vmem:[%s912 + $0x158] sm:$0xff] %v878
  %953 = vst [vmem:[%s912 + $0x160] sm:$0xff] %v879
  %954 = vst [vmem:[%s912 + $0x168] sm:$0xff] %v880
  %955 = vst [vmem:[%s912 + $0x170] sm:$0xff] %v881
  %956 = vst [vmem:[%s912 + $0x178] sm:$0xff] %v882
  %957 = vst [vmem:[%s912 + $0x180] sm:$0xff] %v883
  %958 = vst [vmem:[%s912 + $0x188] sm:$0xff] %v884
  %959 = vst [vmem:[%s912 + $0x190] sm:$0xff] %v885
  %960 = vst [vmem:[%s912 + $0x198] sm:$0xff] %v886
  %961 = vst [vmem:[%s912 + $0x1a0] sm:$0xff] %v887
  %962 = vst [vmem:[%s912 + $0x1a8] sm:$0xff] %v888
  %963 = vst [vmem:[%s912 + $0x1b0] sm:$0xff] %v889
  %964 = vst [vmem:[%s912 + $0x1b8] sm:$0xff] %v890
  %965 = vst [vmem:[%s912 + $0x1c0] sm:$0xff] %v891
  %966 = vst [vmem:[%s912 + $0x1c8] sm:$0xff] %v892
  %967 = vst [vmem:[%s912 + $0x1d0] sm:$0xff] %v893
  %968 = vst [vmem:[%s912 + $0x1d8] sm:$0xff] %v894
  %969 = vst [vmem:[%s912 + $0x1e0] sm:$0xff] %v895
  %970 = vst [vmem:[%s912 + $0x1e8] sm:$0xff] %v896
  %971 = vst [vmem:[%s912 + $0x1f0] sm:$0xff] %v897
  %972 = vst [vmem:[%s912 + $0x1f8] sm:$0xff] %v898
  %973 = vst [vmem:[%s912 + $0x200] sm:$0xff] %v899
  %974 = vst [vmem:[%s912 + $0x208] sm:$0xff] %v900
  %975 = vst [vmem:[%s912 + $0x210] sm:$0xff] %v901
  %976 = vst [vmem:[%s912 + $0x218] sm:$0xff] %v902
  %v977 = vlaneseq
  %v978 = vshrl.u32 %v977, 7
  %v979 = vadd.s32 %v978, 8
  %vm980 = vcmp.ne.s32.totalorder %v978, 0
  %vm981 = vcmp.ne.s32.totalorder %v979, 0
  %vm982 = vcmp.ne.s32.totalorder %v978, 15
  %vm983 = vcmp.ne.s32.totalorder %v979, 15
  %v984 = vld [vmem:[#allocation2] sm:$0xff]
  %v985 = vld [vmem:[#allocation2 + $0x8] sm:$0xff]
  %v986 = vld [vmem:[#allocation2 + $0x10] sm:$0xff]
  %v987 = vld [vmem:[#allocation2 + $0x18] sm:$0xff]
  %v988 = vld [vmem:[#allocation2 + $0x20] sm:$0xff]
  %v989 = vld [vmem:[#allocation2 + $0x28] sm:$0xff]
  %v990 = vld [vmem:[#allocation2 + $0x30] sm:$0xff]
  %v991 = vld [vmem:[#allocation2 + $0x38] sm:$0xff]
  %v992 = vld [vmem:[#allocation2 + $0x40] sm:$0xff]
  %v993 = vld [vmem:[#allocation2 + $0x48] sm:$0xff]
  %v994 = vld [vmem:[#allocation2 + $0x50] sm:$0xff]
  %v995 = vld [vmem:[#allocation2 + $0x58] sm:$0xff]
  %v996 = vld [vmem:[#allocation2 + $0x60] sm:$0xff]
  %v997 = vld [vmem:[#allocation2 + $0x68] sm:$0xff]
  %v998 = vld [vmem:[#allocation2 + $0x70] sm:$0xff]
  %v999 = vld [vmem:[#allocation2 + $0x78] sm:$0xff]
  %v1000 = vld [vmem:[#allocation2 + $0x80] sm:$0xff]
  %v1001 = vld [vmem:[#allocation2 + $0x88] sm:$0xff]
  %v1002 = vld [vmem:[#allocation2 + $0x90] sm:$0xff]
  %v1003 = vld [vmem:[#allocation2 + $0x98] sm:$0xff]
  %v1004 = vld [vmem:[#allocation2 + $0xa0] sm:$0xff]
  %v1005 = vld [vmem:[#allocation2 + $0xa8] sm:$0xff]
  %v1006 = vld [vmem:[#allocation2 + $0xb0] sm:$0xff]
  %v1007 = vld [vmem:[#allocation2 + $0xb8] sm:$0xff]
  %v1008 = vld [vmem:[#allocation2 + $0xc0] sm:$0xff]
  %v1009 = vld [vmem:[#allocation2 + $0xc8] sm:$0xff]
  %v1010 = vld [vmem:[#allocation2 + $0xd0] sm:$0xff]
  %v1011 = vld [vmem:[#allocation2 + $0xd8] sm:$0xff]
  %v1012 = vld [vmem:[#allocation2 + $0xe0] sm:$0xff]
  %v1013 = vld [vmem:[#allocation2 + $0xe8] sm:$0xff]
  %v1014 = vld [vmem:[#allocation2 + $0xf0] sm:$0xff]
  %v1015 = vld [vmem:[#allocation2 + $0xf8] sm:$0xff]
  %v1016 = vld [vmem:[#allocation2 + $0x120] sm:$0xff]
  %v1017 = vld [vmem:[#allocation2 + $0x128] sm:$0xff]
  %v1018 = vld [vmem:[#allocation2 + $0x130] sm:$0xff]
  %v1019 = vld [vmem:[#allocation2 + $0x138] sm:$0xff]
  %v1020 = vld [vmem:[#allocation2 + $0x140] sm:$0xff]
  %v1021 = vld [vmem:[#allocation2 + $0x148] sm:$0xff]
  %v1022 = vld [vmem:[#allocation2 + $0x150] sm:$0xff]
  %v1023 = vld [vmem:[#allocation2 + $0x158] sm:$0xff]
  %v1024 = vld [vmem:[#allocation2 + $0x160] sm:$0xff]
  %v1025 = vld [vmem:[#allocation2 + $0x168] sm:$0xff]
  %v1026 = vld [vmem:[#allocation2 + $0x170] sm:$0xff]
  %v1027 = vld [vmem:[#allocation2 + $0x178] sm:$0xff]
  %v1028 = vld [vmem:[#allocation2 + $0x180] sm:$0xff]
  %v1029 = vld [vmem:[#allocation2 + $0x188] sm:$0xff]
  %v1030 = vld [vmem:[#allocation2 + $0x190] sm:$0xff]
  %v1031 = vld [vmem:[#allocation2 + $0x198] sm:$0xff]
  %v1032 = vld [vmem:[#allocation2 + $0x1a0] sm:$0xff]
  %v1033 = vld [vmem:[#allocation2 + $0x1a8] sm:$0xff]
  %v1034 = vld [vmem:[#allocation2 + $0x1b0] sm:$0xff]
  %v1035 = vld [vmem:[#allocation2 + $0x1b8] sm:$0xff]
  %v1036 = vld [vmem:[#allocation2 + $0x1c0] sm:$0xff]
  %v1037 = vld [vmem:[#allocation2 + $0x1c8] sm:$0xff]
  %v1038 = vld [vmem:[#allocation2 + $0x1d0] sm:$0xff]
  %v1039 = vld [vmem:[#allocation2 + $0x1d8] sm:$0xff]
  %v1040 = vld [vmem:[#allocation2 + $0x1e0] sm:$0xff]
  %v1041 = vld [vmem:[#allocation2 + $0x1e8] sm:$0xff]
  %v1042 = vld [vmem:[#allocation2 + $0x1f0] sm:$0xff]
  %v1043 = vld [vmem:[#allocation2 + $0x1f8] sm:$0xff]
  %v1044 = vld [vmem:[#allocation2 + $0x200] sm:$0xff]
  %v1045 = vld [vmem:[#allocation2 + $0x208] sm:$0xff]
  %v1046 = vld [vmem:[#allocation2 + $0x210] sm:$0xff]
  %v1047 = vld [vmem:[#allocation2 + $0x218] sm:$0xff]
  %v1048 = vrot.slane %v984, 7
  %v1049 = vrot.slane %v986, 7
  %v1050 = vrot.slane %v988, 7
  %v1051 = vrot.slane %v990, 7
  %v1052 = vrot.slane %v992, 7
  %v1053 = vrot.slane %v994, 7
  %v1054 = vrot.slane %v996, 7
  %v1055 = vrot.slane %v998, 7
  %v1056 = vrot.slane %v1000, 7
  %v1057 = vrot.slane %v1002, 7
  %v1058 = vrot.slane %v1004, 7
  %v1059 = vrot.slane %v1006, 7
  %v1060 = vrot.slane %v1008, 7
  %v1061 = vrot.slane %v1010, 7
  %v1062 = vrot.slane %v1012, 7
  %v1063 = vrot.slane %v1014, 7
  %v1064 = vrot.slane %v1016, 7
  %v1065 = vrot.slane %v1018, 7
  %v1066 = vrot.slane %v1020, 7
  %v1067 = vrot.slane %v1022, 7
  %v1068 = vrot.slane %v1024, 7
  %v1069 = vrot.slane %v1026, 7
  %v1070 = vrot.slane %v1028, 7
  %v1071 = vrot.slane %v1030, 7
  %v1072 = vrot.slane %v1032, 7
  %v1073 = vrot.slane %v1034, 7
  %v1074 = vrot.slane %v1036, 7
  %v1075 = vrot.slane %v1038, 7
  %v1076 = vrot.slane %v1040, 7
  %v1077 = vrot.slane %v1042, 7
  %v1078 = vrot.slane %v1044, 7
  %v1079 = vrot.slane %v1046, 7
  %v1080 = vrot.slane %v985, 7
  %v1081 = vrot.slane %v987, 7
  %v1082 = vrot.slane %v989, 7
  %v1083 = vrot.slane %v991, 7
  %v1084 = vrot.slane %v993, 7
  %v1085 = vrot.slane %v995, 7
  %v1086 = vrot.slane %v997, 7
  %v1087 = vrot.slane %v999, 7
  %v1088 = vrot.slane %v1001, 7
  %v1089 = vrot.slane %v1003, 7
  %v1090 = vrot.slane %v1005, 7
  %v1091 = vrot.slane %v1007, 7
  %v1092 = vrot.slane %v1009, 7
  %v1093 = vrot.slane %v1011, 7
  %v1094 = vrot.slane %v1013, 7
  %v1095 = vrot.slane %v1015, 7
  %v1096 = vrot.slane %v1017, 7
  %v1097 = vrot.slane %v1019, 7
  %v1098 = vrot.slane %v1021, 7
  %v1099 = vrot.slane %v1023, 7
  %v1100 = vrot.slane %v1025, 7
  %v1101 = vrot.slane %v1027, 7
  %v1102 = vrot.slane %v1029, 7
  %v1103 = vrot.slane %v1031, 7
  %v1104 = vrot.slane %v1033, 7
  %v1105 = vrot.slane %v1035, 7
  %v1106 = vrot.slane %v1037, 7
  %v1107 = vrot.slane %v1039, 7
  %v1108 = vrot.slane %v1041, 7
  %v1109 = vrot.slane %v1043, 7
  %v1110 = vrot.slane %v1045, 7
  %v1111 = vrot.slane %v1047, 7
  %vm1112 = vcmp.lt.s32.totalorder %v978, 1
  %v1113 = vsel %vm1112, %v1048, %v1080
  %v1114 = vsel %vm1112, %v1049, %v1081
  %v1115 = vsel %vm1112, %v1050, %v1082
  %v1116 = vsel %vm1112, %v1051, %v1083
  %v1117 = vsel %vm1112, %v1052, %v1084
  %v1118 = vsel %vm1112, %v1053, %v1085
  %v1119 = vsel %vm1112, %v1054, %v1086
  %v1120 = vsel %vm1112, %v1055, %v1087
  %v1121 = vsel %vm1112, %v1056, %v1088
  %v1122 = vsel %vm1112, %v1057, %v1089
  %v1123 = vsel %vm1112, %v1058, %v1090
  %v1124 = vsel %vm1112, %v1059, %v1091
  %v1125 = vsel %vm1112, %v1060, %v1092
  %v1126 = vsel %vm1112, %v1061, %v1093
  %v1127 = vsel %vm1112, %v1062, %v1094
  %v1128 = vsel %vm1112, %v1063, %v1095
  %v1129 = vsel %vm1112, %v1064, %v1096
  %v1130 = vsel %vm1112, %v1065, %v1097
  %v1131 = vsel %vm1112, %v1066, %v1098
  %v1132 = vsel %vm1112, %v1067, %v1099
  %v1133 = vsel %vm1112, %v1068, %v1100
  %v1134 = vsel %vm1112, %v1069, %v1101
  %v1135 = vsel %vm1112, %v1070, %v1102
  %v1136 = vsel %vm1112, %v1071, %v1103
  %v1137 = vsel %vm1112, %v1072, %v1104
  %v1138 = vsel %vm1112, %v1073, %v1105
  %v1139 = vsel %vm1112, %v1074, %v1106
  %v1140 = vsel %vm1112, %v1075, %v1107
  %v1141 = vsel %vm1112, %v1076, %v1108
  %v1142 = vsel %vm1112, %v1077, %v1109
  %v1143 = vsel %vm1112, %v1078, %v1110
  %v1144 = vsel %vm1112, %v1079, %v1111
  %v1145 = vsel %vm1112, %v1080, %v1048
  %v1146 = vsel %vm1112, %v1081, %v1049
  %v1147 = vsel %vm1112, %v1082, %v1050
  %v1148 = vsel %vm1112, %v1083, %v1051
  %v1149 = vsel %vm1112, %v1084, %v1052
  %v1150 = vsel %vm1112, %v1085, %v1053
  %v1151 = vsel %vm1112, %v1086, %v1054
  %v1152 = vsel %vm1112, %v1087, %v1055
  %v1153 = vsel %vm1112, %v1088, %v1056
  %v1154 = vsel %vm1112, %v1089, %v1057
  %v1155 = vsel %vm1112, %v1090, %v1058
  %v1156 = vsel %vm1112, %v1091, %v1059
  %v1157 = vsel %vm1112, %v1092, %v1060
  %v1158 = vsel %vm1112, %v1093, %v1061
  %v1159 = vsel %vm1112, %v1094, %v1062
  %v1160 = vsel %vm1112, %v1095, %v1063
  %v1161 = vsel %vm1112, %v1096, %v1064
  %v1162 = vsel %vm1112, %v1097, %v1065
  %v1163 = vsel %vm1112, %v1098, %v1066
  %v1164 = vsel %vm1112, %v1099, %v1067
  %v1165 = vsel %vm1112, %v1100, %v1068
  %v1166 = vsel %vm1112, %v1101, %v1069
  %v1167 = vsel %vm1112, %v1102, %v1070
  %v1168 = vsel %vm1112, %v1103, %v1071
  %v1169 = vsel %vm1112, %v1104, %v1072
  %v1170 = vsel %vm1112, %v1105, %v1073
  %v1171 = vsel %vm1112, %v1106, %v1074
  %v1172 = vsel %vm1112, %v1107, %v1075
  %v1173 = vsel %vm1112, %v1108, %v1076
  %v1174 = vsel %vm1112, %v1109, %v1077
  %v1175 = vsel %vm1112, %v1110, %v1078
  %v1176 = vsel %vm1112, %v1111, %v1079
  %v1177 = vsel %vm980, %v1145, 0.0
  %v1178 = vsel %vm981, %v1113, 0.0
  %v1179 = vsel %vm980, %v1146, 0.0
  %v1180 = vsel %vm981, %v1114, 0.0
  %v1181 = vsel %vm980, %v1147, 0.0
  %v1182 = vsel %vm981, %v1115, 0.0
  %v1183 = vsel %vm980, %v1148, 0.0
  %v1184 = vsel %vm981, %v1116, 0.0
  %v1185 = vsel %vm980, %v1149, 0.0
  %v1186 = vsel %vm981, %v1117, 0.0
  %v1187 = vsel %vm980, %v1150, 0.0
  %v1188 = vsel %vm981, %v1118, 0.0
  %v1189 = vsel %vm980, %v1151, 0.0
  %v1190 = vsel %vm981, %v1119, 0.0
  %v1191 = vsel %vm980, %v1152, 0.0
  %v1192 = vsel %vm981, %v1120, 0.0
  %v1193 = vsel %vm980, %v1153, 0.0
  %v1194 = vsel %vm981, %v1121, 0.0
  %v1195 = vsel %vm980, %v1154, 0.0
  %v1196 = vsel %vm981, %v1122, 0.0
  %v1197 = vsel %vm980, %v1155, 0.0
  %v1198 = vsel %vm981, %v1123, 0.0
  %v1199 = vsel %vm980, %v1156, 0.0
  %v1200 = vsel %vm981, %v1124, 0.0
  %v1201 = vsel %vm980, %v1157, 0.0
  %v1202 = vsel %vm981, %v1125, 0.0
  %v1203 = vsel %vm980, %v1158, 0.0
  %v1204 = vsel %vm981, %v1126, 0.0
  %v1205 = vsel %vm980, %v1159, 0.0
  %v1206 = vsel %vm981, %v1127, 0.0
  %v1207 = vsel %vm980, %v1160, 0.0
  %v1208 = vsel %vm981, %v1128, 0.0
  %v1209 = vsel %vm980, %v1161, 0.0
  %v1210 = vsel %vm981, %v1129, 0.0
  %v1211 = vsel %vm980, %v1162, 0.0
  %v1212 = vsel %vm981, %v1130, 0.0
  %v1213 = vsel %vm980, %v1163, 0.0
  %v1214 = vsel %vm981, %v1131, 0.0
  %v1215 = vsel %vm980, %v1164, 0.0
  %v1216 = vsel %vm981, %v1132, 0.0
  %v1217 = vsel %vm980, %v1165, 0.0
  %v1218 = vsel %vm981, %v1133, 0.0
  %v1219 = vsel %vm980, %v1166, 0.0
  %v1220 = vsel %vm981, %v1134, 0.0
  %v1221 = vsel %vm980, %v1167, 0.0
  %v1222 = vsel %vm981, %v1135, 0.0
  %v1223 = vsel %vm980, %v1168, 0.0
  %v1224 = vsel %vm981, %v1136, 0.0
  %v1225 = vsel %vm980, %v1169, 0.0
  %v1226 = vsel %vm981, %v1137, 0.0
  %v1227 = vsel %vm980, %v1170, 0.0
  %v1228 = vsel %vm981, %v1138, 0.0
  %v1229 = vsel %vm980, %v1171, 0.0
  %v1230 = vsel %vm981, %v1139, 0.0
  %v1231 = vsel %vm980, %v1172, 0.0
  %v1232 = vsel %vm981, %v1140, 0.0
  %v1233 = vsel %vm980, %v1173, 0.0
  %v1234 = vsel %vm981, %v1141, 0.0
  %v1235 = vsel %vm980, %v1174, 0.0
  %v1236 = vsel %vm981, %v1142, 0.0
  %v1237 = vsel %vm980, %v1175, 0.0
  %v1238 = vsel %vm981, %v1143, 0.0
  %v1239 = vsel %vm980, %v1176, 0.0
  %v1240 = vsel %vm981, %v1144, 0.0
  %v1241 = vpack.c.bf16 %v1178, %v1177
  %v1242 = vpack.c.bf16 %v1180, %v1179
  %v1243 = vpack.c.bf16 %v1182, %v1181
  %v1244 = vpack.c.bf16 %v1184, %v1183
  %v1245 = vpack.c.bf16 %v1186, %v1185
  %v1246 = vpack.c.bf16 %v1188, %v1187
  %v1247 = vpack.c.bf16 %v1190, %v1189
  %v1248 = vpack.c.bf16 %v1192, %v1191
  %v1249 = vpack.c.bf16 %v1194, %v1193
  %v1250 = vpack.c.bf16 %v1196, %v1195
  %v1251 = vpack.c.bf16 %v1198, %v1197
  %v1252 = vpack.c.bf16 %v1200, %v1199
  %v1253 = vpack.c.bf16 %v1202, %v1201
  %v1254 = vpack.c.bf16 %v1204, %v1203
  %v1255 = vpack.c.bf16 %v1206, %v1205
  %v1256 = vpack.c.bf16 %v1208, %v1207
  %v1257 = vpack.c.bf16 %v1210, %v1209
  %v1258 = vpack.c.bf16 %v1212, %v1211
  %v1259 = vpack.c.bf16 %v1214, %v1213
  %v1260 = vpack.c.bf16 %v1216, %v1215
  %v1261 = vpack.c.bf16 %v1218, %v1217
  %v1262 = vpack.c.bf16 %v1220, %v1219
  %v1263 = vpack.c.bf16 %v1222, %v1221
  %v1264 = vpack.c.bf16 %v1224, %v1223
  %v1265 = vpack.c.bf16 %v1226, %v1225
  %v1266 = vpack.c.bf16 %v1228, %v1227
  %v1267 = vpack.c.bf16 %v1230, %v1229
  %v1268 = vpack.c.bf16 %v1232, %v1231
  %v1269 = vpack.c.bf16 %v1234, %v1233
  %v1270 = vpack.c.bf16 %v1236, %v1235
  %v1271 = vpack.c.bf16 %v1238, %v1237
  %v1272 = vpack.c.bf16 %v1240, %v1239
  %v1273 = vld [vmem:[%s4] sm:$0xf]
  %v1274 = vld [vmem:[%s4 + $0x4] sm:$0xf]
  %v1275 = vld [vmem:[%s4 + $0x8] sm:$0xf]
  %v1276 = vld [vmem:[%s4 + $0xc] sm:$0xf]
  %v1277 = vld [vmem:[%s4 + $0x10] sm:$0xf]
  %v1278 = vld [vmem:[%s4 + $0x14] sm:$0xf]
  %v1279 = vld [vmem:[%s4 + $0x18] sm:$0xf]
  %v1280 = vld [vmem:[%s4 + $0x1c] sm:$0xf]
  %v1281 = vld [vmem:[%s4 + $0x20] sm:$0xf]
  %v1282 = vld [vmem:[%s4 + $0x24] sm:$0xf]
  %v1283 = vld [vmem:[%s4 + $0x28] sm:$0xf]
  %v1284 = vld [vmem:[%s4 + $0x2c] sm:$0xf]
  %v1285 = vld [vmem:[%s4 + $0x30] sm:$0xf]
  %v1286 = vld [vmem:[%s4 + $0x34] sm:$0xf]
  %v1287 = vld [vmem:[%s4 + $0x38] sm:$0xf]
  %v1288 = vld [vmem:[%s4 + $0x3c] sm:$0xf]
  %v1289 = vpack.c.bf16 %v985, %v984
  %v1290 = vpack.c.bf16 %v987, %v986
  %v1291 = vpack.c.bf16 %v989, %v988
  %v1292 = vpack.c.bf16 %v991, %v990
  %v1293 = vpack.c.bf16 %v993, %v992
  %v1294 = vpack.c.bf16 %v995, %v994
  %v1295 = vpack.c.bf16 %v997, %v996
  %v1296 = vpack.c.bf16 %v999, %v998
  %v1297 = vpack.c.bf16 %v1001, %v1000
  %v1298 = vpack.c.bf16 %v1003, %v1002
  %v1299 = vpack.c.bf16 %v1005, %v1004
  %v1300 = vpack.c.bf16 %v1007, %v1006
  %v1301 = vpack.c.bf16 %v1009, %v1008
  %v1302 = vpack.c.bf16 %v1011, %v1010
  %v1303 = vpack.c.bf16 %v1013, %v1012
  %v1304 = vpack.c.bf16 %v1015, %v1014
  %v1305 = vpack.c.bf16 %v1017, %v1016
  %v1306 = vpack.c.bf16 %v1019, %v1018
  %v1307 = vpack.c.bf16 %v1021, %v1020
  %v1308 = vpack.c.bf16 %v1023, %v1022
  %v1309 = vpack.c.bf16 %v1025, %v1024
  %v1310 = vpack.c.bf16 %v1027, %v1026
  %v1311 = vpack.c.bf16 %v1029, %v1028
  %v1312 = vpack.c.bf16 %v1031, %v1030
  %v1313 = vpack.c.bf16 %v1033, %v1032
  %v1314 = vpack.c.bf16 %v1035, %v1034
  %v1315 = vpack.c.bf16 %v1037, %v1036
  %v1316 = vpack.c.bf16 %v1039, %v1038
  %v1317 = vpack.c.bf16 %v1041, %v1040
  %v1318 = vpack.c.bf16 %v1043, %v1042
  %v1319 = vpack.c.bf16 %v1045, %v1044
  %v1320 = vpack.c.bf16 %v1047, %v1046
  %s1321 = scalar_lea.vmem %s4, 64
  %v1322 = vld [vmem:[%s1321] sm:$0xf]
  %v1323 = vld [vmem:[%s1321 + $0x4] sm:$0xf]
  %v1324 = vld [vmem:[%s1321 + $0x8] sm:$0xf]
  %v1325 = vld [vmem:[%s1321 + $0xc] sm:$0xf]
  %v1326 = vld [vmem:[%s1321 + $0x10] sm:$0xf]
  %v1327 = vld [vmem:[%s1321 + $0x14] sm:$0xf]
  %v1328 = vld [vmem:[%s1321 + $0x18] sm:$0xf]
  %v1329 = vld [vmem:[%s1321 + $0x1c] sm:$0xf]
  %v1330 = vld [vmem:[%s1321 + $0x20] sm:$0xf]
  %v1331 = vld [vmem:[%s1321 + $0x24] sm:$0xf]
  %v1332 = vld [vmem:[%s1321 + $0x28] sm:$0xf]
  %v1333 = vld [vmem:[%s1321 + $0x2c] sm:$0xf]
  %v1334 = vld [vmem:[%s1321 + $0x30] sm:$0xf]
  %v1335 = vld [vmem:[%s1321 + $0x34] sm:$0xf]
  %v1336 = vld [vmem:[%s1321 + $0x38] sm:$0xf]
  %v1337 = vld [vmem:[%s1321 + $0x3c] sm:$0xf]
  %v1354 = vunpack.c.l.b16 %v1322
  %v1355 = vunpack.c.l.b16 %v1323
  %v1356 = vunpack.c.l.b16 %v1324
  %v1357 = vunpack.c.l.b16 %v1325
  %v1358 = vunpack.c.l.b16 %v1326
  %v1359 = vunpack.c.l.b16 %v1327
  %v1360 = vunpack.c.l.b16 %v1328
  %v1361 = vunpack.c.l.b16 %v1329
  %v1362 = vunpack.c.l.b16 %v1330
  %v1363 = vunpack.c.l.b16 %v1331
  %v1364 = vunpack.c.l.b16 %v1332
  %v1365 = vunpack.c.l.b16 %v1333
  %v1366 = vunpack.c.l.b16 %v1334
  %v1367 = vunpack.c.l.b16 %v1335
  %v1368 = vunpack.c.l.b16 %v1336
  %v1369 = vunpack.c.l.b16 %v1337
  %v1370 = vpack.c.b16 %v1355, %v1354
  %v1371 = vpack.c.b16 %v1357, %v1356
  %v1372 = vpack.c.b16 %v1359, %v1358
  %v1373 = vpack.c.b16 %v1361, %v1360
  %v1374 = vpack.c.b16 %v1363, %v1362
  %v1375 = vpack.c.b16 %v1365, %v1364
  %v1376 = vpack.c.b16 %v1367, %v1366
  %v1377 = vpack.c.b16 %v1369, %v1368
  %1386 = vmatprep.subr.bf16.mxu0 0
  %1387 = vmatpush1.bf16.msra.mxu0 %v1377
  %1388 = vmatprep.subr.bf16.mxu0 0
  %1389 = vmatpush1.bf16.msra.mxu0 %v1376
  %1390 = vmatprep.subr.bf16.mxu0 0
  %1391 = vmatpush1.bf16.msra.mxu0 %v1375
  %1392 = vmatprep.subr.bf16.mxu0 0
  %1393 = vmatpush1.bf16.msra.mxu0 %v1374
  %1394 = vmatprep.subr.bf16.mxu0 0
  %1395 = vmatpush1.bf16.msra.mxu0 %v1373
  %1396 = vmatprep.subr.bf16.mxu0 0
  %1397 = vmatpush1.bf16.msra.mxu0 %v1372
  %1398 = vmatprep.subr.bf16.mxu0 0
  %1399 = vmatpush1.bf16.msra.mxu0 %v1371
  %1400 = vmatprep.subr.bf16.mxu0 0
  %1401 = vmatpush1.bf16.msra.mxu0 %v1370
  %1402 = vmatprep.subr.bf16.mxu0 0
  %1403 = vmatpush2.bf16.msra.mxu0 0
  %1404 = vmatprep.subr.bf16.mxu0 0
  %1405 = vmatpush2.bf16.msra.mxu0 0
  %1406 = vmatprep.subr.bf16.mxu0 0
  %1407 = vmatpush2.bf16.msra.mxu0 0
  %1408 = vmatprep.subr.bf16.mxu0 0
  %1409 = vmatpush2.bf16.msra.mxu0 0
  %1410 = vmatprep.subr.bf16.mxu0 0
  %1411 = vmatpush2.bf16.msra.mxu0 0
  %1412 = vmatprep.subr.bf16.mxu0 0
  %1413 = vmatpush2.bf16.msra.mxu0 0
  %1414 = vmatprep.subr.bf16.mxu0 0
  %1415 = vmatpush2.bf16.msra.mxu0 0
  %1416 = vmatprep.subr.bf16.mxu0 0
  %1417 = vmatpush2.bf16.msra.mxu0 0
  %1418 = vmatprep.mubr.bf16.mxu0 0
  %1419 = vmatmul.mubr.bf16.gmra.mxu0 %v1289
  %v1420 = vpop.f32.mrf.mxu0
  %v1421 = vadd.f32 0.0, %v1420
  %v1422 = vpop.f32.mrf.mxu0
  %v1423 = vpop.f32.mrf.mxu0
  %v1424 = vadd.f32 0.0, %v1423
  %v1425 = vpop.f32.mrf.mxu0
  %1426 = vmatprep.mubr.bf16.mxu0 0
  %1427 = vmatmul.mubr.bf16.gmra.mxu0 %v1290
  %v1428 = vpop.f32.mrf.mxu0
  %v1429 = vadd.f32 0.0, %v1428
  %v1430 = vpop.f32.mrf.mxu0
  %v1431 = vpop.f32.mrf.mxu0
  %v1432 = vadd.f32 0.0, %v1431
  %v1433 = vpop.f32.mrf.mxu0
  %1434 = vmatprep.mubr.bf16.mxu0 0
  %1435 = vmatmul.mubr.bf16.gmra.mxu0 %v1291
  %v1436 = vpop.f32.mrf.mxu0
  %v1437 = vadd.f32 0.0, %v1436
  %v1438 = vpop.f32.mrf.mxu0
  %v1439 = vpop.f32.mrf.mxu0
  %v1440 = vadd.f32 0.0, %v1439
  %v1441 = vpop.f32.mrf.mxu0
  %1442 = vmatprep.mubr.bf16.mxu0 0
  %1443 = vmatmul.mubr.bf16.gmra.mxu0 %v1292
  %v1444 = vpop.f32.mrf.mxu0
  %v1445 = vadd.f32 0.0, %v1444
  %v1446 = vpop.f32.mrf.mxu0
  %v1447 = vpop.f32.mrf.mxu0
  %v1448 = vadd.f32 0.0, %v1447
  %v1449 = vpop.f32.mrf.mxu0
  %1450 = vmatprep.mubr.bf16.mxu0 0
  %1451 = vmatmul.mubr.bf16.gmra.mxu0 %v1293
  %v1452 = vpop.f32.mrf.mxu0
  %v1453 = vadd.f32 0.0, %v1452
  %v1454 = vpop.f32.mrf.mxu0
  %v1455 = vpop.f32.mrf.mxu0
  %v1456 = vadd.f32 0.0, %v1455
  %v1457 = vpop.f32.mrf.mxu0
  %1458 = vmatprep.mubr.bf16.mxu0 0
  %1459 = vmatmul.mubr.bf16.gmra.mxu0 %v1294
  %v1460 = vpop.f32.mrf.mxu0
  %v1461 = vadd.f32 0.0, %v1460
  %v1462 = vpop.f32.mrf.mxu0
  %v1463 = vpop.f32.mrf.mxu0
  %v1464 = vadd.f32 0.0, %v1463
  %v1465 = vpop.f32.mrf.mxu0
  %1466 = vmatprep.mubr.bf16.mxu0 0
  %1467 = vmatmul.mubr.bf16.gmra.mxu0 %v1295
  %v1468 = vpop.f32.mrf.mxu0
  %v1469 = vadd.f32 0.0, %v1468
  %v1470 = vpop.f32.mrf.mxu0
  %v1471 = vpop.f32.mrf.mxu0
  %v1472 = vadd.f32 0.0, %v1471
  %v1473 = vpop.f32.mrf.mxu0
  %1474 = vmatprep.mubr.bf16.mxu0 0
  %1475 = vmatmul.mubr.bf16.gmra.mxu0 %v1296
  %v1476 = vpop.f32.mrf.mxu0
  %v1477 = vadd.f32 0.0, %v1476
  %v1478 = vpop.f32.mrf.mxu0
  %v1479 = vpop.f32.mrf.mxu0
  %v1480 = vadd.f32 0.0, %v1479
  %v1481 = vpop.f32.mrf.mxu0
  %1482 = vmatprep.mubr.bf16.mxu0 0
  %1483 = vmatmul.mubr.bf16.gmra.mxu0 %v1297
  %v1484 = vpop.f32.mrf.mxu0
  %v1485 = vadd.f32 0.0, %v1484
  %v1486 = vpop.f32.mrf.mxu0
  %v1487 = vpop.f32.mrf.mxu0
  %v1488 = vadd.f32 0.0, %v1487
  %v1489 = vpop.f32.mrf.mxu0
  %1490 = vmatprep.mubr.bf16.mxu0 0
  %1491 = vmatmul.mubr.bf16.gmra.mxu0 %v1298
  %v1492 = vpop.f32.mrf.mxu0
  %v1493 = vadd.f32 0.0, %v1492
  %v1494 = vpop.f32.mrf.mxu0
  %v1495 = vpop.f32.mrf.mxu0
  %v1496 = vadd.f32 0.0, %v1495
  %v1497 = vpop.f32.mrf.mxu0
  %1498 = vmatprep.mubr.bf16.mxu0 0
  %1499 = vmatmul.mubr.bf16.gmra.mxu0 %v1299
  %v1500 = vpop.f32.mrf.mxu0
  %v1501 = vadd.f32 0.0, %v1500
  %v1502 = vpop.f32.mrf.mxu0
  %v1503 = vpop.f32.mrf.mxu0
  %v1504 = vadd.f32 0.0, %v1503
  %v1505 = vpop.f32.mrf.mxu0
  %1506 = vmatprep.mubr.bf16.mxu0 0
  %1507 = vmatmul.mubr.bf16.gmra.mxu0 %v1300
  %v1508 = vpop.f32.mrf.mxu0
  %v1509 = vadd.f32 0.0, %v1508
  %v1510 = vpop.f32.mrf.mxu0
  %v1511 = vpop.f32.mrf.mxu0
  %v1512 = vadd.f32 0.0, %v1511
  %v1513 = vpop.f32.mrf.mxu0
  %1514 = vmatprep.mubr.bf16.mxu0 0
  %1515 = vmatmul.mubr.bf16.gmra.mxu0 %v1301
  %v1516 = vpop.f32.mrf.mxu0
  %v1517 = vadd.f32 0.0, %v1516
  %v1518 = vpop.f32.mrf.mxu0
  %v1519 = vpop.f32.mrf.mxu0
  %v1520 = vadd.f32 0.0, %v1519
  %v1521 = vpop.f32.mrf.mxu0
  %1522 = vmatprep.mubr.bf16.mxu0 0
  %1523 = vmatmul.mubr.bf16.gmra.mxu0 %v1302
  %v1524 = vpop.f32.mrf.mxu0
  %v1525 = vadd.f32 0.0, %v1524
  %v1526 = vpop.f32.mrf.mxu0
  %v1527 = vpop.f32.mrf.mxu0
  %v1528 = vadd.f32 0.0, %v1527
  %v1529 = vpop.f32.mrf.mxu0
  %1530 = vmatprep.mubr.bf16.mxu0 0
  %1531 = vmatmul.mubr.bf16.gmra.mxu0 %v1303
  %v1532 = vpop.f32.mrf.mxu0
  %v1533 = vadd.f32 0.0, %v1532
  %v1534 = vpop.f32.mrf.mxu0
  %v1535 = vpop.f32.mrf.mxu0
  %v1536 = vadd.f32 0.0, %v1535
  %v1537 = vpop.f32.mrf.mxu0
  %1538 = vmatprep.mubr.bf16.mxu0 0
  %1539 = vmatmul.mubr.bf16.gmra.mxu0 %v1304
  %v1540 = vpop.f32.mrf.mxu0
  %v1541 = vadd.f32 0.0, %v1540
  %v1542 = vpop.f32.mrf.mxu0
  %v1543 = vpop.f32.mrf.mxu0
  %v1544 = vadd.f32 0.0, %v1543
  %v1545 = vpop.f32.mrf.mxu0
  %1546 = vmatprep.mubr.bf16.mxu0 0
  %1547 = vmatmul.mubr.bf16.gmra.mxu0 %v1305
  %v1548 = vpop.f32.mrf.mxu0
  %v1549 = vadd.f32 0.0, %v1548
  %v1550 = vpop.f32.mrf.mxu0
  %v1551 = vpop.f32.mrf.mxu0
  %v1552 = vadd.f32 0.0, %v1551
  %v1553 = vpop.f32.mrf.mxu0
  %1554 = vmatprep.mubr.bf16.mxu0 0
  %1555 = vmatmul.mubr.bf16.gmra.mxu0 %v1306
  %v1556 = vpop.f32.mrf.mxu0
  %v1557 = vadd.f32 0.0, %v1556
  %v1558 = vpop.f32.mrf.mxu0
  %v1559 = vpop.f32.mrf.mxu0
  %v1560 = vadd.f32 0.0, %v1559
  %v1561 = vpop.f32.mrf.mxu0
  %1562 = vmatprep.mubr.bf16.mxu0 0
  %1563 = vmatmul.mubr.bf16.gmra.mxu0 %v1307
  %v1564 = vpop.f32.mrf.mxu0
  %v1565 = vadd.f32 0.0, %v1564
  %v1566 = vpop.f32.mrf.mxu0
  %v1567 = vpop.f32.mrf.mxu0
  %v1568 = vadd.f32 0.0, %v1567
  %v1569 = vpop.f32.mrf.mxu0
  %1570 = vmatprep.mubr.bf16.mxu0 0
  %1571 = vmatmul.mubr.bf16.gmra.mxu0 %v1308
  %v1572 = vpop.f32.mrf.mxu0
  %v1573 = vadd.f32 0.0, %v1572
  %v1574 = vpop.f32.mrf.mxu0
  %v1575 = vpop.f32.mrf.mxu0
  %v1576 = vadd.f32 0.0, %v1575
  %v1577 = vpop.f32.mrf.mxu0
  %1578 = vmatprep.mubr.bf16.mxu0 0
  %1579 = vmatmul.mubr.bf16.gmra.mxu0 %v1309
  %v1580 = vpop.f32.mrf.mxu0
  %v1581 = vadd.f32 0.0, %v1580
  %v1582 = vpop.f32.mrf.mxu0
  %v1583 = vpop.f32.mrf.mxu0
  %v1584 = vadd.f32 0.0, %v1583
  %v1585 = vpop.f32.mrf.mxu0
  %1586 = vmatprep.mubr.bf16.mxu0 0
  %1587 = vmatmul.mubr.bf16.gmra.mxu0 %v1310
  %v1588 = vpop.f32.mrf.mxu0
  %v1589 = vadd.f32 0.0, %v1588
  %v1590 = vpop.f32.mrf.mxu0
  %v1591 = vpop.f32.mrf.mxu0
  %v1592 = vadd.f32 0.0, %v1591
  %v1593 = vpop.f32.mrf.mxu0
  %1594 = vmatprep.mubr.bf16.mxu0 0
  %1595 = vmatmul.mubr.bf16.gmra.mxu0 %v1311
  %v1596 = vpop.f32.mrf.mxu0
  %v1597 = vadd.f32 0.0, %v1596
  %v1598 = vpop.f32.mrf.mxu0
  %v1599 = vpop.f32.mrf.mxu0
  %v1600 = vadd.f32 0.0, %v1599
  %v1601 = vpop.f32.mrf.mxu0
  %1602 = vmatprep.mubr.bf16.mxu0 0
  %1603 = vmatmul.mubr.bf16.gmra.mxu0 %v1312
  %v1604 = vpop.f32.mrf.mxu0
  %v1605 = vadd.f32 0.0, %v1604
  %v1606 = vpop.f32.mrf.mxu0
  %v1607 = vpop.f32.mrf.mxu0
  %v1608 = vadd.f32 0.0, %v1607
  %v1609 = vpop.f32.mrf.mxu0
  %1610 = vmatprep.mubr.bf16.mxu0 0
  %1611 = vmatmul.mubr.bf16.gmra.mxu0 %v1313
  %v1612 = vpop.f32.mrf.mxu0
  %v1613 = vadd.f32 0.0, %v1612
  %v1614 = vpop.f32.mrf.mxu0
  %v1615 = vpop.f32.mrf.mxu0
  %v1616 = vadd.f32 0.0, %v1615
  %v1617 = vpop.f32.mrf.mxu0
  %1618 = vmatprep.mubr.bf16.mxu0 0
  %1619 = vmatmul.mubr.bf16.gmra.mxu0 %v1314
  %v1620 = vpop.f32.mrf.mxu0
  %v1621 = vadd.f32 0.0, %v1620
  %v1622 = vpop.f32.mrf.mxu0
  %v1623 = vpop.f32.mrf.mxu0
  %v1624 = vadd.f32 0.0, %v1623
  %v1625 = vpop.f32.mrf.mxu0
  %1626 = vmatprep.mubr.bf16.mxu0 0
  %1627 = vmatmul.mubr.bf16.gmra.mxu0 %v1315
  %v1628 = vpop.f32.mrf.mxu0
  %v1629 = vadd.f32 0.0, %v1628
  %v1630 = vpop.f32.mrf.mxu0
  %v1631 = vpop.f32.mrf.mxu0
  %v1632 = vadd.f32 0.0, %v1631
  %v1633 = vpop.f32.mrf.mxu0
  %1634 = vmatprep.mubr.bf16.mxu0 0
  %1635 = vmatmul.mubr.bf16.gmra.mxu0 %v1316
  %v1636 = vpop.f32.mrf.mxu0
  %v1637 = vadd.f32 0.0, %v1636
  %v1638 = vpop.f32.mrf.mxu0
  %v1639 = vpop.f32.mrf.mxu0
  %v1640 = vadd.f32 0.0, %v1639
  %v1641 = vpop.f32.mrf.mxu0
  %1642 = vmatprep.mubr.bf16.mxu0 0
  %1643 = vmatmul.mubr.bf16.gmra.mxu0 %v1317
  %v1644 = vpop.f32.mrf.mxu0
  %v1645 = vadd.f32 0.0, %v1644
  %v1646 = vpop.f32.mrf.mxu0
  %v1647 = vpop.f32.mrf.mxu0
  %v1648 = vadd.f32 0.0, %v1647
  %v1649 = vpop.f32.mrf.mxu0
  %1650 = vmatprep.mubr.bf16.mxu0 0
  %1651 = vmatmul.mubr.bf16.gmra.mxu0 %v1318
  %v1652 = vpop.f32.mrf.mxu0
  %v1653 = vadd.f32 0.0, %v1652
  %v1654 = vpop.f32.mrf.mxu0
  %v1655 = vpop.f32.mrf.mxu0
  %v1656 = vadd.f32 0.0, %v1655
  %v1657 = vpop.f32.mrf.mxu0
  %1658 = vmatprep.mubr.bf16.mxu0 0
  %1659 = vmatmul.mubr.bf16.gmra.mxu0 %v1319
  %v1660 = vpop.f32.mrf.mxu0
  %v1661 = vadd.f32 0.0, %v1660
  %v1662 = vpop.f32.mrf.mxu0
  %v1663 = vpop.f32.mrf.mxu0
  %v1664 = vadd.f32 0.0, %v1663
  %v1665 = vpop.f32.mrf.mxu0
  %1666 = vmatprep.mubr.bf16.mxu0 0
  %1667 = vmatmul.mubr.bf16.gmra.mxu0 %v1320
  %v1668 = vpop.f32.mrf.mxu0
  %v1669 = vadd.f32 0.0, %v1668
  %v1670 = vpop.f32.mrf.mxu0
  %v1671 = vpop.f32.mrf.mxu0
  %v1672 = vadd.f32 0.0, %v1671
  %v1673 = vpop.f32.mrf.mxu0
  %1674 = vdwg.mxu0
  %v1691 = vunpack.c.l.b16 %v1273
  %v1692 = vunpack.c.l.b16 %v1274
  %v1693 = vunpack.c.l.b16 %v1275
  %v1694 = vunpack.c.l.b16 %v1276
  %v1695 = vunpack.c.l.b16 %v1277
  %v1696 = vunpack.c.l.b16 %v1278
  %v1697 = vunpack.c.l.b16 %v1279
  %v1698 = vunpack.c.l.b16 %v1280
  %v1699 = vunpack.c.l.b16 %v1281
  %v1700 = vunpack.c.l.b16 %v1282
  %v1701 = vunpack.c.l.b16 %v1283
  %v1702 = vunpack.c.l.b16 %v1284
  %v1703 = vunpack.c.l.b16 %v1285
  %v1704 = vunpack.c.l.b16 %v1286
  %v1705 = vunpack.c.l.b16 %v1287
  %v1706 = vunpack.c.l.b16 %v1288
  %v1707 = vpack.c.b16 %v1692, %v1691
  %v1708 = vpack.c.b16 %v1694, %v1693
  %v1709 = vpack.c.b16 %v1696, %v1695
  %v1710 = vpack.c.b16 %v1698, %v1697
  %v1711 = vpack.c.b16 %v1700, %v1699
  %v1712 = vpack.c.b16 %v1702, %v1701
  %v1713 = vpack.c.b16 %v1704, %v1703
  %v1714 = vpack.c.b16 %v1706, %v1705
  %1723 = vmatprep.subr.bf16.mxu0 0
  %1724 = vmatpush1.bf16.msra.mxu0 %v1714
  %1725 = vmatprep.subr.bf16.mxu0 0
  %1726 = vmatpush1.bf16.msra.mxu0 %v1713
  %1727 = vmatprep.subr.bf16.mxu0 0
  %1728 = vmatpush1.bf16.msra.mxu0 %v1712
  %1729 = vmatprep.subr.bf16.mxu0 0
  %1730 = vmatpush1.bf16.msra.mxu0 %v1711
  %1731 = vmatprep.subr.bf16.mxu0 0
  %1732 = vmatpush1.bf16.msra.mxu0 %v1710
  %1733 = vmatprep.subr.bf16.mxu0 0
  %1734 = vmatpush1.bf16.msra.mxu0 %v1709
  %1735 = vmatprep.subr.bf16.mxu0 0
  %1736 = vmatpush1.bf16.msra.mxu0 %v1708
  %1737 = vmatprep.subr.bf16.mxu0 0
  %1738 = vmatpush1.bf16.msra.mxu0 %v1707
  %1739 = vmatprep.subr.bf16.mxu0 0
  %1740 = vmatpush2.bf16.msra.mxu0 0
  %1741 = vmatprep.subr.bf16.mxu0 0
  %1742 = vmatpush2.bf16.msra.mxu0 0
  %1743 = vmatprep.subr.bf16.mxu0 0
  %1744 = vmatpush2.bf16.msra.mxu0 0
  %1745 = vmatprep.subr.bf16.mxu0 0
  %1746 = vmatpush2.bf16.msra.mxu0 0
  %1747 = vmatprep.subr.bf16.mxu0 0
  %1748 = vmatpush2.bf16.msra.mxu0 0
  %1749 = vmatprep.subr.bf16.mxu0 0
  %1750 = vmatpush2.bf16.msra.mxu0 0
  %1751 = vmatprep.subr.bf16.mxu0 0
  %1752 = vmatpush2.bf16.msra.mxu0 0
  %1753 = vmatprep.subr.bf16.mxu0 0
  %1754 = vmatpush2.bf16.msra.mxu0 0
  %1755 = vmatprep.mubr.bf16.mxu0 0
  %1756 = vmatmul.mubr.bf16.gmra.mxu0 %v1241
  %v1757 = vpop.f32.mrf.mxu0
  %v1758 = vadd.f32 %v1421, %v1757
  %v1759 = vpop.f32.mrf.mxu0
  %v1760 = vpop.f32.mrf.mxu0
  %v1761 = vadd.f32 %v1424, %v1760
  %v1762 = vpop.f32.mrf.mxu0
  %1763 = vmatprep.mubr.bf16.mxu0 0
  %1764 = vmatmul.mubr.bf16.gmra.mxu0 %v1242
  %v1765 = vpop.f32.mrf.mxu0
  %v1766 = vadd.f32 %v1429, %v1765
  %v1767 = vpop.f32.mrf.mxu0
  %v1768 = vpop.f32.mrf.mxu0
  %v1769 = vadd.f32 %v1432, %v1768
  %v1770 = vpop.f32.mrf.mxu0
  %1771 = vmatprep.mubr.bf16.mxu0 0
  %1772 = vmatmul.mubr.bf16.gmra.mxu0 %v1243
  %v1773 = vpop.f32.mrf.mxu0
  %v1774 = vadd.f32 %v1437, %v1773
  %v1775 = vpop.f32.mrf.mxu0
  %v1776 = vpop.f32.mrf.mxu0
  %v1777 = vadd.f32 %v1440, %v1776
  %v1778 = vpop.f32.mrf.mxu0
  %1779 = vmatprep.mubr.bf16.mxu0 0
  %1780 = vmatmul.mubr.bf16.gmra.mxu0 %v1244
  %v1781 = vpop.f32.mrf.mxu0
  %v1782 = vadd.f32 %v1445, %v1781
  %v1783 = vpop.f32.mrf.mxu0
  %v1784 = vpop.f32.mrf.mxu0
  %v1785 = vadd.f32 %v1448, %v1784
  %v1786 = vpop.f32.mrf.mxu0
  %1787 = vmatprep.mubr.bf16.mxu0 0
  %1788 = vmatmul.mubr.bf16.gmra.mxu0 %v1245
  %v1789 = vpop.f32.mrf.mxu0
  %v1790 = vadd.f32 %v1453, %v1789
  %v1791 = vpop.f32.mrf.mxu0
  %v1792 = vpop.f32.mrf.mxu0
  %v1793 = vadd.f32 %v1456, %v1792
  %v1794 = vpop.f32.mrf.mxu0
  %1795 = vmatprep.mubr.bf16.mxu0 0
  %1796 = vmatmul.mubr.bf16.gmra.mxu0 %v1246
  %v1797 = vpop.f32.mrf.mxu0
  %v1798 = vadd.f32 %v1461, %v1797
  %v1799 = vpop.f32.mrf.mxu0
  %v1800 = vpop.f32.mrf.mxu0
  %v1801 = vadd.f32 %v1464, %v1800
  %v1802 = vpop.f32.mrf.mxu0
  %1803 = vmatprep.mubr.bf16.mxu0 0
  %1804 = vmatmul.mubr.bf16.gmra.mxu0 %v1247
  %v1805 = vpop.f32.mrf.mxu0
  %v1806 = vadd.f32 %v1469, %v1805
  %v1807 = vpop.f32.mrf.mxu0
  %v1808 = vpop.f32.mrf.mxu0
  %v1809 = vadd.f32 %v1472, %v1808
  %v1810 = vpop.f32.mrf.mxu0
  %1811 = vmatprep.mubr.bf16.mxu0 0
  %1812 = vmatmul.mubr.bf16.gmra.mxu0 %v1248
  %v1813 = vpop.f32.mrf.mxu0
  %v1814 = vadd.f32 %v1477, %v1813
  %v1815 = vpop.f32.mrf.mxu0
  %v1816 = vpop.f32.mrf.mxu0
  %v1817 = vadd.f32 %v1480, %v1816
  %v1818 = vpop.f32.mrf.mxu0
  %1819 = vmatprep.mubr.bf16.mxu0 0
  %1820 = vmatmul.mubr.bf16.gmra.mxu0 %v1249
  %v1821 = vpop.f32.mrf.mxu0
  %v1822 = vadd.f32 %v1485, %v1821
  %v1823 = vpop.f32.mrf.mxu0
  %v1824 = vpop.f32.mrf.mxu0
  %v1825 = vadd.f32 %v1488, %v1824
  %v1826 = vpop.f32.mrf.mxu0
  %1827 = vmatprep.mubr.bf16.mxu0 0
  %1828 = vmatmul.mubr.bf16.gmra.mxu0 %v1250
  %v1829 = vpop.f32.mrf.mxu0
  %v1830 = vadd.f32 %v1493, %v1829
  %v1831 = vpop.f32.mrf.mxu0
  %v1832 = vpop.f32.mrf.mxu0
  %v1833 = vadd.f32 %v1496, %v1832
  %v1834 = vpop.f32.mrf.mxu0
  %1835 = vmatprep.mubr.bf16.mxu0 0
  %1836 = vmatmul.mubr.bf16.gmra.mxu0 %v1251
  %v1837 = vpop.f32.mrf.mxu0
  %v1838 = vadd.f32 %v1501, %v1837
  %v1839 = vpop.f32.mrf.mxu0
  %v1840 = vpop.f32.mrf.mxu0
  %v1841 = vadd.f32 %v1504, %v1840
  %v1842 = vpop.f32.mrf.mxu0
  %1843 = vmatprep.mubr.bf16.mxu0 0
  %1844 = vmatmul.mubr.bf16.gmra.mxu0 %v1252
  %v1845 = vpop.f32.mrf.mxu0
  %v1846 = vadd.f32 %v1509, %v1845
  %v1847 = vpop.f32.mrf.mxu0
  %v1848 = vpop.f32.mrf.mxu0
  %v1849 = vadd.f32 %v1512, %v1848
  %v1850 = vpop.f32.mrf.mxu0
  %1851 = vmatprep.mubr.bf16.mxu0 0
  %1852 = vmatmul.mubr.bf16.gmra.mxu0 %v1253
  %v1853 = vpop.f32.mrf.mxu0
  %v1854 = vadd.f32 %v1517, %v1853
  %v1855 = vpop.f32.mrf.mxu0
  %v1856 = vpop.f32.mrf.mxu0
  %v1857 = vadd.f32 %v1520, %v1856
  %v1858 = vpop.f32.mrf.mxu0
  %1859 = vmatprep.mubr.bf16.mxu0 0
  %1860 = vmatmul.mubr.bf16.gmra.mxu0 %v1254
  %v1861 = vpop.f32.mrf.mxu0
  %v1862 = vadd.f32 %v1525, %v1861
  %v1863 = vpop.f32.mrf.mxu0
  %v1864 = vpop.f32.mrf.mxu0
  %v1865 = vadd.f32 %v1528, %v1864
  %v1866 = vpop.f32.mrf.mxu0
  %1867 = vmatprep.mubr.bf16.mxu0 0
  %1868 = vmatmul.mubr.bf16.gmra.mxu0 %v1255
  %v1869 = vpop.f32.mrf.mxu0
  %v1870 = vadd.f32 %v1533, %v1869
  %v1871 = vpop.f32.mrf.mxu0
  %v1872 = vpop.f32.mrf.mxu0
  %v1873 = vadd.f32 %v1536, %v1872
  %v1874 = vpop.f32.mrf.mxu0
  %1875 = vmatprep.mubr.bf16.mxu0 0
  %1876 = vmatmul.mubr.bf16.gmra.mxu0 %v1256
  %v1877 = vpop.f32.mrf.mxu0
  %v1878 = vadd.f32 %v1541, %v1877
  %v1879 = vpop.f32.mrf.mxu0
  %v1880 = vpop.f32.mrf.mxu0
  %v1881 = vadd.f32 %v1544, %v1880
  %v1882 = vpop.f32.mrf.mxu0
  %1883 = vmatprep.mubr.bf16.mxu0 0
  %1884 = vmatmul.mubr.bf16.gmra.mxu0 %v1257
  %v1885 = vpop.f32.mrf.mxu0
  %v1886 = vadd.f32 %v1549, %v1885
  %v1887 = vpop.f32.mrf.mxu0
  %v1888 = vpop.f32.mrf.mxu0
  %v1889 = vadd.f32 %v1552, %v1888
  %v1890 = vpop.f32.mrf.mxu0
  %1891 = vmatprep.mubr.bf16.mxu0 0
  %1892 = vmatmul.mubr.bf16.gmra.mxu0 %v1258
  %v1893 = vpop.f32.mrf.mxu0
  %v1894 = vadd.f32 %v1557, %v1893
  %v1895 = vpop.f32.mrf.mxu0
  %v1896 = vpop.f32.mrf.mxu0
  %v1897 = vadd.f32 %v1560, %v1896
  %v1898 = vpop.f32.mrf.mxu0
  %1899 = vmatprep.mubr.bf16.mxu0 0
  %1900 = vmatmul.mubr.bf16.gmra.mxu0 %v1259
  %v1901 = vpop.f32.mrf.mxu0
  %v1902 = vadd.f32 %v1565, %v1901
  %v1903 = vpop.f32.mrf.mxu0
  %v1904 = vpop.f32.mrf.mxu0
  %v1905 = vadd.f32 %v1568, %v1904
  %v1906 = vpop.f32.mrf.mxu0
  %1907 = vmatprep.mubr.bf16.mxu0 0
  %1908 = vmatmul.mubr.bf16.gmra.mxu0 %v1260
  %v1909 = vpop.f32.mrf.mxu0
  %v1910 = vadd.f32 %v1573, %v1909
  %v1911 = vpop.f32.mrf.mxu0
  %v1912 = vpop.f32.mrf.mxu0
  %v1913 = vadd.f32 %v1576, %v1912
  %v1914 = vpop.f32.mrf.mxu0
  %1915 = vmatprep.mubr.bf16.mxu0 0
  %1916 = vmatmul.mubr.bf16.gmra.mxu0 %v1261
  %v1917 = vpop.f32.mrf.mxu0
  %v1918 = vadd.f32 %v1581, %v1917
  %v1919 = vpop.f32.mrf.mxu0
  %v1920 = vpop.f32.mrf.mxu0
  %v1921 = vadd.f32 %v1584, %v1920
  %v1922 = vpop.f32.mrf.mxu0
  %1923 = vmatprep.mubr.bf16.mxu0 0
  %1924 = vmatmul.mubr.bf16.gmra.mxu0 %v1262
  %v1925 = vpop.f32.mrf.mxu0
  %v1926 = vadd.f32 %v1589, %v1925
  %v1927 = vpop.f32.mrf.mxu0
  %v1928 = vpop.f32.mrf.mxu0
  %v1929 = vadd.f32 %v1592, %v1928
  %v1930 = vpop.f32.mrf.mxu0
  %1931 = vmatprep.mubr.bf16.mxu0 0
  %1932 = vmatmul.mubr.bf16.gmra.mxu0 %v1263
  %v1933 = vpop.f32.mrf.mxu0
  %v1934 = vadd.f32 %v1597, %v1933
  %v1935 = vpop.f32.mrf.mxu0
  %v1936 = vpop.f32.mrf.mxu0
  %v1937 = vadd.f32 %v1600, %v1936
  %v1938 = vpop.f32.mrf.mxu0
  %1939 = vmatprep.mubr.bf16.mxu0 0
  %1940 = vmatmul.mubr.bf16.gmra.mxu0 %v1264
  %v1941 = vpop.f32.mrf.mxu0
  %v1942 = vadd.f32 %v1605, %v1941
  %v1943 = vpop.f32.mrf.mxu0
  %v1944 = vpop.f32.mrf.mxu0
  %v1945 = vadd.f32 %v1608, %v1944
  %v1946 = vpop.f32.mrf.mxu0
  %1947 = vmatprep.mubr.bf16.mxu0 0
  %1948 = vmatmul.mubr.bf16.gmra.mxu0 %v1265
  %v1949 = vpop.f32.mrf.mxu0
  %v1950 = vadd.f32 %v1613, %v1949
  %v1951 = vpop.f32.mrf.mxu0
  %v1952 = vpop.f32.mrf.mxu0
  %v1953 = vadd.f32 %v1616, %v1952
  %v1954 = vpop.f32.mrf.mxu0
  %1955 = vmatprep.mubr.bf16.mxu0 0
  %1956 = vmatmul.mubr.bf16.gmra.mxu0 %v1266
  %v1957 = vpop.f32.mrf.mxu0
  %v1958 = vadd.f32 %v1621, %v1957
  %v1959 = vpop.f32.mrf.mxu0
  %v1960 = vpop.f32.mrf.mxu0
  %v1961 = vadd.f32 %v1624, %v1960
  %v1962 = vpop.f32.mrf.mxu0
  %1963 = vmatprep.mubr.bf16.mxu0 0
  %1964 = vmatmul.mubr.bf16.gmra.mxu0 %v1267
  %v1965 = vpop.f32.mrf.mxu0
  %v1966 = vadd.f32 %v1629, %v1965
  %v1967 = vpop.f32.mrf.mxu0
  %v1968 = vpop.f32.mrf.mxu0
  %v1969 = vadd.f32 %v1632, %v1968
  %v1970 = vpop.f32.mrf.mxu0
  %1971 = vmatprep.mubr.bf16.mxu0 0
  %1972 = vmatmul.mubr.bf16.gmra.mxu0 %v1268
  %v1973 = vpop.f32.mrf.mxu0
  %v1974 = vadd.f32 %v1637, %v1973
  %v1975 = vpop.f32.mrf.mxu0
  %v1976 = vpop.f32.mrf.mxu0
  %v1977 = vadd.f32 %v1640, %v1976
  %v1978 = vpop.f32.mrf.mxu0
  %1979 = vmatprep.mubr.bf16.mxu0 0
  %1980 = vmatmul.mubr.bf16.gmra.mxu0 %v1269
  %v1981 = vpop.f32.mrf.mxu0
  %v1982 = vadd.f32 %v1645, %v1981
  %v1983 = vpop.f32.mrf.mxu0
  %v1984 = vpop.f32.mrf.mxu0
  %v1985 = vadd.f32 %v1648, %v1984
  %v1986 = vpop.f32.mrf.mxu0
  %1987 = vmatprep.mubr.bf16.mxu0 0
  %1988 = vmatmul.mubr.bf16.gmra.mxu0 %v1270
  %v1989 = vpop.f32.mrf.mxu0
  %v1990 = vadd.f32 %v1653, %v1989
  %v1991 = vpop.f32.mrf.mxu0
  %v1992 = vpop.f32.mrf.mxu0
  %v1993 = vadd.f32 %v1656, %v1992
  %v1994 = vpop.f32.mrf.mxu0
  %1995 = vmatprep.mubr.bf16.mxu0 0
  %1996 = vmatmul.mubr.bf16.gmra.mxu0 %v1271
  %v1997 = vpop.f32.mrf.mxu0
  %v1998 = vadd.f32 %v1661, %v1997
  %v1999 = vpop.f32.mrf.mxu0
  %v2000 = vpop.f32.mrf.mxu0
  %v2001 = vadd.f32 %v1664, %v2000
  %v2002 = vpop.f32.mrf.mxu0
  %2003 = vmatprep.mubr.bf16.mxu0 0
  %2004 = vmatmul.mubr.bf16.gmra.mxu0 %v1272
  %v2005 = vpop.f32.mrf.mxu0
  %v2006 = vadd.f32 %v1669, %v2005
  %v2007 = vpop.f32.mrf.mxu0
  %v2008 = vpop.f32.mrf.mxu0
  %v2009 = vadd.f32 %v1672, %v2008
  %v2010 = vpop.f32.mrf.mxu0
  %2011 = vdwg.mxu0
  %v2012 = vrot.slane %v984, 1
  %v2013 = vrot.slane %v986, 1
  %v2014 = vrot.slane %v988, 1
  %v2015 = vrot.slane %v990, 1
  %v2016 = vrot.slane %v992, 1
  %v2017 = vrot.slane %v994, 1
  %v2018 = vrot.slane %v996, 1
  %v2019 = vrot.slane %v998, 1
  %v2020 = vrot.slane %v1000, 1
  %v2021 = vrot.slane %v1002, 1
  %v2022 = vrot.slane %v1004, 1
  %v2023 = vrot.slane %v1006, 1
  %v2024 = vrot.slane %v1008, 1
  %v2025 = vrot.slane %v1010, 1
  %v2026 = vrot.slane %v1012, 1
  %v2027 = vrot.slane %v1014, 1
  %v2028 = vrot.slane %v1016, 1
  %v2029 = vrot.slane %v1018, 1
  %v2030 = vrot.slane %v1020, 1
  %v2031 = vrot.slane %v1022, 1
  %v2032 = vrot.slane %v1024, 1
  %v2033 = vrot.slane %v1026, 1
  %v2034 = vrot.slane %v1028, 1
  %v2035 = vrot.slane %v1030, 1
  %v2036 = vrot.slane %v1032, 1
  %v2037 = vrot.slane %v1034, 1
  %v2038 = vrot.slane %v1036, 1
  %v2039 = vrot.slane %v1038, 1
  %v2040 = vrot.slane %v1040, 1
  %v2041 = vrot.slane %v1042, 1
  %v2042 = vrot.slane %v1044, 1
  %v2043 = vrot.slane %v1046, 1
  %v2044 = vrot.slane %v985, 1
  %v2045 = vrot.slane %v987, 1
  %v2046 = vrot.slane %v989, 1
  %v2047 = vrot.slane %v991, 1
  %v2048 = vrot.slane %v993, 1
  %v2049 = vrot.slane %v995, 1
  %v2050 = vrot.slane %v997, 1
  %v2051 = vrot.slane %v999, 1
  %v2052 = vrot.slane %v1001, 1
  %v2053 = vrot.slane %v1003, 1
  %v2054 = vrot.slane %v1005, 1
  %v2055 = vrot.slane %v1007, 1
  %v2056 = vrot.slane %v1009, 1
  %v2057 = vrot.slane %v1011, 1
  %v2058 = vrot.slane %v1013, 1
  %v2059 = vrot.slane %v1015, 1
  %v2060 = vrot.slane %v1017, 1
  %v2061 = vrot.slane %v1019, 1
  %v2062 = vrot.slane %v1021, 1
  %v2063 = vrot.slane %v1023, 1
  %v2064 = vrot.slane %v1025, 1
  %v2065 = vrot.slane %v1027, 1
  %v2066 = vrot.slane %v1029, 1
  %v2067 = vrot.slane %v1031, 1
  %v2068 = vrot.slane %v1033, 1
  %v2069 = vrot.slane %v1035, 1
  %v2070 = vrot.slane %v1037, 1
  %v2071 = vrot.slane %v1039, 1
  %v2072 = vrot.slane %v1041, 1
  %v2073 = vrot.slane %v1043, 1
  %v2074 = vrot.slane %v1045, 1
  %v2075 = vrot.slane %v1047, 1
  %vm2076 = vcmp.lt.s32.totalorder %v978, 7
  %v2077 = vsel %vm2076, %v2012, %v2044
  %v2078 = vsel %vm2076, %v2013, %v2045
  %v2079 = vsel %vm2076, %v2014, %v2046
  %v2080 = vsel %vm2076, %v2015, %v2047
  %v2081 = vsel %vm2076, %v2016, %v2048
  %v2082 = vsel %vm2076, %v2017, %v2049
  %v2083 = vsel %vm2076, %v2018, %v2050
  %v2084 = vsel %vm2076, %v2019, %v2051
  %v2085 = vsel %vm2076, %v2020, %v2052
  %v2086 = vsel %vm2076, %v2021, %v2053
  %v2087 = vsel %vm2076, %v2022, %v2054
  %v2088 = vsel %vm2076, %v2023, %v2055
  %v2089 = vsel %vm2076, %v2024, %v2056
  %v2090 = vsel %vm2076, %v2025, %v2057
  %v2091 = vsel %vm2076, %v2026, %v2058
  %v2092 = vsel %vm2076, %v2027, %v2059
  %v2093 = vsel %vm2076, %v2028, %v2060
  %v2094 = vsel %vm2076, %v2029, %v2061
  %v2095 = vsel %vm2076, %v2030, %v2062
  %v2096 = vsel %vm2076, %v2031, %v2063
  %v2097 = vsel %vm2076, %v2032, %v2064
  %v2098 = vsel %vm2076, %v2033, %v2065
  %v2099 = vsel %vm2076, %v2034, %v2066
  %v2100 = vsel %vm2076, %v2035, %v2067
  %v2101 = vsel %vm2076, %v2036, %v2068
  %v2102 = vsel %vm2076, %v2037, %v2069
  %v2103 = vsel %vm2076, %v2038, %v2070
  %v2104 = vsel %vm2076, %v2039, %v2071
  %v2105 = vsel %vm2076, %v2040, %v2072
  %v2106 = vsel %vm2076, %v2041, %v2073
  %v2107 = vsel %vm2076, %v2042, %v2074
  %v2108 = vsel %vm2076, %v2043, %v2075
  %v2109 = vsel %vm2076, %v2044, %v2012
  %v2110 = vsel %vm2076, %v2045, %v2013
  %v2111 = vsel %vm2076, %v2046, %v2014
  %v2112 = vsel %vm2076, %v2047, %v2015
  %v2113 = vsel %vm2076, %v2048, %v2016
  %v2114 = vsel %vm2076, %v2049, %v2017
  %v2115 = vsel %vm2076, %v2050, %v2018
  %v2116 = vsel %vm2076, %v2051, %v2019
  %v2117 = vsel %vm2076, %v2052, %v2020
  %v2118 = vsel %vm2076, %v2053, %v2021
  %v2119 = vsel %vm2076, %v2054, %v2022
  %v2120 = vsel %vm2076, %v2055, %v2023
  %v2121 = vsel %vm2076, %v2056, %v2024
  %v2122 = vsel %vm2076, %v2057, %v2025
  %v2123 = vsel %vm2076, %v2058, %v2026
  %v2124 = vsel %vm2076, %v2059, %v2027
  %v2125 = vsel %vm2076, %v2060, %v2028
  %v2126 = vsel %vm2076, %v2061, %v2029
  %v2127 = vsel %vm2076, %v2062, %v2030
  %v2128 = vsel %vm2076, %v2063, %v2031
  %v2129 = vsel %vm2076, %v2064, %v2032
  %v2130 = vsel %vm2076, %v2065, %v2033
  %v2131 = vsel %vm2076, %v2066, %v2034
  %v2132 = vsel %vm2076, %v2067, %v2035
  %v2133 = vsel %vm2076, %v2068, %v2036
  %v2134 = vsel %vm2076, %v2069, %v2037
  %v2135 = vsel %vm2076, %v2070, %v2038
  %v2136 = vsel %vm2076, %v2071, %v2039
  %v2137 = vsel %vm2076, %v2072, %v2040
  %v2138 = vsel %vm2076, %v2073, %v2041
  %v2139 = vsel %vm2076, %v2074, %v2042
  %v2140 = vsel %vm2076, %v2075, %v2043
  %v2141 = vsel %vm982, %v2077, 0.0
  %v2142 = vsel %vm983, %v2109, 0.0
  %v2143 = vsel %vm982, %v2078, 0.0
  %v2144 = vsel %vm983, %v2110, 0.0
  %v2145 = vsel %vm982, %v2079, 0.0
  %v2146 = vsel %vm983, %v2111, 0.0
  %v2147 = vsel %vm982, %v2080, 0.0
  %v2148 = vsel %vm983, %v2112, 0.0
  %v2149 = vsel %vm982, %v2081, 0.0
  %v2150 = vsel %vm983, %v2113, 0.0
  %v2151 = vsel %vm982, %v2082, 0.0
  %v2152 = vsel %vm983, %v2114, 0.0
  %v2153 = vsel %vm982, %v2083, 0.0
  %v2154 = vsel %vm983, %v2115, 0.0
  %v2155 = vsel %vm982, %v2084, 0.0
  %v2156 = vsel %vm983, %v2116, 0.0
  %v2157 = vsel %vm982, %v2085, 0.0
  %v2158 = vsel %vm983, %v2117, 0.0
  %v2159 = vsel %vm982, %v2086, 0.0
  %v2160 = vsel %vm983, %v2118, 0.0
  %v2161 = vsel %vm982, %v2087, 0.0
  %v2162 = vsel %vm983, %v2119, 0.0
  %v2163 = vsel %vm982, %v2088, 0.0
  %v2164 = vsel %vm983, %v2120, 0.0
  %v2165 = vsel %vm982, %v2089, 0.0
  %v2166 = vsel %vm983, %v2121, 0.0
  %v2167 = vsel %vm982, %v2090, 0.0
  %v2168 = vsel %vm983, %v2122, 0.0
  %v2169 = vsel %vm982, %v2091, 0.0
  %v2170 = vsel %vm983, %v2123, 0.0
  %v2171 = vsel %vm982, %v2092, 0.0
  %v2172 = vsel %vm983, %v2124, 0.0
  %v2173 = vsel %vm982, %v2093, 0.0
  %v2174 = vsel %vm983, %v2125, 0.0
  %v2175 = vsel %vm982, %v2094, 0.0
  %v2176 = vsel %vm983, %v2126, 0.0
  %v2177 = vsel %vm982, %v2095, 0.0
  %v2178 = vsel %vm983, %v2127, 0.0
  %v2179 = vsel %vm982, %v2096, 0.0
  %v2180 = vsel %vm983, %v2128, 0.0
  %v2181 = vsel %vm982, %v2097, 0.0
  %v2182 = vsel %vm983, %v2129, 0.0
  %v2183 = vsel %vm982, %v2098, 0.0
  %v2184 = vsel %vm983, %v2130, 0.0
  %v2185 = vsel %vm982, %v2099, 0.0
  %v2186 = vsel %vm983, %v2131, 0.0
  %v2187 = vsel %vm982, %v2100, 0.0
  %v2188 = vsel %vm983, %v2132, 0.0
  %v2189 = vsel %vm982, %v2101, 0.0
  %v2190 = vsel %vm983, %v2133, 0.0
  %v2191 = vsel %vm982, %v2102, 0.0
  %v2192 = vsel %vm983, %v2134, 0.0
  %v2193 = vsel %vm982, %v2103, 0.0
  %v2194 = vsel %vm983, %v2135, 0.0
  %v2195 = vsel %vm982, %v2104, 0.0
  %v2196 = vsel %vm983, %v2136, 0.0
  %v2197 = vsel %vm982, %v2105, 0.0
  %v2198 = vsel %vm983, %v2137, 0.0
  %v2199 = vsel %vm982, %v2106, 0.0
  %v2200 = vsel %vm983, %v2138, 0.0
  %v2201 = vsel %vm982, %v2107, 0.0
  %v2202 = vsel %vm983, %v2139, 0.0
  %v2203 = vsel %vm982, %v2108, 0.0
  %v2204 = vsel %vm983, %v2140, 0.0
  %v2205 = vpack.c.bf16 %v2142, %v2141
  %v2206 = vpack.c.bf16 %v2144, %v2143
  %v2207 = vpack.c.bf16 %v2146, %v2145
  %v2208 = vpack.c.bf16 %v2148, %v2147
  %v2209 = vpack.c.bf16 %v2150, %v2149
  %v2210 = vpack.c.bf16 %v2152, %v2151
  %v2211 = vpack.c.bf16 %v2154, %v2153
  %v2212 = vpack.c.bf16 %v2156, %v2155
  %v2213 = vpack.c.bf16 %v2158, %v2157
  %v2214 = vpack.c.bf16 %v2160, %v2159
  %v2215 = vpack.c.bf16 %v2162, %v2161
  %v2216 = vpack.c.bf16 %v2164, %v2163
  %v2217 = vpack.c.bf16 %v2166, %v2165
  %v2218 = vpack.c.bf16 %v2168, %v2167
  %v2219 = vpack.c.bf16 %v2170, %v2169
  %v2220 = vpack.c.bf16 %v2172, %v2171
  %v2221 = vpack.c.bf16 %v2174, %v2173
  %v2222 = vpack.c.bf16 %v2176, %v2175
  %v2223 = vpack.c.bf16 %v2178, %v2177
  %v2224 = vpack.c.bf16 %v2180, %v2179
  %v2225 = vpack.c.bf16 %v2182, %v2181
  %v2226 = vpack.c.bf16 %v2184, %v2183
  %v2227 = vpack.c.bf16 %v2186, %v2185
  %v2228 = vpack.c.bf16 %v2188, %v2187
  %v2229 = vpack.c.bf16 %v2190, %v2189
  %v2230 = vpack.c.bf16 %v2192, %v2191
  %v2231 = vpack.c.bf16 %v2194, %v2193
  %v2232 = vpack.c.bf16 %v2196, %v2195
  %v2233 = vpack.c.bf16 %v2198, %v2197
  %v2234 = vpack.c.bf16 %v2200, %v2199
  %v2235 = vpack.c.bf16 %v2202, %v2201
  %v2236 = vpack.c.bf16 %v2204, %v2203
  %s2237 = scalar_lea.vmem %s4, 128
  %v2238 = vld [vmem:[%s2237] sm:$0xf]
  %v2239 = vld [vmem:[%s2237 + $0x4] sm:$0xf]
  %v2240 = vld [vmem:[%s2237 + $0x8] sm:$0xf]
  %v2241 = vld [vmem:[%s2237 + $0xc] sm:$0xf]
  %v2242 = vld [vmem:[%s2237 + $0x10] sm:$0xf]
  %v2243 = vld [vmem:[%s2237 + $0x14] sm:$0xf]
  %v2244 = vld [vmem:[%s2237 + $0x18] sm:$0xf]
  %v2245 = vld [vmem:[%s2237 + $0x1c] sm:$0xf]
  %v2246 = vld [vmem:[%s2237 + $0x20] sm:$0xf]
  %v2247 = vld [vmem:[%s2237 + $0x24] sm:$0xf]
  %v2248 = vld [vmem:[%s2237 + $0x28] sm:$0xf]
  %v2249 = vld [vmem:[%s2237 + $0x2c] sm:$0xf]
  %v2250 = vld [vmem:[%s2237 + $0x30] sm:$0xf]
  %v2251 = vld [vmem:[%s2237 + $0x34] sm:$0xf]
  %v2252 = vld [vmem:[%s2237 + $0x38] sm:$0xf]
  %v2253 = vld [vmem:[%s2237 + $0x3c] sm:$0xf]
  %v2270 = vunpack.c.l.b16 %v2238
  %v2271 = vunpack.c.l.b16 %v2239
  %v2272 = vunpack.c.l.b16 %v2240
  %v2273 = vunpack.c.l.b16 %v2241
  %v2274 = vunpack.c.l.b16 %v2242
  %v2275 = vunpack.c.l.b16 %v2243
  %v2276 = vunpack.c.l.b16 %v2244
  %v2277 = vunpack.c.l.b16 %v2245
  %v2278 = vunpack.c.l.b16 %v2246
  %v2279 = vunpack.c.l.b16 %v2247
  %v2280 = vunpack.c.l.b16 %v2248
  %v2281 = vunpack.c.l.b16 %v2249
  %v2282 = vunpack.c.l.b16 %v2250
  %v2283 = vunpack.c.l.b16 %v2251
  %v2284 = vunpack.c.l.b16 %v2252
  %v2285 = vunpack.c.l.b16 %v2253
  %v2286 = vpack.c.b16 %v2271, %v2270
  %v2287 = vpack.c.b16 %v2273, %v2272
  %v2288 = vpack.c.b16 %v2275, %v2274
  %v2289 = vpack.c.b16 %v2277, %v2276
  %v2290 = vpack.c.b16 %v2279, %v2278
  %v2291 = vpack.c.b16 %v2281, %v2280
  %v2292 = vpack.c.b16 %v2283, %v2282
  %v2293 = vpack.c.b16 %v2285, %v2284
  %2302 = vmatprep.subr.bf16.mxu0 0
  %2303 = vmatpush1.bf16.msra.mxu0 %v2293
  %2304 = vmatprep.subr.bf16.mxu0 0
  %2305 = vmatpush1.bf16.msra.mxu0 %v2292
  %2306 = vmatprep.subr.bf16.mxu0 0
  %2307 = vmatpush1.bf16.msra.mxu0 %v2291
  %2308 = vmatprep.subr.bf16.mxu0 0
  %2309 = vmatpush1.bf16.msra.mxu0 %v2290
  %2310 = vmatprep.subr.bf16.mxu0 0
  %2311 = vmatpush1.bf16.msra.mxu0 %v2289
  %2312 = vmatprep.subr.bf16.mxu0 0
  %2313 = vmatpush1.bf16.msra.mxu0 %v2288
  %2314 = vmatprep.subr.bf16.mxu0 0
  %2315 = vmatpush1.bf16.msra.mxu0 %v2287
  %2316 = vmatprep.subr.bf16.mxu0 0
  %2317 = vmatpush1.bf16.msra.mxu0 %v2286
  %2318 = vmatprep.subr.bf16.mxu0 0
  %2319 = vmatpush2.bf16.msra.mxu0 0
  %2320 = vmatprep.subr.bf16.mxu0 0
  %2321 = vmatpush2.bf16.msra.mxu0 0
  %2322 = vmatprep.subr.bf16.mxu0 0
  %2323 = vmatpush2.bf16.msra.mxu0 0
  %2324 = vmatprep.subr.bf16.mxu0 0
  %2325 = vmatpush2.bf16.msra.mxu0 0
  %2326 = vmatprep.subr.bf16.mxu0 0
  %2327 = vmatpush2.bf16.msra.mxu0 0
  %2328 = vmatprep.subr.bf16.mxu0 0
  %2329 = vmatpush2.bf16.msra.mxu0 0
  %2330 = vmatprep.subr.bf16.mxu0 0
  %2331 = vmatpush2.bf16.msra.mxu0 0
  %2332 = vmatprep.subr.bf16.mxu0 0
  %2333 = vmatpush2.bf16.msra.mxu0 0
  %2334 = vmatprep.mubr.bf16.mxu0 0
  %2335 = vmatmul.mubr.bf16.gmra.mxu0 %v2205
  %v2336 = vpop.f32.mrf.mxu0
  %v2337 = vadd.f32 0.0, %v2336
  %v2338 = vpop.f32.mrf.mxu0
  %v2339 = vpop.f32.mrf.mxu0
  %v2340 = vadd.f32 0.0, %v2339
  %v2341 = vpop.f32.mrf.mxu0
  %2342 = vmatprep.mubr.bf16.mxu0 0
  %2343 = vmatmul.mubr.bf16.gmra.mxu0 %v2206
  %v2344 = vpop.f32.mrf.mxu0
  %v2345 = vadd.f32 0.0, %v2344
  %v2346 = vpop.f32.mrf.mxu0
  %v2347 = vpop.f32.mrf.mxu0
  %v2348 = vadd.f32 0.0, %v2347
  %v2349 = vpop.f32.mrf.mxu0
  %2350 = vmatprep.mubr.bf16.mxu0 0
  %2351 = vmatmul.mubr.bf16.gmra.mxu0 %v2207
  %v2352 = vpop.f32.mrf.mxu0
  %v2353 = vadd.f32 0.0, %v2352
  %v2354 = vpop.f32.mrf.mxu0
  %v2355 = vpop.f32.mrf.mxu0
  %v2356 = vadd.f32 0.0, %v2355
  %v2357 = vpop.f32.mrf.mxu0
  %2358 = vmatprep.mubr.bf16.mxu0 0
  %2359 = vmatmul.mubr.bf16.gmra.mxu0 %v2208
  %v2360 = vpop.f32.mrf.mxu0
  %v2361 = vadd.f32 0.0, %v2360
  %v2362 = vpop.f32.mrf.mxu0
  %v2363 = vpop.f32.mrf.mxu0
  %v2364 = vadd.f32 0.0, %v2363
  %v2365 = vpop.f32.mrf.mxu0
  %2366 = vmatprep.mubr.bf16.mxu0 0
  %2367 = vmatmul.mubr.bf16.gmra.mxu0 %v2209
  %v2368 = vpop.f32.mrf.mxu0
  %v2369 = vadd.f32 0.0, %v2368
  %v2370 = vpop.f32.mrf.mxu0
  %v2371 = vpop.f32.mrf.mxu0
  %v2372 = vadd.f32 0.0, %v2371
  %v2373 = vpop.f32.mrf.mxu0
  %2374 = vmatprep.mubr.bf16.mxu0 0
  %2375 = vmatmul.mubr.bf16.gmra.mxu0 %v2210
  %v2376 = vpop.f32.mrf.mxu0
  %v2377 = vadd.f32 0.0, %v2376
  %v2378 = vpop.f32.mrf.mxu0
  %v2379 = vpop.f32.mrf.mxu0
  %v2380 = vadd.f32 0.0, %v2379
  %v2381 = vpop.f32.mrf.mxu0
  %2382 = vmatprep.mubr.bf16.mxu0 0
  %2383 = vmatmul.mubr.bf16.gmra.mxu0 %v2211
  %v2384 = vpop.f32.mrf.mxu0
  %v2385 = vadd.f32 0.0, %v2384
  %v2386 = vpop.f32.mrf.mxu0
  %v2387 = vpop.f32.mrf.mxu0
  %v2388 = vadd.f32 0.0, %v2387
  %v2389 = vpop.f32.mrf.mxu0
  %2390 = vmatprep.mubr.bf16.mxu0 0
  %2391 = vmatmul.mubr.bf16.gmra.mxu0 %v2212
  %v2392 = vpop.f32.mrf.mxu0
  %v2393 = vadd.f32 0.0, %v2392
  %v2394 = vpop.f32.mrf.mxu0
  %v2395 = vpop.f32.mrf.mxu0
  %v2396 = vadd.f32 0.0, %v2395
  %v2397 = vpop.f32.mrf.mxu0
  %2398 = vmatprep.mubr.bf16.mxu0 0
  %2399 = vmatmul.mubr.bf16.gmra.mxu0 %v2213
  %v2400 = vpop.f32.mrf.mxu0
  %v2401 = vadd.f32 0.0, %v2400
  %v2402 = vpop.f32.mrf.mxu0
  %v2403 = vpop.f32.mrf.mxu0
  %v2404 = vadd.f32 0.0, %v2403
  %v2405 = vpop.f32.mrf.mxu0
  %2406 = vmatprep.mubr.bf16.mxu0 0
  %2407 = vmatmul.mubr.bf16.gmra.mxu0 %v2214
  %v2408 = vpop.f32.mrf.mxu0
  %v2409 = vadd.f32 0.0, %v2408
  %v2410 = vpop.f32.mrf.mxu0
  %v2411 = vpop.f32.mrf.mxu0
  %v2412 = vadd.f32 0.0, %v2411
  %v2413 = vpop.f32.mrf.mxu0
  %2414 = vmatprep.mubr.bf16.mxu0 0
  %2415 = vmatmul.mubr.bf16.gmra.mxu0 %v2215
  %v2416 = vpop.f32.mrf.mxu0
  %v2417 = vadd.f32 0.0, %v2416
  %v2418 = vpop.f32.mrf.mxu0
  %v2419 = vpop.f32.mrf.mxu0
  %v2420 = vadd.f32 0.0, %v2419
  %v2421 = vpop.f32.mrf.mxu0
  %2422 = vmatprep.mubr.bf16.mxu0 0
  %2423 = vmatmul.mubr.bf16.gmra.mxu0 %v2216
  %v2424 = vpop.f32.mrf.mxu0
  %v2425 = vadd.f32 0.0, %v2424
  %v2426 = vpop.f32.mrf.mxu0
  %v2427 = vpop.f32.mrf.mxu0
  %v2428 = vadd.f32 0.0, %v2427
  %v2429 = vpop.f32.mrf.mxu0
  %2430 = vmatprep.mubr.bf16.mxu0 0
  %2431 = vmatmul.mubr.bf16.gmra.mxu0 %v2217
  %v2432 = vpop.f32.mrf.mxu0
  %v2433 = vadd.f32 0.0, %v2432
  %v2434 = vpop.f32.mrf.mxu0
  %v2435 = vpop.f32.mrf.mxu0
  %v2436 = vadd.f32 0.0, %v2435
  %v2437 = vpop.f32.mrf.mxu0
  %2438 = vmatprep.mubr.bf16.mxu0 0
  %2439 = vmatmul.mubr.bf16.gmra.mxu0 %v2218
  %v2440 = vpop.f32.mrf.mxu0
  %v2441 = vadd.f32 0.0, %v2440
  %v2442 = vpop.f32.mrf.mxu0
  %v2443 = vpop.f32.mrf.mxu0
  %v2444 = vadd.f32 0.0, %v2443
  %v2445 = vpop.f32.mrf.mxu0
  %2446 = vmatprep.mubr.bf16.mxu0 0
  %2447 = vmatmul.mubr.bf16.gmra.mxu0 %v2219
  %v2448 = vpop.f32.mrf.mxu0
  %v2449 = vadd.f32 0.0, %v2448
  %v2450 = vpop.f32.mrf.mxu0
  %v2451 = vpop.f32.mrf.mxu0
  %v2452 = vadd.f32 0.0, %v2451
  %v2453 = vpop.f32.mrf.mxu0
  %2454 = vmatprep.mubr.bf16.mxu0 0
  %2455 = vmatmul.mubr.bf16.gmra.mxu0 %v2220
  %v2456 = vpop.f32.mrf.mxu0
  %v2457 = vadd.f32 0.0, %v2456
  %v2458 = vpop.f32.mrf.mxu0
  %v2459 = vpop.f32.mrf.mxu0
  %v2460 = vadd.f32 0.0, %v2459
  %v2461 = vpop.f32.mrf.mxu0
  %2462 = vmatprep.mubr.bf16.mxu0 0
  %2463 = vmatmul.mubr.bf16.gmra.mxu0 %v2221
  %v2464 = vpop.f32.mrf.mxu0
  %v2465 = vadd.f32 0.0, %v2464
  %v2466 = vpop.f32.mrf.mxu0
  %v2467 = vpop.f32.mrf.mxu0
  %v2468 = vadd.f32 0.0, %v2467
  %v2469 = vpop.f32.mrf.mxu0
  %2470 = vmatprep.mubr.bf16.mxu0 0
  %2471 = vmatmul.mubr.bf16.gmra.mxu0 %v2222
  %v2472 = vpop.f32.mrf.mxu0
  %v2473 = vadd.f32 0.0, %v2472
  %v2474 = vpop.f32.mrf.mxu0
  %v2475 = vpop.f32.mrf.mxu0
  %v2476 = vadd.f32 0.0, %v2475
  %v2477 = vpop.f32.mrf.mxu0
  %2478 = vmatprep.mubr.bf16.mxu0 0
  %2479 = vmatmul.mubr.bf16.gmra.mxu0 %v2223
  %v2480 = vpop.f32.mrf.mxu0
  %v2481 = vadd.f32 0.0, %v2480
  %v2482 = vpop.f32.mrf.mxu0
  %v2483 = vpop.f32.mrf.mxu0
  %v2484 = vadd.f32 0.0, %v2483
  %v2485 = vpop.f32.mrf.mxu0
  %2486 = vmatprep.mubr.bf16.mxu0 0
  %2487 = vmatmul.mubr.bf16.gmra.mxu0 %v2224
  %v2488 = vpop.f32.mrf.mxu0
  %v2489 = vadd.f32 0.0, %v2488
  %v2490 = vpop.f32.mrf.mxu0
  %v2491 = vpop.f32.mrf.mxu0
  %v2492 = vadd.f32 0.0, %v2491
  %v2493 = vpop.f32.mrf.mxu0
  %2494 = vmatprep.mubr.bf16.mxu0 0
  %2495 = vmatmul.mubr.bf16.gmra.mxu0 %v2225
  %v2496 = vpop.f32.mrf.mxu0
  %v2497 = vadd.f32 0.0, %v2496
  %v2498 = vpop.f32.mrf.mxu0
  %v2499 = vpop.f32.mrf.mxu0
  %v2500 = vadd.f32 0.0, %v2499
  %v2501 = vpop.f32.mrf.mxu0
  %2502 = vmatprep.mubr.bf16.mxu0 0
  %2503 = vmatmul.mubr.bf16.gmra.mxu0 %v2226
  %v2504 = vpop.f32.mrf.mxu0
  %v2505 = vadd.f32 0.0, %v2504
  %v2506 = vpop.f32.mrf.mxu0
  %v2507 = vpop.f32.mrf.mxu0
  %v2508 = vadd.f32 0.0, %v2507
  %v2509 = vpop.f32.mrf.mxu0
  %2510 = vmatprep.mubr.bf16.mxu0 0
  %2511 = vmatmul.mubr.bf16.gmra.mxu0 %v2227
  %v2512 = vpop.f32.mrf.mxu0
  %v2513 = vadd.f32 0.0, %v2512
  %v2514 = vpop.f32.mrf.mxu0
  %v2515 = vpop.f32.mrf.mxu0
  %v2516 = vadd.f32 0.0, %v2515
  %v2517 = vpop.f32.mrf.mxu0
  %2518 = vmatprep.mubr.bf16.mxu0 0
  %2519 = vmatmul.mubr.bf16.gmra.mxu0 %v2228
  %v2520 = vpop.f32.mrf.mxu0
  %v2521 = vadd.f32 0.0, %v2520
  %v2522 = vpop.f32.mrf.mxu0
  %v2523 = vpop.f32.mrf.mxu0
  %v2524 = vadd.f32 0.0, %v2523
  %v2525 = vpop.f32.mrf.mxu0
  %2526 = vmatprep.mubr.bf16.mxu0 0
  %2527 = vmatmul.mubr.bf16.gmra.mxu0 %v2229
  %v2528 = vpop.f32.mrf.mxu0
  %v2529 = vadd.f32 0.0, %v2528
  %v2530 = vpop.f32.mrf.mxu0
  %v2531 = vpop.f32.mrf.mxu0
  %v2532 = vadd.f32 0.0, %v2531
  %v2533 = vpop.f32.mrf.mxu0
  %2534 = vmatprep.mubr.bf16.mxu0 0
  %2535 = vmatmul.mubr.bf16.gmra.mxu0 %v2230
  %v2536 = vpop.f32.mrf.mxu0
  %v2537 = vadd.f32 0.0, %v2536
  %v2538 = vpop.f32.mrf.mxu0
  %v2539 = vpop.f32.mrf.mxu0
  %v2540 = vadd.f32 0.0, %v2539
  %v2541 = vpop.f32.mrf.mxu0
  %2542 = vmatprep.mubr.bf16.mxu0 0
  %2543 = vmatmul.mubr.bf16.gmra.mxu0 %v2231
  %v2544 = vpop.f32.mrf.mxu0
  %v2545 = vadd.f32 0.0, %v2544
  %v2546 = vpop.f32.mrf.mxu0
  %v2547 = vpop.f32.mrf.mxu0
  %v2548 = vadd.f32 0.0, %v2547
  %v2549 = vpop.f32.mrf.mxu0
  %2550 = vmatprep.mubr.bf16.mxu0 0
  %2551 = vmatmul.mubr.bf16.gmra.mxu0 %v2232
  %v2552 = vpop.f32.mrf.mxu0
  %v2553 = vadd.f32 0.0, %v2552
  %v2554 = vpop.f32.mrf.mxu0
  %v2555 = vpop.f32.mrf.mxu0
  %v2556 = vadd.f32 0.0, %v2555
  %v2557 = vpop.f32.mrf.mxu0
  %2558 = vmatprep.mubr.bf16.mxu0 0
  %2559 = vmatmul.mubr.bf16.gmra.mxu0 %v2233
  %v2560 = vpop.f32.mrf.mxu0
  %v2561 = vadd.f32 0.0, %v2560
  %v2562 = vpop.f32.mrf.mxu0
  %v2563 = vpop.f32.mrf.mxu0
  %v2564 = vadd.f32 0.0, %v2563
  %v2565 = vpop.f32.mrf.mxu0
  %2566 = vmatprep.mubr.bf16.mxu0 0
  %2567 = vmatmul.mubr.bf16.gmra.mxu0 %v2234
  %v2568 = vpop.f32.mrf.mxu0
  %v2569 = vadd.f32 0.0, %v2568
  %v2570 = vpop.f32.mrf.mxu0
  %v2571 = vpop.f32.mrf.mxu0
  %v2572 = vadd.f32 0.0, %v2571
  %v2573 = vpop.f32.mrf.mxu0
  %2574 = vmatprep.mubr.bf16.mxu0 0
  %2575 = vmatmul.mubr.bf16.gmra.mxu0 %v2235
  %v2576 = vpop.f32.mrf.mxu0
  %v2577 = vadd.f32 0.0, %v2576
  %v2578 = vpop.f32.mrf.mxu0
  %v2579 = vpop.f32.mrf.mxu0
  %v2580 = vadd.f32 0.0, %v2579
  %v2581 = vpop.f32.mrf.mxu0
  %2582 = vmatprep.mubr.bf16.mxu0 0
  %2583 = vmatmul.mubr.bf16.gmra.mxu0 %v2236
  %v2584 = vpop.f32.mrf.mxu0
  %v2585 = vadd.f32 0.0, %v2584
  %v2586 = vpop.f32.mrf.mxu0
  %v2587 = vpop.f32.mrf.mxu0
  %v2588 = vadd.f32 0.0, %v2587
  %v2589 = vpop.f32.mrf.mxu0
  %2590 = vdwg.mxu0
  %v2591 = vadd.f32 %v1758, %v2337
  %v2592 = vadd.f32 %v1761, %v2340
  %v2593 = vadd.f32 %v1766, %v2345
  %v2594 = vadd.f32 %v1769, %v2348
  %v2595 = vadd.f32 %v1774, %v2353
  %v2596 = vadd.f32 %v1777, %v2356
  %v2597 = vadd.f32 %v1782, %v2361
  %v2598 = vadd.f32 %v1785, %v2364
  %v2599 = vadd.f32 %v1790, %v2369
  %v2600 = vadd.f32 %v1793, %v2372
  %v2601 = vadd.f32 %v1798, %v2377
  %v2602 = vadd.f32 %v1801, %v2380
  %v2603 = vadd.f32 %v1806, %v2385
  %v2604 = vadd.f32 %v1809, %v2388
  %v2605 = vadd.f32 %v1814, %v2393
  %v2606 = vadd.f32 %v1817, %v2396
  %v2607 = vadd.f32 %v1822, %v2401
  %v2608 = vadd.f32 %v1825, %v2404
  %v2609 = vadd.f32 %v1830, %v2409
  %v2610 = vadd.f32 %v1833, %v2412
  %v2611 = vadd.f32 %v1838, %v2417
  %v2612 = vadd.f32 %v1841, %v2420
  %v2613 = vadd.f32 %v1846, %v2425
  %v2614 = vadd.f32 %v1849, %v2428
  %v2615 = vadd.f32 %v1854, %v2433
  %v2616 = vadd.f32 %v1857, %v2436
  %v2617 = vadd.f32 %v1862, %v2441
  %v2618 = vadd.f32 %v1865, %v2444
  %v2619 = vadd.f32 %v1870, %v2449
  %v2620 = vadd.f32 %v1873, %v2452
  %v2621 = vadd.f32 %v1878, %v2457
  %v2622 = vadd.f32 %v1881, %v2460
  %v2623 = vadd.f32 %v1886, %v2465
  %v2624 = vadd.f32 %v1889, %v2468
  %v2625 = vadd.f32 %v1894, %v2473
  %v2626 = vadd.f32 %v1897, %v2476
  %v2627 = vadd.f32 %v1902, %v2481
  %v2628 = vadd.f32 %v1905, %v2484
  %v2629 = vadd.f32 %v1910, %v2489
  %v2630 = vadd.f32 %v1913, %v2492
  %v2631 = vadd.f32 %v1918, %v2497
  %v2632 = vadd.f32 %v1921, %v2500
  %v2633 = vadd.f32 %v1926, %v2505
  %v2634 = vadd.f32 %v1929, %v2508
  %v2635 = vadd.f32 %v1934, %v2513
  %v2636 = vadd.f32 %v1937, %v2516
  %v2637 = vadd.f32 %v1942, %v2521
  %v2638 = vadd.f32 %v1945, %v2524
  %v2639 = vadd.f32 %v1950, %v2529
  %v2640 = vadd.f32 %v1953, %v2532
  %v2641 = vadd.f32 %v1958, %v2537
  %v2642 = vadd.f32 %v1961, %v2540
  %v2643 = vadd.f32 %v1966, %v2545
  %v2644 = vadd.f32 %v1969, %v2548
  %v2645 = vadd.f32 %v1974, %v2553
  %v2646 = vadd.f32 %v1977, %v2556
  %v2647 = vadd.f32 %v1982, %v2561
  %v2648 = vadd.f32 %v1985, %v2564
  %v2649 = vadd.f32 %v1990, %v2569
  %v2650 = vadd.f32 %v1993, %v2572
  %v2651 = vadd.f32 %v1998, %v2577
  %v2652 = vadd.f32 %v2001, %v2580
  %v2653 = vadd.f32 %v2006, %v2585
  %v2654 = vadd.f32 %v2009, %v2588
  %v2655 = vld [vmem:[%s912] sm:$0xff]
  %v2656 = vld [vmem:[%s912 + $0x8] sm:$0xff]
  %v2657 = vld [vmem:[%s912 + $0x10] sm:$0xff]
  %v2658 = vld [vmem:[%s912 + $0x18] sm:$0xff]
  %v2659 = vld [vmem:[%s912 + $0x20] sm:$0xff]
  %v2660 = vld [vmem:[%s912 + $0x28] sm:$0xff]
  %v2661 = vld [vmem:[%s912 + $0x30] sm:$0xff]
  %v2662 = vld [vmem:[%s912 + $0x38] sm:$0xff]
  %v2663 = vld [vmem:[%s912 + $0x40] sm:$0xff]
  %v2664 = vld [vmem:[%s912 + $0x48] sm:$0xff]
  %v2665 = vld [vmem:[%s912 + $0x50] sm:$0xff]
  %v2666 = vld [vmem:[%s912 + $0x58] sm:$0xff]
  %v2667 = vld [vmem:[%s912 + $0x60] sm:$0xff]
  %v2668 = vld [vmem:[%s912 + $0x68] sm:$0xff]
  %v2669 = vld [vmem:[%s912 + $0x70] sm:$0xff]
  %v2670 = vld [vmem:[%s912 + $0x78] sm:$0xff]
  %v2671 = vld [vmem:[%s912 + $0x80] sm:$0xff]
  %v2672 = vld [vmem:[%s912 + $0x88] sm:$0xff]
  %v2673 = vld [vmem:[%s912 + $0x90] sm:$0xff]
  %v2674 = vld [vmem:[%s912 + $0x98] sm:$0xff]
  %v2675 = vld [vmem:[%s912 + $0xa0] sm:$0xff]
  %v2676 = vld [vmem:[%s912 + $0xa8] sm:$0xff]
  %v2677 = vld [vmem:[%s912 + $0xb0] sm:$0xff]
  %v2678 = vld [vmem:[%s912 + $0xb8] sm:$0xff]
  %v2679 = vld [vmem:[%s912 + $0xc0] sm:$0xff]
  %v2680 = vld [vmem:[%s912 + $0xc8] sm:$0xff]
  %v2681 = vld [vmem:[%s912 + $0xd0] sm:$0xff]
  %v2682 = vld [vmem:[%s912 + $0xd8] sm:$0xff]
  %v2683 = vld [vmem:[%s912 + $0xe0] sm:$0xff]
  %v2684 = vld [vmem:[%s912 + $0xe8] sm:$0xff]
  %v2685 = vld [vmem:[%s912 + $0xf0] sm:$0xff]
  %v2686 = vld [vmem:[%s912 + $0xf8] sm:$0xff]
  %v2687 = vld [vmem:[%s912 + $0x120] sm:$0xff]
  %v2688 = vld [vmem:[%s912 + $0x128] sm:$0xff]
  %v2689 = vld [vmem:[%s912 + $0x130] sm:$0xff]
  %v2690 = vld [vmem:[%s912 + $0x138] sm:$0xff]
  %v2691 = vld [vmem:[%s912 + $0x140] sm:$0xff]
  %v2692 = vld [vmem:[%s912 + $0x148] sm:$0xff]
  %v2693 = vld [vmem:[%s912 + $0x150] sm:$0xff]
  %v2694 = vld [vmem:[%s912 + $0x158] sm:$0xff]
  %v2695 = vld [vmem:[%s912 + $0x160] sm:$0xff]
  %v2696 = vld [vmem:[%s912 + $0x168] sm:$0xff]
  %v2697 = vld [vmem:[%s912 + $0x170] sm:$0xff]
  %v2698 = vld [vmem:[%s912 + $0x178] sm:$0xff]
  %v2699 = vld [vmem:[%s912 + $0x180] sm:$0xff]
  %v2700 = vld [vmem:[%s912 + $0x188] sm:$0xff]
  %v2701 = vld [vmem:[%s912 + $0x190] sm:$0xff]
  %v2702 = vld [vmem:[%s912 + $0x198] sm:$0xff]
  %v2703 = vld [vmem:[%s912 + $0x1a0] sm:$0xff]
  %v2704 = vld [vmem:[%s912 + $0x1a8] sm:$0xff]
  %v2705 = vld [vmem:[%s912 + $0x1b0] sm:$0xff]
  %v2706 = vld [vmem:[%s912 + $0x1b8] sm:$0xff]
  %v2707 = vld [vmem:[%s912 + $0x1c0] sm:$0xff]
  %v2708 = vld [vmem:[%s912 + $0x1c8] sm:$0xff]
  %v2709 = vld [vmem:[%s912 + $0x1d0] sm:$0xff]
  %v2710 = vld [vmem:[%s912 + $0x1d8] sm:$0xff]
  %v2711 = vld [vmem:[%s912 + $0x1e0] sm:$0xff]
  %v2712 = vld [vmem:[%s912 + $0x1e8] sm:$0xff]
  %v2713 = vld [vmem:[%s912 + $0x1f0] sm:$0xff]
  %v2714 = vld [vmem:[%s912 + $0x1f8] sm:$0xff]
  %v2715 = vld [vmem:[%s912 + $0x200] sm:$0xff]
  %v2716 = vld [vmem:[%s912 + $0x208] sm:$0xff]
  %v2717 = vld [vmem:[%s912 + $0x210] sm:$0xff]
  %v2718 = vld [vmem:[%s912 + $0x218] sm:$0xff]
  %v2719 = vrot.slane %v2655, 7
  %v2720 = vrot.slane %v2657, 7
  %v2721 = vrot.slane %v2659, 7
  %v2722 = vrot.slane %v2661, 7
  %v2723 = vrot.slane %v2663, 7
  %v2724 = vrot.slane %v2665, 7
  %v2725 = vrot.slane %v2667, 7
  %v2726 = vrot.slane %v2669, 7
  %v2727 = vrot.slane %v2671, 7
  %v2728 = vrot.slane %v2673, 7
  %v2729 = vrot.slane %v2675, 7
  %v2730 = vrot.slane %v2677, 7
  %v2731 = vrot.slane %v2679, 7
  %v2732 = vrot.slane %v2681, 7
  %v2733 = vrot.slane %v2683, 7
  %v2734 = vrot.slane %v2685, 7
  %v2735 = vrot.slane %v2687, 7
  %v2736 = vrot.slane %v2689, 7
  %v2737 = vrot.slane %v2691, 7
  %v2738 = vrot.slane %v2693, 7
  %v2739 = vrot.slane %v2695, 7
  %v2740 = vrot.slane %v2697, 7
  %v2741 = vrot.slane %v2699, 7
  %v2742 = vrot.slane %v2701, 7
  %v2743 = vrot.slane %v2703, 7
  %v2744 = vrot.slane %v2705, 7
  %v2745 = vrot.slane %v2707, 7
  %v2746 = vrot.slane %v2709, 7
  %v2747 = vrot.slane %v2711, 7
  %v2748 = vrot.slane %v2713, 7
  %v2749 = vrot.slane %v2715, 7
  %v2750 = vrot.slane %v2717, 7
  %v2751 = vrot.slane %v2656, 7
  %v2752 = vrot.slane %v2658, 7
  %v2753 = vrot.slane %v2660, 7
  %v2754 = vrot.slane %v2662, 7
  %v2755 = vrot.slane %v2664, 7
  %v2756 = vrot.slane %v2666, 7
  %v2757 = vrot.slane %v2668, 7
  %v2758 = vrot.slane %v2670, 7
  %v2759 = vrot.slane %v2672, 7
  %v2760 = vrot.slane %v2674, 7
  %v2761 = vrot.slane %v2676, 7
  %v2762 = vrot.slane %v2678, 7
  %v2763 = vrot.slane %v2680, 7
  %v2764 = vrot.slane %v2682, 7
  %v2765 = vrot.slane %v2684, 7
  %v2766 = vrot.slane %v2686, 7
  %v2767 = vrot.slane %v2688, 7
  %v2768 = vrot.slane %v2690, 7
  %v2769 = vrot.slane %v2692, 7
  %v2770 = vrot.slane %v2694, 7
  %v2771 = vrot.slane %v2696, 7
  %v2772 = vrot.slane %v2698, 7
  %v2773 = vrot.slane %v2700, 7
  %v2774 = vrot.slane %v2702, 7
  %v2775 = vrot.slane %v2704, 7
  %v2776 = vrot.slane %v2706, 7
  %v2777 = vrot.slane %v2708, 7
  %v2778 = vrot.slane %v2710, 7
  %v2779 = vrot.slane %v2712, 7
  %v2780 = vrot.slane %v2714, 7
  %v2781 = vrot.slane %v2716, 7
  %v2782 = vrot.slane %v2718, 7
  %v2783 = vsel %vm1112, %v2719, %v2751
  %v2784 = vsel %vm1112, %v2720, %v2752
  %v2785 = vsel %vm1112, %v2721, %v2753
  %v2786 = vsel %vm1112, %v2722, %v2754
  %v2787 = vsel %vm1112, %v2723, %v2755
  %v2788 = vsel %vm1112, %v2724, %v2756
  %v2789 = vsel %vm1112, %v2725, %v2757
  %v2790 = vsel %vm1112, %v2726, %v2758
  %v2791 = vsel %vm1112, %v2727, %v2759
  %v2792 = vsel %vm1112, %v2728, %v2760
  %v2793 = vsel %vm1112, %v2729, %v2761
  %v2794 = vsel %vm1112, %v2730, %v2762
  %v2795 = vsel %vm1112, %v2731, %v2763
  %v2796 = vsel %vm1112, %v2732, %v2764
  %v2797 = vsel %vm1112, %v2733, %v2765
  %v2798 = vsel %vm1112, %v2734, %v2766
  %v2799 = vsel %vm1112, %v2735, %v2767
  %v2800 = vsel %vm1112, %v2736, %v2768
  %v2801 = vsel %vm1112, %v2737, %v2769
  %v2802 = vsel %vm1112, %v2738, %v2770
  %v2803 = vsel %vm1112, %v2739, %v2771
  %v2804 = vsel %vm1112, %v2740, %v2772
  %v2805 = vsel %vm1112, %v2741, %v2773
  %v2806 = vsel %vm1112, %v2742, %v2774
  %v2807 = vsel %vm1112, %v2743, %v2775
  %v2808 = vsel %vm1112, %v2744, %v2776
  %v2809 = vsel %vm1112, %v2745, %v2777
  %v2810 = vsel %vm1112, %v2746, %v2778
  %v2811 = vsel %vm1112, %v2747, %v2779
  %v2812 = vsel %vm1112, %v2748, %v2780
  %v2813 = vsel %vm1112, %v2749, %v2781
  %v2814 = vsel %vm1112, %v2750, %v2782
  %v2815 = vsel %vm1112, %v2751, %v2719
  %v2816 = vsel %vm1112, %v2752, %v2720
  %v2817 = vsel %vm1112, %v2753, %v2721
  %v2818 = vsel %vm1112, %v2754, %v2722
  %v2819 = vsel %vm1112, %v2755, %v2723
  %v2820 = vsel %vm1112, %v2756, %v2724
  %v2821 = vsel %vm1112, %v2757, %v2725
  %v2822 = vsel %vm1112, %v2758, %v2726
  %v2823 = vsel %vm1112, %v2759, %v2727
  %v2824 = vsel %vm1112, %v2760, %v2728
  %v2825 = vsel %vm1112, %v2761, %v2729
  %v2826 = vsel %vm1112, %v2762, %v2730
  %v2827 = vsel %vm1112, %v2763, %v2731
  %v2828 = vsel %vm1112, %v2764, %v2732
  %v2829 = vsel %vm1112, %v2765, %v2733
  %v2830 = vsel %vm1112, %v2766, %v2734
  %v2831 = vsel %vm1112, %v2767, %v2735
  %v2832 = vsel %vm1112, %v2768, %v2736
  %v2833 = vsel %vm1112, %v2769, %v2737
  %v2834 = vsel %vm1112, %v2770, %v2738
  %v2835 = vsel %vm1112, %v2771, %v2739
  %v2836 = vsel %vm1112, %v2772, %v2740
  %v2837 = vsel %vm1112, %v2773, %v2741
  %v2838 = vsel %vm1112, %v2774, %v2742
  %v2839 = vsel %vm1112, %v2775, %v2743
  %v2840 = vsel %vm1112, %v2776, %v2744
  %v2841 = vsel %vm1112, %v2777, %v2745
  %v2842 = vsel %vm1112, %v2778, %v2746
  %v2843 = vsel %vm1112, %v2779, %v2747
  %v2844 = vsel %vm1112, %v2780, %v2748
  %v2845 = vsel %vm1112, %v2781, %v2749
  %v2846 = vsel %vm1112, %v2782, %v2750
  %v2847 = vsel %vm980, %v2815, 0.0
  %v2848 = vsel %vm981, %v2783, 0.0
  %v2849 = vsel %vm980, %v2816, 0.0
  %v2850 = vsel %vm981, %v2784, 0.0
  %v2851 = vsel %vm980, %v2817, 0.0
  %v2852 = vsel %vm981, %v2785, 0.0
  %v2853 = vsel %vm980, %v2818, 0.0
  %v2854 = vsel %vm981, %v2786, 0.0
  %v2855 = vsel %vm980, %v2819, 0.0
  %v2856 = vsel %vm981, %v2787, 0.0
  %v2857 = vsel %vm980, %v2820, 0.0
  %v2858 = vsel %vm981, %v2788, 0.0
  %v2859 = vsel %vm980, %v2821, 0.0
  %v2860 = vsel %vm981, %v2789, 0.0
  %v2861 = vsel %vm980, %v2822, 0.0
  %v2862 = vsel %vm981, %v2790, 0.0
  %v2863 = vsel %vm980, %v2823, 0.0
  %v2864 = vsel %vm981, %v2791, 0.0
  %v2865 = vsel %vm980, %v2824, 0.0
  %v2866 = vsel %vm981, %v2792, 0.0
  %v2867 = vsel %vm980, %v2825, 0.0
  %v2868 = vsel %vm981, %v2793, 0.0
  %v2869 = vsel %vm980, %v2826, 0.0
  %v2870 = vsel %vm981, %v2794, 0.0
  %v2871 = vsel %vm980, %v2827, 0.0
  %v2872 = vsel %vm981, %v2795, 0.0
  %v2873 = vsel %vm980, %v2828, 0.0
  %v2874 = vsel %vm981, %v2796, 0.0
  %v2875 = vsel %vm980, %v2829, 0.0
  %v2876 = vsel %vm981, %v2797, 0.0
  %v2877 = vsel %vm980, %v2830, 0.0
  %v2878 = vsel %vm981, %v2798, 0.0
  %v2879 = vsel %vm980, %v2831, 0.0
  %v2880 = vsel %vm981, %v2799, 0.0
  %v2881 = vsel %vm980, %v2832, 0.0
  %v2882 = vsel %vm981, %v2800, 0.0
  %v2883 = vsel %vm980, %v2833, 0.0
  %v2884 = vsel %vm981, %v2801, 0.0
  %v2885 = vsel %vm980, %v2834, 0.0
  %v2886 = vsel %vm981, %v2802, 0.0
  %v2887 = vsel %vm980, %v2835, 0.0
  %v2888 = vsel %vm981, %v2803, 0.0
  %v2889 = vsel %vm980, %v2836, 0.0
  %v2890 = vsel %vm981, %v2804, 0.0
  %v2891 = vsel %vm980, %v2837, 0.0
  %v2892 = vsel %vm981, %v2805, 0.0
  %v2893 = vsel %vm980, %v2838, 0.0
  %v2894 = vsel %vm981, %v2806, 0.0
  %v2895 = vsel %vm980, %v2839, 0.0
  %v2896 = vsel %vm981, %v2807, 0.0
  %v2897 = vsel %vm980, %v2840, 0.0
  %v2898 = vsel %vm981, %v2808, 0.0
  %v2899 = vsel %vm980, %v2841, 0.0
  %v2900 = vsel %vm981, %v2809, 0.0
  %v2901 = vsel %vm980, %v2842, 0.0
  %v2902 = vsel %vm981, %v2810, 0.0
  %v2903 = vsel %vm980, %v2843, 0.0
  %v2904 = vsel %vm981, %v2811, 0.0
  %v2905 = vsel %vm980, %v2844, 0.0
  %v2906 = vsel %vm981, %v2812, 0.0
  %v2907 = vsel %vm980, %v2845, 0.0
  %v2908 = vsel %vm981, %v2813, 0.0
  %v2909 = vsel %vm980, %v2846, 0.0
  %v2910 = vsel %vm981, %v2814, 0.0
  %v2911 = vpack.c.bf16 %v2848, %v2847
  %v2912 = vpack.c.bf16 %v2850, %v2849
  %v2913 = vpack.c.bf16 %v2852, %v2851
  %v2914 = vpack.c.bf16 %v2854, %v2853
  %v2915 = vpack.c.bf16 %v2856, %v2855
  %v2916 = vpack.c.bf16 %v2858, %v2857
  %v2917 = vpack.c.bf16 %v2860, %v2859
  %v2918 = vpack.c.bf16 %v2862, %v2861
  %v2919 = vpack.c.bf16 %v2864, %v2863
  %v2920 = vpack.c.bf16 %v2866, %v2865
  %v2921 = vpack.c.bf16 %v2868, %v2867
  %v2922 = vpack.c.bf16 %v2870, %v2869
  %v2923 = vpack.c.bf16 %v2872, %v2871
  %v2924 = vpack.c.bf16 %v2874, %v2873
  %v2925 = vpack.c.bf16 %v2876, %v2875
  %v2926 = vpack.c.bf16 %v2878, %v2877
  %v2927 = vpack.c.bf16 %v2880, %v2879
  %v2928 = vpack.c.bf16 %v2882, %v2881
  %v2929 = vpack.c.bf16 %v2884, %v2883
  %v2930 = vpack.c.bf16 %v2886, %v2885
  %v2931 = vpack.c.bf16 %v2888, %v2887
  %v2932 = vpack.c.bf16 %v2890, %v2889
  %v2933 = vpack.c.bf16 %v2892, %v2891
  %v2934 = vpack.c.bf16 %v2894, %v2893
  %v2935 = vpack.c.bf16 %v2896, %v2895
  %v2936 = vpack.c.bf16 %v2898, %v2897
  %v2937 = vpack.c.bf16 %v2900, %v2899
  %v2938 = vpack.c.bf16 %v2902, %v2901
  %v2939 = vpack.c.bf16 %v2904, %v2903
  %v2940 = vpack.c.bf16 %v2906, %v2905
  %v2941 = vpack.c.bf16 %v2908, %v2907
  %v2942 = vpack.c.bf16 %v2910, %v2909
  %s2943 = scalar_lea.vmem %s4, 192
  %v2944 = vld [vmem:[%s2943] sm:$0xf]
  %v2945 = vld [vmem:[%s2943 + $0x4] sm:$0xf]
  %v2946 = vld [vmem:[%s2943 + $0x8] sm:$0xf]
  %v2947 = vld [vmem:[%s2943 + $0xc] sm:$0xf]
  %v2948 = vld [vmem:[%s2943 + $0x10] sm:$0xf]
  %v2949 = vld [vmem:[%s2943 + $0x14] sm:$0xf]
  %v2950 = vld [vmem:[%s2943 + $0x18] sm:$0xf]
  %v2951 = vld [vmem:[%s2943 + $0x1c] sm:$0xf]
  %v2952 = vld [vmem:[%s2943 + $0x20] sm:$0xf]
  %v2953 = vld [vmem:[%s2943 + $0x24] sm:$0xf]
  %v2954 = vld [vmem:[%s2943 + $0x28] sm:$0xf]
  %v2955 = vld [vmem:[%s2943 + $0x2c] sm:$0xf]
  %v2956 = vld [vmem:[%s2943 + $0x30] sm:$0xf]
  %v2957 = vld [vmem:[%s2943 + $0x34] sm:$0xf]
  %v2958 = vld [vmem:[%s2943 + $0x38] sm:$0xf]
  %v2959 = vld [vmem:[%s2943 + $0x3c] sm:$0xf]
  %v2976 = vunpack.c.l.b16 %v2944
  %v2977 = vunpack.c.l.b16 %v2945
  %v2978 = vunpack.c.l.b16 %v2946
  %v2979 = vunpack.c.l.b16 %v2947
  %v2980 = vunpack.c.l.b16 %v2948
  %v2981 = vunpack.c.l.b16 %v2949
  %v2982 = vunpack.c.l.b16 %v2950
  %v2983 = vunpack.c.l.b16 %v2951
  %v2984 = vunpack.c.l.b16 %v2952
  %v2985 = vunpack.c.l.b16 %v2953
  %v2986 = vunpack.c.l.b16 %v2954
  %v2987 = vunpack.c.l.b16 %v2955
  %v2988 = vunpack.c.l.b16 %v2956
  %v2989 = vunpack.c.l.b16 %v2957
  %v2990 = vunpack.c.l.b16 %v2958
  %v2991 = vunpack.c.l.b16 %v2959
  %v2992 = vpack.c.b16 %v2977, %v2976
  %v2993 = vpack.c.b16 %v2979, %v2978
  %v2994 = vpack.c.b16 %v2981, %v2980
  %v2995 = vpack.c.b16 %v2983, %v2982
  %v2996 = vpack.c.b16 %v2985, %v2984
  %v2997 = vpack.c.b16 %v2987, %v2986
  %v2998 = vpack.c.b16 %v2989, %v2988
  %v2999 = vpack.c.b16 %v2991, %v2990
  %3008 = vmatprep.subr.bf16.mxu0 0
  %3009 = vmatpush1.bf16.msra.mxu0 %v2999
  %3010 = vmatprep.subr.bf16.mxu0 0
  %3011 = vmatpush1.bf16.msra.mxu0 %v2998
  %3012 = vmatprep.subr.bf16.mxu0 0
  %3013 = vmatpush1.bf16.msra.mxu0 %v2997
  %3014 = vmatprep.subr.bf16.mxu0 0
  %3015 = vmatpush1.bf16.msra.mxu0 %v2996
  %3016 = vmatprep.subr.bf16.mxu0 0
  %3017 = vmatpush1.bf16.msra.mxu0 %v2995
  %3018 = vmatprep.subr.bf16.mxu0 0
  %3019 = vmatpush1.bf16.msra.mxu0 %v2994
  %3020 = vmatprep.subr.bf16.mxu0 0
  %3021 = vmatpush1.bf16.msra.mxu0 %v2993
  %3022 = vmatprep.subr.bf16.mxu0 0
  %3023 = vmatpush1.bf16.msra.mxu0 %v2992
  %3024 = vmatprep.subr.bf16.mxu0 0
  %3025 = vmatpush2.bf16.msra.mxu0 0
  %3026 = vmatprep.subr.bf16.mxu0 0
  %3027 = vmatpush2.bf16.msra.mxu0 0
  %3028 = vmatprep.subr.bf16.mxu0 0
  %3029 = vmatpush2.bf16.msra.mxu0 0
  %3030 = vmatprep.subr.bf16.mxu0 0
  %3031 = vmatpush2.bf16.msra.mxu0 0
  %3032 = vmatprep.subr.bf16.mxu0 0
  %3033 = vmatpush2.bf16.msra.mxu0 0
  %3034 = vmatprep.subr.bf16.mxu0 0
  %3035 = vmatpush2.bf16.msra.mxu0 0
  %3036 = vmatprep.subr.bf16.mxu0 0
  %3037 = vmatpush2.bf16.msra.mxu0 0
  %3038 = vmatprep.subr.bf16.mxu0 0
  %3039 = vmatpush2.bf16.msra.mxu0 0
  %3040 = vmatprep.mubr.bf16.mxu0 0
  %3041 = vmatmul.mubr.bf16.gmra.mxu0 %v2911
  %v3042 = vpop.f32.mrf.mxu0
  %v3043 = vadd.f32 0.0, %v3042
  %v3044 = vpop.f32.mrf.mxu0
  %v3045 = vpop.f32.mrf.mxu0
  %v3046 = vadd.f32 0.0, %v3045
  %v3047 = vpop.f32.mrf.mxu0
  %3048 = vmatprep.mubr.bf16.mxu0 0
  %3049 = vmatmul.mubr.bf16.gmra.mxu0 %v2912
  %v3050 = vpop.f32.mrf.mxu0
  %v3051 = vadd.f32 0.0, %v3050
  %v3052 = vpop.f32.mrf.mxu0
  %v3053 = vpop.f32.mrf.mxu0
  %v3054 = vadd.f32 0.0, %v3053
  %v3055 = vpop.f32.mrf.mxu0
  %3056 = vmatprep.mubr.bf16.mxu0 0
  %3057 = vmatmul.mubr.bf16.gmra.mxu0 %v2913
  %v3058 = vpop.f32.mrf.mxu0
  %v3059 = vadd.f32 0.0, %v3058
  %v3060 = vpop.f32.mrf.mxu0
  %v3061 = vpop.f32.mrf.mxu0
  %v3062 = vadd.f32 0.0, %v3061
  %v3063 = vpop.f32.mrf.mxu0
  %3064 = vmatprep.mubr.bf16.mxu0 0
  %3065 = vmatmul.mubr.bf16.gmra.mxu0 %v2914
  %v3066 = vpop.f32.mrf.mxu0
  %v3067 = vadd.f32 0.0, %v3066
  %v3068 = vpop.f32.mrf.mxu0
  %v3069 = vpop.f32.mrf.mxu0
  %v3070 = vadd.f32 0.0, %v3069
  %v3071 = vpop.f32.mrf.mxu0
  %3072 = vmatprep.mubr.bf16.mxu0 0
  %3073 = vmatmul.mubr.bf16.gmra.mxu0 %v2915
  %v3074 = vpop.f32.mrf.mxu0
  %v3075 = vadd.f32 0.0, %v3074
  %v3076 = vpop.f32.mrf.mxu0
  %v3077 = vpop.f32.mrf.mxu0
  %v3078 = vadd.f32 0.0, %v3077
  %v3079 = vpop.f32.mrf.mxu0
  %3080 = vmatprep.mubr.bf16.mxu0 0
  %3081 = vmatmul.mubr.bf16.gmra.mxu0 %v2916
  %v3082 = vpop.f32.mrf.mxu0
  %v3083 = vadd.f32 0.0, %v3082
  %v3084 = vpop.f32.mrf.mxu0
  %v3085 = vpop.f32.mrf.mxu0
  %v3086 = vadd.f32 0.0, %v3085
  %v3087 = vpop.f32.mrf.mxu0
  %3088 = vmatprep.mubr.bf16.mxu0 0
  %3089 = vmatmul.mubr.bf16.gmra.mxu0 %v2917
  %v3090 = vpop.f32.mrf.mxu0
  %v3091 = vadd.f32 0.0, %v3090
  %v3092 = vpop.f32.mrf.mxu0
  %v3093 = vpop.f32.mrf.mxu0
  %v3094 = vadd.f32 0.0, %v3093
  %v3095 = vpop.f32.mrf.mxu0
  %3096 = vmatprep.mubr.bf16.mxu0 0
  %3097 = vmatmul.mubr.bf16.gmra.mxu0 %v2918
  %v3098 = vpop.f32.mrf.mxu0
  %v3099 = vadd.f32 0.0, %v3098
  %v3100 = vpop.f32.mrf.mxu0
  %v3101 = vpop.f32.mrf.mxu0
  %v3102 = vadd.f32 0.0, %v3101
  %v3103 = vpop.f32.mrf.mxu0
  %3104 = vmatprep.mubr.bf16.mxu0 0
  %3105 = vmatmul.mubr.bf16.gmra.mxu0 %v2919
  %v3106 = vpop.f32.mrf.mxu0
  %v3107 = vadd.f32 0.0, %v3106
  %v3108 = vpop.f32.mrf.mxu0
  %v3109 = vpop.f32.mrf.mxu0
  %v3110 = vadd.f32 0.0, %v3109
  %v3111 = vpop.f32.mrf.mxu0
  %3112 = vmatprep.mubr.bf16.mxu0 0
  %3113 = vmatmul.mubr.bf16.gmra.mxu0 %v2920
  %v3114 = vpop.f32.mrf.mxu0
  %v3115 = vadd.f32 0.0, %v3114
  %v3116 = vpop.f32.mrf.mxu0
  %v3117 = vpop.f32.mrf.mxu0
  %v3118 = vadd.f32 0.0, %v3117
  %v3119 = vpop.f32.mrf.mxu0
  %3120 = vmatprep.mubr.bf16.mxu0 0
  %3121 = vmatmul.mubr.bf16.gmra.mxu0 %v2921
  %v3122 = vpop.f32.mrf.mxu0
  %v3123 = vadd.f32 0.0, %v3122
  %v3124 = vpop.f32.mrf.mxu0
  %v3125 = vpop.f32.mrf.mxu0
  %v3126 = vadd.f32 0.0, %v3125
  %v3127 = vpop.f32.mrf.mxu0
  %3128 = vmatprep.mubr.bf16.mxu0 0
  %3129 = vmatmul.mubr.bf16.gmra.mxu0 %v2922
  %v3130 = vpop.f32.mrf.mxu0
  %v3131 = vadd.f32 0.0, %v3130
  %v3132 = vpop.f32.mrf.mxu0
  %v3133 = vpop.f32.mrf.mxu0
  %v3134 = vadd.f32 0.0, %v3133
  %v3135 = vpop.f32.mrf.mxu0
  %3136 = vmatprep.mubr.bf16.mxu0 0
  %3137 = vmatmul.mubr.bf16.gmra.mxu0 %v2923
  %v3138 = vpop.f32.mrf.mxu0
  %v3139 = vadd.f32 0.0, %v3138
  %v3140 = vpop.f32.mrf.mxu0
  %v3141 = vpop.f32.mrf.mxu0
  %v3142 = vadd.f32 0.0, %v3141
  %v3143 = vpop.f32.mrf.mxu0
  %3144 = vmatprep.mubr.bf16.mxu0 0
  %3145 = vmatmul.mubr.bf16.gmra.mxu0 %v2924
  %v3146 = vpop.f32.mrf.mxu0
  %v3147 = vadd.f32 0.0, %v3146
  %v3148 = vpop.f32.mrf.mxu0
  %v3149 = vpop.f32.mrf.mxu0
  %v3150 = vadd.f32 0.0, %v3149
  %v3151 = vpop.f32.mrf.mxu0
  %3152 = vmatprep.mubr.bf16.mxu0 0
  %3153 = vmatmul.mubr.bf16.gmra.mxu0 %v2925
  %v3154 = vpop.f32.mrf.mxu0
  %v3155 = vadd.f32 0.0, %v3154
  %v3156 = vpop.f32.mrf.mxu0
  %v3157 = vpop.f32.mrf.mxu0
  %v3158 = vadd.f32 0.0, %v3157
  %v3159 = vpop.f32.mrf.mxu0
  %3160 = vmatprep.mubr.bf16.mxu0 0
  %3161 = vmatmul.mubr.bf16.gmra.mxu0 %v2926
  %v3162 = vpop.f32.mrf.mxu0
  %v3163 = vadd.f32 0.0, %v3162
  %v3164 = vpop.f32.mrf.mxu0
  %v3165 = vpop.f32.mrf.mxu0
  %v3166 = vadd.f32 0.0, %v3165
  %v3167 = vpop.f32.mrf.mxu0
  %3168 = vmatprep.mubr.bf16.mxu0 0
  %3169 = vmatmul.mubr.bf16.gmra.mxu0 %v2927
  %v3170 = vpop.f32.mrf.mxu0
  %v3171 = vadd.f32 0.0, %v3170
  %v3172 = vpop.f32.mrf.mxu0
  %v3173 = vpop.f32.mrf.mxu0
  %v3174 = vadd.f32 0.0, %v3173
  %v3175 = vpop.f32.mrf.mxu0
  %3176 = vmatprep.mubr.bf16.mxu0 0
  %3177 = vmatmul.mubr.bf16.gmra.mxu0 %v2928
  %v3178 = vpop.f32.mrf.mxu0
  %v3179 = vadd.f32 0.0, %v3178
  %v3180 = vpop.f32.mrf.mxu0
  %v3181 = vpop.f32.mrf.mxu0
  %v3182 = vadd.f32 0.0, %v3181
  %v3183 = vpop.f32.mrf.mxu0
  %3184 = vmatprep.mubr.bf16.mxu0 0
  %3185 = vmatmul.mubr.bf16.gmra.mxu0 %v2929
  %v3186 = vpop.f32.mrf.mxu0
  %v3187 = vadd.f32 0.0, %v3186
  %v3188 = vpop.f32.mrf.mxu0
  %v3189 = vpop.f32.mrf.mxu0
  %v3190 = vadd.f32 0.0, %v3189
  %v3191 = vpop.f32.mrf.mxu0
  %3192 = vmatprep.mubr.bf16.mxu0 0
  %3193 = vmatmul.mubr.bf16.gmra.mxu0 %v2930
  %v3194 = vpop.f32.mrf.mxu0
  %v3195 = vadd.f32 0.0, %v3194
  %v3196 = vpop.f32.mrf.mxu0
  %v3197 = vpop.f32.mrf.mxu0
  %v3198 = vadd.f32 0.0, %v3197
  %v3199 = vpop.f32.mrf.mxu0
  %3200 = vmatprep.mubr.bf16.mxu0 0
  %3201 = vmatmul.mubr.bf16.gmra.mxu0 %v2931
  %v3202 = vpop.f32.mrf.mxu0
  %v3203 = vadd.f32 0.0, %v3202
  %v3204 = vpop.f32.mrf.mxu0
  %v3205 = vpop.f32.mrf.mxu0
  %v3206 = vadd.f32 0.0, %v3205
  %v3207 = vpop.f32.mrf.mxu0
  %3208 = vmatprep.mubr.bf16.mxu0 0
  %3209 = vmatmul.mubr.bf16.gmra.mxu0 %v2932
  %v3210 = vpop.f32.mrf.mxu0
  %v3211 = vadd.f32 0.0, %v3210
  %v3212 = vpop.f32.mrf.mxu0
  %v3213 = vpop.f32.mrf.mxu0
  %v3214 = vadd.f32 0.0, %v3213
  %v3215 = vpop.f32.mrf.mxu0
  %3216 = vmatprep.mubr.bf16.mxu0 0
  %3217 = vmatmul.mubr.bf16.gmra.mxu0 %v2933
  %v3218 = vpop.f32.mrf.mxu0
  %v3219 = vadd.f32 0.0, %v3218
  %v3220 = vpop.f32.mrf.mxu0
  %v3221 = vpop.f32.mrf.mxu0
  %v3222 = vadd.f32 0.0, %v3221
  %v3223 = vpop.f32.mrf.mxu0
  %3224 = vmatprep.mubr.bf16.mxu0 0
  %3225 = vmatmul.mubr.bf16.gmra.mxu0 %v2934
  %v3226 = vpop.f32.mrf.mxu0
  %v3227 = vadd.f32 0.0, %v3226
  %v3228 = vpop.f32.mrf.mxu0
  %v3229 = vpop.f32.mrf.mxu0
  %v3230 = vadd.f32 0.0, %v3229
  %v3231 = vpop.f32.mrf.mxu0
  %3232 = vmatprep.mubr.bf16.mxu0 0
  %3233 = vmatmul.mubr.bf16.gmra.mxu0 %v2935
  %v3234 = vpop.f32.mrf.mxu0
  %v3235 = vadd.f32 0.0, %v3234
  %v3236 = vpop.f32.mrf.mxu0
  %v3237 = vpop.f32.mrf.mxu0
  %v3238 = vadd.f32 0.0, %v3237
  %v3239 = vpop.f32.mrf.mxu0
  %3240 = vmatprep.mubr.bf16.mxu0 0
  %3241 = vmatmul.mubr.bf16.gmra.mxu0 %v2936
  %v3242 = vpop.f32.mrf.mxu0
  %v3243 = vadd.f32 0.0, %v3242
  %v3244 = vpop.f32.mrf.mxu0
  %v3245 = vpop.f32.mrf.mxu0
  %v3246 = vadd.f32 0.0, %v3245
  %v3247 = vpop.f32.mrf.mxu0
  %3248 = vmatprep.mubr.bf16.mxu0 0
  %3249 = vmatmul.mubr.bf16.gmra.mxu0 %v2937
  %v3250 = vpop.f32.mrf.mxu0
  %v3251 = vadd.f32 0.0, %v3250
  %v3252 = vpop.f32.mrf.mxu0
  %v3253 = vpop.f32.mrf.mxu0
  %v3254 = vadd.f32 0.0, %v3253
  %v3255 = vpop.f32.mrf.mxu0
  %3256 = vmatprep.mubr.bf16.mxu0 0
  %3257 = vmatmul.mubr.bf16.gmra.mxu0 %v2938
  %v3258 = vpop.f32.mrf.mxu0
  %v3259 = vadd.f32 0.0, %v3258
  %v3260 = vpop.f32.mrf.mxu0
  %v3261 = vpop.f32.mrf.mxu0
  %v3262 = vadd.f32 0.0, %v3261
  %v3263 = vpop.f32.mrf.mxu0
  %3264 = vmatprep.mubr.bf16.mxu0 0
  %3265 = vmatmul.mubr.bf16.gmra.mxu0 %v2939
  %v3266 = vpop.f32.mrf.mxu0
  %v3267 = vadd.f32 0.0, %v3266
  %v3268 = vpop.f32.mrf.mxu0
  %v3269 = vpop.f32.mrf.mxu0
  %v3270 = vadd.f32 0.0, %v3269
  %v3271 = vpop.f32.mrf.mxu0
  %3272 = vmatprep.mubr.bf16.mxu0 0
  %3273 = vmatmul.mubr.bf16.gmra.mxu0 %v2940
  %v3274 = vpop.f32.mrf.mxu0
  %v3275 = vadd.f32 0.0, %v3274
  %v3276 = vpop.f32.mrf.mxu0
  %v3277 = vpop.f32.mrf.mxu0
  %v3278 = vadd.f32 0.0, %v3277
  %v3279 = vpop.f32.mrf.mxu0
  %3280 = vmatprep.mubr.bf16.mxu0 0
  %3281 = vmatmul.mubr.bf16.gmra.mxu0 %v2941
  %v3282 = vpop.f32.mrf.mxu0
  %v3283 = vadd.f32 0.0, %v3282
  %v3284 = vpop.f32.mrf.mxu0
  %v3285 = vpop.f32.mrf.mxu0
  %v3286 = vadd.f32 0.0, %v3285
  %v3287 = vpop.f32.mrf.mxu0
  %3288 = vmatprep.mubr.bf16.mxu0 0
  %3289 = vmatmul.mubr.bf16.gmra.mxu0 %v2942
  %v3290 = vpop.f32.mrf.mxu0
  %v3291 = vadd.f32 0.0, %v3290
  %v3292 = vpop.f32.mrf.mxu0
  %v3293 = vpop.f32.mrf.mxu0
  %v3294 = vadd.f32 0.0, %v3293
  %v3295 = vpop.f32.mrf.mxu0
  %3296 = vdwg.mxu0
  %v3297 = vadd.f32 %v2591, %v3043
  %v3298 = vadd.f32 %v2592, %v3046
  %v3299 = vadd.f32 %v2593, %v3051
  %v3300 = vadd.f32 %v2594, %v3054
  %v3301 = vadd.f32 %v2595, %v3059
  %v3302 = vadd.f32 %v2596, %v3062
  %v3303 = vadd.f32 %v2597, %v3067
  %v3304 = vadd.f32 %v2598, %v3070
  %v3305 = vadd.f32 %v2599, %v3075
  %v3306 = vadd.f32 %v2600, %v3078
  %v3307 = vadd.f32 %v2601, %v3083
  %v3308 = vadd.f32 %v2602, %v3086
  %v3309 = vadd.f32 %v2603, %v3091
  %v3310 = vadd.f32 %v2604, %v3094
  %v3311 = vadd.f32 %v2605, %v3099
  %v3312 = vadd.f32 %v2606, %v3102
  %v3313 = vadd.f32 %v2607, %v3107
  %v3314 = vadd.f32 %v2608, %v3110
  %v3315 = vadd.f32 %v2609, %v3115
  %v3316 = vadd.f32 %v2610, %v3118
  %v3317 = vadd.f32 %v2611, %v3123
  %v3318 = vadd.f32 %v2612, %v3126
  %v3319 = vadd.f32 %v2613, %v3131
  %v3320 = vadd.f32 %v2614, %v3134
  %v3321 = vadd.f32 %v2615, %v3139
  %v3322 = vadd.f32 %v2616, %v3142
  %v3323 = vadd.f32 %v2617, %v3147
  %v3324 = vadd.f32 %v2618, %v3150
  %v3325 = vadd.f32 %v2619, %v3155
  %v3326 = vadd.f32 %v2620, %v3158
  %v3327 = vadd.f32 %v2621, %v3163
  %v3328 = vadd.f32 %v2622, %v3166
  %v3329 = vadd.f32 %v2623, %v3171
  %v3330 = vadd.f32 %v2624, %v3174
  %v3331 = vadd.f32 %v2625, %v3179
  %v3332 = vadd.f32 %v2626, %v3182
  %v3333 = vadd.f32 %v2627, %v3187
  %v3334 = vadd.f32 %v2628, %v3190
  %v3335 = vadd.f32 %v2629, %v3195
  %v3336 = vadd.f32 %v2630, %v3198
  %v3337 = vadd.f32 %v2631, %v3203
  %v3338 = vadd.f32 %v2632, %v3206
  %v3339 = vadd.f32 %v2633, %v3211
  %v3340 = vadd.f32 %v2634, %v3214
  %v3341 = vadd.f32 %v2635, %v3219
  %v3342 = vadd.f32 %v2636, %v3222
  %v3343 = vadd.f32 %v2637, %v3227
  %v3344 = vadd.f32 %v2638, %v3230
  %v3345 = vadd.f32 %v2639, %v3235
  %v3346 = vadd.f32 %v2640, %v3238
  %v3347 = vadd.f32 %v2641, %v3243
  %v3348 = vadd.f32 %v2642, %v3246
  %v3349 = vadd.f32 %v2643, %v3251
  %v3350 = vadd.f32 %v2644, %v3254
  %v3351 = vadd.f32 %v2645, %v3259
  %v3352 = vadd.f32 %v2646, %v3262
  %v3353 = vadd.f32 %v2647, %v3267
  %v3354 = vadd.f32 %v2648, %v3270
  %v3355 = vadd.f32 %v2649, %v3275
  %v3356 = vadd.f32 %v2650, %v3278
  %v3357 = vadd.f32 %v2651, %v3283
  %v3358 = vadd.f32 %v2652, %v3286
  %v3359 = vadd.f32 %v2653, %v3291
  %v3360 = vadd.f32 %v2654, %v3294
  %v3361 = vpack.c.bf16 %v2656, %v2655
  %v3362 = vpack.c.bf16 %v2658, %v2657
  %v3363 = vpack.c.bf16 %v2660, %v2659
  %v3364 = vpack.c.bf16 %v2662, %v2661
  %v3365 = vpack.c.bf16 %v2664, %v2663
  %v3366 = vpack.c.bf16 %v2666, %v2665
  %v3367 = vpack.c.bf16 %v2668, %v2667
  %v3368 = vpack.c.bf16 %v2670, %v2669
  %v3369 = vpack.c.bf16 %v2672, %v2671
  %v3370 = vpack.c.bf16 %v2674, %v2673
  %v3371 = vpack.c.bf16 %v2676, %v2675
  %v3372 = vpack.c.bf16 %v2678, %v2677
  %v3373 = vpack.c.bf16 %v2680, %v2679
  %v3374 = vpack.c.bf16 %v2682, %v2681
  %v3375 = vpack.c.bf16 %v2684, %v2683
  %v3376 = vpack.c.bf16 %v2686, %v2685
  %v3377 = vpack.c.bf16 %v2688, %v2687
  %v3378 = vpack.c.bf16 %v2690, %v2689
  %v3379 = vpack.c.bf16 %v2692, %v2691
  %v3380 = vpack.c.bf16 %v2694, %v2693
  %v3381 = vpack.c.bf16 %v2696, %v2695
  %v3382 = vpack.c.bf16 %v2698, %v2697
  %v3383 = vpack.c.bf16 %v2700, %v2699
  %v3384 = vpack.c.bf16 %v2702, %v2701
  %v3385 = vpack.c.bf16 %v2704, %v2703
  %v3386 = vpack.c.bf16 %v2706, %v2705
  %v3387 = vpack.c.bf16 %v2708, %v2707
  %v3388 = vpack.c.bf16 %v2710, %v2709
  %v3389 = vpack.c.bf16 %v2712, %v2711
  %v3390 = vpack.c.bf16 %v2714, %v2713
  %v3391 = vpack.c.bf16 %v2716, %v2715
  %v3392 = vpack.c.bf16 %v2718, %v2717
  %s3393 = scalar_lea.vmem %s4, 256
  %v3394 = vld [vmem:[%s3393] sm:$0xf]
  %v3395 = vld [vmem:[%s3393 + $0x4] sm:$0xf]
  %v3396 = vld [vmem:[%s3393 + $0x8] sm:$0xf]
  %v3397 = vld [vmem:[%s3393 + $0xc] sm:$0xf]
  %v3398 = vld [vmem:[%s3393 + $0x10] sm:$0xf]
  %v3399 = vld [vmem:[%s3393 + $0x14] sm:$0xf]
  %v3400 = vld [vmem:[%s3393 + $0x18] sm:$0xf]
  %v3401 = vld [vmem:[%s3393 + $0x1c] sm:$0xf]
  %v3402 = vld [vmem:[%s3393 + $0x20] sm:$0xf]
  %v3403 = vld [vmem:[%s3393 + $0x24] sm:$0xf]
  %v3404 = vld [vmem:[%s3393 + $0x28] sm:$0xf]
  %v3405 = vld [vmem:[%s3393 + $0x2c] sm:$0xf]
  %v3406 = vld [vmem:[%s3393 + $0x30] sm:$0xf]
  %v3407 = vld [vmem:[%s3393 + $0x34] sm:$0xf]
  %v3408 = vld [vmem:[%s3393 + $0x38] sm:$0xf]
  %v3409 = vld [vmem:[%s3393 + $0x3c] sm:$0xf]
  %v3426 = vunpack.c.l.b16 %v3394
  %v3427 = vunpack.c.l.b16 %v3395
  %v3428 = vunpack.c.l.b16 %v3396
  %v3429 = vunpack.c.l.b16 %v3397
  %v3430 = vunpack.c.l.b16 %v3398
  %v3431 = vunpack.c.l.b16 %v3399
  %v3432 = vunpack.c.l.b16 %v3400
  %v3433 = vunpack.c.l.b16 %v3401
  %v3434 = vunpack.c.l.b16 %v3402
  %v3435 = vunpack.c.l.b16 %v3403
  %v3436 = vunpack.c.l.b16 %v3404
  %v3437 = vunpack.c.l.b16 %v3405
  %v3438 = vunpack.c.l.b16 %v3406
  %v3439 = vunpack.c.l.b16 %v3407
  %v3440 = vunpack.c.l.b16 %v3408
  %v3441 = vunpack.c.l.b16 %v3409
  %v3442 = vpack.c.b16 %v3427, %v3426
  %v3443 = vpack.c.b16 %v3429, %v3428
  %v3444 = vpack.c.b16 %v3431, %v3430
  %v3445 = vpack.c.b16 %v3433, %v3432
  %v3446 = vpack.c.b16 %v3435, %v3434
  %v3447 = vpack.c.b16 %v3437, %v3436
  %v3448 = vpack.c.b16 %v3439, %v3438
  %v3449 = vpack.c.b16 %v3441, %v3440
  %3458 = vmatprep.subr.bf16.mxu0 0
  %3459 = vmatpush1.bf16.msra.mxu0 %v3449
  %3460 = vmatprep.subr.bf16.mxu0 0
  %3461 = vmatpush1.bf16.msra.mxu0 %v3448
  %3462 = vmatprep.subr.bf16.mxu0 0
  %3463 = vmatpush1.bf16.msra.mxu0 %v3447
  %3464 = vmatprep.subr.bf16.mxu0 0
  %3465 = vmatpush1.bf16.msra.mxu0 %v3446
  %3466 = vmatprep.subr.bf16.mxu0 0
  %3467 = vmatpush1.bf16.msra.mxu0 %v3445
  %3468 = vmatprep.subr.bf16.mxu0 0
  %3469 = vmatpush1.bf16.msra.mxu0 %v3444
  %3470 = vmatprep.subr.bf16.mxu0 0
  %3471 = vmatpush1.bf16.msra.mxu0 %v3443
  %3472 = vmatprep.subr.bf16.mxu0 0
  %3473 = vmatpush1.bf16.msra.mxu0 %v3442
  %3474 = vmatprep.subr.bf16.mxu0 0
  %3475 = vmatpush2.bf16.msra.mxu0 0
  %3476 = vmatprep.subr.bf16.mxu0 0
  %3477 = vmatpush2.bf16.msra.mxu0 0
  %3478 = vmatprep.subr.bf16.mxu0 0
  %3479 = vmatpush2.bf16.msra.mxu0 0
  %3480 = vmatprep.subr.bf16.mxu0 0
  %3481 = vmatpush2.bf16.msra.mxu0 0
  %3482 = vmatprep.subr.bf16.mxu0 0
  %3483 = vmatpush2.bf16.msra.mxu0 0
  %3484 = vmatprep.subr.bf16.mxu0 0
  %3485 = vmatpush2.bf16.msra.mxu0 0
  %3486 = vmatprep.subr.bf16.mxu0 0
  %3487 = vmatpush2.bf16.msra.mxu0 0
  %3488 = vmatprep.subr.bf16.mxu0 0
  %3489 = vmatpush2.bf16.msra.mxu0 0
  %3490 = vmatprep.mubr.bf16.mxu0 0
  %3491 = vmatmul.mubr.bf16.gmra.mxu0 %v3361
  %v3492 = vpop.f32.mrf.mxu0
  %v3493 = vadd.f32 0.0, %v3492
  %v3494 = vpop.f32.mrf.mxu0
  %v3495 = vpop.f32.mrf.mxu0
  %v3496 = vadd.f32 0.0, %v3495
  %v3497 = vpop.f32.mrf.mxu0
  %3498 = vmatprep.mubr.bf16.mxu0 0
  %3499 = vmatmul.mubr.bf16.gmra.mxu0 %v3362
  %v3500 = vpop.f32.mrf.mxu0
  %v3501 = vadd.f32 0.0, %v3500
  %v3502 = vpop.f32.mrf.mxu0
  %v3503 = vpop.f32.mrf.mxu0
  %v3504 = vadd.f32 0.0, %v3503
  %v3505 = vpop.f32.mrf.mxu0
  %3506 = vmatprep.mubr.bf16.mxu0 0
  %3507 = vmatmul.mubr.bf16.gmra.mxu0 %v3363
  %v3508 = vpop.f32.mrf.mxu0
  %v3509 = vadd.f32 0.0, %v3508
  %v3510 = vpop.f32.mrf.mxu0
  %v3511 = vpop.f32.mrf.mxu0
  %v3512 = vadd.f32 0.0, %v3511
  %v3513 = vpop.f32.mrf.mxu0
  %3514 = vmatprep.mubr.bf16.mxu0 0
  %3515 = vmatmul.mubr.bf16.gmra.mxu0 %v3364
  %v3516 = vpop.f32.mrf.mxu0
  %v3517 = vadd.f32 0.0, %v3516
  %v3518 = vpop.f32.mrf.mxu0
  %v3519 = vpop.f32.mrf.mxu0
  %v3520 = vadd.f32 0.0, %v3519
  %v3521 = vpop.f32.mrf.mxu0
  %3522 = vmatprep.mubr.bf16.mxu0 0
  %3523 = vmatmul.mubr.bf16.gmra.mxu0 %v3365
  %v3524 = vpop.f32.mrf.mxu0
  %v3525 = vadd.f32 0.0, %v3524
  %v3526 = vpop.f32.mrf.mxu0
  %v3527 = vpop.f32.mrf.mxu0
  %v3528 = vadd.f32 0.0, %v3527
  %v3529 = vpop.f32.mrf.mxu0
  %3530 = vmatprep.mubr.bf16.mxu0 0
  %3531 = vmatmul.mubr.bf16.gmra.mxu0 %v3366
  %v3532 = vpop.f32.mrf.mxu0
  %v3533 = vadd.f32 0.0, %v3532
  %v3534 = vpop.f32.mrf.mxu0
  %v3535 = vpop.f32.mrf.mxu0
  %v3536 = vadd.f32 0.0, %v3535
  %v3537 = vpop.f32.mrf.mxu0
  %3538 = vmatprep.mubr.bf16.mxu0 0
  %3539 = vmatmul.mubr.bf16.gmra.mxu0 %v3367
  %v3540 = vpop.f32.mrf.mxu0
  %v3541 = vadd.f32 0.0, %v3540
  %v3542 = vpop.f32.mrf.mxu0
  %v3543 = vpop.f32.mrf.mxu0
  %v3544 = vadd.f32 0.0, %v3543
  %v3545 = vpop.f32.mrf.mxu0
  %3546 = vmatprep.mubr.bf16.mxu0 0
  %3547 = vmatmul.mubr.bf16.gmra.mxu0 %v3368
  %v3548 = vpop.f32.mrf.mxu0
  %v3549 = vadd.f32 0.0, %v3548
  %v3550 = vpop.f32.mrf.mxu0
  %v3551 = vpop.f32.mrf.mxu0
  %v3552 = vadd.f32 0.0, %v3551
  %v3553 = vpop.f32.mrf.mxu0
  %3554 = vmatprep.mubr.bf16.mxu0 0
  %3555 = vmatmul.mubr.bf16.gmra.mxu0 %v3369
  %v3556 = vpop.f32.mrf.mxu0
  %v3557 = vadd.f32 0.0, %v3556
  %v3558 = vpop.f32.mrf.mxu0
  %v3559 = vpop.f32.mrf.mxu0
  %v3560 = vadd.f32 0.0, %v3559
  %v3561 = vpop.f32.mrf.mxu0
  %3562 = vmatprep.mubr.bf16.mxu0 0
  %3563 = vmatmul.mubr.bf16.gmra.mxu0 %v3370
  %v3564 = vpop.f32.mrf.mxu0
  %v3565 = vadd.f32 0.0, %v3564
  %v3566 = vpop.f32.mrf.mxu0
  %v3567 = vpop.f32.mrf.mxu0
  %v3568 = vadd.f32 0.0, %v3567
  %v3569 = vpop.f32.mrf.mxu0
  %3570 = vmatprep.mubr.bf16.mxu0 0
  %3571 = vmatmul.mubr.bf16.gmra.mxu0 %v3371
  %v3572 = vpop.f32.mrf.mxu0
  %v3573 = vadd.f32 0.0, %v3572
  %v3574 = vpop.f32.mrf.mxu0
  %v3575 = vpop.f32.mrf.mxu0
  %v3576 = vadd.f32 0.0, %v3575
  %v3577 = vpop.f32.mrf.mxu0
  %3578 = vmatprep.mubr.bf16.mxu0 0
  %3579 = vmatmul.mubr.bf16.gmra.mxu0 %v3372
  %v3580 = vpop.f32.mrf.mxu0
  %v3581 = vadd.f32 0.0, %v3580
  %v3582 = vpop.f32.mrf.mxu0
  %v3583 = vpop.f32.mrf.mxu0
  %v3584 = vadd.f32 0.0, %v3583
  %v3585 = vpop.f32.mrf.mxu0
  %3586 = vmatprep.mubr.bf16.mxu0 0
  %3587 = vmatmul.mubr.bf16.gmra.mxu0 %v3373
  %v3588 = vpop.f32.mrf.mxu0
  %v3589 = vadd.f32 0.0, %v3588
  %v3590 = vpop.f32.mrf.mxu0
  %v3591 = vpop.f32.mrf.mxu0
  %v3592 = vadd.f32 0.0, %v3591
  %v3593 = vpop.f32.mrf.mxu0
  %3594 = vmatprep.mubr.bf16.mxu0 0
  %3595 = vmatmul.mubr.bf16.gmra.mxu0 %v3374
  %v3596 = vpop.f32.mrf.mxu0
  %v3597 = vadd.f32 0.0, %v3596
  %v3598 = vpop.f32.mrf.mxu0
  %v3599 = vpop.f32.mrf.mxu0
  %v3600 = vadd.f32 0.0, %v3599
  %v3601 = vpop.f32.mrf.mxu0
  %3602 = vmatprep.mubr.bf16.mxu0 0
  %3603 = vmatmul.mubr.bf16.gmra.mxu0 %v3375
  %v3604 = vpop.f32.mrf.mxu0
  %v3605 = vadd.f32 0.0, %v3604
  %v3606 = vpop.f32.mrf.mxu0
  %v3607 = vpop.f32.mrf.mxu0
  %v3608 = vadd.f32 0.0, %v3607
  %v3609 = vpop.f32.mrf.mxu0
  %3610 = vmatprep.mubr.bf16.mxu0 0
  %3611 = vmatmul.mubr.bf16.gmra.mxu0 %v3376
  %v3612 = vpop.f32.mrf.mxu0
  %v3613 = vadd.f32 0.0, %v3612
  %v3614 = vpop.f32.mrf.mxu0
  %v3615 = vpop.f32.mrf.mxu0
  %v3616 = vadd.f32 0.0, %v3615
  %v3617 = vpop.f32.mrf.mxu0
  %3618 = vmatprep.mubr.bf16.mxu0 0
  %3619 = vmatmul.mubr.bf16.gmra.mxu0 %v3377
  %v3620 = vpop.f32.mrf.mxu0
  %v3621 = vadd.f32 0.0, %v3620
  %v3622 = vpop.f32.mrf.mxu0
  %v3623 = vpop.f32.mrf.mxu0
  %v3624 = vadd.f32 0.0, %v3623
  %v3625 = vpop.f32.mrf.mxu0
  %3626 = vmatprep.mubr.bf16.mxu0 0
  %3627 = vmatmul.mubr.bf16.gmra.mxu0 %v3378
  %v3628 = vpop.f32.mrf.mxu0
  %v3629 = vadd.f32 0.0, %v3628
  %v3630 = vpop.f32.mrf.mxu0
  %v3631 = vpop.f32.mrf.mxu0
  %v3632 = vadd.f32 0.0, %v3631
  %v3633 = vpop.f32.mrf.mxu0
  %3634 = vmatprep.mubr.bf16.mxu0 0
  %3635 = vmatmul.mubr.bf16.gmra.mxu0 %v3379
  %v3636 = vpop.f32.mrf.mxu0
  %v3637 = vadd.f32 0.0, %v3636
  %v3638 = vpop.f32.mrf.mxu0
  %v3639 = vpop.f32.mrf.mxu0
  %v3640 = vadd.f32 0.0, %v3639
  %v3641 = vpop.f32.mrf.mxu0
  %3642 = vmatprep.mubr.bf16.mxu0 0
  %3643 = vmatmul.mubr.bf16.gmra.mxu0 %v3380
  %v3644 = vpop.f32.mrf.mxu0
  %v3645 = vadd.f32 0.0, %v3644
  %v3646 = vpop.f32.mrf.mxu0
  %v3647 = vpop.f32.mrf.mxu0
  %v3648 = vadd.f32 0.0, %v3647
  %v3649 = vpop.f32.mrf.mxu0
  %3650 = vmatprep.mubr.bf16.mxu0 0
  %3651 = vmatmul.mubr.bf16.gmra.mxu0 %v3381
  %v3652 = vpop.f32.mrf.mxu0
  %v3653 = vadd.f32 0.0, %v3652
  %v3654 = vpop.f32.mrf.mxu0
  %v3655 = vpop.f32.mrf.mxu0
  %v3656 = vadd.f32 0.0, %v3655
  %v3657 = vpop.f32.mrf.mxu0
  %3658 = vmatprep.mubr.bf16.mxu0 0
  %3659 = vmatmul.mubr.bf16.gmra.mxu0 %v3382
  %v3660 = vpop.f32.mrf.mxu0
  %v3661 = vadd.f32 0.0, %v3660
  %v3662 = vpop.f32.mrf.mxu0
  %v3663 = vpop.f32.mrf.mxu0
  %v3664 = vadd.f32 0.0, %v3663
  %v3665 = vpop.f32.mrf.mxu0
  %3666 = vmatprep.mubr.bf16.mxu0 0
  %3667 = vmatmul.mubr.bf16.gmra.mxu0 %v3383
  %v3668 = vpop.f32.mrf.mxu0
  %v3669 = vadd.f32 0.0, %v3668
  %v3670 = vpop.f32.mrf.mxu0
  %v3671 = vpop.f32.mrf.mxu0
  %v3672 = vadd.f32 0.0, %v3671
  %v3673 = vpop.f32.mrf.mxu0
  %3674 = vmatprep.mubr.bf16.mxu0 0
  %3675 = vmatmul.mubr.bf16.gmra.mxu0 %v3384
  %v3676 = vpop.f32.mrf.mxu0
  %v3677 = vadd.f32 0.0, %v3676
  %v3678 = vpop.f32.mrf.mxu0
  %v3679 = vpop.f32.mrf.mxu0
  %v3680 = vadd.f32 0.0, %v3679
  %v3681 = vpop.f32.mrf.mxu0
  %3682 = vmatprep.mubr.bf16.mxu0 0
  %3683 = vmatmul.mubr.bf16.gmra.mxu0 %v3385
  %v3684 = vpop.f32.mrf.mxu0
  %v3685 = vadd.f32 0.0, %v3684
  %v3686 = vpop.f32.mrf.mxu0
  %v3687 = vpop.f32.mrf.mxu0
  %v3688 = vadd.f32 0.0, %v3687
  %v3689 = vpop.f32.mrf.mxu0
  %3690 = vmatprep.mubr.bf16.mxu0 0
  %3691 = vmatmul.mubr.bf16.gmra.mxu0 %v3386
  %v3692 = vpop.f32.mrf.mxu0
  %v3693 = vadd.f32 0.0, %v3692
  %v3694 = vpop.f32.mrf.mxu0
  %v3695 = vpop.f32.mrf.mxu0
  %v3696 = vadd.f32 0.0, %v3695
  %v3697 = vpop.f32.mrf.mxu0
  %3698 = vmatprep.mubr.bf16.mxu0 0
  %3699 = vmatmul.mubr.bf16.gmra.mxu0 %v3387
  %v3700 = vpop.f32.mrf.mxu0
  %v3701 = vadd.f32 0.0, %v3700
  %v3702 = vpop.f32.mrf.mxu0
  %v3703 = vpop.f32.mrf.mxu0
  %v3704 = vadd.f32 0.0, %v3703
  %v3705 = vpop.f32.mrf.mxu0
  %3706 = vmatprep.mubr.bf16.mxu0 0
  %3707 = vmatmul.mubr.bf16.gmra.mxu0 %v3388
  %v3708 = vpop.f32.mrf.mxu0
  %v3709 = vadd.f32 0.0, %v3708
  %v3710 = vpop.f32.mrf.mxu0
  %v3711 = vpop.f32.mrf.mxu0
  %v3712 = vadd.f32 0.0, %v3711
  %v3713 = vpop.f32.mrf.mxu0
  %3714 = vmatprep.mubr.bf16.mxu0 0
  %3715 = vmatmul.mubr.bf16.gmra.mxu0 %v3389
  %v3716 = vpop.f32.mrf.mxu0
  %v3717 = vadd.f32 0.0, %v3716
  %v3718 = vpop.f32.mrf.mxu0
  %v3719 = vpop.f32.mrf.mxu0
  %v3720 = vadd.f32 0.0, %v3719
  %v3721 = vpop.f32.mrf.mxu0
  %3722 = vmatprep.mubr.bf16.mxu0 0
  %3723 = vmatmul.mubr.bf16.gmra.mxu0 %v3390
  %v3724 = vpop.f32.mrf.mxu0
  %v3725 = vadd.f32 0.0, %v3724
  %v3726 = vpop.f32.mrf.mxu0
  %v3727 = vpop.f32.mrf.mxu0
  %v3728 = vadd.f32 0.0, %v3727
  %v3729 = vpop.f32.mrf.mxu0
  %3730 = vmatprep.mubr.bf16.mxu0 0
  %3731 = vmatmul.mubr.bf16.gmra.mxu0 %v3391
  %v3732 = vpop.f32.mrf.mxu0
  %v3733 = vadd.f32 0.0, %v3732
  %v3734 = vpop.f32.mrf.mxu0
  %v3735 = vpop.f32.mrf.mxu0
  %v3736 = vadd.f32 0.0, %v3735
  %v3737 = vpop.f32.mrf.mxu0
  %3738 = vmatprep.mubr.bf16.mxu0 0
  %3739 = vmatmul.mubr.bf16.gmra.mxu0 %v3392
  %v3740 = vpop.f32.mrf.mxu0
  %v3741 = vadd.f32 0.0, %v3740
  %v3742 = vpop.f32.mrf.mxu0
  %v3743 = vpop.f32.mrf.mxu0
  %v3744 = vadd.f32 0.0, %v3743
  %v3745 = vpop.f32.mrf.mxu0
  %3746 = vdwg.mxu0
  %v3747 = vadd.f32 %v3297, %v3493
  %v3748 = vadd.f32 %v3298, %v3496
  %v3749 = vadd.f32 %v3299, %v3501
  %v3750 = vadd.f32 %v3300, %v3504
  %v3751 = vadd.f32 %v3301, %v3509
  %v3752 = vadd.f32 %v3302, %v3512
  %v3753 = vadd.f32 %v3303, %v3517
  %v3754 = vadd.f32 %v3304, %v3520
  %v3755 = vadd.f32 %v3305, %v3525
  %v3756 = vadd.f32 %v3306, %v3528
  %v3757 = vadd.f32 %v3307, %v3533
  %v3758 = vadd.f32 %v3308, %v3536
  %v3759 = vadd.f32 %v3309, %v3541
  %v3760 = vadd.f32 %v3310, %v3544
  %v3761 = vadd.f32 %v3311, %v3549
  %v3762 = vadd.f32 %v3312, %v3552
  %v3763 = vadd.f32 %v3313, %v3557
  %v3764 = vadd.f32 %v3314, %v3560
  %v3765 = vadd.f32 %v3315, %v3565
  %v3766 = vadd.f32 %v3316, %v3568
  %v3767 = vadd.f32 %v3317, %v3573
  %v3768 = vadd.f32 %v3318, %v3576
  %v3769 = vadd.f32 %v3319, %v3581
  %v3770 = vadd.f32 %v3320, %v3584
  %v3771 = vadd.f32 %v3321, %v3589
  %v3772 = vadd.f32 %v3322, %v3592
  %v3773 = vadd.f32 %v3323, %v3597
  %v3774 = vadd.f32 %v3324, %v3600
  %v3775 = vadd.f32 %v3325, %v3605
  %v3776 = vadd.f32 %v3326, %v3608
  %v3777 = vadd.f32 %v3327, %v3613
  %v3778 = vadd.f32 %v3328, %v3616
  %v3779 = vadd.f32 %v3329, %v3621
  %v3780 = vadd.f32 %v3330, %v3624
  %v3781 = vadd.f32 %v3331, %v3629
  %v3782 = vadd.f32 %v3332, %v3632
  %v3783 = vadd.f32 %v3333, %v3637
  %v3784 = vadd.f32 %v3334, %v3640
  %v3785 = vadd.f32 %v3335, %v3645
  %v3786 = vadd.f32 %v3336, %v3648
  %v3787 = vadd.f32 %v3337, %v3653
  %v3788 = vadd.f32 %v3338, %v3656
  %v3789 = vadd.f32 %v3339, %v3661
  %v3790 = vadd.f32 %v3340, %v3664
  %v3791 = vadd.f32 %v3341, %v3669
  %v3792 = vadd.f32 %v3342, %v3672
  %v3793 = vadd.f32 %v3343, %v3677
  %v3794 = vadd.f32 %v3344, %v3680
  %v3795 = vadd.f32 %v3345, %v3685
  %v3796 = vadd.f32 %v3346, %v3688
  %v3797 = vadd.f32 %v3347, %v3693
  %v3798 = vadd.f32 %v3348, %v3696
  %v3799 = vadd.f32 %v3349, %v3701
  %v3800 = vadd.f32 %v3350, %v3704
  %v3801 = vadd.f32 %v3351, %v3709
  %v3802 = vadd.f32 %v3352, %v3712
  %v3803 = vadd.f32 %v3353, %v3717
  %v3804 = vadd.f32 %v3354, %v3720
  %v3805 = vadd.f32 %v3355, %v3725
  %v3806 = vadd.f32 %v3356, %v3728
  %v3807 = vadd.f32 %v3357, %v3733
  %v3808 = vadd.f32 %v3358, %v3736
  %v3809 = vadd.f32 %v3359, %v3741
  %v3810 = vadd.f32 %v3360, %v3744
  %v3811 = vrot.slane %v2655, 1
  %v3812 = vrot.slane %v2657, 1
  %v3813 = vrot.slane %v2659, 1
  %v3814 = vrot.slane %v2661, 1
  %v3815 = vrot.slane %v2663, 1
  %v3816 = vrot.slane %v2665, 1
  %v3817 = vrot.slane %v2667, 1
  %v3818 = vrot.slane %v2669, 1
  %v3819 = vrot.slane %v2671, 1
  %v3820 = vrot.slane %v2673, 1
  %v3821 = vrot.slane %v2675, 1
  %v3822 = vrot.slane %v2677, 1
  %v3823 = vrot.slane %v2679, 1
  %v3824 = vrot.slane %v2681, 1
  %v3825 = vrot.slane %v2683, 1
  %v3826 = vrot.slane %v2685, 1
  %v3827 = vrot.slane %v2687, 1
  %v3828 = vrot.slane %v2689, 1
  %v3829 = vrot.slane %v2691, 1
  %v3830 = vrot.slane %v2693, 1
  %v3831 = vrot.slane %v2695, 1
  %v3832 = vrot.slane %v2697, 1
  %v3833 = vrot.slane %v2699, 1
  %v3834 = vrot.slane %v2701, 1
  %v3835 = vrot.slane %v2703, 1
  %v3836 = vrot.slane %v2705, 1
  %v3837 = vrot.slane %v2707, 1
  %v3838 = vrot.slane %v2709, 1
  %v3839 = vrot.slane %v2711, 1
  %v3840 = vrot.slane %v2713, 1
  %v3841 = vrot.slane %v2715, 1
  %v3842 = vrot.slane %v2717, 1
  %v3843 = vrot.slane %v2656, 1
  %v3844 = vrot.slane %v2658, 1
  %v3845 = vrot.slane %v2660, 1
  %v3846 = vrot.slane %v2662, 1
  %v3847 = vrot.slane %v2664, 1
  %v3848 = vrot.slane %v2666, 1
  %v3849 = vrot.slane %v2668, 1
  %v3850 = vrot.slane %v2670, 1
  %v3851 = vrot.slane %v2672, 1
  %v3852 = vrot.slane %v2674, 1
  %v3853 = vrot.slane %v2676, 1
  %v3854 = vrot.slane %v2678, 1
  %v3855 = vrot.slane %v2680, 1
  %v3856 = vrot.slane %v2682, 1
  %v3857 = vrot.slane %v2684, 1
  %v3858 = vrot.slane %v2686, 1
  %v3859 = vrot.slane %v2688, 1
  %v3860 = vrot.slane %v2690, 1
  %v3861 = vrot.slane %v2692, 1
  %v3862 = vrot.slane %v2694, 1
  %v3863 = vrot.slane %v2696, 1
  %v3864 = vrot.slane %v2698, 1
  %v3865 = vrot.slane %v2700, 1
  %v3866 = vrot.slane %v2702, 1
  %v3867 = vrot.slane %v2704, 1
  %v3868 = vrot.slane %v2706, 1
  %v3869 = vrot.slane %v2708, 1
  %v3870 = vrot.slane %v2710, 1
  %v3871 = vrot.slane %v2712, 1
  %v3872 = vrot.slane %v2714, 1
  %v3873 = vrot.slane %v2716, 1
  %v3874 = vrot.slane %v2718, 1
  %v3875 = vsel %vm2076, %v3811, %v3843
  %v3876 = vsel %vm2076, %v3812, %v3844
  %v3877 = vsel %vm2076, %v3813, %v3845
  %v3878 = vsel %vm2076, %v3814, %v3846
  %v3879 = vsel %vm2076, %v3815, %v3847
  %v3880 = vsel %vm2076, %v3816, %v3848
  %v3881 = vsel %vm2076, %v3817, %v3849
  %v3882 = vsel %vm2076, %v3818, %v3850
  %v3883 = vsel %vm2076, %v3819, %v3851
  %v3884 = vsel %vm2076, %v3820, %v3852
  %v3885 = vsel %vm2076, %v3821, %v3853
  %v3886 = vsel %vm2076, %v3822, %v3854
  %v3887 = vsel %vm2076, %v3823, %v3855
  %v3888 = vsel %vm2076, %v3824, %v3856
  %v3889 = vsel %vm2076, %v3825, %v3857
  %v3890 = vsel %vm2076, %v3826, %v3858
  %v3891 = vsel %vm2076, %v3827, %v3859
  %v3892 = vsel %vm2076, %v3828, %v3860
  %v3893 = vsel %vm2076, %v3829, %v3861
  %v3894 = vsel %vm2076, %v3830, %v3862
  %v3895 = vsel %vm2076, %v3831, %v3863
  %v3896 = vsel %vm2076, %v3832, %v3864
  %v3897 = vsel %vm2076, %v3833, %v3865
  %v3898 = vsel %vm2076, %v3834, %v3866
  %v3899 = vsel %vm2076, %v3835, %v3867
  %v3900 = vsel %vm2076, %v3836, %v3868
  %v3901 = vsel %vm2076, %v3837, %v3869
  %v3902 = vsel %vm2076, %v3838, %v3870
  %v3903 = vsel %vm2076, %v3839, %v3871
  %v3904 = vsel %vm2076, %v3840, %v3872
  %v3905 = vsel %vm2076, %v3841, %v3873
  %v3906 = vsel %vm2076, %v3842, %v3874
  %v3907 = vsel %vm2076, %v3843, %v3811
  %v3908 = vsel %vm2076, %v3844, %v3812
  %v3909 = vsel %vm2076, %v3845, %v3813
  %v3910 = vsel %vm2076, %v3846, %v3814
  %v3911 = vsel %vm2076, %v3847, %v3815
  %v3912 = vsel %vm2076, %v3848, %v3816
  %v3913 = vsel %vm2076, %v3849, %v3817
  %v3914 = vsel %vm2076, %v3850, %v3818
  %v3915 = vsel %vm2076, %v3851, %v3819
  %v3916 = vsel %vm2076, %v3852, %v3820
  %v3917 = vsel %vm2076, %v3853, %v3821
  %v3918 = vsel %vm2076, %v3854, %v3822
  %v3919 = vsel %vm2076, %v3855, %v3823
  %v3920 = vsel %vm2076, %v3856, %v3824
  %v3921 = vsel %vm2076, %v3857, %v3825
  %v3922 = vsel %vm2076, %v3858, %v3826
  %v3923 = vsel %vm2076, %v3859, %v3827
  %v3924 = vsel %vm2076, %v3860, %v3828
  %v3925 = vsel %vm2076, %v3861, %v3829
  %v3926 = vsel %vm2076, %v3862, %v3830
  %v3927 = vsel %vm2076, %v3863, %v3831
  %v3928 = vsel %vm2076, %v3864, %v3832
  %v3929 = vsel %vm2076, %v3865, %v3833
  %v3930 = vsel %vm2076, %v3866, %v3834
  %v3931 = vsel %vm2076, %v3867, %v3835
  %v3932 = vsel %vm2076, %v3868, %v3836
  %v3933 = vsel %vm2076, %v3869, %v3837
  %v3934 = vsel %vm2076, %v3870, %v3838
  %v3935 = vsel %vm2076, %v3871, %v3839
  %v3936 = vsel %vm2076, %v3872, %v3840
  %v3937 = vsel %vm2076, %v3873, %v3841
  %v3938 = vsel %vm2076, %v3874, %v3842
  %v3939 = vsel %vm982, %v3875, 0.0
  %v3940 = vsel %vm983, %v3907, 0.0
  %v3941 = vsel %vm982, %v3876, 0.0
  %v3942 = vsel %vm983, %v3908, 0.0
  %v3943 = vsel %vm982, %v3877, 0.0
  %v3944 = vsel %vm983, %v3909, 0.0
  %v3945 = vsel %vm982, %v3878, 0.0
  %v3946 = vsel %vm983, %v3910, 0.0
  %v3947 = vsel %vm982, %v3879, 0.0
  %v3948 = vsel %vm983, %v3911, 0.0
  %v3949 = vsel %vm982, %v3880, 0.0
  %v3950 = vsel %vm983, %v3912, 0.0
  %v3951 = vsel %vm982, %v3881, 0.0
  %v3952 = vsel %vm983, %v3913, 0.0
  %v3953 = vsel %vm982, %v3882, 0.0
  %v3954 = vsel %vm983, %v3914, 0.0
  %v3955 = vsel %vm982, %v3883, 0.0
  %v3956 = vsel %vm983, %v3915, 0.0
  %v3957 = vsel %vm982, %v3884, 0.0
  %v3958 = vsel %vm983, %v3916, 0.0
  %v3959 = vsel %vm982, %v3885, 0.0
  %v3960 = vsel %vm983, %v3917, 0.0
  %v3961 = vsel %vm982, %v3886, 0.0
  %v3962 = vsel %vm983, %v3918, 0.0
  %v3963 = vsel %vm982, %v3887, 0.0
  %v3964 = vsel %vm983, %v3919, 0.0
  %v3965 = vsel %vm982, %v3888, 0.0
  %v3966 = vsel %vm983, %v3920, 0.0
  %v3967 = vsel %vm982, %v3889, 0.0
  %v3968 = vsel %vm983, %v3921, 0.0
  %v3969 = vsel %vm982, %v3890, 0.0
  %v3970 = vsel %vm983, %v3922, 0.0
  %v3971 = vsel %vm982, %v3891, 0.0
  %v3972 = vsel %vm983, %v3923, 0.0
  %v3973 = vsel %vm982, %v3892, 0.0
  %v3974 = vsel %vm983, %v3924, 0.0
  %v3975 = vsel %vm982, %v3893, 0.0
  %v3976 = vsel %vm983, %v3925, 0.0
  %v3977 = vsel %vm982, %v3894, 0.0
  %v3978 = vsel %vm983, %v3926, 0.0
  %v3979 = vsel %vm982, %v3895, 0.0
  %v3980 = vsel %vm983, %v3927, 0.0
  %v3981 = vsel %vm982, %v3896, 0.0
  %v3982 = vsel %vm983, %v3928, 0.0
  %v3983 = vsel %vm982, %v3897, 0.0
  %v3984 = vsel %vm983, %v3929, 0.0
  %v3985 = vsel %vm982, %v3898, 0.0
  %v3986 = vsel %vm983, %v3930, 0.0
  %v3987 = vsel %vm982, %v3899, 0.0
  %v3988 = vsel %vm983, %v3931, 0.0
  %v3989 = vsel %vm982, %v3900, 0.0
  %v3990 = vsel %vm983, %v3932, 0.0
  %v3991 = vsel %vm982, %v3901, 0.0
  %v3992 = vsel %vm983, %v3933, 0.0
  %v3993 = vsel %vm982, %v3902, 0.0
  %v3994 = vsel %vm983, %v3934, 0.0
  %v3995 = vsel %vm982, %v3903, 0.0
  %v3996 = vsel %vm983, %v3935, 0.0
  %v3997 = vsel %vm982, %v3904, 0.0
  %v3998 = vsel %vm983, %v3936, 0.0
  %v3999 = vsel %vm982, %v3905, 0.0
  %v4000 = vsel %vm983, %v3937, 0.0
  %v4001 = vsel %vm982, %v3906, 0.0
  %v4002 = vsel %vm983, %v3938, 0.0
  %v4003 = vpack.c.bf16 %v3940, %v3939
  %v4004 = vpack.c.bf16 %v3942, %v3941
  %v4005 = vpack.c.bf16 %v3944, %v3943
  %v4006 = vpack.c.bf16 %v3946, %v3945
  %v4007 = vpack.c.bf16 %v3948, %v3947
  %v4008 = vpack.c.bf16 %v3950, %v3949
  %v4009 = vpack.c.bf16 %v3952, %v3951
  %v4010 = vpack.c.bf16 %v3954, %v3953
  %v4011 = vpack.c.bf16 %v3956, %v3955
  %v4012 = vpack.c.bf16 %v3958, %v3957
  %v4013 = vpack.c.bf16 %v3960, %v3959
  %v4014 = vpack.c.bf16 %v3962, %v3961
  %v4015 = vpack.c.bf16 %v3964, %v3963
  %v4016 = vpack.c.bf16 %v3966, %v3965
  %v4017 = vpack.c.bf16 %v3968, %v3967
  %v4018 = vpack.c.bf16 %v3970, %v3969
  %v4019 = vpack.c.bf16 %v3972, %v3971
  %v4020 = vpack.c.bf16 %v3974, %v3973
  %v4021 = vpack.c.bf16 %v3976, %v3975
  %v4022 = vpack.c.bf16 %v3978, %v3977
  %v4023 = vpack.c.bf16 %v3980, %v3979
  %v4024 = vpack.c.bf16 %v3982, %v3981
  %v4025 = vpack.c.bf16 %v3984, %v3983
  %v4026 = vpack.c.bf16 %v3986, %v3985
  %v4027 = vpack.c.bf16 %v3988, %v3987
  %v4028 = vpack.c.bf16 %v3990, %v3989
  %v4029 = vpack.c.bf16 %v3992, %v3991
  %v4030 = vpack.c.bf16 %v3994, %v3993
  %v4031 = vpack.c.bf16 %v3996, %v3995
  %v4032 = vpack.c.bf16 %v3998, %v3997
  %v4033 = vpack.c.bf16 %v4000, %v3999
  %v4034 = vpack.c.bf16 %v4002, %v4001
  %s4035 = scalar_lea.vmem %s4, 320
  %v4036 = vld [vmem:[%s4035] sm:$0xf]
  %v4037 = vld [vmem:[%s4035 + $0x4] sm:$0xf]
  %v4038 = vld [vmem:[%s4035 + $0x8] sm:$0xf]
  %v4039 = vld [vmem:[%s4035 + $0xc] sm:$0xf]
  %v4040 = vld [vmem:[%s4035 + $0x10] sm:$0xf]
  %v4041 = vld [vmem:[%s4035 + $0x14] sm:$0xf]
  %v4042 = vld [vmem:[%s4035 + $0x18] sm:$0xf]
  %v4043 = vld [vmem:[%s4035 + $0x1c] sm:$0xf]
  %v4044 = vld [vmem:[%s4035 + $0x20] sm:$0xf]
  %v4045 = vld [vmem:[%s4035 + $0x24] sm:$0xf]
  %v4046 = vld [vmem:[%s4035 + $0x28] sm:$0xf]
  %v4047 = vld [vmem:[%s4035 + $0x2c] sm:$0xf]
  %v4048 = vld [vmem:[%s4035 + $0x30] sm:$0xf]
  %v4049 = vld [vmem:[%s4035 + $0x34] sm:$0xf]
  %v4050 = vld [vmem:[%s4035 + $0x38] sm:$0xf]
  %v4051 = vld [vmem:[%s4035 + $0x3c] sm:$0xf]
  %v4068 = vunpack.c.l.b16 %v4036
  %v4069 = vunpack.c.l.b16 %v4037
  %v4070 = vunpack.c.l.b16 %v4038
  %v4071 = vunpack.c.l.b16 %v4039
  %v4072 = vunpack.c.l.b16 %v4040
  %v4073 = vunpack.c.l.b16 %v4041
  %v4074 = vunpack.c.l.b16 %v4042
  %v4075 = vunpack.c.l.b16 %v4043
  %v4076 = vunpack.c.l.b16 %v4044
  %v4077 = vunpack.c.l.b16 %v4045
  %v4078 = vunpack.c.l.b16 %v4046
  %v4079 = vunpack.c.l.b16 %v4047
  %v4080 = vunpack.c.l.b16 %v4048
  %v4081 = vunpack.c.l.b16 %v4049
  %v4082 = vunpack.c.l.b16 %v4050
  %v4083 = vunpack.c.l.b16 %v4051
  %v4084 = vpack.c.b16 %v4069, %v4068
  %v4085 = vpack.c.b16 %v4071, %v4070
  %v4086 = vpack.c.b16 %v4073, %v4072
  %v4087 = vpack.c.b16 %v4075, %v4074
  %v4088 = vpack.c.b16 %v4077, %v4076
  %v4089 = vpack.c.b16 %v4079, %v4078
  %v4090 = vpack.c.b16 %v4081, %v4080
  %v4091 = vpack.c.b16 %v4083, %v4082
  %4100 = vmatprep.subr.bf16.mxu0 0
  %4101 = vmatpush1.bf16.msra.mxu0 %v4091
  %4102 = vmatprep.subr.bf16.mxu0 0
  %4103 = vmatpush1.bf16.msra.mxu0 %v4090
  %4104 = vmatprep.subr.bf16.mxu0 0
  %4105 = vmatpush1.bf16.msra.mxu0 %v4089
  %4106 = vmatprep.subr.bf16.mxu0 0
  %4107 = vmatpush1.bf16.msra.mxu0 %v4088
  %4108 = vmatprep.subr.bf16.mxu0 0
  %4109 = vmatpush1.bf16.msra.mxu0 %v4087
  %4110 = vmatprep.subr.bf16.mxu0 0
  %4111 = vmatpush1.bf16.msra.mxu0 %v4086
  %4112 = vmatprep.subr.bf16.mxu0 0
  %4113 = vmatpush1.bf16.msra.mxu0 %v4085
  %4114 = vmatprep.subr.bf16.mxu0 0
  %4115 = vmatpush1.bf16.msra.mxu0 %v4084
  %4116 = vmatprep.subr.bf16.mxu0 0
  %4117 = vmatpush2.bf16.msra.mxu0 0
  %4118 = vmatprep.subr.bf16.mxu0 0
  %4119 = vmatpush2.bf16.msra.mxu0 0
  %4120 = vmatprep.subr.bf16.mxu0 0
  %4121 = vmatpush2.bf16.msra.mxu0 0
  %4122 = vmatprep.subr.bf16.mxu0 0
  %4123 = vmatpush2.bf16.msra.mxu0 0
  %4124 = vmatprep.subr.bf16.mxu0 0
  %4125 = vmatpush2.bf16.msra.mxu0 0
  %4126 = vmatprep.subr.bf16.mxu0 0
  %4127 = vmatpush2.bf16.msra.mxu0 0
  %4128 = vmatprep.subr.bf16.mxu0 0
  %4129 = vmatpush2.bf16.msra.mxu0 0
  %4130 = vmatprep.subr.bf16.mxu0 0
  %4131 = vmatpush2.bf16.msra.mxu0 0
  %4132 = vmatprep.mubr.bf16.mxu0 0
  %4133 = vmatmul.mubr.bf16.gmra.mxu0 %v4003
  %v4134 = vpop.f32.mrf.mxu0
  %v4135 = vadd.f32 0.0, %v4134
  %v4136 = vpop.f32.mrf.mxu0
  %v4137 = vpop.f32.mrf.mxu0
  %v4138 = vadd.f32 0.0, %v4137
  %v4139 = vpop.f32.mrf.mxu0
  %4140 = vmatprep.mubr.bf16.mxu0 0
  %4141 = vmatmul.mubr.bf16.gmra.mxu0 %v4004
  %v4142 = vpop.f32.mrf.mxu0
  %v4143 = vadd.f32 0.0, %v4142
  %v4144 = vpop.f32.mrf.mxu0
  %v4145 = vpop.f32.mrf.mxu0
  %v4146 = vadd.f32 0.0, %v4145
  %v4147 = vpop.f32.mrf.mxu0
  %4148 = vmatprep.mubr.bf16.mxu0 0
  %4149 = vmatmul.mubr.bf16.gmra.mxu0 %v4005
  %v4150 = vpop.f32.mrf.mxu0
  %v4151 = vadd.f32 0.0, %v4150
  %v4152 = vpop.f32.mrf.mxu0
  %v4153 = vpop.f32.mrf.mxu0
  %v4154 = vadd.f32 0.0, %v4153
  %v4155 = vpop.f32.mrf.mxu0
  %4156 = vmatprep.mubr.bf16.mxu0 0
  %4157 = vmatmul.mubr.bf16.gmra.mxu0 %v4006
  %v4158 = vpop.f32.mrf.mxu0
  %v4159 = vadd.f32 0.0, %v4158
  %v4160 = vpop.f32.mrf.mxu0
  %v4161 = vpop.f32.mrf.mxu0
  %v4162 = vadd.f32 0.0, %v4161
  %v4163 = vpop.f32.mrf.mxu0
  %4164 = vmatprep.mubr.bf16.mxu0 0
  %4165 = vmatmul.mubr.bf16.gmra.mxu0 %v4007
  %v4166 = vpop.f32.mrf.mxu0
  %v4167 = vadd.f32 0.0, %v4166
  %v4168 = vpop.f32.mrf.mxu0
  %v4169 = vpop.f32.mrf.mxu0
  %v4170 = vadd.f32 0.0, %v4169
  %v4171 = vpop.f32.mrf.mxu0
  %4172 = vmatprep.mubr.bf16.mxu0 0
  %4173 = vmatmul.mubr.bf16.gmra.mxu0 %v4008
  %v4174 = vpop.f32.mrf.mxu0
  %v4175 = vadd.f32 0.0, %v4174
  %v4176 = vpop.f32.mrf.mxu0
  %v4177 = vpop.f32.mrf.mxu0
  %v4178 = vadd.f32 0.0, %v4177
  %v4179 = vpop.f32.mrf.mxu0
  %4180 = vmatprep.mubr.bf16.mxu0 0
  %4181 = vmatmul.mubr.bf16.gmra.mxu0 %v4009
  %v4182 = vpop.f32.mrf.mxu0
  %v4183 = vadd.f32 0.0, %v4182
  %v4184 = vpop.f32.mrf.mxu0
  %v4185 = vpop.f32.mrf.mxu0
  %v4186 = vadd.f32 0.0, %v4185
  %v4187 = vpop.f32.mrf.mxu0
  %4188 = vmatprep.mubr.bf16.mxu0 0
  %4189 = vmatmul.mubr.bf16.gmra.mxu0 %v4010
  %v4190 = vpop.f32.mrf.mxu0
  %v4191 = vadd.f32 0.0, %v4190
  %v4192 = vpop.f32.mrf.mxu0
  %v4193 = vpop.f32.mrf.mxu0
  %v4194 = vadd.f32 0.0, %v4193
  %v4195 = vpop.f32.mrf.mxu0
  %4196 = vmatprep.mubr.bf16.mxu0 0
  %4197 = vmatmul.mubr.bf16.gmra.mxu0 %v4011
  %v4198 = vpop.f32.mrf.mxu0
  %v4199 = vadd.f32 0.0, %v4198
  %v4200 = vpop.f32.mrf.mxu0
  %v4201 = vpop.f32.mrf.mxu0
  %v4202 = vadd.f32 0.0, %v4201
  %v4203 = vpop.f32.mrf.mxu0
  %4204 = vmatprep.mubr.bf16.mxu0 0
  %4205 = vmatmul.mubr.bf16.gmra.mxu0 %v4012
  %v4206 = vpop.f32.mrf.mxu0
  %v4207 = vadd.f32 0.0, %v4206
  %v4208 = vpop.f32.mrf.mxu0
  %v4209 = vpop.f32.mrf.mxu0
  %v4210 = vadd.f32 0.0, %v4209
  %v4211 = vpop.f32.mrf.mxu0
  %4212 = vmatprep.mubr.bf16.mxu0 0
  %4213 = vmatmul.mubr.bf16.gmra.mxu0 %v4013
  %v4214 = vpop.f32.mrf.mxu0
  %v4215 = vadd.f32 0.0, %v4214
  %v4216 = vpop.f32.mrf.mxu0
  %v4217 = vpop.f32.mrf.mxu0
  %v4218 = vadd.f32 0.0, %v4217
  %v4219 = vpop.f32.mrf.mxu0
  %4220 = vmatprep.mubr.bf16.mxu0 0
  %4221 = vmatmul.mubr.bf16.gmra.mxu0 %v4014
  %v4222 = vpop.f32.mrf.mxu0
  %v4223 = vadd.f32 0.0, %v4222
  %v4224 = vpop.f32.mrf.mxu0
  %v4225 = vpop.f32.mrf.mxu0
  %v4226 = vadd.f32 0.0, %v4225
  %v4227 = vpop.f32.mrf.mxu0
  %4228 = vmatprep.mubr.bf16.mxu0 0
  %4229 = vmatmul.mubr.bf16.gmra.mxu0 %v4015
  %v4230 = vpop.f32.mrf.mxu0
  %v4231 = vadd.f32 0.0, %v4230
  %v4232 = vpop.f32.mrf.mxu0
  %v4233 = vpop.f32.mrf.mxu0
  %v4234 = vadd.f32 0.0, %v4233
  %v4235 = vpop.f32.mrf.mxu0
  %4236 = vmatprep.mubr.bf16.mxu0 0
  %4237 = vmatmul.mubr.bf16.gmra.mxu0 %v4016
  %v4238 = vpop.f32.mrf.mxu0
  %v4239 = vadd.f32 0.0, %v4238
  %v4240 = vpop.f32.mrf.mxu0
  %v4241 = vpop.f32.mrf.mxu0
  %v4242 = vadd.f32 0.0, %v4241
  %v4243 = vpop.f32.mrf.mxu0
  %4244 = vmatprep.mubr.bf16.mxu0 0
  %4245 = vmatmul.mubr.bf16.gmra.mxu0 %v4017
  %v4246 = vpop.f32.mrf.mxu0
  %v4247 = vadd.f32 0.0, %v4246
  %v4248 = vpop.f32.mrf.mxu0
  %v4249 = vpop.f32.mrf.mxu0
  %v4250 = vadd.f32 0.0, %v4249
  %v4251 = vpop.f32.mrf.mxu0
  %4252 = vmatprep.mubr.bf16.mxu0 0
  %4253 = vmatmul.mubr.bf16.gmra.mxu0 %v4018
  %v4254 = vpop.f32.mrf.mxu0
  %v4255 = vadd.f32 0.0, %v4254
  %v4256 = vpop.f32.mrf.mxu0
  %v4257 = vpop.f32.mrf.mxu0
  %v4258 = vadd.f32 0.0, %v4257
  %v4259 = vpop.f32.mrf.mxu0
  %4260 = vmatprep.mubr.bf16.mxu0 0
  %4261 = vmatmul.mubr.bf16.gmra.mxu0 %v4019
  %v4262 = vpop.f32.mrf.mxu0
  %v4263 = vadd.f32 0.0, %v4262
  %v4264 = vpop.f32.mrf.mxu0
  %v4265 = vpop.f32.mrf.mxu0
  %v4266 = vadd.f32 0.0, %v4265
  %v4267 = vpop.f32.mrf.mxu0
  %4268 = vmatprep.mubr.bf16.mxu0 0
  %4269 = vmatmul.mubr.bf16.gmra.mxu0 %v4020
  %v4270 = vpop.f32.mrf.mxu0
  %v4271 = vadd.f32 0.0, %v4270
  %v4272 = vpop.f32.mrf.mxu0
  %v4273 = vpop.f32.mrf.mxu0
  %v4274 = vadd.f32 0.0, %v4273
  %v4275 = vpop.f32.mrf.mxu0
  %4276 = vmatprep.mubr.bf16.mxu0 0
  %4277 = vmatmul.mubr.bf16.gmra.mxu0 %v4021
  %v4278 = vpop.f32.mrf.mxu0
  %v4279 = vadd.f32 0.0, %v4278
  %v4280 = vpop.f32.mrf.mxu0
  %v4281 = vpop.f32.mrf.mxu0
  %v4282 = vadd.f32 0.0, %v4281
  %v4283 = vpop.f32.mrf.mxu0
  %4284 = vmatprep.mubr.bf16.mxu0 0
  %4285 = vmatmul.mubr.bf16.gmra.mxu0 %v4022
  %v4286 = vpop.f32.mrf.mxu0
  %v4287 = vadd.f32 0.0, %v4286
  %v4288 = vpop.f32.mrf.mxu0
  %v4289 = vpop.f32.mrf.mxu0
  %v4290 = vadd.f32 0.0, %v4289
  %v4291 = vpop.f32.mrf.mxu0
  %4292 = vmatprep.mubr.bf16.mxu0 0
  %4293 = vmatmul.mubr.bf16.gmra.mxu0 %v4023
  %v4294 = vpop.f32.mrf.mxu0
  %v4295 = vadd.f32 0.0, %v4294
  %v4296 = vpop.f32.mrf.mxu0
  %v4297 = vpop.f32.mrf.mxu0
  %v4298 = vadd.f32 0.0, %v4297
  %v4299 = vpop.f32.mrf.mxu0
  %4300 = vmatprep.mubr.bf16.mxu0 0
  %4301 = vmatmul.mubr.bf16.gmra.mxu0 %v4024
  %v4302 = vpop.f32.mrf.mxu0
  %v4303 = vadd.f32 0.0, %v4302
  %v4304 = vpop.f32.mrf.mxu0
  %v4305 = vpop.f32.mrf.mxu0
  %v4306 = vadd.f32 0.0, %v4305
  %v4307 = vpop.f32.mrf.mxu0
  %4308 = vmatprep.mubr.bf16.mxu0 0
  %4309 = vmatmul.mubr.bf16.gmra.mxu0 %v4025
  %v4310 = vpop.f32.mrf.mxu0
  %v4311 = vadd.f32 0.0, %v4310
  %v4312 = vpop.f32.mrf.mxu0
  %v4313 = vpop.f32.mrf.mxu0
  %v4314 = vadd.f32 0.0, %v4313
  %v4315 = vpop.f32.mrf.mxu0
  %4316 = vmatprep.mubr.bf16.mxu0 0
  %4317 = vmatmul.mubr.bf16.gmra.mxu0 %v4026
  %v4318 = vpop.f32.mrf.mxu0
  %v4319 = vadd.f32 0.0, %v4318
  %v4320 = vpop.f32.mrf.mxu0
  %v4321 = vpop.f32.mrf.mxu0
  %v4322 = vadd.f32 0.0, %v4321
  %v4323 = vpop.f32.mrf.mxu0
  %4324 = vmatprep.mubr.bf16.mxu0 0
  %4325 = vmatmul.mubr.bf16.gmra.mxu0 %v4027
  %v4326 = vpop.f32.mrf.mxu0
  %v4327 = vadd.f32 0.0, %v4326
  %v4328 = vpop.f32.mrf.mxu0
  %v4329 = vpop.f32.mrf.mxu0
  %v4330 = vadd.f32 0.0, %v4329
  %v4331 = vpop.f32.mrf.mxu0
  %4332 = vmatprep.mubr.bf16.mxu0 0
  %4333 = vmatmul.mubr.bf16.gmra.mxu0 %v4028
  %v4334 = vpop.f32.mrf.mxu0
  %v4335 = vadd.f32 0.0, %v4334
  %v4336 = vpop.f32.mrf.mxu0
  %v4337 = vpop.f32.mrf.mxu0
  %v4338 = vadd.f32 0.0, %v4337
  %v4339 = vpop.f32.mrf.mxu0
  %4340 = vmatprep.mubr.bf16.mxu0 0
  %4341 = vmatmul.mubr.bf16.gmra.mxu0 %v4029
  %v4342 = vpop.f32.mrf.mxu0
  %v4343 = vadd.f32 0.0, %v4342
  %v4344 = vpop.f32.mrf.mxu0
  %v4345 = vpop.f32.mrf.mxu0
  %v4346 = vadd.f32 0.0, %v4345
  %v4347 = vpop.f32.mrf.mxu0
  %4348 = vmatprep.mubr.bf16.mxu0 0
  %4349 = vmatmul.mubr.bf16.gmra.mxu0 %v4030
  %v4350 = vpop.f32.mrf.mxu0
  %v4351 = vadd.f32 0.0, %v4350
  %v4352 = vpop.f32.mrf.mxu0
  %v4353 = vpop.f32.mrf.mxu0
  %v4354 = vadd.f32 0.0, %v4353
  %v4355 = vpop.f32.mrf.mxu0
  %4356 = vmatprep.mubr.bf16.mxu0 0
  %4357 = vmatmul.mubr.bf16.gmra.mxu0 %v4031
  %v4358 = vpop.f32.mrf.mxu0
  %v4359 = vadd.f32 0.0, %v4358
  %v4360 = vpop.f32.mrf.mxu0
  %v4361 = vpop.f32.mrf.mxu0
  %v4362 = vadd.f32 0.0, %v4361
  %v4363 = vpop.f32.mrf.mxu0
  %4364 = vmatprep.mubr.bf16.mxu0 0
  %4365 = vmatmul.mubr.bf16.gmra.mxu0 %v4032
  %v4366 = vpop.f32.mrf.mxu0
  %v4367 = vadd.f32 0.0, %v4366
  %v4368 = vpop.f32.mrf.mxu0
  %v4369 = vpop.f32.mrf.mxu0
  %v4370 = vadd.f32 0.0, %v4369
  %v4371 = vpop.f32.mrf.mxu0
  %4372 = vmatprep.mubr.bf16.mxu0 0
  %4373 = vmatmul.mubr.bf16.gmra.mxu0 %v4033
  %v4374 = vpop.f32.mrf.mxu0
  %v4375 = vadd.f32 0.0, %v4374
  %v4376 = vpop.f32.mrf.mxu0
  %v4377 = vpop.f32.mrf.mxu0
  %v4378 = vadd.f32 0.0, %v4377
  %v4379 = vpop.f32.mrf.mxu0
  %4380 = vmatprep.mubr.bf16.mxu0 0
  %4381 = vmatmul.mubr.bf16.gmra.mxu0 %v4034
  %v4382 = vpop.f32.mrf.mxu0
  %v4383 = vadd.f32 0.0, %v4382
  %v4384 = vpop.f32.mrf.mxu0
  %v4385 = vpop.f32.mrf.mxu0
  %v4386 = vadd.f32 0.0, %v4385
  %v4387 = vpop.f32.mrf.mxu0
  %4388 = vdwg.mxu0
  %v4389 = vadd.f32 %v3747, %v4135
  %v4390 = vadd.f32 %v3748, %v4138
  %v4391 = vadd.f32 %v3749, %v4143
  %v4392 = vadd.f32 %v3750, %v4146
  %v4393 = vadd.f32 %v3751, %v4151
  %v4394 = vadd.f32 %v3752, %v4154
  %v4395 = vadd.f32 %v3753, %v4159
  %v4396 = vadd.f32 %v3754, %v4162
  %v4397 = vadd.f32 %v3755, %v4167
  %v4398 = vadd.f32 %v3756, %v4170
  %v4399 = vadd.f32 %v3757, %v4175
  %v4400 = vadd.f32 %v3758, %v4178
  %v4401 = vadd.f32 %v3759, %v4183
  %v4402 = vadd.f32 %v3760, %v4186
  %v4403 = vadd.f32 %v3761, %v4191
  %v4404 = vadd.f32 %v3762, %v4194
  %v4405 = vadd.f32 %v3763, %v4199
  %v4406 = vadd.f32 %v3764, %v4202
  %v4407 = vadd.f32 %v3765, %v4207
  %v4408 = vadd.f32 %v3766, %v4210
  %v4409 = vadd.f32 %v3767, %v4215
  %v4410 = vadd.f32 %v3768, %v4218
  %v4411 = vadd.f32 %v3769, %v4223
  %v4412 = vadd.f32 %v3770, %v4226
  %v4413 = vadd.f32 %v3771, %v4231
  %v4414 = vadd.f32 %v3772, %v4234
  %v4415 = vadd.f32 %v3773, %v4239
  %v4416 = vadd.f32 %v3774, %v4242
  %v4417 = vadd.f32 %v3775, %v4247
  %v4418 = vadd.f32 %v3776, %v4250
  %v4419 = vadd.f32 %v3777, %v4255
  %v4420 = vadd.f32 %v3778, %v4258
  %v4421 = vadd.f32 %v3779, %v4263
  %v4422 = vadd.f32 %v3780, %v4266
  %v4423 = vadd.f32 %v3781, %v4271
  %v4424 = vadd.f32 %v3782, %v4274
  %v4425 = vadd.f32 %v3783, %v4279
  %v4426 = vadd.f32 %v3784, %v4282
  %v4427 = vadd.f32 %v3785, %v4287
  %v4428 = vadd.f32 %v3786, %v4290
  %v4429 = vadd.f32 %v3787, %v4295
  %v4430 = vadd.f32 %v3788, %v4298
  %v4431 = vadd.f32 %v3789, %v4303
  %v4432 = vadd.f32 %v3790, %v4306
  %v4433 = vadd.f32 %v3791, %v4311
  %v4434 = vadd.f32 %v3792, %v4314
  %v4435 = vadd.f32 %v3793, %v4319
  %v4436 = vadd.f32 %v3794, %v4322
  %v4437 = vadd.f32 %v3795, %v4327
  %v4438 = vadd.f32 %v3796, %v4330
  %v4439 = vadd.f32 %v3797, %v4335
  %v4440 = vadd.f32 %v3798, %v4338
  %v4441 = vadd.f32 %v3799, %v4343
  %v4442 = vadd.f32 %v3800, %v4346
  %v4443 = vadd.f32 %v3801, %v4351
  %v4444 = vadd.f32 %v3802, %v4354
  %v4445 = vadd.f32 %v3803, %v4359
  %v4446 = vadd.f32 %v3804, %v4362
  %v4447 = vadd.f32 %v3805, %v4367
  %v4448 = vadd.f32 %v3806, %v4370
  %v4449 = vadd.f32 %v3807, %v4375
  %v4450 = vadd.f32 %v3808, %v4378
  %v4451 = vadd.f32 %v3809, %v4383
  %v4452 = vadd.f32 %v3810, %v4386
  %s4453 = scalar_lea.vmem [#allocation2], 32
  %v4454 = vld [vmem:[%s4453] sm:$0xff]
  %v4455 = vld [vmem:[%s4453 + $0x8] sm:$0xff]
  %v4456 = vld [vmem:[%s4453 + $0x10] sm:$0xff]
  %v4457 = vld [vmem:[%s4453 + $0x18] sm:$0xff]
  %v4458 = vld [vmem:[%s4453 + $0x20] sm:$0xff]
  %v4459 = vld [vmem:[%s4453 + $0x28] sm:$0xff]
  %v4460 = vld [vmem:[%s4453 + $0x30] sm:$0xff]
  %v4461 = vld [vmem:[%s4453 + $0x38] sm:$0xff]
  %v4462 = vld [vmem:[%s4453 + $0x40] sm:$0xff]
  %v4463 = vld [vmem:[%s4453 + $0x48] sm:$0xff]
  %v4464 = vld [vmem:[%s4453 + $0x50] sm:$0xff]
  %v4465 = vld [vmem:[%s4453 + $0x58] sm:$0xff]
  %v4466 = vld [vmem:[%s4453 + $0x60] sm:$0xff]
  %v4467 = vld [vmem:[%s4453 + $0x68] sm:$0xff]
  %v4468 = vld [vmem:[%s4453 + $0x70] sm:$0xff]
  %v4469 = vld [vmem:[%s4453 + $0x78] sm:$0xff]
  %v4470 = vld [vmem:[%s4453 + $0x80] sm:$0xff]
  %v4471 = vld [vmem:[%s4453 + $0x88] sm:$0xff]
  %v4472 = vld [vmem:[%s4453 + $0x90] sm:$0xff]
  %v4473 = vld [vmem:[%s4453 + $0x98] sm:$0xff]
  %v4474 = vld [vmem:[%s4453 + $0xa0] sm:$0xff]
  %v4475 = vld [vmem:[%s4453 + $0xa8] sm:$0xff]
  %v4476 = vld [vmem:[%s4453 + $0xb0] sm:$0xff]
  %v4477 = vld [vmem:[%s4453 + $0xb8] sm:$0xff]
  %v4478 = vld [vmem:[%s4453 + $0xc0] sm:$0xff]
  %v4479 = vld [vmem:[%s4453 + $0xc8] sm:$0xff]
  %v4480 = vld [vmem:[%s4453 + $0xd0] sm:$0xff]
  %v4481 = vld [vmem:[%s4453 + $0xd8] sm:$0xff]
  %v4482 = vld [vmem:[%s4453 + $0xe0] sm:$0xff]
  %v4483 = vld [vmem:[%s4453 + $0xe8] sm:$0xff]
  %v4484 = vld [vmem:[%s4453 + $0xf0] sm:$0xff]
  %v4485 = vld [vmem:[%s4453 + $0xf8] sm:$0xff]
  %v4486 = vld [vmem:[%s4453 + $0x120] sm:$0xff]
  %v4487 = vld [vmem:[%s4453 + $0x128] sm:$0xff]
  %v4488 = vld [vmem:[%s4453 + $0x130] sm:$0xff]
  %v4489 = vld [vmem:[%s4453 + $0x138] sm:$0xff]
  %v4490 = vld [vmem:[%s4453 + $0x140] sm:$0xff]
  %v4491 = vld [vmem:[%s4453 + $0x148] sm:$0xff]
  %v4492 = vld [vmem:[%s4453 + $0x150] sm:$0xff]
  %v4493 = vld [vmem:[%s4453 + $0x158] sm:$0xff]
  %v4494 = vld [vmem:[%s4453 + $0x160] sm:$0xff]
  %v4495 = vld [vmem:[%s4453 + $0x168] sm:$0xff]
  %v4496 = vld [vmem:[%s4453 + $0x170] sm:$0xff]
  %v4497 = vld [vmem:[%s4453 + $0x178] sm:$0xff]
  %v4498 = vld [vmem:[%s4453 + $0x180] sm:$0xff]
  %v4499 = vld [vmem:[%s4453 + $0x188] sm:$0xff]
  %v4500 = vld [vmem:[%s4453 + $0x190] sm:$0xff]
  %v4501 = vld [vmem:[%s4453 + $0x198] sm:$0xff]
  %v4502 = vld [vmem:[%s4453 + $0x1a0] sm:$0xff]
  %v4503 = vld [vmem:[%s4453 + $0x1a8] sm:$0xff]
  %v4504 = vld [vmem:[%s4453 + $0x1b0] sm:$0xff]
  %v4505 = vld [vmem:[%s4453 + $0x1b8] sm:$0xff]
  %v4506 = vld [vmem:[%s4453 + $0x1c0] sm:$0xff]
  %v4507 = vld [vmem:[%s4453 + $0x1c8] sm:$0xff]
  %v4508 = vld [vmem:[%s4453 + $0x1d0] sm:$0xff]
  %v4509 = vld [vmem:[%s4453 + $0x1d8] sm:$0xff]
  %v4510 = vld [vmem:[%s4453 + $0x1e0] sm:$0xff]
  %v4511 = vld [vmem:[%s4453 + $0x1e8] sm:$0xff]
  %v4512 = vld [vmem:[%s4453 + $0x1f0] sm:$0xff]
  %v4513 = vld [vmem:[%s4453 + $0x1f8] sm:$0xff]
  %v4514 = vld [vmem:[%s4453 + $0x200] sm:$0xff]
  %v4515 = vld [vmem:[%s4453 + $0x208] sm:$0xff]
  %v4516 = vld [vmem:[%s4453 + $0x210] sm:$0xff]
  %v4517 = vld [vmem:[%s4453 + $0x218] sm:$0xff]
  %v4518 = vrot.slane %v4454, 7
  %v4519 = vrot.slane %v4456, 7
  %v4520 = vrot.slane %v4458, 7
  %v4521 = vrot.slane %v4460, 7
  %v4522 = vrot.slane %v4462, 7
  %v4523 = vrot.slane %v4464, 7
  %v4524 = vrot.slane %v4466, 7
  %v4525 = vrot.slane %v4468, 7
  %v4526 = vrot.slane %v4470, 7
  %v4527 = vrot.slane %v4472, 7
  %v4528 = vrot.slane %v4474, 7
  %v4529 = vrot.slane %v4476, 7
  %v4530 = vrot.slane %v4478, 7
  %v4531 = vrot.slane %v4480, 7
  %v4532 = vrot.slane %v4482, 7
  %v4533 = vrot.slane %v4484, 7
  %v4534 = vrot.slane %v4486, 7
  %v4535 = vrot.slane %v4488, 7
  %v4536 = vrot.slane %v4490, 7
  %v4537 = vrot.slane %v4492, 7
  %v4538 = vrot.slane %v4494, 7
  %v4539 = vrot.slane %v4496, 7
  %v4540 = vrot.slane %v4498, 7
  %v4541 = vrot.slane %v4500, 7
  %v4542 = vrot.slane %v4502, 7
  %v4543 = vrot.slane %v4504, 7
  %v4544 = vrot.slane %v4506, 7
  %v4545 = vrot.slane %v4508, 7
  %v4546 = vrot.slane %v4510, 7
  %v4547 = vrot.slane %v4512, 7
  %v4548 = vrot.slane %v4514, 7
  %v4549 = vrot.slane %v4516, 7
  %v4550 = vrot.slane %v4455, 7
  %v4551 = vrot.slane %v4457, 7
  %v4552 = vrot.slane %v4459, 7
  %v4553 = vrot.slane %v4461, 7
  %v4554 = vrot.slane %v4463, 7
  %v4555 = vrot.slane %v4465, 7
  %v4556 = vrot.slane %v4467, 7
  %v4557 = vrot.slane %v4469, 7
  %v4558 = vrot.slane %v4471, 7
  %v4559 = vrot.slane %v4473, 7
  %v4560 = vrot.slane %v4475, 7
  %v4561 = vrot.slane %v4477, 7
  %v4562 = vrot.slane %v4479, 7
  %v4563 = vrot.slane %v4481, 7
  %v4564 = vrot.slane %v4483, 7
  %v4565 = vrot.slane %v4485, 7
  %v4566 = vrot.slane %v4487, 7
  %v4567 = vrot.slane %v4489, 7
  %v4568 = vrot.slane %v4491, 7
  %v4569 = vrot.slane %v4493, 7
  %v4570 = vrot.slane %v4495, 7
  %v4571 = vrot.slane %v4497, 7
  %v4572 = vrot.slane %v4499, 7
  %v4573 = vrot.slane %v4501, 7
  %v4574 = vrot.slane %v4503, 7
  %v4575 = vrot.slane %v4505, 7
  %v4576 = vrot.slane %v4507, 7
  %v4577 = vrot.slane %v4509, 7
  %v4578 = vrot.slane %v4511, 7
  %v4579 = vrot.slane %v4513, 7
  %v4580 = vrot.slane %v4515, 7
  %v4581 = vrot.slane %v4517, 7
  %v4582 = vsel %vm1112, %v4518, %v4550
  %v4583 = vsel %vm1112, %v4519, %v4551
  %v4584 = vsel %vm1112, %v4520, %v4552
  %v4585 = vsel %vm1112, %v4521, %v4553
  %v4586 = vsel %vm1112, %v4522, %v4554
  %v4587 = vsel %vm1112, %v4523, %v4555
  %v4588 = vsel %vm1112, %v4524, %v4556
  %v4589 = vsel %vm1112, %v4525, %v4557
  %v4590 = vsel %vm1112, %v4526, %v4558
  %v4591 = vsel %vm1112, %v4527, %v4559
  %v4592 = vsel %vm1112, %v4528, %v4560
  %v4593 = vsel %vm1112, %v4529, %v4561
  %v4594 = vsel %vm1112, %v4530, %v4562
  %v4595 = vsel %vm1112, %v4531, %v4563
  %v4596 = vsel %vm1112, %v4532, %v4564
  %v4597 = vsel %vm1112, %v4533, %v4565
  %v4598 = vsel %vm1112, %v4534, %v4566
  %v4599 = vsel %vm1112, %v4535, %v4567
  %v4600 = vsel %vm1112, %v4536, %v4568
  %v4601 = vsel %vm1112, %v4537, %v4569
  %v4602 = vsel %vm1112, %v4538, %v4570
  %v4603 = vsel %vm1112, %v4539, %v4571
  %v4604 = vsel %vm1112, %v4540, %v4572
  %v4605 = vsel %vm1112, %v4541, %v4573
  %v4606 = vsel %vm1112, %v4542, %v4574
  %v4607 = vsel %vm1112, %v4543, %v4575
  %v4608 = vsel %vm1112, %v4544, %v4576
  %v4609 = vsel %vm1112, %v4545, %v4577
  %v4610 = vsel %vm1112, %v4546, %v4578
  %v4611 = vsel %vm1112, %v4547, %v4579
  %v4612 = vsel %vm1112, %v4548, %v4580
  %v4613 = vsel %vm1112, %v4549, %v4581
  %v4614 = vsel %vm1112, %v4550, %v4518
  %v4615 = vsel %vm1112, %v4551, %v4519
  %v4616 = vsel %vm1112, %v4552, %v4520
  %v4617 = vsel %vm1112, %v4553, %v4521
  %v4618 = vsel %vm1112, %v4554, %v4522
  %v4619 = vsel %vm1112, %v4555, %v4523
  %v4620 = vsel %vm1112, %v4556, %v4524
  %v4621 = vsel %vm1112, %v4557, %v4525
  %v4622 = vsel %vm1112, %v4558, %v4526
  %v4623 = vsel %vm1112, %v4559, %v4527
  %v4624 = vsel %vm1112, %v4560, %v4528
  %v4625 = vsel %vm1112, %v4561, %v4529
  %v4626 = vsel %vm1112, %v4562, %v4530
  %v4627 = vsel %vm1112, %v4563, %v4531
  %v4628 = vsel %vm1112, %v4564, %v4532
  %v4629 = vsel %vm1112, %v4565, %v4533
  %v4630 = vsel %vm1112, %v4566, %v4534
  %v4631 = vsel %vm1112, %v4567, %v4535
  %v4632 = vsel %vm1112, %v4568, %v4536
  %v4633 = vsel %vm1112, %v4569, %v4537
  %v4634 = vsel %vm1112, %v4570, %v4538
  %v4635 = vsel %vm1112, %v4571, %v4539
  %v4636 = vsel %vm1112, %v4572, %v4540
  %v4637 = vsel %vm1112, %v4573, %v4541
  %v4638 = vsel %vm1112, %v4574, %v4542
  %v4639 = vsel %vm1112, %v4575, %v4543
  %v4640 = vsel %vm1112, %v4576, %v4544
  %v4641 = vsel %vm1112, %v4577, %v4545
  %v4642 = vsel %vm1112, %v4578, %v4546
  %v4643 = vsel %vm1112, %v4579, %v4547
  %v4644 = vsel %vm1112, %v4580, %v4548
  %v4645 = vsel %vm1112, %v4581, %v4549
  %v4646 = vsel %vm980, %v4614, 0.0
  %v4647 = vsel %vm981, %v4582, 0.0
  %v4648 = vsel %vm980, %v4615, 0.0
  %v4649 = vsel %vm981, %v4583, 0.0
  %v4650 = vsel %vm980, %v4616, 0.0
  %v4651 = vsel %vm981, %v4584, 0.0
  %v4652 = vsel %vm980, %v4617, 0.0
  %v4653 = vsel %vm981, %v4585, 0.0
  %v4654 = vsel %vm980, %v4618, 0.0
  %v4655 = vsel %vm981, %v4586, 0.0
  %v4656 = vsel %vm980, %v4619, 0.0
  %v4657 = vsel %vm981, %v4587, 0.0
  %v4658 = vsel %vm980, %v4620, 0.0
  %v4659 = vsel %vm981, %v4588, 0.0
  %v4660 = vsel %vm980, %v4621, 0.0
  %v4661 = vsel %vm981, %v4589, 0.0
  %v4662 = vsel %vm980, %v4622, 0.0
  %v4663 = vsel %vm981, %v4590, 0.0
  %v4664 = vsel %vm980, %v4623, 0.0
  %v4665 = vsel %vm981, %v4591, 0.0
  %v4666 = vsel %vm980, %v4624, 0.0
  %v4667 = vsel %vm981, %v4592, 0.0
  %v4668 = vsel %vm980, %v4625, 0.0
  %v4669 = vsel %vm981, %v4593, 0.0
  %v4670 = vsel %vm980, %v4626, 0.0
  %v4671 = vsel %vm981, %v4594, 0.0
  %v4672 = vsel %vm980, %v4627, 0.0
  %v4673 = vsel %vm981, %v4595, 0.0
  %v4674 = vsel %vm980, %v4628, 0.0
  %v4675 = vsel %vm981, %v4596, 0.0
  %v4676 = vsel %vm980, %v4629, 0.0
  %v4677 = vsel %vm981, %v4597, 0.0
  %v4678 = vsel %vm980, %v4630, 0.0
  %v4679 = vsel %vm981, %v4598, 0.0
  %v4680 = vsel %vm980, %v4631, 0.0
  %v4681 = vsel %vm981, %v4599, 0.0
  %v4682 = vsel %vm980, %v4632, 0.0
  %v4683 = vsel %vm981, %v4600, 0.0
  %v4684 = vsel %vm980, %v4633, 0.0
  %v4685 = vsel %vm981, %v4601, 0.0
  %v4686 = vsel %vm980, %v4634, 0.0
  %v4687 = vsel %vm981, %v4602, 0.0
  %v4688 = vsel %vm980, %v4635, 0.0
  %v4689 = vsel %vm981, %v4603, 0.0
  %v4690 = vsel %vm980, %v4636, 0.0
  %v4691 = vsel %vm981, %v4604, 0.0
  %v4692 = vsel %vm980, %v4637, 0.0
  %v4693 = vsel %vm981, %v4605, 0.0
  %v4694 = vsel %vm980, %v4638, 0.0
  %v4695 = vsel %vm981, %v4606, 0.0
  %v4696 = vsel %vm980, %v4639, 0.0
  %v4697 = vsel %vm981, %v4607, 0.0
  %v4698 = vsel %vm980, %v4640, 0.0
  %v4699 = vsel %vm981, %v4608, 0.0
  %v4700 = vsel %vm980, %v4641, 0.0
  %v4701 = vsel %vm981, %v4609, 0.0
  %v4702 = vsel %vm980, %v4642, 0.0
  %v4703 = vsel %vm981, %v4610, 0.0
  %v4704 = vsel %vm980, %v4643, 0.0
  %v4705 = vsel %vm981, %v4611, 0.0
  %v4706 = vsel %vm980, %v4644, 0.0
  %v4707 = vsel %vm981, %v4612, 0.0
  %v4708 = vsel %vm980, %v4645, 0.0
  %v4709 = vsel %vm981, %v4613, 0.0
  %v4710 = vpack.c.bf16 %v4647, %v4646
  %v4711 = vpack.c.bf16 %v4649, %v4648
  %v4712 = vpack.c.bf16 %v4651, %v4650
  %v4713 = vpack.c.bf16 %v4653, %v4652
  %v4714 = vpack.c.bf16 %v4655, %v4654
  %v4715 = vpack.c.bf16 %v4657, %v4656
  %v4716 = vpack.c.bf16 %v4659, %v4658
  %v4717 = vpack.c.bf16 %v4661, %v4660
  %v4718 = vpack.c.bf16 %v4663, %v4662
  %v4719 = vpack.c.bf16 %v4665, %v4664
  %v4720 = vpack.c.bf16 %v4667, %v4666
  %v4721 = vpack.c.bf16 %v4669, %v4668
  %v4722 = vpack.c.bf16 %v4671, %v4670
  %v4723 = vpack.c.bf16 %v4673, %v4672
  %v4724 = vpack.c.bf16 %v4675, %v4674
  %v4725 = vpack.c.bf16 %v4677, %v4676
  %v4726 = vpack.c.bf16 %v4679, %v4678
  %v4727 = vpack.c.bf16 %v4681, %v4680
  %v4728 = vpack.c.bf16 %v4683, %v4682
  %v4729 = vpack.c.bf16 %v4685, %v4684
  %v4730 = vpack.c.bf16 %v4687, %v4686
  %v4731 = vpack.c.bf16 %v4689, %v4688
  %v4732 = vpack.c.bf16 %v4691, %v4690
  %v4733 = vpack.c.bf16 %v4693, %v4692
  %v4734 = vpack.c.bf16 %v4695, %v4694
  %v4735 = vpack.c.bf16 %v4697, %v4696
  %v4736 = vpack.c.bf16 %v4699, %v4698
  %v4737 = vpack.c.bf16 %v4701, %v4700
  %v4738 = vpack.c.bf16 %v4703, %v4702
  %v4739 = vpack.c.bf16 %v4705, %v4704
  %v4740 = vpack.c.bf16 %v4707, %v4706
  %v4741 = vpack.c.bf16 %v4709, %v4708
  %s4742 = scalar_lea.vmem %s4, 384
  %v4743 = vld [vmem:[%s4742] sm:$0xf]
  %v4744 = vld [vmem:[%s4742 + $0x4] sm:$0xf]
  %v4745 = vld [vmem:[%s4742 + $0x8] sm:$0xf]
  %v4746 = vld [vmem:[%s4742 + $0xc] sm:$0xf]
  %v4747 = vld [vmem:[%s4742 + $0x10] sm:$0xf]
  %v4748 = vld [vmem:[%s4742 + $0x14] sm:$0xf]
  %v4749 = vld [vmem:[%s4742 + $0x18] sm:$0xf]
  %v4750 = vld [vmem:[%s4742 + $0x1c] sm:$0xf]
  %v4751 = vld [vmem:[%s4742 + $0x20] sm:$0xf]
  %v4752 = vld [vmem:[%s4742 + $0x24] sm:$0xf]
  %v4753 = vld [vmem:[%s4742 + $0x28] sm:$0xf]
  %v4754 = vld [vmem:[%s4742 + $0x2c] sm:$0xf]
  %v4755 = vld [vmem:[%s4742 + $0x30] sm:$0xf]
  %v4756 = vld [vmem:[%s4742 + $0x34] sm:$0xf]
  %v4757 = vld [vmem:[%s4742 + $0x38] sm:$0xf]
  %v4758 = vld [vmem:[%s4742 + $0x3c] sm:$0xf]
  %v4775 = vunpack.c.l.b16 %v4743
  %v4776 = vunpack.c.l.b16 %v4744
  %v4777 = vunpack.c.l.b16 %v4745
  %v4778 = vunpack.c.l.b16 %v4746
  %v4779 = vunpack.c.l.b16 %v4747
  %v4780 = vunpack.c.l.b16 %v4748
  %v4781 = vunpack.c.l.b16 %v4749
  %v4782 = vunpack.c.l.b16 %v4750
  %v4783 = vunpack.c.l.b16 %v4751
  %v4784 = vunpack.c.l.b16 %v4752
  %v4785 = vunpack.c.l.b16 %v4753
  %v4786 = vunpack.c.l.b16 %v4754
  %v4787 = vunpack.c.l.b16 %v4755
  %v4788 = vunpack.c.l.b16 %v4756
  %v4789 = vunpack.c.l.b16 %v4757
  %v4790 = vunpack.c.l.b16 %v4758
  %v4791 = vpack.c.b16 %v4776, %v4775
  %v4792 = vpack.c.b16 %v4778, %v4777
  %v4793 = vpack.c.b16 %v4780, %v4779
  %v4794 = vpack.c.b16 %v4782, %v4781
  %v4795 = vpack.c.b16 %v4784, %v4783
  %v4796 = vpack.c.b16 %v4786, %v4785
  %v4797 = vpack.c.b16 %v4788, %v4787
  %v4798 = vpack.c.b16 %v4790, %v4789
  %4807 = vmatprep.subr.bf16.mxu0 0
  %4808 = vmatpush1.bf16.msra.mxu0 %v4798
  %4809 = vmatprep.subr.bf16.mxu0 0
  %4810 = vmatpush1.bf16.msra.mxu0 %v4797
  %4811 = vmatprep.subr.bf16.mxu0 0
  %4812 = vmatpush1.bf16.msra.mxu0 %v4796
  %4813 = vmatprep.subr.bf16.mxu0 0
  %4814 = vmatpush1.bf16.msra.mxu0 %v4795
  %4815 = vmatprep.subr.bf16.mxu0 0
  %4816 = vmatpush1.bf16.msra.mxu0 %v4794
  %4817 = vmatprep.subr.bf16.mxu0 0
  %4818 = vmatpush1.bf16.msra.mxu0 %v4793
  %4819 = vmatprep.subr.bf16.mxu0 0
  %4820 = vmatpush1.bf16.msra.mxu0 %v4792
  %4821 = vmatprep.subr.bf16.mxu0 0
  %4822 = vmatpush1.bf16.msra.mxu0 %v4791
  %4823 = vmatprep.subr.bf16.mxu0 0
  %4824 = vmatpush2.bf16.msra.mxu0 0
  %4825 = vmatprep.subr.bf16.mxu0 0
  %4826 = vmatpush2.bf16.msra.mxu0 0
  %4827 = vmatprep.subr.bf16.mxu0 0
  %4828 = vmatpush2.bf16.msra.mxu0 0
  %4829 = vmatprep.subr.bf16.mxu0 0
  %4830 = vmatpush2.bf16.msra.mxu0 0
  %4831 = vmatprep.subr.bf16.mxu0 0
  %4832 = vmatpush2.bf16.msra.mxu0 0
  %4833 = vmatprep.subr.bf16.mxu0 0
  %4834 = vmatpush2.bf16.msra.mxu0 0
  %4835 = vmatprep.subr.bf16.mxu0 0
  %4836 = vmatpush2.bf16.msra.mxu0 0
  %4837 = vmatprep.subr.bf16.mxu0 0
  %4838 = vmatpush2.bf16.msra.mxu0 0
  %4839 = vmatprep.mubr.bf16.mxu0 0
  %4840 = vmatmul.mubr.bf16.gmra.mxu0 %v4710
  %v4841 = vpop.f32.mrf.mxu0
  %v4842 = vadd.f32 0.0, %v4841
  %v4843 = vpop.f32.mrf.mxu0
  %v4844 = vpop.f32.mrf.mxu0
  %v4845 = vadd.f32 0.0, %v4844
  %v4846 = vpop.f32.mrf.mxu0
  %4847 = vmatprep.mubr.bf16.mxu0 0
  %4848 = vmatmul.mubr.bf16.gmra.mxu0 %v4711
  %v4849 = vpop.f32.mrf.mxu0
  %v4850 = vadd.f32 0.0, %v4849
  %v4851 = vpop.f32.mrf.mxu0
  %v4852 = vpop.f32.mrf.mxu0
  %v4853 = vadd.f32 0.0, %v4852
  %v4854 = vpop.f32.mrf.mxu0
  %4855 = vmatprep.mubr.bf16.mxu0 0
  %4856 = vmatmul.mubr.bf16.gmra.mxu0 %v4712
  %v4857 = vpop.f32.mrf.mxu0
  %v4858 = vadd.f32 0.0, %v4857
  %v4859 = vpop.f32.mrf.mxu0
  %v4860 = vpop.f32.mrf.mxu0
  %v4861 = vadd.f32 0.0, %v4860
  %v4862 = vpop.f32.mrf.mxu0
  %4863 = vmatprep.mubr.bf16.mxu0 0
  %4864 = vmatmul.mubr.bf16.gmra.mxu0 %v4713
  %v4865 = vpop.f32.mrf.mxu0
  %v4866 = vadd.f32 0.0, %v4865
  %v4867 = vpop.f32.mrf.mxu0
  %v4868 = vpop.f32.mrf.mxu0
  %v4869 = vadd.f32 0.0, %v4868
  %v4870 = vpop.f32.mrf.mxu0
  %4871 = vmatprep.mubr.bf16.mxu0 0
  %4872 = vmatmul.mubr.bf16.gmra.mxu0 %v4714
  %v4873 = vpop.f32.mrf.mxu0
  %v4874 = vadd.f32 0.0, %v4873
  %v4875 = vpop.f32.mrf.mxu0
  %v4876 = vpop.f32.mrf.mxu0
  %v4877 = vadd.f32 0.0, %v4876
  %v4878 = vpop.f32.mrf.mxu0
  %4879 = vmatprep.mubr.bf16.mxu0 0
  %4880 = vmatmul.mubr.bf16.gmra.mxu0 %v4715
  %v4881 = vpop.f32.mrf.mxu0
  %v4882 = vadd.f32 0.0, %v4881
  %v4883 = vpop.f32.mrf.mxu0
  %v4884 = vpop.f32.mrf.mxu0
  %v4885 = vadd.f32 0.0, %v4884
  %v4886 = vpop.f32.mrf.mxu0
  %4887 = vmatprep.mubr.bf16.mxu0 0
  %4888 = vmatmul.mubr.bf16.gmra.mxu0 %v4716
  %v4889 = vpop.f32.mrf.mxu0
  %v4890 = vadd.f32 0.0, %v4889
  %v4891 = vpop.f32.mrf.mxu0
  %v4892 = vpop.f32.mrf.mxu0
  %v4893 = vadd.f32 0.0, %v4892
  %v4894 = vpop.f32.mrf.mxu0
  %4895 = vmatprep.mubr.bf16.mxu0 0
  %4896 = vmatmul.mubr.bf16.gmra.mxu0 %v4717
  %v4897 = vpop.f32.mrf.mxu0
  %v4898 = vadd.f32 0.0, %v4897
  %v4899 = vpop.f32.mrf.mxu0
  %v4900 = vpop.f32.mrf.mxu0
  %v4901 = vadd.f32 0.0, %v4900
  %v4902 = vpop.f32.mrf.mxu0
  %4903 = vmatprep.mubr.bf16.mxu0 0
  %4904 = vmatmul.mubr.bf16.gmra.mxu0 %v4718
  %v4905 = vpop.f32.mrf.mxu0
  %v4906 = vadd.f32 0.0, %v4905
  %v4907 = vpop.f32.mrf.mxu0
  %v4908 = vpop.f32.mrf.mxu0
  %v4909 = vadd.f32 0.0, %v4908
  %v4910 = vpop.f32.mrf.mxu0
  %4911 = vmatprep.mubr.bf16.mxu0 0
  %4912 = vmatmul.mubr.bf16.gmra.mxu0 %v4719
  %v4913 = vpop.f32.mrf.mxu0
  %v4914 = vadd.f32 0.0, %v4913
  %v4915 = vpop.f32.mrf.mxu0
  %v4916 = vpop.f32.mrf.mxu0
  %v4917 = vadd.f32 0.0, %v4916
  %v4918 = vpop.f32.mrf.mxu0
  %4919 = vmatprep.mubr.bf16.mxu0 0
  %4920 = vmatmul.mubr.bf16.gmra.mxu0 %v4720
  %v4921 = vpop.f32.mrf.mxu0
  %v4922 = vadd.f32 0.0, %v4921
  %v4923 = vpop.f32.mrf.mxu0
  %v4924 = vpop.f32.mrf.mxu0
  %v4925 = vadd.f32 0.0, %v4924
  %v4926 = vpop.f32.mrf.mxu0
  %4927 = vmatprep.mubr.bf16.mxu0 0
  %4928 = vmatmul.mubr.bf16.gmra.mxu0 %v4721
  %v4929 = vpop.f32.mrf.mxu0
  %v4930 = vadd.f32 0.0, %v4929
  %v4931 = vpop.f32.mrf.mxu0
  %v4932 = vpop.f32.mrf.mxu0
  %v4933 = vadd.f32 0.0, %v4932
  %v4934 = vpop.f32.mrf.mxu0
  %4935 = vmatprep.mubr.bf16.mxu0 0
  %4936 = vmatmul.mubr.bf16.gmra.mxu0 %v4722
  %v4937 = vpop.f32.mrf.mxu0
  %v4938 = vadd.f32 0.0, %v4937
  %v4939 = vpop.f32.mrf.mxu0
  %v4940 = vpop.f32.mrf.mxu0
  %v4941 = vadd.f32 0.0, %v4940
  %v4942 = vpop.f32.mrf.mxu0
  %4943 = vmatprep.mubr.bf16.mxu0 0
  %4944 = vmatmul.mubr.bf16.gmra.mxu0 %v4723
  %v4945 = vpop.f32.mrf.mxu0
  %v4946 = vadd.f32 0.0, %v4945
  %v4947 = vpop.f32.mrf.mxu0
  %v4948 = vpop.f32.mrf.mxu0
  %v4949 = vadd.f32 0.0, %v4948
  %v4950 = vpop.f32.mrf.mxu0
  %4951 = vmatprep.mubr.bf16.mxu0 0
  %4952 = vmatmul.mubr.bf16.gmra.mxu0 %v4724
  %v4953 = vpop.f32.mrf.mxu0
  %v4954 = vadd.f32 0.0, %v4953
  %v4955 = vpop.f32.mrf.mxu0
  %v4956 = vpop.f32.mrf.mxu0
  %v4957 = vadd.f32 0.0, %v4956
  %v4958 = vpop.f32.mrf.mxu0
  %4959 = vmatprep.mubr.bf16.mxu0 0
  %4960 = vmatmul.mubr.bf16.gmra.mxu0 %v4725
  %v4961 = vpop.f32.mrf.mxu0
  %v4962 = vadd.f32 0.0, %v4961
  %v4963 = vpop.f32.mrf.mxu0
  %v4964 = vpop.f32.mrf.mxu0
  %v4965 = vadd.f32 0.0, %v4964
  %v4966 = vpop.f32.mrf.mxu0
  %4967 = vmatprep.mubr.bf16.mxu0 0
  %4968 = vmatmul.mubr.bf16.gmra.mxu0 %v4726
  %v4969 = vpop.f32.mrf.mxu0
  %v4970 = vadd.f32 0.0, %v4969
  %v4971 = vpop.f32.mrf.mxu0
  %v4972 = vpop.f32.mrf.mxu0
  %v4973 = vadd.f32 0.0, %v4972
  %v4974 = vpop.f32.mrf.mxu0
  %4975 = vmatprep.mubr.bf16.mxu0 0
  %4976 = vmatmul.mubr.bf16.gmra.mxu0 %v4727
  %v4977 = vpop.f32.mrf.mxu0
  %v4978 = vadd.f32 0.0, %v4977
  %v4979 = vpop.f32.mrf.mxu0
  %v4980 = vpop.f32.mrf.mxu0
  %v4981 = vadd.f32 0.0, %v4980
  %v4982 = vpop.f32.mrf.mxu0
  %4983 = vmatprep.mubr.bf16.mxu0 0
  %4984 = vmatmul.mubr.bf16.gmra.mxu0 %v4728
  %v4985 = vpop.f32.mrf.mxu0
  %v4986 = vadd.f32 0.0, %v4985
  %v4987 = vpop.f32.mrf.mxu0
  %v4988 = vpop.f32.mrf.mxu0
  %v4989 = vadd.f32 0.0, %v4988
  %v4990 = vpop.f32.mrf.mxu0
  %4991 = vmatprep.mubr.bf16.mxu0 0
  %4992 = vmatmul.mubr.bf16.gmra.mxu0 %v4729
  %v4993 = vpop.f32.mrf.mxu0
  %v4994 = vadd.f32 0.0, %v4993
  %v4995 = vpop.f32.mrf.mxu0
  %v4996 = vpop.f32.mrf.mxu0
  %v4997 = vadd.f32 0.0, %v4996
  %v4998 = vpop.f32.mrf.mxu0
  %4999 = vmatprep.mubr.bf16.mxu0 0
  %5000 = vmatmul.mubr.bf16.gmra.mxu0 %v4730
  %v5001 = vpop.f32.mrf.mxu0
  %v5002 = vadd.f32 0.0, %v5001
  %v5003 = vpop.f32.mrf.mxu0
  %v5004 = vpop.f32.mrf.mxu0
  %v5005 = vadd.f32 0.0, %v5004
  %v5006 = vpop.f32.mrf.mxu0
  %5007 = vmatprep.mubr.bf16.mxu0 0
  %5008 = vmatmul.mubr.bf16.gmra.mxu0 %v4731
  %v5009 = vpop.f32.mrf.mxu0
  %v5010 = vadd.f32 0.0, %v5009
  %v5011 = vpop.f32.mrf.mxu0
  %v5012 = vpop.f32.mrf.mxu0
  %v5013 = vadd.f32 0.0, %v5012
  %v5014 = vpop.f32.mrf.mxu0
  %5015 = vmatprep.mubr.bf16.mxu0 0
  %5016 = vmatmul.mubr.bf16.gmra.mxu0 %v4732
  %v5017 = vpop.f32.mrf.mxu0
  %v5018 = vadd.f32 0.0, %v5017
  %v5019 = vpop.f32.mrf.mxu0
  %v5020 = vpop.f32.mrf.mxu0
  %v5021 = vadd.f32 0.0, %v5020
  %v5022 = vpop.f32.mrf.mxu0
  %5023 = vmatprep.mubr.bf16.mxu0 0
  %5024 = vmatmul.mubr.bf16.gmra.mxu0 %v4733
  %v5025 = vpop.f32.mrf.mxu0
  %v5026 = vadd.f32 0.0, %v5025
  %v5027 = vpop.f32.mrf.mxu0
  %v5028 = vpop.f32.mrf.mxu0
  %v5029 = vadd.f32 0.0, %v5028
  %v5030 = vpop.f32.mrf.mxu0
  %5031 = vmatprep.mubr.bf16.mxu0 0
  %5032 = vmatmul.mubr.bf16.gmra.mxu0 %v4734
  %v5033 = vpop.f32.mrf.mxu0
  %v5034 = vadd.f32 0.0, %v5033
  %v5035 = vpop.f32.mrf.mxu0
  %v5036 = vpop.f32.mrf.mxu0
  %v5037 = vadd.f32 0.0, %v5036
  %v5038 = vpop.f32.mrf.mxu0
  %5039 = vmatprep.mubr.bf16.mxu0 0
  %5040 = vmatmul.mubr.bf16.gmra.mxu0 %v4735
  %v5041 = vpop.f32.mrf.mxu0
  %v5042 = vadd.f32 0.0, %v5041
  %v5043 = vpop.f32.mrf.mxu0
  %v5044 = vpop.f32.mrf.mxu0
  %v5045 = vadd.f32 0.0, %v5044
  %v5046 = vpop.f32.mrf.mxu0
  %5047 = vmatprep.mubr.bf16.mxu0 0
  %5048 = vmatmul.mubr.bf16.gmra.mxu0 %v4736
  %v5049 = vpop.f32.mrf.mxu0
  %v5050 = vadd.f32 0.0, %v5049
  %v5051 = vpop.f32.mrf.mxu0
  %v5052 = vpop.f32.mrf.mxu0
  %v5053 = vadd.f32 0.0, %v5052
  %v5054 = vpop.f32.mrf.mxu0
  %5055 = vmatprep.mubr.bf16.mxu0 0
  %5056 = vmatmul.mubr.bf16.gmra.mxu0 %v4737
  %v5057 = vpop.f32.mrf.mxu0
  %v5058 = vadd.f32 0.0, %v5057
  %v5059 = vpop.f32.mrf.mxu0
  %v5060 = vpop.f32.mrf.mxu0
  %v5061 = vadd.f32 0.0, %v5060
  %v5062 = vpop.f32.mrf.mxu0
  %5063 = vmatprep.mubr.bf16.mxu0 0
  %5064 = vmatmul.mubr.bf16.gmra.mxu0 %v4738
  %v5065 = vpop.f32.mrf.mxu0
  %v5066 = vadd.f32 0.0, %v5065
  %v5067 = vpop.f32.mrf.mxu0
  %v5068 = vpop.f32.mrf.mxu0
  %v5069 = vadd.f32 0.0, %v5068
  %v5070 = vpop.f32.mrf.mxu0
  %5071 = vmatprep.mubr.bf16.mxu0 0
  %5072 = vmatmul.mubr.bf16.gmra.mxu0 %v4739
  %v5073 = vpop.f32.mrf.mxu0
  %v5074 = vadd.f32 0.0, %v5073
  %v5075 = vpop.f32.mrf.mxu0
  %v5076 = vpop.f32.mrf.mxu0
  %v5077 = vadd.f32 0.0, %v5076
  %v5078 = vpop.f32.mrf.mxu0
  %5079 = vmatprep.mubr.bf16.mxu0 0
  %5080 = vmatmul.mubr.bf16.gmra.mxu0 %v4740
  %v5081 = vpop.f32.mrf.mxu0
  %v5082 = vadd.f32 0.0, %v5081
  %v5083 = vpop.f32.mrf.mxu0
  %v5084 = vpop.f32.mrf.mxu0
  %v5085 = vadd.f32 0.0, %v5084
  %v5086 = vpop.f32.mrf.mxu0
  %5087 = vmatprep.mubr.bf16.mxu0 0
  %5088 = vmatmul.mubr.bf16.gmra.mxu0 %v4741
  %v5089 = vpop.f32.mrf.mxu0
  %v5090 = vadd.f32 0.0, %v5089
  %v5091 = vpop.f32.mrf.mxu0
  %v5092 = vpop.f32.mrf.mxu0
  %v5093 = vadd.f32 0.0, %v5092
  %v5094 = vpop.f32.mrf.mxu0
  %5095 = vdwg.mxu0
  %v5096 = vadd.f32 %v4389, %v4842
  %v5097 = vadd.f32 %v4390, %v4845
  %v5098 = vadd.f32 %v4391, %v4850
  %v5099 = vadd.f32 %v4392, %v4853
  %v5100 = vadd.f32 %v4393, %v4858
  %v5101 = vadd.f32 %v4394, %v4861
  %v5102 = vadd.f32 %v4395, %v4866
  %v5103 = vadd.f32 %v4396, %v4869
  %v5104 = vadd.f32 %v4397, %v4874
  %v5105 = vadd.f32 %v4398, %v4877
  %v5106 = vadd.f32 %v4399, %v4882
  %v5107 = vadd.f32 %v4400, %v4885
  %v5108 = vadd.f32 %v4401, %v4890
  %v5109 = vadd.f32 %v4402, %v4893
  %v5110 = vadd.f32 %v4403, %v4898
  %v5111 = vadd.f32 %v4404, %v4901
  %v5112 = vadd.f32 %v4405, %v4906
  %v5113 = vadd.f32 %v4406, %v4909
  %v5114 = vadd.f32 %v4407, %v4914
  %v5115 = vadd.f32 %v4408, %v4917
  %v5116 = vadd.f32 %v4409, %v4922
  %v5117 = vadd.f32 %v4410, %v4925
  %v5118 = vadd.f32 %v4411, %v4930
  %v5119 = vadd.f32 %v4412, %v4933
  %v5120 = vadd.f32 %v4413, %v4938
  %v5121 = vadd.f32 %v4414, %v4941
  %v5122 = vadd.f32 %v4415, %v4946
  %v5123 = vadd.f32 %v4416, %v4949
  %v5124 = vadd.f32 %v4417, %v4954
  %v5125 = vadd.f32 %v4418, %v4957
  %v5126 = vadd.f32 %v4419, %v4962
  %v5127 = vadd.f32 %v4420, %v4965
  %v5128 = vadd.f32 %v4421, %v4970
  %v5129 = vadd.f32 %v4422, %v4973
  %v5130 = vadd.f32 %v4423, %v4978
  %v5131 = vadd.f32 %v4424, %v4981
  %v5132 = vadd.f32 %v4425, %v4986
  %v5133 = vadd.f32 %v4426, %v4989
  %v5134 = vadd.f32 %v4427, %v4994
  %v5135 = vadd.f32 %v4428, %v4997
  %v5136 = vadd.f32 %v4429, %v5002
  %v5137 = vadd.f32 %v4430, %v5005
  %v5138 = vadd.f32 %v4431, %v5010
  %v5139 = vadd.f32 %v4432, %v5013
  %v5140 = vadd.f32 %v4433, %v5018
  %v5141 = vadd.f32 %v4434, %v5021
  %v5142 = vadd.f32 %v4435, %v5026
  %v5143 = vadd.f32 %v4436, %v5029
  %v5144 = vadd.f32 %v4437, %v5034
  %v5145 = vadd.f32 %v4438, %v5037
  %v5146 = vadd.f32 %v4439, %v5042
  %v5147 = vadd.f32 %v4440, %v5045
  %v5148 = vadd.f32 %v4441, %v5050
  %v5149 = vadd.f32 %v4442, %v5053
  %v5150 = vadd.f32 %v4443, %v5058
  %v5151 = vadd.f32 %v4444, %v5061
  %v5152 = vadd.f32 %v4445, %v5066
  %v5153 = vadd.f32 %v4446, %v5069
  %v5154 = vadd.f32 %v4447, %v5074
  %v5155 = vadd.f32 %v4448, %v5077
  %v5156 = vadd.f32 %v4449, %v5082
  %v5157 = vadd.f32 %v4450, %v5085
  %v5158 = vadd.f32 %v4451, %v5090
  %v5159 = vadd.f32 %v4452, %v5093
  %v5160 = vpack.c.bf16 %v4455, %v4454
  %v5161 = vpack.c.bf16 %v4457, %v4456
  %v5162 = vpack.c.bf16 %v4459, %v4458
  %v5163 = vpack.c.bf16 %v4461, %v4460
  %v5164 = vpack.c.bf16 %v4463, %v4462
  %v5165 = vpack.c.bf16 %v4465, %v4464
  %v5166 = vpack.c.bf16 %v4467, %v4466
  %v5167 = vpack.c.bf16 %v4469, %v4468
  %v5168 = vpack.c.bf16 %v4471, %v4470
  %v5169 = vpack.c.bf16 %v4473, %v4472
  %v5170 = vpack.c.bf16 %v4475, %v4474
  %v5171 = vpack.c.bf16 %v4477, %v4476
  %v5172 = vpack.c.bf16 %v4479, %v4478
  %v5173 = vpack.c.bf16 %v4481, %v4480
  %v5174 = vpack.c.bf16 %v4483, %v4482
  %v5175 = vpack.c.bf16 %v4485, %v4484
  %v5176 = vpack.c.bf16 %v4487, %v4486
  %v5177 = vpack.c.bf16 %v4489, %v4488
  %v5178 = vpack.c.bf16 %v4491, %v4490
  %v5179 = vpack.c.bf16 %v4493, %v4492
  %v5180 = vpack.c.bf16 %v4495, %v4494
  %v5181 = vpack.c.bf16 %v4497, %v4496
  %v5182 = vpack.c.bf16 %v4499, %v4498
  %v5183 = vpack.c.bf16 %v4501, %v4500
  %v5184 = vpack.c.bf16 %v4503, %v4502
  %v5185 = vpack.c.bf16 %v4505, %v4504
  %v5186 = vpack.c.bf16 %v4507, %v4506
  %v5187 = vpack.c.bf16 %v4509, %v4508
  %v5188 = vpack.c.bf16 %v4511, %v4510
  %v5189 = vpack.c.bf16 %v4513, %v4512
  %v5190 = vpack.c.bf16 %v4515, %v4514
  %v5191 = vpack.c.bf16 %v4517, %v4516
  %s5192 = scalar_lea.vmem %s4, 448
  %v5193 = vld [vmem:[%s5192] sm:$0xf]
  %v5194 = vld [vmem:[%s5192 + $0x4] sm:$0xf]
  %v5195 = vld [vmem:[%s5192 + $0x8] sm:$0xf]
  %v5196 = vld [vmem:[%s5192 + $0xc] sm:$0xf]
  %v5197 = vld [vmem:[%s5192 + $0x10] sm:$0xf]
  %v5198 = vld [vmem:[%s5192 + $0x14] sm:$0xf]
  %v5199 = vld [vmem:[%s5192 + $0x18] sm:$0xf]
  %v5200 = vld [vmem:[%s5192 + $0x1c] sm:$0xf]
  %v5201 = vld [vmem:[%s5192 + $0x20] sm:$0xf]
  %v5202 = vld [vmem:[%s5192 + $0x24] sm:$0xf]
  %v5203 = vld [vmem:[%s5192 + $0x28] sm:$0xf]
  %v5204 = vld [vmem:[%s5192 + $0x2c] sm:$0xf]
  %v5205 = vld [vmem:[%s5192 + $0x30] sm:$0xf]
  %v5206 = vld [vmem:[%s5192 + $0x34] sm:$0xf]
  %v5207 = vld [vmem:[%s5192 + $0x38] sm:$0xf]
  %v5208 = vld [vmem:[%s5192 + $0x3c] sm:$0xf]
  %v5225 = vunpack.c.l.b16 %v5193
  %v5226 = vunpack.c.l.b16 %v5194
  %v5227 = vunpack.c.l.b16 %v5195
  %v5228 = vunpack.c.l.b16 %v5196
  %v5229 = vunpack.c.l.b16 %v5197
  %v5230 = vunpack.c.l.b16 %v5198
  %v5231 = vunpack.c.l.b16 %v5199
  %v5232 = vunpack.c.l.b16 %v5200
  %v5233 = vunpack.c.l.b16 %v5201
  %v5234 = vunpack.c.l.b16 %v5202
  %v5235 = vunpack.c.l.b16 %v5203
  %v5236 = vunpack.c.l.b16 %v5204
  %v5237 = vunpack.c.l.b16 %v5205
  %v5238 = vunpack.c.l.b16 %v5206
  %v5239 = vunpack.c.l.b16 %v5207
  %v5240 = vunpack.c.l.b16 %v5208
  %v5241 = vpack.c.b16 %v5226, %v5225
  %v5242 = vpack.c.b16 %v5228, %v5227
  %v5243 = vpack.c.b16 %v5230, %v5229
  %v5244 = vpack.c.b16 %v5232, %v5231
  %v5245 = vpack.c.b16 %v5234, %v5233
  %v5246 = vpack.c.b16 %v5236, %v5235
  %v5247 = vpack.c.b16 %v5238, %v5237
  %v5248 = vpack.c.b16 %v5240, %v5239
  %5257 = vmatprep.subr.bf16.mxu0 0
  %5258 = vmatpush1.bf16.msra.mxu0 %v5248
  %5259 = vmatprep.subr.bf16.mxu0 0
  %5260 = vmatpush1.bf16.msra.mxu0 %v5247
  %5261 = vmatprep.subr.bf16.mxu0 0
  %5262 = vmatpush1.bf16.msra.mxu0 %v5246
  %5263 = vmatprep.subr.bf16.mxu0 0
  %5264 = vmatpush1.bf16.msra.mxu0 %v5245
  %5265 = vmatprep.subr.bf16.mxu0 0
  %5266 = vmatpush1.bf16.msra.mxu0 %v5244
  %5267 = vmatprep.subr.bf16.mxu0 0
  %5268 = vmatpush1.bf16.msra.mxu0 %v5243
  %5269 = vmatprep.subr.bf16.mxu0 0
  %5270 = vmatpush1.bf16.msra.mxu0 %v5242
  %5271 = vmatprep.subr.bf16.mxu0 0
  %5272 = vmatpush1.bf16.msra.mxu0 %v5241
  %5273 = vmatprep.subr.bf16.mxu0 0
  %5274 = vmatpush2.bf16.msra.mxu0 0
  %5275 = vmatprep.subr.bf16.mxu0 0
  %5276 = vmatpush2.bf16.msra.mxu0 0
  %5277 = vmatprep.subr.bf16.mxu0 0
  %5278 = vmatpush2.bf16.msra.mxu0 0
  %5279 = vmatprep.subr.bf16.mxu0 0
  %5280 = vmatpush2.bf16.msra.mxu0 0
  %5281 = vmatprep.subr.bf16.mxu0 0
  %5282 = vmatpush2.bf16.msra.mxu0 0
  %5283 = vmatprep.subr.bf16.mxu0 0
  %5284 = vmatpush2.bf16.msra.mxu0 0
  %5285 = vmatprep.subr.bf16.mxu0 0
  %5286 = vmatpush2.bf16.msra.mxu0 0
  %5287 = vmatprep.subr.bf16.mxu0 0
  %5288 = vmatpush2.bf16.msra.mxu0 0
  %5289 = vmatprep.mubr.bf16.mxu0 0
  %5290 = vmatmul.mubr.bf16.gmra.mxu0 %v5160
  %v5291 = vpop.f32.mrf.mxu0
  %v5292 = vadd.f32 0.0, %v5291
  %v5293 = vpop.f32.mrf.mxu0
  %v5294 = vpop.f32.mrf.mxu0
  %v5295 = vadd.f32 0.0, %v5294
  %v5296 = vpop.f32.mrf.mxu0
  %5297 = vmatprep.mubr.bf16.mxu0 0
  %5298 = vmatmul.mubr.bf16.gmra.mxu0 %v5161
  %v5299 = vpop.f32.mrf.mxu0
  %v5300 = vadd.f32 0.0, %v5299
  %v5301 = vpop.f32.mrf.mxu0
  %v5302 = vpop.f32.mrf.mxu0
  %v5303 = vadd.f32 0.0, %v5302
  %v5304 = vpop.f32.mrf.mxu0
  %5305 = vmatprep.mubr.bf16.mxu0 0
  %5306 = vmatmul.mubr.bf16.gmra.mxu0 %v5162
  %v5307 = vpop.f32.mrf.mxu0
  %v5308 = vadd.f32 0.0, %v5307
  %v5309 = vpop.f32.mrf.mxu0
  %v5310 = vpop.f32.mrf.mxu0
  %v5311 = vadd.f32 0.0, %v5310
  %v5312 = vpop.f32.mrf.mxu0
  %5313 = vmatprep.mubr.bf16.mxu0 0
  %5314 = vmatmul.mubr.bf16.gmra.mxu0 %v5163
  %v5315 = vpop.f32.mrf.mxu0
  %v5316 = vadd.f32 0.0, %v5315
  %v5317 = vpop.f32.mrf.mxu0
  %v5318 = vpop.f32.mrf.mxu0
  %v5319 = vadd.f32 0.0, %v5318
  %v5320 = vpop.f32.mrf.mxu0
  %5321 = vmatprep.mubr.bf16.mxu0 0
  %5322 = vmatmul.mubr.bf16.gmra.mxu0 %v5164
  %v5323 = vpop.f32.mrf.mxu0
  %v5324 = vadd.f32 0.0, %v5323
  %v5325 = vpop.f32.mrf.mxu0
  %v5326 = vpop.f32.mrf.mxu0
  %v5327 = vadd.f32 0.0, %v5326
  %v5328 = vpop.f32.mrf.mxu0
  %5329 = vmatprep.mubr.bf16.mxu0 0
  %5330 = vmatmul.mubr.bf16.gmra.mxu0 %v5165
  %v5331 = vpop.f32.mrf.mxu0
  %v5332 = vadd.f32 0.0, %v5331
  %v5333 = vpop.f32.mrf.mxu0
  %v5334 = vpop.f32.mrf.mxu0
  %v5335 = vadd.f32 0.0, %v5334
  %v5336 = vpop.f32.mrf.mxu0
  %5337 = vmatprep.mubr.bf16.mxu0 0
  %5338 = vmatmul.mubr.bf16.gmra.mxu0 %v5166
  %v5339 = vpop.f32.mrf.mxu0
  %v5340 = vadd.f32 0.0, %v5339
  %v5341 = vpop.f32.mrf.mxu0
  %v5342 = vpop.f32.mrf.mxu0
  %v5343 = vadd.f32 0.0, %v5342
  %v5344 = vpop.f32.mrf.mxu0
  %5345 = vmatprep.mubr.bf16.mxu0 0
  %5346 = vmatmul.mubr.bf16.gmra.mxu0 %v5167
  %v5347 = vpop.f32.mrf.mxu0
  %v5348 = vadd.f32 0.0, %v5347
  %v5349 = vpop.f32.mrf.mxu0
  %v5350 = vpop.f32.mrf.mxu0
  %v5351 = vadd.f32 0.0, %v5350
  %v5352 = vpop.f32.mrf.mxu0
  %5353 = vmatprep.mubr.bf16.mxu0 0
  %5354 = vmatmul.mubr.bf16.gmra.mxu0 %v5168
  %v5355 = vpop.f32.mrf.mxu0
  %v5356 = vadd.f32 0.0, %v5355
  %v5357 = vpop.f32.mrf.mxu0
  %v5358 = vpop.f32.mrf.mxu0
  %v5359 = vadd.f32 0.0, %v5358
  %v5360 = vpop.f32.mrf.mxu0
  %5361 = vmatprep.mubr.bf16.mxu0 0
  %5362 = vmatmul.mubr.bf16.gmra.mxu0 %v5169
  %v5363 = vpop.f32.mrf.mxu0
  %v5364 = vadd.f32 0.0, %v5363
  %v5365 = vpop.f32.mrf.mxu0
  %v5366 = vpop.f32.mrf.mxu0
  %v5367 = vadd.f32 0.0, %v5366
  %v5368 = vpop.f32.mrf.mxu0
  %5369 = vmatprep.mubr.bf16.mxu0 0
  %5370 = vmatmul.mubr.bf16.gmra.mxu0 %v5170
  %v5371 = vpop.f32.mrf.mxu0
  %v5372 = vadd.f32 0.0, %v5371
  %v5373 = vpop.f32.mrf.mxu0
  %v5374 = vpop.f32.mrf.mxu0
  %v5375 = vadd.f32 0.0, %v5374
  %v5376 = vpop.f32.mrf.mxu0
  %5377 = vmatprep.mubr.bf16.mxu0 0
  %5378 = vmatmul.mubr.bf16.gmra.mxu0 %v5171
  %v5379 = vpop.f32.mrf.mxu0
  %v5380 = vadd.f32 0.0, %v5379
  %v5381 = vpop.f32.mrf.mxu0
  %v5382 = vpop.f32.mrf.mxu0
  %v5383 = vadd.f32 0.0, %v5382
  %v5384 = vpop.f32.mrf.mxu0
  %5385 = vmatprep.mubr.bf16.mxu0 0
  %5386 = vmatmul.mubr.bf16.gmra.mxu0 %v5172
  %v5387 = vpop.f32.mrf.mxu0
  %v5388 = vadd.f32 0.0, %v5387
  %v5389 = vpop.f32.mrf.mxu0
  %v5390 = vpop.f32.mrf.mxu0
  %v5391 = vadd.f32 0.0, %v5390
  %v5392 = vpop.f32.mrf.mxu0
  %5393 = vmatprep.mubr.bf16.mxu0 0
  %5394 = vmatmul.mubr.bf16.gmra.mxu0 %v5173
  %v5395 = vpop.f32.mrf.mxu0
  %v5396 = vadd.f32 0.0, %v5395
  %v5397 = vpop.f32.mrf.mxu0
  %v5398 = vpop.f32.mrf.mxu0
  %v5399 = vadd.f32 0.0, %v5398
  %v5400 = vpop.f32.mrf.mxu0
  %5401 = vmatprep.mubr.bf16.mxu0 0
  %5402 = vmatmul.mubr.bf16.gmra.mxu0 %v5174
  %v5403 = vpop.f32.mrf.mxu0
  %v5404 = vadd.f32 0.0, %v5403
  %v5405 = vpop.f32.mrf.mxu0
  %v5406 = vpop.f32.mrf.mxu0
  %v5407 = vadd.f32 0.0, %v5406
  %v5408 = vpop.f32.mrf.mxu0
  %5409 = vmatprep.mubr.bf16.mxu0 0
  %5410 = vmatmul.mubr.bf16.gmra.mxu0 %v5175
  %v5411 = vpop.f32.mrf.mxu0
  %v5412 = vadd.f32 0.0, %v5411
  %v5413 = vpop.f32.mrf.mxu0
  %v5414 = vpop.f32.mrf.mxu0
  %v5415 = vadd.f32 0.0, %v5414
  %v5416 = vpop.f32.mrf.mxu0
  %5417 = vmatprep.mubr.bf16.mxu0 0
  %5418 = vmatmul.mubr.bf16.gmra.mxu0 %v5176
  %v5419 = vpop.f32.mrf.mxu0
  %v5420 = vadd.f32 0.0, %v5419
  %v5421 = vpop.f32.mrf.mxu0
  %v5422 = vpop.f32.mrf.mxu0
  %v5423 = vadd.f32 0.0, %v5422
  %v5424 = vpop.f32.mrf.mxu0
  %5425 = vmatprep.mubr.bf16.mxu0 0
  %5426 = vmatmul.mubr.bf16.gmra.mxu0 %v5177
  %v5427 = vpop.f32.mrf.mxu0
  %v5428 = vadd.f32 0.0, %v5427
  %v5429 = vpop.f32.mrf.mxu0
  %v5430 = vpop.f32.mrf.mxu0
  %v5431 = vadd.f32 0.0, %v5430
  %v5432 = vpop.f32.mrf.mxu0
  %5433 = vmatprep.mubr.bf16.mxu0 0
  %5434 = vmatmul.mubr.bf16.gmra.mxu0 %v5178
  %v5435 = vpop.f32.mrf.mxu0
  %v5436 = vadd.f32 0.0, %v5435
  %v5437 = vpop.f32.mrf.mxu0
  %v5438 = vpop.f32.mrf.mxu0
  %v5439 = vadd.f32 0.0, %v5438
  %v5440 = vpop.f32.mrf.mxu0
  %5441 = vmatprep.mubr.bf16.mxu0 0
  %5442 = vmatmul.mubr.bf16.gmra.mxu0 %v5179
  %v5443 = vpop.f32.mrf.mxu0
  %v5444 = vadd.f32 0.0, %v5443
  %v5445 = vpop.f32.mrf.mxu0
  %v5446 = vpop.f32.mrf.mxu0
  %v5447 = vadd.f32 0.0, %v5446
  %v5448 = vpop.f32.mrf.mxu0
  %5449 = vmatprep.mubr.bf16.mxu0 0
  %5450 = vmatmul.mubr.bf16.gmra.mxu0 %v5180
  %v5451 = vpop.f32.mrf.mxu0
  %v5452 = vadd.f32 0.0, %v5451
  %v5453 = vpop.f32.mrf.mxu0
  %v5454 = vpop.f32.mrf.mxu0
  %v5455 = vadd.f32 0.0, %v5454
  %v5456 = vpop.f32.mrf.mxu0
  %5457 = vmatprep.mubr.bf16.mxu0 0
  %5458 = vmatmul.mubr.bf16.gmra.mxu0 %v5181
  %v5459 = vpop.f32.mrf.mxu0
  %v5460 = vadd.f32 0.0, %v5459
  %v5461 = vpop.f32.mrf.mxu0
  %v5462 = vpop.f32.mrf.mxu0
  %v5463 = vadd.f32 0.0, %v5462
  %v5464 = vpop.f32.mrf.mxu0
  %5465 = vmatprep.mubr.bf16.mxu0 0
  %5466 = vmatmul.mubr.bf16.gmra.mxu0 %v5182
  %v5467 = vpop.f32.mrf.mxu0
  %v5468 = vadd.f32 0.0, %v5467
  %v5469 = vpop.f32.mrf.mxu0
  %v5470 = vpop.f32.mrf.mxu0
  %v5471 = vadd.f32 0.0, %v5470
  %v5472 = vpop.f32.mrf.mxu0
  %5473 = vmatprep.mubr.bf16.mxu0 0
  %5474 = vmatmul.mubr.bf16.gmra.mxu0 %v5183
  %v5475 = vpop.f32.mrf.mxu0
  %v5476 = vadd.f32 0.0, %v5475
  %v5477 = vpop.f32.mrf.mxu0
  %v5478 = vpop.f32.mrf.mxu0
  %v5479 = vadd.f32 0.0, %v5478
  %v5480 = vpop.f32.mrf.mxu0
  %5481 = vmatprep.mubr.bf16.mxu0 0
  %5482 = vmatmul.mubr.bf16.gmra.mxu0 %v5184
  %v5483 = vpop.f32.mrf.mxu0
  %v5484 = vadd.f32 0.0, %v5483
  %v5485 = vpop.f32.mrf.mxu0
  %v5486 = vpop.f32.mrf.mxu0
  %v5487 = vadd.f32 0.0, %v5486
  %v5488 = vpop.f32.mrf.mxu0
  %5489 = vmatprep.mubr.bf16.mxu0 0
  %5490 = vmatmul.mubr.bf16.gmra.mxu0 %v5185
  %v5491 = vpop.f32.mrf.mxu0
  %v5492 = vadd.f32 0.0, %v5491
  %v5493 = vpop.f32.mrf.mxu0
  %v5494 = vpop.f32.mrf.mxu0
  %v5495 = vadd.f32 0.0, %v5494
  %v5496 = vpop.f32.mrf.mxu0
  %5497 = vmatprep.mubr.bf16.mxu0 0
  %5498 = vmatmul.mubr.bf16.gmra.mxu0 %v5186
  %v5499 = vpop.f32.mrf.mxu0
  %v5500 = vadd.f32 0.0, %v5499
  %v5501 = vpop.f32.mrf.mxu0
  %v5502 = vpop.f32.mrf.mxu0
  %v5503 = vadd.f32 0.0, %v5502
  %v5504 = vpop.f32.mrf.mxu0
  %5505 = vmatprep.mubr.bf16.mxu0 0
  %5506 = vmatmul.mubr.bf16.gmra.mxu0 %v5187
  %v5507 = vpop.f32.mrf.mxu0
  %v5508 = vadd.f32 0.0, %v5507
  %v5509 = vpop.f32.mrf.mxu0
  %v5510 = vpop.f32.mrf.mxu0
  %v5511 = vadd.f32 0.0, %v5510
  %v5512 = vpop.f32.mrf.mxu0
  %5513 = vmatprep.mubr.bf16.mxu0 0
  %5514 = vmatmul.mubr.bf16.gmra.mxu0 %v5188
  %v5515 = vpop.f32.mrf.mxu0
  %v5516 = vadd.f32 0.0, %v5515
  %v5517 = vpop.f32.mrf.mxu0
  %v5518 = vpop.f32.mrf.mxu0
  %v5519 = vadd.f32 0.0, %v5518
  %v5520 = vpop.f32.mrf.mxu0
  %5521 = vmatprep.mubr.bf16.mxu0 0
  %5522 = vmatmul.mubr.bf16.gmra.mxu0 %v5189
  %v5523 = vpop.f32.mrf.mxu0
  %v5524 = vadd.f32 0.0, %v5523
  %v5525 = vpop.f32.mrf.mxu0
  %v5526 = vpop.f32.mrf.mxu0
  %v5527 = vadd.f32 0.0, %v5526
  %v5528 = vpop.f32.mrf.mxu0
  %5529 = vmatprep.mubr.bf16.mxu0 0
  %5530 = vmatmul.mubr.bf16.gmra.mxu0 %v5190
  %v5531 = vpop.f32.mrf.mxu0
  %v5532 = vadd.f32 0.0, %v5531
  %v5533 = vpop.f32.mrf.mxu0
  %v5534 = vpop.f32.mrf.mxu0
  %v5535 = vadd.f32 0.0, %v5534
  %v5536 = vpop.f32.mrf.mxu0
  %5537 = vmatprep.mubr.bf16.mxu0 0
  %5538 = vmatmul.mubr.bf16.gmra.mxu0 %v5191
  %v5539 = vpop.f32.mrf.mxu0
  %v5540 = vadd.f32 0.0, %v5539
  %v5541 = vpop.f32.mrf.mxu0
  %v5542 = vpop.f32.mrf.mxu0
  %v5543 = vadd.f32 0.0, %v5542
  %v5544 = vpop.f32.mrf.mxu0
  %5545 = vdwg.mxu0
  %v5546 = vadd.f32 %v5096, %v5292
  %v5547 = vadd.f32 %v5097, %v5295
  %v5548 = vadd.f32 %v5098, %v5300
  %v5549 = vadd.f32 %v5099, %v5303
  %v5550 = vadd.f32 %v5100, %v5308
  %v5551 = vadd.f32 %v5101, %v5311
  %v5552 = vadd.f32 %v5102, %v5316
  %v5553 = vadd.f32 %v5103, %v5319
  %v5554 = vadd.f32 %v5104, %v5324
  %v5555 = vadd.f32 %v5105, %v5327
  %v5556 = vadd.f32 %v5106, %v5332
  %v5557 = vadd.f32 %v5107, %v5335
  %v5558 = vadd.f32 %v5108, %v5340
  %v5559 = vadd.f32 %v5109, %v5343
  %v5560 = vadd.f32 %v5110, %v5348
  %v5561 = vadd.f32 %v5111, %v5351
  %v5562 = vadd.f32 %v5112, %v5356
  %v5563 = vadd.f32 %v5113, %v5359
  %v5564 = vadd.f32 %v5114, %v5364
  %v5565 = vadd.f32 %v5115, %v5367
  %v5566 = vadd.f32 %v5116, %v5372
  %v5567 = vadd.f32 %v5117, %v5375
  %v5568 = vadd.f32 %v5118, %v5380
  %v5569 = vadd.f32 %v5119, %v5383
  %v5570 = vadd.f32 %v5120, %v5388
  %v5571 = vadd.f32 %v5121, %v5391
  %v5572 = vadd.f32 %v5122, %v5396
  %v5573 = vadd.f32 %v5123, %v5399
  %v5574 = vadd.f32 %v5124, %v5404
  %v5575 = vadd.f32 %v5125, %v5407
  %v5576 = vadd.f32 %v5126, %v5412
  %v5577 = vadd.f32 %v5127, %v5415
  %v5578 = vadd.f32 %v5128, %v5420
  %v5579 = vadd.f32 %v5129, %v5423
  %v5580 = vadd.f32 %v5130, %v5428
  %v5581 = vadd.f32 %v5131, %v5431
  %v5582 = vadd.f32 %v5132, %v5436
  %v5583 = vadd.f32 %v5133, %v5439
  %v5584 = vadd.f32 %v5134, %v5444
  %v5585 = vadd.f32 %v5135, %v5447
  %v5586 = vadd.f32 %v5136, %v5452
  %v5587 = vadd.f32 %v5137, %v5455
  %v5588 = vadd.f32 %v5138, %v5460
  %v5589 = vadd.f32 %v5139, %v5463
  %v5590 = vadd.f32 %v5140, %v5468
  %v5591 = vadd.f32 %v5141, %v5471
  %v5592 = vadd.f32 %v5142, %v5476
  %v5593 = vadd.f32 %v5143, %v5479
  %v5594 = vadd.f32 %v5144, %v5484
  %v5595 = vadd.f32 %v5145, %v5487
  %v5596 = vadd.f32 %v5146, %v5492
  %v5597 = vadd.f32 %v5147, %v5495
  %v5598 = vadd.f32 %v5148, %v5500
  %v5599 = vadd.f32 %v5149, %v5503
  %v5600 = vadd.f32 %v5150, %v5508
  %v5601 = vadd.f32 %v5151, %v5511
  %v5602 = vadd.f32 %v5152, %v5516
  %v5603 = vadd.f32 %v5153, %v5519
  %v5604 = vadd.f32 %v5154, %v5524
  %v5605 = vadd.f32 %v5155, %v5527
  %v5606 = vadd.f32 %v5156, %v5532
  %v5607 = vadd.f32 %v5157, %v5535
  %v5608 = vadd.f32 %v5158, %v5540
  %v5609 = vadd.f32 %v5159, %v5543
  %v5610 = vrot.slane %v4454, 1
  %v5611 = vrot.slane %v4456, 1
  %v5612 = vrot.slane %v4458, 1
  %v5613 = vrot.slane %v4460, 1
  %v5614 = vrot.slane %v4462, 1
  %v5615 = vrot.slane %v4464, 1
  %v5616 = vrot.slane %v4466, 1
  %v5617 = vrot.slane %v4468, 1
  %v5618 = vrot.slane %v4470, 1
  %v5619 = vrot.slane %v4472, 1
  %v5620 = vrot.slane %v4474, 1
  %v5621 = vrot.slane %v4476, 1
  %v5622 = vrot.slane %v4478, 1
  %v5623 = vrot.slane %v4480, 1
  %v5624 = vrot.slane %v4482, 1
  %v5625 = vrot.slane %v4484, 1
  %v5626 = vrot.slane %v4486, 1
  %v5627 = vrot.slane %v4488, 1
  %v5628 = vrot.slane %v4490, 1
  %v5629 = vrot.slane %v4492, 1
  %v5630 = vrot.slane %v4494, 1
  %v5631 = vrot.slane %v4496, 1
  %v5632 = vrot.slane %v4498, 1
  %v5633 = vrot.slane %v4500, 1
  %v5634 = vrot.slane %v4502, 1
  %v5635 = vrot.slane %v4504, 1
  %v5636 = vrot.slane %v4506, 1
  %v5637 = vrot.slane %v4508, 1
  %v5638 = vrot.slane %v4510, 1
  %v5639 = vrot.slane %v4512, 1
  %v5640 = vrot.slane %v4514, 1
  %v5641 = vrot.slane %v4516, 1
  %v5642 = vrot.slane %v4455, 1
  %v5643 = vrot.slane %v4457, 1
  %v5644 = vrot.slane %v4459, 1
  %v5645 = vrot.slane %v4461, 1
  %v5646 = vrot.slane %v4463, 1
  %v5647 = vrot.slane %v4465, 1
  %v5648 = vrot.slane %v4467, 1
  %v5649 = vrot.slane %v4469, 1
  %v5650 = vrot.slane %v4471, 1
  %v5651 = vrot.slane %v4473, 1
  %v5652 = vrot.slane %v4475, 1
  %v5653 = vrot.slane %v4477, 1
  %v5654 = vrot.slane %v4479, 1
  %v5655 = vrot.slane %v4481, 1
  %v5656 = vrot.slane %v4483, 1
  %v5657 = vrot.slane %v4485, 1
  %v5658 = vrot.slane %v4487, 1
  %v5659 = vrot.slane %v4489, 1
  %v5660 = vrot.slane %v4491, 1
  %v5661 = vrot.slane %v4493, 1
  %v5662 = vrot.slane %v4495, 1
  %v5663 = vrot.slane %v4497, 1
  %v5664 = vrot.slane %v4499, 1
  %v5665 = vrot.slane %v4501, 1
  %v5666 = vrot.slane %v4503, 1
  %v5667 = vrot.slane %v4505, 1
  %v5668 = vrot.slane %v4507, 1
  %v5669 = vrot.slane %v4509, 1
  %v5670 = vrot.slane %v4511, 1
  %v5671 = vrot.slane %v4513, 1
  %v5672 = vrot.slane %v4515, 1
  %v5673 = vrot.slane %v4517, 1
  %v5674 = vsel %vm2076, %v5610, %v5642
  %v5675 = vsel %vm2076, %v5611, %v5643
  %v5676 = vsel %vm2076, %v5612, %v5644
  %v5677 = vsel %vm2076, %v5613, %v5645
  %v5678 = vsel %vm2076, %v5614, %v5646
  %v5679 = vsel %vm2076, %v5615, %v5647
  %v5680 = vsel %vm2076, %v5616, %v5648
  %v5681 = vsel %vm2076, %v5617, %v5649
  %v5682 = vsel %vm2076, %v5618, %v5650
  %v5683 = vsel %vm2076, %v5619, %v5651
  %v5684 = vsel %vm2076, %v5620, %v5652
  %v5685 = vsel %vm2076, %v5621, %v5653
  %v5686 = vsel %vm2076, %v5622, %v5654
  %v5687 = vsel %vm2076, %v5623, %v5655
  %v5688 = vsel %vm2076, %v5624, %v5656
  %v5689 = vsel %vm2076, %v5625, %v5657
  %v5690 = vsel %vm2076, %v5626, %v5658
  %v5691 = vsel %vm2076, %v5627, %v5659
  %v5692 = vsel %vm2076, %v5628, %v5660
  %v5693 = vsel %vm2076, %v5629, %v5661
  %v5694 = vsel %vm2076, %v5630, %v5662
  %v5695 = vsel %vm2076, %v5631, %v5663
  %v5696 = vsel %vm2076, %v5632, %v5664
  %v5697 = vsel %vm2076, %v5633, %v5665
  %v5698 = vsel %vm2076, %v5634, %v5666
  %v5699 = vsel %vm2076, %v5635, %v5667
  %v5700 = vsel %vm2076, %v5636, %v5668
  %v5701 = vsel %vm2076, %v5637, %v5669
  %v5702 = vsel %vm2076, %v5638, %v5670
  %v5703 = vsel %vm2076, %v5639, %v5671
  %v5704 = vsel %vm2076, %v5640, %v5672
  %v5705 = vsel %vm2076, %v5641, %v5673
  %v5706 = vsel %vm2076, %v5642, %v5610
  %v5707 = vsel %vm2076, %v5643, %v5611
  %v5708 = vsel %vm2076, %v5644, %v5612
  %v5709 = vsel %vm2076, %v5645, %v5613
  %v5710 = vsel %vm2076, %v5646, %v5614
  %v5711 = vsel %vm2076, %v5647, %v5615
  %v5712 = vsel %vm2076, %v5648, %v5616
  %v5713 = vsel %vm2076, %v5649, %v5617
  %v5714 = vsel %vm2076, %v5650, %v5618
  %v5715 = vsel %vm2076, %v5651, %v5619
  %v5716 = vsel %vm2076, %v5652, %v5620
  %v5717 = vsel %vm2076, %v5653, %v5621
  %v5718 = vsel %vm2076, %v5654, %v5622
  %v5719 = vsel %vm2076, %v5655, %v5623
  %v5720 = vsel %vm2076, %v5656, %v5624
  %v5721 = vsel %vm2076, %v5657, %v5625
  %v5722 = vsel %vm2076, %v5658, %v5626
  %v5723 = vsel %vm2076, %v5659, %v5627
  %v5724 = vsel %vm2076, %v5660, %v5628
  %v5725 = vsel %vm2076, %v5661, %v5629
  %v5726 = vsel %vm2076, %v5662, %v5630
  %v5727 = vsel %vm2076, %v5663, %v5631
  %v5728 = vsel %vm2076, %v5664, %v5632
  %v5729 = vsel %vm2076, %v5665, %v5633
  %v5730 = vsel %vm2076, %v5666, %v5634
  %v5731 = vsel %vm2076, %v5667, %v5635
  %v5732 = vsel %vm2076, %v5668, %v5636
  %v5733 = vsel %vm2076, %v5669, %v5637
  %v5734 = vsel %vm2076, %v5670, %v5638
  %v5735 = vsel %vm2076, %v5671, %v5639
  %v5736 = vsel %vm2076, %v5672, %v5640
  %v5737 = vsel %vm2076, %v5673, %v5641
  %v5738 = vsel %vm982, %v5674, 0.0
  %v5739 = vsel %vm983, %v5706, 0.0
  %v5740 = vsel %vm982, %v5675, 0.0
  %v5741 = vsel %vm983, %v5707, 0.0
  %v5742 = vsel %vm982, %v5676, 0.0
  %v5743 = vsel %vm983, %v5708, 0.0
  %v5744 = vsel %vm982, %v5677, 0.0
  %v5745 = vsel %vm983, %v5709, 0.0
  %v5746 = vsel %vm982, %v5678, 0.0
  %v5747 = vsel %vm983, %v5710, 0.0
  %v5748 = vsel %vm982, %v5679, 0.0
  %v5749 = vsel %vm983, %v5711, 0.0
  %v5750 = vsel %vm982, %v5680, 0.0
  %v5751 = vsel %vm983, %v5712, 0.0
  %v5752 = vsel %vm982, %v5681, 0.0
  %v5753 = vsel %vm983, %v5713, 0.0
  %v5754 = vsel %vm982, %v5682, 0.0
  %v5755 = vsel %vm983, %v5714, 0.0
  %v5756 = vsel %vm982, %v5683, 0.0
  %v5757 = vsel %vm983, %v5715, 0.0
  %v5758 = vsel %vm982, %v5684, 0.0
  %v5759 = vsel %vm983, %v5716, 0.0
  %v5760 = vsel %vm982, %v5685, 0.0
  %v5761 = vsel %vm983, %v5717, 0.0
  %v5762 = vsel %vm982, %v5686, 0.0
  %v5763 = vsel %vm983, %v5718, 0.0
  %v5764 = vsel %vm982, %v5687, 0.0
  %v5765 = vsel %vm983, %v5719, 0.0
  %v5766 = vsel %vm982, %v5688, 0.0
  %v5767 = vsel %vm983, %v5720, 0.0
  %v5768 = vsel %vm982, %v5689, 0.0
  %v5769 = vsel %vm983, %v5721, 0.0
  %v5770 = vsel %vm982, %v5690, 0.0
  %v5771 = vsel %vm983, %v5722, 0.0
  %v5772 = vsel %vm982, %v5691, 0.0
  %v5773 = vsel %vm983, %v5723, 0.0
  %v5774 = vsel %vm982, %v5692, 0.0
  %v5775 = vsel %vm983, %v5724, 0.0
  %v5776 = vsel %vm982, %v5693, 0.0
  %v5777 = vsel %vm983, %v5725, 0.0
  %v5778 = vsel %vm982, %v5694, 0.0
  %v5779 = vsel %vm983, %v5726, 0.0
  %v5780 = vsel %vm982, %v5695, 0.0
  %v5781 = vsel %vm983, %v5727, 0.0
  %v5782 = vsel %vm982, %v5696, 0.0
  %v5783 = vsel %vm983, %v5728, 0.0
  %v5784 = vsel %vm982, %v5697, 0.0
  %v5785 = vsel %vm983, %v5729, 0.0
  %v5786 = vsel %vm982, %v5698, 0.0
  %v5787 = vsel %vm983, %v5730, 0.0
  %v5788 = vsel %vm982, %v5699, 0.0
  %v5789 = vsel %vm983, %v5731, 0.0
  %v5790 = vsel %vm982, %v5700, 0.0
  %v5791 = vsel %vm983, %v5732, 0.0
  %v5792 = vsel %vm982, %v5701, 0.0
  %v5793 = vsel %vm983, %v5733, 0.0
  %v5794 = vsel %vm982, %v5702, 0.0
  %v5795 = vsel %vm983, %v5734, 0.0
  %v5796 = vsel %vm982, %v5703, 0.0
  %v5797 = vsel %vm983, %v5735, 0.0
  %v5798 = vsel %vm982, %v5704, 0.0
  %v5799 = vsel %vm983, %v5736, 0.0
  %v5800 = vsel %vm982, %v5705, 0.0
  %v5801 = vsel %vm983, %v5737, 0.0
  %v5802 = vpack.c.bf16 %v5739, %v5738
  %v5803 = vpack.c.bf16 %v5741, %v5740
  %v5804 = vpack.c.bf16 %v5743, %v5742
  %v5805 = vpack.c.bf16 %v5745, %v5744
  %v5806 = vpack.c.bf16 %v5747, %v5746
  %v5807 = vpack.c.bf16 %v5749, %v5748
  %v5808 = vpack.c.bf16 %v5751, %v5750
  %v5809 = vpack.c.bf16 %v5753, %v5752
  %v5810 = vpack.c.bf16 %v5755, %v5754
  %v5811 = vpack.c.bf16 %v5757, %v5756
  %v5812 = vpack.c.bf16 %v5759, %v5758
  %v5813 = vpack.c.bf16 %v5761, %v5760
  %v5814 = vpack.c.bf16 %v5763, %v5762
  %v5815 = vpack.c.bf16 %v5765, %v5764
  %v5816 = vpack.c.bf16 %v5767, %v5766
  %v5817 = vpack.c.bf16 %v5769, %v5768
  %v5818 = vpack.c.bf16 %v5771, %v5770
  %v5819 = vpack.c.bf16 %v5773, %v5772
  %v5820 = vpack.c.bf16 %v5775, %v5774
  %v5821 = vpack.c.bf16 %v5777, %v5776
  %v5822 = vpack.c.bf16 %v5779, %v5778
  %v5823 = vpack.c.bf16 %v5781, %v5780
  %v5824 = vpack.c.bf16 %v5783, %v5782
  %v5825 = vpack.c.bf16 %v5785, %v5784
  %v5826 = vpack.c.bf16 %v5787, %v5786
  %v5827 = vpack.c.bf16 %v5789, %v5788
  %v5828 = vpack.c.bf16 %v5791, %v5790
  %v5829 = vpack.c.bf16 %v5793, %v5792
  %v5830 = vpack.c.bf16 %v5795, %v5794
  %v5831 = vpack.c.bf16 %v5797, %v5796
  %v5832 = vpack.c.bf16 %v5799, %v5798
  %v5833 = vpack.c.bf16 %v5801, %v5800
  %s5834 = scalar_lea.vmem %s4, 512
  %v5835 = vld [vmem:[%s5834] sm:$0xf]
  %v5836 = vld [vmem:[%s5834 + $0x4] sm:$0xf]
  %v5837 = vld [vmem:[%s5834 + $0x8] sm:$0xf]
  %v5838 = vld [vmem:[%s5834 + $0xc] sm:$0xf]
  %v5839 = vld [vmem:[%s5834 + $0x10] sm:$0xf]
  %v5840 = vld [vmem:[%s5834 + $0x14] sm:$0xf]
  %v5841 = vld [vmem:[%s5834 + $0x18] sm:$0xf]
  %v5842 = vld [vmem:[%s5834 + $0x1c] sm:$0xf]
  %v5843 = vld [vmem:[%s5834 + $0x20] sm:$0xf]
  %v5844 = vld [vmem:[%s5834 + $0x24] sm:$0xf]
  %v5845 = vld [vmem:[%s5834 + $0x28] sm:$0xf]
  %v5846 = vld [vmem:[%s5834 + $0x2c] sm:$0xf]
  %v5847 = vld [vmem:[%s5834 + $0x30] sm:$0xf]
  %v5848 = vld [vmem:[%s5834 + $0x34] sm:$0xf]
  %v5849 = vld [vmem:[%s5834 + $0x38] sm:$0xf]
  %v5850 = vld [vmem:[%s5834 + $0x3c] sm:$0xf]
  %v5867 = vunpack.c.l.b16 %v5835
  %v5868 = vunpack.c.l.b16 %v5836
  %v5869 = vunpack.c.l.b16 %v5837
  %v5870 = vunpack.c.l.b16 %v5838
  %v5871 = vunpack.c.l.b16 %v5839
  %v5872 = vunpack.c.l.b16 %v5840
  %v5873 = vunpack.c.l.b16 %v5841
  %v5874 = vunpack.c.l.b16 %v5842
  %v5875 = vunpack.c.l.b16 %v5843
  %v5876 = vunpack.c.l.b16 %v5844
  %v5877 = vunpack.c.l.b16 %v5845
  %v5878 = vunpack.c.l.b16 %v5846
  %v5879 = vunpack.c.l.b16 %v5847
  %v5880 = vunpack.c.l.b16 %v5848
  %v5881 = vunpack.c.l.b16 %v5849
  %v5882 = vunpack.c.l.b16 %v5850
  %v5883 = vpack.c.b16 %v5868, %v5867
  %v5884 = vpack.c.b16 %v5870, %v5869
  %v5885 = vpack.c.b16 %v5872, %v5871
  %v5886 = vpack.c.b16 %v5874, %v5873
  %v5887 = vpack.c.b16 %v5876, %v5875
  %v5888 = vpack.c.b16 %v5878, %v5877
  %v5889 = vpack.c.b16 %v5880, %v5879
  %v5890 = vpack.c.b16 %v5882, %v5881
  %5899 = vmatprep.subr.bf16.mxu0 0
  %5900 = vmatpush1.bf16.msra.mxu0 %v5890
  %5901 = vmatprep.subr.bf16.mxu0 0
  %5902 = vmatpush1.bf16.msra.mxu0 %v5889
  %5903 = vmatprep.subr.bf16.mxu0 0
  %5904 = vmatpush1.bf16.msra.mxu0 %v5888
  %5905 = vmatprep.subr.bf16.mxu0 0
  %5906 = vmatpush1.bf16.msra.mxu0 %v5887
  %5907 = vmatprep.subr.bf16.mxu0 0
  %5908 = vmatpush1.bf16.msra.mxu0 %v5886
  %5909 = vmatprep.subr.bf16.mxu0 0
  %5910 = vmatpush1.bf16.msra.mxu0 %v5885
  %5911 = vmatprep.subr.bf16.mxu0 0
  %5912 = vmatpush1.bf16.msra.mxu0 %v5884
  %5913 = vmatprep.subr.bf16.mxu0 0
  %5914 = vmatpush1.bf16.msra.mxu0 %v5883
  %5915 = vmatprep.subr.bf16.mxu0 0
  %5916 = vmatpush2.bf16.msra.mxu0 0
  %5917 = vmatprep.subr.bf16.mxu0 0
  %5918 = vmatpush2.bf16.msra.mxu0 0
  %5919 = vmatprep.subr.bf16.mxu0 0
  %5920 = vmatpush2.bf16.msra.mxu0 0
  %5921 = vmatprep.subr.bf16.mxu0 0
  %5922 = vmatpush2.bf16.msra.mxu0 0
  %5923 = vmatprep.subr.bf16.mxu0 0
  %5924 = vmatpush2.bf16.msra.mxu0 0
  %5925 = vmatprep.subr.bf16.mxu0 0
  %5926 = vmatpush2.bf16.msra.mxu0 0
  %5927 = vmatprep.subr.bf16.mxu0 0
  %5928 = vmatpush2.bf16.msra.mxu0 0
  %5929 = vmatprep.subr.bf16.mxu0 0
  %5930 = vmatpush2.bf16.msra.mxu0 0
  %5931 = vmatprep.mubr.bf16.mxu0 0
  %5932 = vmatmul.mubr.bf16.gmra.mxu0 %v5802
  %v5933 = vpop.f32.mrf.mxu0
  %v5934 = vadd.f32 0.0, %v5933
  %v5935 = vpop.f32.mrf.mxu0
  %v5936 = vpop.f32.mrf.mxu0
  %v5937 = vadd.f32 0.0, %v5936
  %v5938 = vpop.f32.mrf.mxu0
  %5939 = vmatprep.mubr.bf16.mxu0 0
  %5940 = vmatmul.mubr.bf16.gmra.mxu0 %v5803
  %v5941 = vpop.f32.mrf.mxu0
  %v5942 = vadd.f32 0.0, %v5941
  %v5943 = vpop.f32.mrf.mxu0
  %v5944 = vpop.f32.mrf.mxu0
  %v5945 = vadd.f32 0.0, %v5944
  %v5946 = vpop.f32.mrf.mxu0
  %5947 = vmatprep.mubr.bf16.mxu0 0
  %5948 = vmatmul.mubr.bf16.gmra.mxu0 %v5804
  %v5949 = vpop.f32.mrf.mxu0
  %v5950 = vadd.f32 0.0, %v5949
  %v5951 = vpop.f32.mrf.mxu0
  %v5952 = vpop.f32.mrf.mxu0
  %v5953 = vadd.f32 0.0, %v5952
  %v5954 = vpop.f32.mrf.mxu0
  %5955 = vmatprep.mubr.bf16.mxu0 0
  %5956 = vmatmul.mubr.bf16.gmra.mxu0 %v5805
  %v5957 = vpop.f32.mrf.mxu0
  %v5958 = vadd.f32 0.0, %v5957
  %v5959 = vpop.f32.mrf.mxu0
  %v5960 = vpop.f32.mrf.mxu0
  %v5961 = vadd.f32 0.0, %v5960
  %v5962 = vpop.f32.mrf.mxu0
  %5963 = vmatprep.mubr.bf16.mxu0 0
  %5964 = vmatmul.mubr.bf16.gmra.mxu0 %v5806
  %v5965 = vpop.f32.mrf.mxu0
  %v5966 = vadd.f32 0.0, %v5965
  %v5967 = vpop.f32.mrf.mxu0
  %v5968 = vpop.f32.mrf.mxu0
  %v5969 = vadd.f32 0.0, %v5968
  %v5970 = vpop.f32.mrf.mxu0
  %5971 = vmatprep.mubr.bf16.mxu0 0
  %5972 = vmatmul.mubr.bf16.gmra.mxu0 %v5807
  %v5973 = vpop.f32.mrf.mxu0
  %v5974 = vadd.f32 0.0, %v5973
  %v5975 = vpop.f32.mrf.mxu0
  %v5976 = vpop.f32.mrf.mxu0
  %v5977 = vadd.f32 0.0, %v5976
  %v5978 = vpop.f32.mrf.mxu0
  %5979 = vmatprep.mubr.bf16.mxu0 0
  %5980 = vmatmul.mubr.bf16.gmra.mxu0 %v5808
  %v5981 = vpop.f32.mrf.mxu0
  %v5982 = vadd.f32 0.0, %v5981
  %v5983 = vpop.f32.mrf.mxu0
  %v5984 = vpop.f32.mrf.mxu0
  %v5985 = vadd.f32 0.0, %v5984
  %v5986 = vpop.f32.mrf.mxu0
  %5987 = vmatprep.mubr.bf16.mxu0 0
  %5988 = vmatmul.mubr.bf16.gmra.mxu0 %v5809
  %v5989 = vpop.f32.mrf.mxu0
  %v5990 = vadd.f32 0.0, %v5989
  %v5991 = vpop.f32.mrf.mxu0
  %v5992 = vpop.f32.mrf.mxu0
  %v5993 = vadd.f32 0.0, %v5992
  %v5994 = vpop.f32.mrf.mxu0
  %5995 = vmatprep.mubr.bf16.mxu0 0
  %5996 = vmatmul.mubr.bf16.gmra.mxu0 %v5810
  %v5997 = vpop.f32.mrf.mxu0
  %v5998 = vadd.f32 0.0, %v5997
  %v5999 = vpop.f32.mrf.mxu0
  %v6000 = vpop.f32.mrf.mxu0
  %v6001 = vadd.f32 0.0, %v6000
  %v6002 = vpop.f32.mrf.mxu0
  %6003 = vmatprep.mubr.bf16.mxu0 0
  %6004 = vmatmul.mubr.bf16.gmra.mxu0 %v5811
  %v6005 = vpop.f32.mrf.mxu0
  %v6006 = vadd.f32 0.0, %v6005
  %v6007 = vpop.f32.mrf.mxu0
  %v6008 = vpop.f32.mrf.mxu0
  %v6009 = vadd.f32 0.0, %v6008
  %v6010 = vpop.f32.mrf.mxu0
  %6011 = vmatprep.mubr.bf16.mxu0 0
  %6012 = vmatmul.mubr.bf16.gmra.mxu0 %v5812
  %v6013 = vpop.f32.mrf.mxu0
  %v6014 = vadd.f32 0.0, %v6013
  %v6015 = vpop.f32.mrf.mxu0
  %v6016 = vpop.f32.mrf.mxu0
  %v6017 = vadd.f32 0.0, %v6016
  %v6018 = vpop.f32.mrf.mxu0
  %6019 = vmatprep.mubr.bf16.mxu0 0
  %6020 = vmatmul.mubr.bf16.gmra.mxu0 %v5813
  %v6021 = vpop.f32.mrf.mxu0
  %v6022 = vadd.f32 0.0, %v6021
  %v6023 = vpop.f32.mrf.mxu0
  %v6024 = vpop.f32.mrf.mxu0
  %v6025 = vadd.f32 0.0, %v6024
  %v6026 = vpop.f32.mrf.mxu0
  %6027 = vmatprep.mubr.bf16.mxu0 0
  %6028 = vmatmul.mubr.bf16.gmra.mxu0 %v5814
  %v6029 = vpop.f32.mrf.mxu0
  %v6030 = vadd.f32 0.0, %v6029
  %v6031 = vpop.f32.mrf.mxu0
  %v6032 = vpop.f32.mrf.mxu0
  %v6033 = vadd.f32 0.0, %v6032
  %v6034 = vpop.f32.mrf.mxu0
  %6035 = vmatprep.mubr.bf16.mxu0 0
  %6036 = vmatmul.mubr.bf16.gmra.mxu0 %v5815
  %v6037 = vpop.f32.mrf.mxu0
  %v6038 = vadd.f32 0.0, %v6037
  %v6039 = vpop.f32.mrf.mxu0
  %v6040 = vpop.f32.mrf.mxu0
  %v6041 = vadd.f32 0.0, %v6040
  %v6042 = vpop.f32.mrf.mxu0
  %6043 = vmatprep.mubr.bf16.mxu0 0
  %6044 = vmatmul.mubr.bf16.gmra.mxu0 %v5816
  %v6045 = vpop.f32.mrf.mxu0
  %v6046 = vadd.f32 0.0, %v6045
  %v6047 = vpop.f32.mrf.mxu0
  %v6048 = vpop.f32.mrf.mxu0
  %v6049 = vadd.f32 0.0, %v6048
  %v6050 = vpop.f32.mrf.mxu0
  %6051 = vmatprep.mubr.bf16.mxu0 0
  %6052 = vmatmul.mubr.bf16.gmra.mxu0 %v5817
  %v6053 = vpop.f32.mrf.mxu0
  %v6054 = vadd.f32 0.0, %v6053
  %v6055 = vpop.f32.mrf.mxu0
  %v6056 = vpop.f32.mrf.mxu0
  %v6057 = vadd.f32 0.0, %v6056
  %v6058 = vpop.f32.mrf.mxu0
  %6059 = vmatprep.mubr.bf16.mxu0 0
  %6060 = vmatmul.mubr.bf16.gmra.mxu0 %v5818
  %v6061 = vpop.f32.mrf.mxu0
  %v6062 = vadd.f32 0.0, %v6061
  %v6063 = vpop.f32.mrf.mxu0
  %v6064 = vpop.f32.mrf.mxu0
  %v6065 = vadd.f32 0.0, %v6064
  %v6066 = vpop.f32.mrf.mxu0
  %6067 = vmatprep.mubr.bf16.mxu0 0
  %6068 = vmatmul.mubr.bf16.gmra.mxu0 %v5819
  %v6069 = vpop.f32.mrf.mxu0
  %v6070 = vadd.f32 0.0, %v6069
  %v6071 = vpop.f32.mrf.mxu0
  %v6072 = vpop.f32.mrf.mxu0
  %v6073 = vadd.f32 0.0, %v6072
  %v6074 = vpop.f32.mrf.mxu0
  %6075 = vmatprep.mubr.bf16.mxu0 0
  %6076 = vmatmul.mubr.bf16.gmra.mxu0 %v5820
  %v6077 = vpop.f32.mrf.mxu0
  %v6078 = vadd.f32 0.0, %v6077
  %v6079 = vpop.f32.mrf.mxu0
  %v6080 = vpop.f32.mrf.mxu0
  %v6081 = vadd.f32 0.0, %v6080
  %v6082 = vpop.f32.mrf.mxu0
  %6083 = vmatprep.mubr.bf16.mxu0 0
  %6084 = vmatmul.mubr.bf16.gmra.mxu0 %v5821
  %v6085 = vpop.f32.mrf.mxu0
  %v6086 = vadd.f32 0.0, %v6085
  %v6087 = vpop.f32.mrf.mxu0
  %v6088 = vpop.f32.mrf.mxu0
  %v6089 = vadd.f32 0.0, %v6088
  %v6090 = vpop.f32.mrf.mxu0
  %6091 = vmatprep.mubr.bf16.mxu0 0
  %6092 = vmatmul.mubr.bf16.gmra.mxu0 %v5822
  %v6093 = vpop.f32.mrf.mxu0
  %v6094 = vadd.f32 0.0, %v6093
  %v6095 = vpop.f32.mrf.mxu0
  %v6096 = vpop.f32.mrf.mxu0
  %v6097 = vadd.f32 0.0, %v6096
  %v6098 = vpop.f32.mrf.mxu0
  %6099 = vmatprep.mubr.bf16.mxu0 0
  %6100 = vmatmul.mubr.bf16.gmra.mxu0 %v5823
  %v6101 = vpop.f32.mrf.mxu0
  %v6102 = vadd.f32 0.0, %v6101
  %v6103 = vpop.f32.mrf.mxu0
  %v6104 = vpop.f32.mrf.mxu0
  %v6105 = vadd.f32 0.0, %v6104
  %v6106 = vpop.f32.mrf.mxu0
  %6107 = vmatprep.mubr.bf16.mxu0 0
  %6108 = vmatmul.mubr.bf16.gmra.mxu0 %v5824
  %v6109 = vpop.f32.mrf.mxu0
  %v6110 = vadd.f32 0.0, %v6109
  %v6111 = vpop.f32.mrf.mxu0
  %v6112 = vpop.f32.mrf.mxu0
  %v6113 = vadd.f32 0.0, %v6112
  %v6114 = vpop.f32.mrf.mxu0
  %6115 = vmatprep.mubr.bf16.mxu0 0
  %6116 = vmatmul.mubr.bf16.gmra.mxu0 %v5825
  %v6117 = vpop.f32.mrf.mxu0
  %v6118 = vadd.f32 0.0, %v6117
  %v6119 = vpop.f32.mrf.mxu0
  %v6120 = vpop.f32.mrf.mxu0
  %v6121 = vadd.f32 0.0, %v6120
  %v6122 = vpop.f32.mrf.mxu0
  %6123 = vmatprep.mubr.bf16.mxu0 0
  %6124 = vmatmul.mubr.bf16.gmra.mxu0 %v5826
  %v6125 = vpop.f32.mrf.mxu0
  %v6126 = vadd.f32 0.0, %v6125
  %v6127 = vpop.f32.mrf.mxu0
  %v6128 = vpop.f32.mrf.mxu0
  %v6129 = vadd.f32 0.0, %v6128
  %v6130 = vpop.f32.mrf.mxu0
  %6131 = vmatprep.mubr.bf16.mxu0 0
  %6132 = vmatmul.mubr.bf16.gmra.mxu0 %v5827
  %v6133 = vpop.f32.mrf.mxu0
  %v6134 = vadd.f32 0.0, %v6133
  %v6135 = vpop.f32.mrf.mxu0
  %v6136 = vpop.f32.mrf.mxu0
  %v6137 = vadd.f32 0.0, %v6136
  %v6138 = vpop.f32.mrf.mxu0
  %6139 = vmatprep.mubr.bf16.mxu0 0
  %6140 = vmatmul.mubr.bf16.gmra.mxu0 %v5828
  %v6141 = vpop.f32.mrf.mxu0
  %v6142 = vadd.f32 0.0, %v6141
  %v6143 = vpop.f32.mrf.mxu0
  %v6144 = vpop.f32.mrf.mxu0
  %v6145 = vadd.f32 0.0, %v6144
  %v6146 = vpop.f32.mrf.mxu0
  %6147 = vmatprep.mubr.bf16.mxu0 0
  %6148 = vmatmul.mubr.bf16.gmra.mxu0 %v5829
  %v6149 = vpop.f32.mrf.mxu0
  %v6150 = vadd.f32 0.0, %v6149
  %v6151 = vpop.f32.mrf.mxu0
  %v6152 = vpop.f32.mrf.mxu0
  %v6153 = vadd.f32 0.0, %v6152
  %v6154 = vpop.f32.mrf.mxu0
  %6155 = vmatprep.mubr.bf16.mxu0 0
  %6156 = vmatmul.mubr.bf16.gmra.mxu0 %v5830
  %v6157 = vpop.f32.mrf.mxu0
  %v6158 = vadd.f32 0.0, %v6157
  %v6159 = vpop.f32.mrf.mxu0
  %v6160 = vpop.f32.mrf.mxu0
  %v6161 = vadd.f32 0.0, %v6160
  %v6162 = vpop.f32.mrf.mxu0
  %6163 = vmatprep.mubr.bf16.mxu0 0
  %6164 = vmatmul.mubr.bf16.gmra.mxu0 %v5831
  %v6165 = vpop.f32.mrf.mxu0
  %v6166 = vadd.f32 0.0, %v6165
  %v6167 = vpop.f32.mrf.mxu0
  %v6168 = vpop.f32.mrf.mxu0
  %v6169 = vadd.f32 0.0, %v6168
  %v6170 = vpop.f32.mrf.mxu0
  %6171 = vmatprep.mubr.bf16.mxu0 0
  %6172 = vmatmul.mubr.bf16.gmra.mxu0 %v5832
  %v6173 = vpop.f32.mrf.mxu0
  %v6174 = vadd.f32 0.0, %v6173
  %v6175 = vpop.f32.mrf.mxu0
  %v6176 = vpop.f32.mrf.mxu0
  %v6177 = vadd.f32 0.0, %v6176
  %v6178 = vpop.f32.mrf.mxu0
  %6179 = vmatprep.mubr.bf16.mxu0 0
  %6180 = vmatmul.mubr.bf16.gmra.mxu0 %v5833
  %v6181 = vpop.f32.mrf.mxu0
  %v6182 = vadd.f32 0.0, %v6181
  %v6183 = vpop.f32.mrf.mxu0
  %v6184 = vpop.f32.mrf.mxu0
  %v6185 = vadd.f32 0.0, %v6184
  %v6186 = vpop.f32.mrf.mxu0
  %6187 = vdwg.mxu0
  %v6188 = vadd.f32 %v5546, %v5934
  %v6189 = vadd.f32 %v5547, %v5937
  %v6190 = vadd.f32 %v5548, %v5942
  %v6191 = vadd.f32 %v5549, %v5945
  %v6192 = vadd.f32 %v5550, %v5950
  %v6193 = vadd.f32 %v5551, %v5953
  %v6194 = vadd.f32 %v5552, %v5958
  %v6195 = vadd.f32 %v5553, %v5961
  %v6196 = vadd.f32 %v5554, %v5966
  %v6197 = vadd.f32 %v5555, %v5969
  %v6198 = vadd.f32 %v5556, %v5974
  %v6199 = vadd.f32 %v5557, %v5977
  %v6200 = vadd.f32 %v5558, %v5982
  %v6201 = vadd.f32 %v5559, %v5985
  %v6202 = vadd.f32 %v5560, %v5990
  %v6203 = vadd.f32 %v5561, %v5993
  %v6204 = vadd.f32 %v5562, %v5998
  %v6205 = vadd.f32 %v5563, %v6001
  %v6206 = vadd.f32 %v5564, %v6006
  %v6207 = vadd.f32 %v5565, %v6009
  %v6208 = vadd.f32 %v5566, %v6014
  %v6209 = vadd.f32 %v5567, %v6017
  %v6210 = vadd.f32 %v5568, %v6022
  %v6211 = vadd.f32 %v5569, %v6025
  %v6212 = vadd.f32 %v5570, %v6030
  %v6213 = vadd.f32 %v5571, %v6033
  %v6214 = vadd.f32 %v5572, %v6038
  %v6215 = vadd.f32 %v5573, %v6041
  %v6216 = vadd.f32 %v5574, %v6046
  %v6217 = vadd.f32 %v5575, %v6049
  %v6218 = vadd.f32 %v5576, %v6054
  %v6219 = vadd.f32 %v5577, %v6057
  %v6220 = vadd.f32 %v5578, %v6062
  %v6221 = vadd.f32 %v5579, %v6065
  %v6222 = vadd.f32 %v5580, %v6070
  %v6223 = vadd.f32 %v5581, %v6073
  %v6224 = vadd.f32 %v5582, %v6078
  %v6225 = vadd.f32 %v5583, %v6081
  %v6226 = vadd.f32 %v5584, %v6086
  %v6227 = vadd.f32 %v5585, %v6089
  %v6228 = vadd.f32 %v5586, %v6094
  %v6229 = vadd.f32 %v5587, %v6097
  %v6230 = vadd.f32 %v5588, %v6102
  %v6231 = vadd.f32 %v5589, %v6105
  %v6232 = vadd.f32 %v5590, %v6110
  %v6233 = vadd.f32 %v5591, %v6113
  %v6234 = vadd.f32 %v5592, %v6118
  %v6235 = vadd.f32 %v5593, %v6121
  %v6236 = vadd.f32 %v5594, %v6126
  %v6237 = vadd.f32 %v5595, %v6129
  %v6238 = vadd.f32 %v5596, %v6134
  %v6239 = vadd.f32 %v5597, %v6137
  %v6240 = vadd.f32 %v5598, %v6142
  %v6241 = vadd.f32 %v5599, %v6145
  %v6242 = vadd.f32 %v5600, %v6150
  %v6243 = vadd.f32 %v5601, %v6153
  %v6244 = vadd.f32 %v5602, %v6158
  %v6245 = vadd.f32 %v5603, %v6161
  %v6246 = vadd.f32 %v5604, %v6166
  %v6247 = vadd.f32 %v5605, %v6169
  %v6248 = vadd.f32 %v5606, %v6174
  %v6249 = vadd.f32 %v5607, %v6177
  %v6250 = vadd.f32 %v5608, %v6182
  %v6251 = vadd.f32 %v5609, %v6185
  %v6252 = vld [vmem:[%s5] sm:$0x1]
  %v6253 = vld [vmem:[%s6] sm:$0x1]
  %v6254 = vadd.f32 %v6188, %v6189
  %v6255 = vadd.f32 %v6254, %v6190
  %v6256 = vadd.f32 %v6255, %v6191
  %v6257 = vadd.f32 %v6256, %v6192
  %v6258 = vadd.f32 %v6257, %v6193
  %v6259 = vadd.f32 %v6258, %v6194
  %v6260 = vadd.f32 %v6259, %v6195
  %v6261 = vadd.f32 %v6260, %v6196
  %v6262 = vadd.f32 %v6261, %v6197
  %v6263 = vadd.f32 %v6262, %v6198
  %v6264 = vadd.f32 %v6263, %v6199
  %v6265 = vadd.f32 %v6264, %v6200
  %v6266 = vadd.f32 %v6265, %v6201
  %v6267 = vadd.f32 %v6266, %v6202
  %v6268 = vadd.f32 %v6267, %v6203
  %v6269 = vadd.f32 %v6268, %v6204
  %v6270 = vadd.f32 %v6269, %v6205
  %v6271 = vadd.f32 %v6270, %v6206
  %v6272 = vadd.f32 %v6271, %v6207
  %v6273 = vadd.f32 %v6272, %v6208
  %v6274 = vadd.f32 %v6273, %v6209
  %v6275 = vadd.f32 %v6274, %v6210
  %v6276 = vadd.f32 %v6275, %v6211
  %v6277 = vadd.f32 %v6276, %v6212
  %v6278 = vadd.f32 %v6277, %v6213
  %v6279 = vadd.f32 %v6278, %v6214
  %v6280 = vadd.f32 %v6279, %v6215
  %v6281 = vadd.f32 %v6280, %v6216
  %v6282 = vadd.f32 %v6281, %v6217
  %v6283 = vadd.f32 %v6282, %v6218
  %v6284 = vadd.f32 %v6283, %v6219
  %v6285 = vadd.f32 %v6284, %v6220
  %v6286 = vadd.f32 %v6285, %v6221
  %v6287 = vadd.f32 %v6286, %v6222
  %v6288 = vadd.f32 %v6287, %v6223
  %v6289 = vadd.f32 %v6288, %v6224
  %v6290 = vadd.f32 %v6289, %v6225
  %v6291 = vadd.f32 %v6290, %v6226
  %v6292 = vadd.f32 %v6291, %v6227
  %v6293 = vadd.f32 %v6292, %v6228
  %v6294 = vadd.f32 %v6293, %v6229
  %v6295 = vadd.f32 %v6294, %v6230
  %v6296 = vadd.f32 %v6295, %v6231
  %v6297 = vadd.f32 %v6296, %v6232
  %v6298 = vadd.f32 %v6297, %v6233
  %v6299 = vadd.f32 %v6298, %v6234
  %v6300 = vadd.f32 %v6299, %v6235
  %v6301 = vadd.f32 %v6300, %v6236
  %v6302 = vadd.f32 %v6301, %v6237
  %v6303 = vadd.f32 %v6302, %v6238
  %v6304 = vadd.f32 %v6303, %v6239
  %v6305 = vadd.f32 %v6304, %v6240
  %v6306 = vadd.f32 %v6305, %v6241
  %v6307 = vadd.f32 %v6306, %v6242
  %v6308 = vadd.f32 %v6307, %v6243
  %v6309 = vadd.f32 %v6308, %v6244
  %v6310 = vadd.f32 %v6309, %v6245
  %v6311 = vadd.f32 %v6310, %v6246
  %v6312 = vadd.f32 %v6311, %v6247
  %v6313 = vadd.f32 %v6312, %v6248
  %v6314 = vadd.f32 %v6313, %v6249
  %v6315 = vadd.f32 %v6314, %v6250
  %v6316 = vadd.f32 %v6315, %v6251
  %v6317 = vrot.slane %v6316, 4
  %v6318 = vadd.f32 %v6316, %v6317
  %v6319 = vrot.slane %v6318, 2
  %v6320 = vadd.f32 %v6318, %v6319
  %v6321 = vrot.slane %v6320, 1
  %v6322 = vadd.f32 %v6320, %v6321
  %v6323 = vmul.f32 %v6188, %v6188
  %v6324 = vmul.f32 %v6189, %v6189
  %v6325 = vmul.f32 %v6190, %v6190
  %v6326 = vmul.f32 %v6191, %v6191
  %v6327 = vmul.f32 %v6192, %v6192
  %v6328 = vmul.f32 %v6193, %v6193
  %v6329 = vmul.f32 %v6194, %v6194
  %v6330 = vmul.f32 %v6195, %v6195
  %v6331 = vmul.f32 %v6196, %v6196
  %v6332 = vmul.f32 %v6197, %v6197
  %v6333 = vmul.f32 %v6198, %v6198
  %v6334 = vmul.f32 %v6199, %v6199
  %v6335 = vmul.f32 %v6200, %v6200
  %v6336 = vmul.f32 %v6201, %v6201
  %v6337 = vmul.f32 %v6202, %v6202
  %v6338 = vmul.f32 %v6203, %v6203
  %v6339 = vmul.f32 %v6204, %v6204
  %v6340 = vmul.f32 %v6205, %v6205
  %v6341 = vmul.f32 %v6206, %v6206
  %v6342 = vmul.f32 %v6207, %v6207
  %v6343 = vmul.f32 %v6208, %v6208
  %v6344 = vmul.f32 %v6209, %v6209
  %v6345 = vmul.f32 %v6210, %v6210
  %v6346 = vmul.f32 %v6211, %v6211
  %v6347 = vmul.f32 %v6212, %v6212
  %v6348 = vmul.f32 %v6213, %v6213
  %v6349 = vmul.f32 %v6214, %v6214
  %v6350 = vmul.f32 %v6215, %v6215
  %v6351 = vmul.f32 %v6216, %v6216
  %v6352 = vmul.f32 %v6217, %v6217
  %v6353 = vmul.f32 %v6218, %v6218
  %v6354 = vmul.f32 %v6219, %v6219
  %v6355 = vmul.f32 %v6220, %v6220
  %v6356 = vmul.f32 %v6221, %v6221
  %v6357 = vmul.f32 %v6222, %v6222
  %v6358 = vmul.f32 %v6223, %v6223
  %v6359 = vmul.f32 %v6224, %v6224
  %v6360 = vmul.f32 %v6225, %v6225
  %v6361 = vmul.f32 %v6226, %v6226
  %v6362 = vmul.f32 %v6227, %v6227
  %v6363 = vmul.f32 %v6228, %v6228
  %v6364 = vmul.f32 %v6229, %v6229
  %v6365 = vmul.f32 %v6230, %v6230
  %v6366 = vmul.f32 %v6231, %v6231
  %v6367 = vmul.f32 %v6232, %v6232
  %v6368 = vmul.f32 %v6233, %v6233
  %v6369 = vmul.f32 %v6234, %v6234
  %v6370 = vmul.f32 %v6235, %v6235
  %v6371 = vmul.f32 %v6236, %v6236
  %v6372 = vmul.f32 %v6237, %v6237
  %v6373 = vmul.f32 %v6238, %v6238
  %v6374 = vmul.f32 %v6239, %v6239
  %v6375 = vmul.f32 %v6240, %v6240
  %v6376 = vmul.f32 %v6241, %v6241
  %v6377 = vmul.f32 %v6242, %v6242
  %v6378 = vmul.f32 %v6243, %v6243
  %v6379 = vmul.f32 %v6244, %v6244
  %v6380 = vmul.f32 %v6245, %v6245
  %v6381 = vmul.f32 %v6246, %v6246
  %v6382 = vmul.f32 %v6247, %v6247
  %v6383 = vmul.f32 %v6248, %v6248
  %v6384 = vmul.f32 %v6249, %v6249
  %v6385 = vmul.f32 %v6250, %v6250
  %v6386 = vmul.f32 %v6251, %v6251
  %v6387 = vadd.f32 %v6323, %v6324
  %v6388 = vadd.f32 %v6387, %v6325
  %v6389 = vadd.f32 %v6388, %v6326
  %v6390 = vadd.f32 %v6389, %v6327
  %v6391 = vadd.f32 %v6390, %v6328
  %v6392 = vadd.f32 %v6391, %v6329
  %v6393 = vadd.f32 %v6392, %v6330
  %v6394 = vadd.f32 %v6393, %v6331
  %v6395 = vadd.f32 %v6394, %v6332
  %v6396 = vadd.f32 %v6395, %v6333
  %v6397 = vadd.f32 %v6396, %v6334
  %v6398 = vadd.f32 %v6397, %v6335
  %v6399 = vadd.f32 %v6398, %v6336
  %v6400 = vadd.f32 %v6399, %v6337
  %v6401 = vadd.f32 %v6400, %v6338
  %v6402 = vadd.f32 %v6401, %v6339
  %v6403 = vadd.f32 %v6402, %v6340
  %v6404 = vadd.f32 %v6403, %v6341
  %v6405 = vadd.f32 %v6404, %v6342
  %v6406 = vadd.f32 %v6405, %v6343
  %v6407 = vadd.f32 %v6406, %v6344
  %v6408 = vadd.f32 %v6407, %v6345
  %v6409 = vadd.f32 %v6408, %v6346
  %v6410 = vadd.f32 %v6409, %v6347
  %v6411 = vadd.f32 %v6410, %v6348
  %v6412 = vadd.f32 %v6411, %v6349
  %v6413 = vadd.f32 %v6412, %v6350
  %v6414 = vadd.f32 %v6413, %v6351
  %v6415 = vadd.f32 %v6414, %v6352
  %v6416 = vadd.f32 %v6415, %v6353
  %v6417 = vadd.f32 %v6416, %v6354
  %v6418 = vadd.f32 %v6417, %v6355
  %v6419 = vadd.f32 %v6418, %v6356
  %v6420 = vadd.f32 %v6419, %v6357
  %v6421 = vadd.f32 %v6420, %v6358
  %v6422 = vadd.f32 %v6421, %v6359
  %v6423 = vadd.f32 %v6422, %v6360
  %v6424 = vadd.f32 %v6423, %v6361
  %v6425 = vadd.f32 %v6424, %v6362
  %v6426 = vadd.f32 %v6425, %v6363
  %v6427 = vadd.f32 %v6426, %v6364
  %v6428 = vadd.f32 %v6427, %v6365
  %v6429 = vadd.f32 %v6428, %v6366
  %v6430 = vadd.f32 %v6429, %v6367
  %v6431 = vadd.f32 %v6430, %v6368
  %v6432 = vadd.f32 %v6431, %v6369
  %v6433 = vadd.f32 %v6432, %v6370
  %v6434 = vadd.f32 %v6433, %v6371
  %v6435 = vadd.f32 %v6434, %v6372
  %v6436 = vadd.f32 %v6435, %v6373
  %v6437 = vadd.f32 %v6436, %v6374
  %v6438 = vadd.f32 %v6437, %v6375
  %v6439 = vadd.f32 %v6438, %v6376
  %v6440 = vadd.f32 %v6439, %v6377
  %v6441 = vadd.f32 %v6440, %v6378
  %v6442 = vadd.f32 %v6441, %v6379
  %v6443 = vadd.f32 %v6442, %v6380
  %v6444 = vadd.f32 %v6443, %v6381
  %v6445 = vadd.f32 %v6444, %v6382
  %v6446 = vadd.f32 %v6445, %v6383
  %v6447 = vadd.f32 %v6446, %v6384
  %v6448 = vadd.f32 %v6447, %v6385
  %v6449 = vadd.f32 %v6448, %v6386
  %v6450 = vrot.slane %v6449, 4
  %v6451 = vadd.f32 %v6449, %v6450
  %v6452 = vrot.slane %v6451, 2
  %v6453 = vadd.f32 %v6451, %v6452
  %v6454 = vrot.slane %v6453, 1
  %v6455 = vadd.f32 %v6453, %v6454
  %v6456 = vmul.f32 %v6322, 0.001953125
  %v6457 = vmul.f32 %v6455, 0.001953125
  %v6458 = vmul.f32 %v6456, %v6456
  %v6459 = vsub.f32 %v6457, %v6458
  %v6460 = vmax.f32 %v6459, 0.0
  %v6461 = vadd.f32 %v6460, 1e-05
  %v6462 = vrsqrt.pop %v6461
  %v6463 = vmul.f32 %v6252, %v6462
  %v6464 = vmul.f32 %v6456, %v6463
  %v6465 = vsub.f32 %v6253, %v6464
  %v6467 = vlaneseq
  %v6468 = vshrl.u32 %v6467, 7
  %v6469 = vsub.s32 0, %v6468
  %v6470 = vrot.slane %v6463, %v6469
  %v6472 = vmul.f32 %v6188, %v6470
  %v6473 = vmul.f32 %v6189, %v6470
  %v6474 = vmul.f32 %v6190, %v6470
  %v6475 = vmul.f32 %v6191, %v6470
  %v6476 = vmul.f32 %v6192, %v6470
  %v6477 = vmul.f32 %v6193, %v6470
  %v6478 = vmul.f32 %v6194, %v6470
  %v6479 = vmul.f32 %v6195, %v6470
  %v6480 = vmul.f32 %v6196, %v6470
  %v6481 = vmul.f32 %v6197, %v6470
  %v6482 = vmul.f32 %v6198, %v6470
  %v6483 = vmul.f32 %v6199, %v6470
  %v6484 = vmul.f32 %v6200, %v6470
  %v6485 = vmul.f32 %v6201, %v6470
  %v6486 = vmul.f32 %v6202, %v6470
  %v6487 = vmul.f32 %v6203, %v6470
  %v6488 = vmul.f32 %v6204, %v6470
  %v6489 = vmul.f32 %v6205, %v6470
  %v6490 = vmul.f32 %v6206, %v6470
  %v6491 = vmul.f32 %v6207, %v6470
  %v6492 = vmul.f32 %v6208, %v6470
  %v6493 = vmul.f32 %v6209, %v6470
  %v6494 = vmul.f32 %v6210, %v6470
  %v6495 = vmul.f32 %v6211, %v6470
  %v6496 = vmul.f32 %v6212, %v6470
  %v6497 = vmul.f32 %v6213, %v6470
  %v6498 = vmul.f32 %v6214, %v6470
  %v6499 = vmul.f32 %v6215, %v6470
  %v6500 = vmul.f32 %v6216, %v6470
  %v6501 = vmul.f32 %v6217, %v6470
  %v6502 = vmul.f32 %v6218, %v6470
  %v6503 = vmul.f32 %v6219, %v6470
  %v6504 = vmul.f32 %v6220, %v6470
  %v6505 = vmul.f32 %v6221, %v6470
  %v6506 = vmul.f32 %v6222, %v6470
  %v6507 = vmul.f32 %v6223, %v6470
  %v6508 = vmul.f32 %v6224, %v6470
  %v6509 = vmul.f32 %v6225, %v6470
  %v6510 = vmul.f32 %v6226, %v6470
  %v6511 = vmul.f32 %v6227, %v6470
  %v6512 = vmul.f32 %v6228, %v6470
  %v6513 = vmul.f32 %v6229, %v6470
  %v6514 = vmul.f32 %v6230, %v6470
  %v6515 = vmul.f32 %v6231, %v6470
  %v6516 = vmul.f32 %v6232, %v6470
  %v6517 = vmul.f32 %v6233, %v6470
  %v6518 = vmul.f32 %v6234, %v6470
  %v6519 = vmul.f32 %v6235, %v6470
  %v6520 = vmul.f32 %v6236, %v6470
  %v6521 = vmul.f32 %v6237, %v6470
  %v6522 = vmul.f32 %v6238, %v6470
  %v6523 = vmul.f32 %v6239, %v6470
  %v6524 = vmul.f32 %v6240, %v6470
  %v6525 = vmul.f32 %v6241, %v6470
  %v6526 = vmul.f32 %v6242, %v6470
  %v6527 = vmul.f32 %v6243, %v6470
  %v6528 = vmul.f32 %v6244, %v6470
  %v6529 = vmul.f32 %v6245, %v6470
  %v6530 = vmul.f32 %v6246, %v6470
  %v6531 = vmul.f32 %v6247, %v6470
  %v6532 = vmul.f32 %v6248, %v6470
  %v6533 = vmul.f32 %v6249, %v6470
  %v6534 = vmul.f32 %v6250, %v6470
  %v6535 = vmul.f32 %v6251, %v6470
  %v6537 = vlaneseq
  %v6538 = vshrl.u32 %v6537, 7
  %v6539 = vsub.s32 0, %v6538
  %v6540 = vrot.slane %v6465, %v6539
  %v6542 = vadd.f32 %v6472, %v6540
  %v6543 = vadd.f32 %v6473, %v6540
  %v6544 = vadd.f32 %v6474, %v6540
  %v6545 = vadd.f32 %v6475, %v6540
  %v6546 = vadd.f32 %v6476, %v6540
  %v6547 = vadd.f32 %v6477, %v6540
  %v6548 = vadd.f32 %v6478, %v6540
  %v6549 = vadd.f32 %v6479, %v6540
  %v6550 = vadd.f32 %v6480, %v6540
  %v6551 = vadd.f32 %v6481, %v6540
  %v6552 = vadd.f32 %v6482, %v6540
  %v6553 = vadd.f32 %v6483, %v6540
  %v6554 = vadd.f32 %v6484, %v6540
  %v6555 = vadd.f32 %v6485, %v6540
  %v6556 = vadd.f32 %v6486, %v6540
  %v6557 = vadd.f32 %v6487, %v6540
  %v6558 = vadd.f32 %v6488, %v6540
  %v6559 = vadd.f32 %v6489, %v6540
  %v6560 = vadd.f32 %v6490, %v6540
  %v6561 = vadd.f32 %v6491, %v6540
  %v6562 = vadd.f32 %v6492, %v6540
  %v6563 = vadd.f32 %v6493, %v6540
  %v6564 = vadd.f32 %v6494, %v6540
  %v6565 = vadd.f32 %v6495, %v6540
  %v6566 = vadd.f32 %v6496, %v6540
  %v6567 = vadd.f32 %v6497, %v6540
  %v6568 = vadd.f32 %v6498, %v6540
  %v6569 = vadd.f32 %v6499, %v6540
  %v6570 = vadd.f32 %v6500, %v6540
  %v6571 = vadd.f32 %v6501, %v6540
  %v6572 = vadd.f32 %v6502, %v6540
  %v6573 = vadd.f32 %v6503, %v6540
  %v6574 = vadd.f32 %v6504, %v6540
  %v6575 = vadd.f32 %v6505, %v6540
  %v6576 = vadd.f32 %v6506, %v6540
  %v6577 = vadd.f32 %v6507, %v6540
  %v6578 = vadd.f32 %v6508, %v6540
  %v6579 = vadd.f32 %v6509, %v6540
  %v6580 = vadd.f32 %v6510, %v6540
  %v6581 = vadd.f32 %v6511, %v6540
  %v6582 = vadd.f32 %v6512, %v6540
  %v6583 = vadd.f32 %v6513, %v6540
  %v6584 = vadd.f32 %v6514, %v6540
  %v6585 = vadd.f32 %v6515, %v6540
  %v6586 = vadd.f32 %v6516, %v6540
  %v6587 = vadd.f32 %v6517, %v6540
  %v6588 = vadd.f32 %v6518, %v6540
  %v6589 = vadd.f32 %v6519, %v6540
  %v6590 = vadd.f32 %v6520, %v6540
  %v6591 = vadd.f32 %v6521, %v6540
  %v6592 = vadd.f32 %v6522, %v6540
  %v6593 = vadd.f32 %v6523, %v6540
  %v6594 = vadd.f32 %v6524, %v6540
  %v6595 = vadd.f32 %v6525, %v6540
  %v6596 = vadd.f32 %v6526, %v6540
  %v6597 = vadd.f32 %v6527, %v6540
  %v6598 = vadd.f32 %v6528, %v6540
  %v6599 = vadd.f32 %v6529, %v6540
  %v6600 = vadd.f32 %v6530, %v6540
  %v6601 = vadd.f32 %v6531, %v6540
  %v6602 = vadd.f32 %v6532, %v6540
  %v6603 = vadd.f32 %v6533, %v6540
  %v6604 = vadd.f32 %v6534, %v6540
  %v6605 = vadd.f32 %v6535, %v6540
  %v6606 = vmax.f32 %v6542, 0.0
  %v6607 = vmax.f32 %v6543, 0.0
  %v6608 = vmax.f32 %v6544, 0.0
  %v6609 = vmax.f32 %v6545, 0.0
  %v6610 = vmax.f32 %v6546, 0.0
  %v6611 = vmax.f32 %v6547, 0.0
  %v6612 = vmax.f32 %v6548, 0.0
  %v6613 = vmax.f32 %v6549, 0.0
  %v6614 = vmax.f32 %v6550, 0.0
  %v6615 = vmax.f32 %v6551, 0.0
  %v6616 = vmax.f32 %v6552, 0.0
  %v6617 = vmax.f32 %v6553, 0.0
  %v6618 = vmax.f32 %v6554, 0.0
  %v6619 = vmax.f32 %v6555, 0.0
  %v6620 = vmax.f32 %v6556, 0.0
  %v6621 = vmax.f32 %v6557, 0.0
  %v6622 = vmax.f32 %v6558, 0.0
  %v6623 = vmax.f32 %v6559, 0.0
  %v6624 = vmax.f32 %v6560, 0.0
  %v6625 = vmax.f32 %v6561, 0.0
  %v6626 = vmax.f32 %v6562, 0.0
  %v6627 = vmax.f32 %v6563, 0.0
  %v6628 = vmax.f32 %v6564, 0.0
  %v6629 = vmax.f32 %v6565, 0.0
  %v6630 = vmax.f32 %v6566, 0.0
  %v6631 = vmax.f32 %v6567, 0.0
  %v6632 = vmax.f32 %v6568, 0.0
  %v6633 = vmax.f32 %v6569, 0.0
  %v6634 = vmax.f32 %v6570, 0.0
  %v6635 = vmax.f32 %v6571, 0.0
  %v6636 = vmax.f32 %v6572, 0.0
  %v6637 = vmax.f32 %v6573, 0.0
  %v6638 = vmax.f32 %v6574, 0.0
  %v6639 = vmax.f32 %v6575, 0.0
  %v6640 = vmax.f32 %v6576, 0.0
  %v6641 = vmax.f32 %v6577, 0.0
  %v6642 = vmax.f32 %v6578, 0.0
  %v6643 = vmax.f32 %v6579, 0.0
  %v6644 = vmax.f32 %v6580, 0.0
  %v6645 = vmax.f32 %v6581, 0.0
  %v6646 = vmax.f32 %v6582, 0.0
  %v6647 = vmax.f32 %v6583, 0.0
  %v6648 = vmax.f32 %v6584, 0.0
  %v6649 = vmax.f32 %v6585, 0.0
  %v6650 = vmax.f32 %v6586, 0.0
  %v6651 = vmax.f32 %v6587, 0.0
  %v6652 = vmax.f32 %v6588, 0.0
  %v6653 = vmax.f32 %v6589, 0.0
  %v6654 = vmax.f32 %v6590, 0.0
  %v6655 = vmax.f32 %v6591, 0.0
  %v6656 = vmax.f32 %v6592, 0.0
  %v6657 = vmax.f32 %v6593, 0.0
  %v6658 = vmax.f32 %v6594, 0.0
  %v6659 = vmax.f32 %v6595, 0.0
  %v6660 = vmax.f32 %v6596, 0.0
  %v6661 = vmax.f32 %v6597, 0.0
  %v6662 = vmax.f32 %v6598, 0.0
  %v6663 = vmax.f32 %v6599, 0.0
  %v6664 = vmax.f32 %v6600, 0.0
  %v6665 = vmax.f32 %v6601, 0.0
  %v6666 = vmax.f32 %v6602, 0.0
  %v6667 = vmax.f32 %v6603, 0.0
  %v6668 = vmax.f32 %v6604, 0.0
  %v6669 = vmax.f32 %v6605, 0.0
  %v6670 = vpack.c.bf16 %v6607, %v6606
  %v6671 = vpack.c.bf16 %v6609, %v6608
  %v6672 = vpack.c.bf16 %v6611, %v6610
  %v6673 = vpack.c.bf16 %v6613, %v6612
  %v6674 = vpack.c.bf16 %v6615, %v6614
  %v6675 = vpack.c.bf16 %v6617, %v6616
  %v6676 = vpack.c.bf16 %v6619, %v6618
  %v6677 = vpack.c.bf16 %v6621, %v6620
  %v6678 = vpack.c.bf16 %v6623, %v6622
  %v6679 = vpack.c.bf16 %v6625, %v6624
  %v6680 = vpack.c.bf16 %v6627, %v6626
  %v6681 = vpack.c.bf16 %v6629, %v6628
  %v6682 = vpack.c.bf16 %v6631, %v6630
  %v6683 = vpack.c.bf16 %v6633, %v6632
  %v6684 = vpack.c.bf16 %v6635, %v6634
  %v6685 = vpack.c.bf16 %v6637, %v6636
  %v6686 = vpack.c.bf16 %v6639, %v6638
  %v6687 = vpack.c.bf16 %v6641, %v6640
  %v6688 = vpack.c.bf16 %v6643, %v6642
  %v6689 = vpack.c.bf16 %v6645, %v6644
  %v6690 = vpack.c.bf16 %v6647, %v6646
  %v6691 = vpack.c.bf16 %v6649, %v6648
  %v6692 = vpack.c.bf16 %v6651, %v6650
  %v6693 = vpack.c.bf16 %v6653, %v6652
  %v6694 = vpack.c.bf16 %v6655, %v6654
  %v6695 = vpack.c.bf16 %v6657, %v6656
  %v6696 = vpack.c.bf16 %v6659, %v6658
  %v6697 = vpack.c.bf16 %v6661, %v6660
  %v6698 = vpack.c.bf16 %v6663, %v6662
  %v6699 = vpack.c.bf16 %v6665, %v6664
  %v6700 = vpack.c.bf16 %v6667, %v6666
  %v6701 = vpack.c.bf16 %v6669, %v6668
  %v6702 = vld [vmem:[%s7] sm:$0xf]
  %v6703 = vld [vmem:[%s7 + $0x4] sm:$0xf]
  %v6704 = vld [vmem:[%s7 + $0x8] sm:$0xf]
  %v6705 = vld [vmem:[%s7 + $0xc] sm:$0xf]
  %v6706 = vld [vmem:[%s7 + $0x10] sm:$0xf]
  %v6707 = vld [vmem:[%s7 + $0x14] sm:$0xf]
  %v6708 = vld [vmem:[%s7 + $0x18] sm:$0xf]
  %v6709 = vld [vmem:[%s7 + $0x1c] sm:$0xf]
  %v6710 = vld [vmem:[%s7 + $0x20] sm:$0xf]
  %v6711 = vld [vmem:[%s7 + $0x24] sm:$0xf]
  %v6712 = vld [vmem:[%s7 + $0x28] sm:$0xf]
  %v6713 = vld [vmem:[%s7 + $0x2c] sm:$0xf]
  %v6714 = vld [vmem:[%s7 + $0x30] sm:$0xf]
  %v6715 = vld [vmem:[%s7 + $0x34] sm:$0xf]
  %v6716 = vld [vmem:[%s7 + $0x38] sm:$0xf]
  %v6717 = vld [vmem:[%s7 + $0x3c] sm:$0xf]
  %v6734 = vunpack.c.l.b16 %v6702
  %v6735 = vunpack.c.l.b16 %v6703
  %v6736 = vunpack.c.l.b16 %v6704
  %v6737 = vunpack.c.l.b16 %v6705
  %v6738 = vunpack.c.l.b16 %v6706
  %v6739 = vunpack.c.l.b16 %v6707
  %v6740 = vunpack.c.l.b16 %v6708
  %v6741 = vunpack.c.l.b16 %v6709
  %v6742 = vunpack.c.l.b16 %v6710
  %v6743 = vunpack.c.l.b16 %v6711
  %v6744 = vunpack.c.l.b16 %v6712
  %v6745 = vunpack.c.l.b16 %v6713
  %v6746 = vunpack.c.l.b16 %v6714
  %v6747 = vunpack.c.l.b16 %v6715
  %v6748 = vunpack.c.l.b16 %v6716
  %v6749 = vunpack.c.l.b16 %v6717
  %v6750 = vpack.c.b16 %v6735, %v6734
  %v6751 = vpack.c.b16 %v6737, %v6736
  %v6752 = vpack.c.b16 %v6739, %v6738
  %v6753 = vpack.c.b16 %v6741, %v6740
  %v6754 = vpack.c.b16 %v6743, %v6742
  %v6755 = vpack.c.b16 %v6745, %v6744
  %v6756 = vpack.c.b16 %v6747, %v6746
  %v6757 = vpack.c.b16 %v6749, %v6748
  %6766 = vmatprep.subr.bf16.mxu0 0
  %6767 = vmatpush1.bf16.msra.mxu0 %v6757
  %6768 = vmatprep.subr.bf16.mxu0 0
  %6769 = vmatpush1.bf16.msra.mxu0 %v6756
  %6770 = vmatprep.subr.bf16.mxu0 0
  %6771 = vmatpush1.bf16.msra.mxu0 %v6755
  %6772 = vmatprep.subr.bf16.mxu0 0
  %6773 = vmatpush1.bf16.msra.mxu0 %v6754
  %6774 = vmatprep.subr.bf16.mxu0 0
  %6775 = vmatpush1.bf16.msra.mxu0 %v6753
  %6776 = vmatprep.subr.bf16.mxu0 0
  %6777 = vmatpush1.bf16.msra.mxu0 %v6752
  %6778 = vmatprep.subr.bf16.mxu0 0
  %6779 = vmatpush1.bf16.msra.mxu0 %v6751
  %6780 = vmatprep.subr.bf16.mxu0 0
  %6781 = vmatpush1.bf16.msra.mxu0 %v6750
  %6782 = vmatprep.subr.bf16.mxu0 0
  %6783 = vmatpush2.bf16.msra.mxu0 0
  %6784 = vmatprep.subr.bf16.mxu0 0
  %6785 = vmatpush2.bf16.msra.mxu0 0
  %6786 = vmatprep.subr.bf16.mxu0 0
  %6787 = vmatpush2.bf16.msra.mxu0 0
  %6788 = vmatprep.subr.bf16.mxu0 0
  %6789 = vmatpush2.bf16.msra.mxu0 0
  %6790 = vmatprep.subr.bf16.mxu0 0
  %6791 = vmatpush2.bf16.msra.mxu0 0
  %6792 = vmatprep.subr.bf16.mxu0 0
  %6793 = vmatpush2.bf16.msra.mxu0 0
  %6794 = vmatprep.subr.bf16.mxu0 0
  %6795 = vmatpush2.bf16.msra.mxu0 0
  %6796 = vmatprep.subr.bf16.mxu0 0
  %6797 = vmatpush2.bf16.msra.mxu0 0
  %6798 = vmatprep.mubr.bf16.mxu0 0
  %6799 = vmatmul.mubr.bf16.gmra.mxu0 %v6670
  %v6800 = vpop.f32.mrf.mxu0
  %v6801 = vadd.f32 0.0, %v6800
  %v6802 = vpop.f32.mrf.mxu0
  %v6803 = vpop.f32.mrf.mxu0
  %v6804 = vadd.f32 0.0, %v6803
  %v6805 = vpop.f32.mrf.mxu0
  %6806 = vmatprep.mubr.bf16.mxu0 0
  %6807 = vmatmul.mubr.bf16.gmra.mxu0 %v6671
  %v6808 = vpop.f32.mrf.mxu0
  %v6809 = vadd.f32 0.0, %v6808
  %v6810 = vpop.f32.mrf.mxu0
  %v6811 = vpop.f32.mrf.mxu0
  %v6812 = vadd.f32 0.0, %v6811
  %v6813 = vpop.f32.mrf.mxu0
  %6814 = vmatprep.mubr.bf16.mxu0 0
  %6815 = vmatmul.mubr.bf16.gmra.mxu0 %v6672
  %v6816 = vpop.f32.mrf.mxu0
  %v6817 = vadd.f32 0.0, %v6816
  %v6818 = vpop.f32.mrf.mxu0
  %v6819 = vpop.f32.mrf.mxu0
  %v6820 = vadd.f32 0.0, %v6819
  %v6821 = vpop.f32.mrf.mxu0
  %6822 = vmatprep.mubr.bf16.mxu0 0
  %6823 = vmatmul.mubr.bf16.gmra.mxu0 %v6673
  %v6824 = vpop.f32.mrf.mxu0
  %v6825 = vadd.f32 0.0, %v6824
  %v6826 = vpop.f32.mrf.mxu0
  %v6827 = vpop.f32.mrf.mxu0
  %v6828 = vadd.f32 0.0, %v6827
  %v6829 = vpop.f32.mrf.mxu0
  %6830 = vmatprep.mubr.bf16.mxu0 0
  %6831 = vmatmul.mubr.bf16.gmra.mxu0 %v6674
  %v6832 = vpop.f32.mrf.mxu0
  %v6833 = vadd.f32 0.0, %v6832
  %v6834 = vpop.f32.mrf.mxu0
  %v6835 = vpop.f32.mrf.mxu0
  %v6836 = vadd.f32 0.0, %v6835
  %v6837 = vpop.f32.mrf.mxu0
  %6838 = vmatprep.mubr.bf16.mxu0 0
  %6839 = vmatmul.mubr.bf16.gmra.mxu0 %v6675
  %v6840 = vpop.f32.mrf.mxu0
  %v6841 = vadd.f32 0.0, %v6840
  %v6842 = vpop.f32.mrf.mxu0
  %v6843 = vpop.f32.mrf.mxu0
  %v6844 = vadd.f32 0.0, %v6843
  %v6845 = vpop.f32.mrf.mxu0
  %6846 = vmatprep.mubr.bf16.mxu0 0
  %6847 = vmatmul.mubr.bf16.gmra.mxu0 %v6676
  %v6848 = vpop.f32.mrf.mxu0
  %v6849 = vadd.f32 0.0, %v6848
  %v6850 = vpop.f32.mrf.mxu0
  %v6851 = vpop.f32.mrf.mxu0
  %v6852 = vadd.f32 0.0, %v6851
  %v6853 = vpop.f32.mrf.mxu0
  %6854 = vmatprep.mubr.bf16.mxu0 0
  %6855 = vmatmul.mubr.bf16.gmra.mxu0 %v6677
  %v6856 = vpop.f32.mrf.mxu0
  %v6857 = vadd.f32 0.0, %v6856
  %v6858 = vpop.f32.mrf.mxu0
  %v6859 = vpop.f32.mrf.mxu0
  %v6860 = vadd.f32 0.0, %v6859
  %v6861 = vpop.f32.mrf.mxu0
  %6862 = vmatprep.mubr.bf16.mxu0 0
  %6863 = vmatmul.mubr.bf16.gmra.mxu0 %v6678
  %v6864 = vpop.f32.mrf.mxu0
  %v6865 = vadd.f32 0.0, %v6864
  %v6866 = vpop.f32.mrf.mxu0
  %v6867 = vpop.f32.mrf.mxu0
  %v6868 = vadd.f32 0.0, %v6867
  %v6869 = vpop.f32.mrf.mxu0
  %6870 = vmatprep.mubr.bf16.mxu0 0
  %6871 = vmatmul.mubr.bf16.gmra.mxu0 %v6679
  %v6872 = vpop.f32.mrf.mxu0
  %v6873 = vadd.f32 0.0, %v6872
  %v6874 = vpop.f32.mrf.mxu0
  %v6875 = vpop.f32.mrf.mxu0
  %v6876 = vadd.f32 0.0, %v6875
  %v6877 = vpop.f32.mrf.mxu0
  %6878 = vmatprep.mubr.bf16.mxu0 0
  %6879 = vmatmul.mubr.bf16.gmra.mxu0 %v6680
  %v6880 = vpop.f32.mrf.mxu0
  %v6881 = vadd.f32 0.0, %v6880
  %v6882 = vpop.f32.mrf.mxu0
  %v6883 = vpop.f32.mrf.mxu0
  %v6884 = vadd.f32 0.0, %v6883
  %v6885 = vpop.f32.mrf.mxu0
  %6886 = vmatprep.mubr.bf16.mxu0 0
  %6887 = vmatmul.mubr.bf16.gmra.mxu0 %v6681
  %v6888 = vpop.f32.mrf.mxu0
  %v6889 = vadd.f32 0.0, %v6888
  %v6890 = vpop.f32.mrf.mxu0
  %v6891 = vpop.f32.mrf.mxu0
  %v6892 = vadd.f32 0.0, %v6891
  %v6893 = vpop.f32.mrf.mxu0
  %6894 = vmatprep.mubr.bf16.mxu0 0
  %6895 = vmatmul.mubr.bf16.gmra.mxu0 %v6682
  %v6896 = vpop.f32.mrf.mxu0
  %v6897 = vadd.f32 0.0, %v6896
  %v6898 = vpop.f32.mrf.mxu0
  %v6899 = vpop.f32.mrf.mxu0
  %v6900 = vadd.f32 0.0, %v6899
  %v6901 = vpop.f32.mrf.mxu0
  %6902 = vmatprep.mubr.bf16.mxu0 0
  %6903 = vmatmul.mubr.bf16.gmra.mxu0 %v6683
  %v6904 = vpop.f32.mrf.mxu0
  %v6905 = vadd.f32 0.0, %v6904
  %v6906 = vpop.f32.mrf.mxu0
  %v6907 = vpop.f32.mrf.mxu0
  %v6908 = vadd.f32 0.0, %v6907
  %v6909 = vpop.f32.mrf.mxu0
  %6910 = vmatprep.mubr.bf16.mxu0 0
  %6911 = vmatmul.mubr.bf16.gmra.mxu0 %v6684
  %v6912 = vpop.f32.mrf.mxu0
  %v6913 = vadd.f32 0.0, %v6912
  %v6914 = vpop.f32.mrf.mxu0
  %v6915 = vpop.f32.mrf.mxu0
  %v6916 = vadd.f32 0.0, %v6915
  %v6917 = vpop.f32.mrf.mxu0
  %6918 = vmatprep.mubr.bf16.mxu0 0
  %6919 = vmatmul.mubr.bf16.gmra.mxu0 %v6685
  %v6920 = vpop.f32.mrf.mxu0
  %v6921 = vadd.f32 0.0, %v6920
  %v6922 = vpop.f32.mrf.mxu0
  %v6923 = vpop.f32.mrf.mxu0
  %v6924 = vadd.f32 0.0, %v6923
  %v6925 = vpop.f32.mrf.mxu0
  %6926 = vmatprep.mubr.bf16.mxu0 0
  %6927 = vmatmul.mubr.bf16.gmra.mxu0 %v6686
  %v6928 = vpop.f32.mrf.mxu0
  %v6929 = vadd.f32 0.0, %v6928
  %v6930 = vpop.f32.mrf.mxu0
  %v6931 = vpop.f32.mrf.mxu0
  %v6932 = vadd.f32 0.0, %v6931
  %v6933 = vpop.f32.mrf.mxu0
  %6934 = vmatprep.mubr.bf16.mxu0 0
  %6935 = vmatmul.mubr.bf16.gmra.mxu0 %v6687
  %v6936 = vpop.f32.mrf.mxu0
  %v6937 = vadd.f32 0.0, %v6936
  %v6938 = vpop.f32.mrf.mxu0
  %v6939 = vpop.f32.mrf.mxu0
  %v6940 = vadd.f32 0.0, %v6939
  %v6941 = vpop.f32.mrf.mxu0
  %6942 = vmatprep.mubr.bf16.mxu0 0
  %6943 = vmatmul.mubr.bf16.gmra.mxu0 %v6688
  %v6944 = vpop.f32.mrf.mxu0
  %v6945 = vadd.f32 0.0, %v6944
  %v6946 = vpop.f32.mrf.mxu0
  %v6947 = vpop.f32.mrf.mxu0
  %v6948 = vadd.f32 0.0, %v6947
  %v6949 = vpop.f32.mrf.mxu0
  %6950 = vmatprep.mubr.bf16.mxu0 0
  %6951 = vmatmul.mubr.bf16.gmra.mxu0 %v6689
  %v6952 = vpop.f32.mrf.mxu0
  %v6953 = vadd.f32 0.0, %v6952
  %v6954 = vpop.f32.mrf.mxu0
  %v6955 = vpop.f32.mrf.mxu0
  %v6956 = vadd.f32 0.0, %v6955
  %v6957 = vpop.f32.mrf.mxu0
  %6958 = vmatprep.mubr.bf16.mxu0 0
  %6959 = vmatmul.mubr.bf16.gmra.mxu0 %v6690
  %v6960 = vpop.f32.mrf.mxu0
  %v6961 = vadd.f32 0.0, %v6960
  %v6962 = vpop.f32.mrf.mxu0
  %v6963 = vpop.f32.mrf.mxu0
  %v6964 = vadd.f32 0.0, %v6963
  %v6965 = vpop.f32.mrf.mxu0
  %6966 = vmatprep.mubr.bf16.mxu0 0
  %6967 = vmatmul.mubr.bf16.gmra.mxu0 %v6691
  %v6968 = vpop.f32.mrf.mxu0
  %v6969 = vadd.f32 0.0, %v6968
  %v6970 = vpop.f32.mrf.mxu0
  %v6971 = vpop.f32.mrf.mxu0
  %v6972 = vadd.f32 0.0, %v6971
  %v6973 = vpop.f32.mrf.mxu0
  %6974 = vmatprep.mubr.bf16.mxu0 0
  %6975 = vmatmul.mubr.bf16.gmra.mxu0 %v6692
  %v6976 = vpop.f32.mrf.mxu0
  %v6977 = vadd.f32 0.0, %v6976
  %v6978 = vpop.f32.mrf.mxu0
  %v6979 = vpop.f32.mrf.mxu0
  %v6980 = vadd.f32 0.0, %v6979
  %v6981 = vpop.f32.mrf.mxu0
  %6982 = vmatprep.mubr.bf16.mxu0 0
  %6983 = vmatmul.mubr.bf16.gmra.mxu0 %v6693
  %v6984 = vpop.f32.mrf.mxu0
  %v6985 = vadd.f32 0.0, %v6984
  %v6986 = vpop.f32.mrf.mxu0
  %v6987 = vpop.f32.mrf.mxu0
  %v6988 = vadd.f32 0.0, %v6987
  %v6989 = vpop.f32.mrf.mxu0
  %6990 = vmatprep.mubr.bf16.mxu0 0
  %6991 = vmatmul.mubr.bf16.gmra.mxu0 %v6694
  %v6992 = vpop.f32.mrf.mxu0
  %v6993 = vadd.f32 0.0, %v6992
  %v6994 = vpop.f32.mrf.mxu0
  %v6995 = vpop.f32.mrf.mxu0
  %v6996 = vadd.f32 0.0, %v6995
  %v6997 = vpop.f32.mrf.mxu0
  %6998 = vmatprep.mubr.bf16.mxu0 0
  %6999 = vmatmul.mubr.bf16.gmra.mxu0 %v6695
  %v7000 = vpop.f32.mrf.mxu0
  %v7001 = vadd.f32 0.0, %v7000
  %v7002 = vpop.f32.mrf.mxu0
  %v7003 = vpop.f32.mrf.mxu0
  %v7004 = vadd.f32 0.0, %v7003
  %v7005 = vpop.f32.mrf.mxu0
  %7006 = vmatprep.mubr.bf16.mxu0 0
  %7007 = vmatmul.mubr.bf16.gmra.mxu0 %v6696
  %v7008 = vpop.f32.mrf.mxu0
  %v7009 = vadd.f32 0.0, %v7008
  %v7010 = vpop.f32.mrf.mxu0
  %v7011 = vpop.f32.mrf.mxu0
  %v7012 = vadd.f32 0.0, %v7011
  %v7013 = vpop.f32.mrf.mxu0
  %7014 = vmatprep.mubr.bf16.mxu0 0
  %7015 = vmatmul.mubr.bf16.gmra.mxu0 %v6697
  %v7016 = vpop.f32.mrf.mxu0
  %v7017 = vadd.f32 0.0, %v7016
  %v7018 = vpop.f32.mrf.mxu0
  %v7019 = vpop.f32.mrf.mxu0
  %v7020 = vadd.f32 0.0, %v7019
  %v7021 = vpop.f32.mrf.mxu0
  %7022 = vmatprep.mubr.bf16.mxu0 0
  %7023 = vmatmul.mubr.bf16.gmra.mxu0 %v6698
  %v7024 = vpop.f32.mrf.mxu0
  %v7025 = vadd.f32 0.0, %v7024
  %v7026 = vpop.f32.mrf.mxu0
  %v7027 = vpop.f32.mrf.mxu0
  %v7028 = vadd.f32 0.0, %v7027
  %v7029 = vpop.f32.mrf.mxu0
  %7030 = vmatprep.mubr.bf16.mxu0 0
  %7031 = vmatmul.mubr.bf16.gmra.mxu0 %v6699
  %v7032 = vpop.f32.mrf.mxu0
  %v7033 = vadd.f32 0.0, %v7032
  %v7034 = vpop.f32.mrf.mxu0
  %v7035 = vpop.f32.mrf.mxu0
  %v7036 = vadd.f32 0.0, %v7035
  %v7037 = vpop.f32.mrf.mxu0
  %7038 = vmatprep.mubr.bf16.mxu0 0
  %7039 = vmatmul.mubr.bf16.gmra.mxu0 %v6700
  %v7040 = vpop.f32.mrf.mxu0
  %v7041 = vadd.f32 0.0, %v7040
  %v7042 = vpop.f32.mrf.mxu0
  %v7043 = vpop.f32.mrf.mxu0
  %v7044 = vadd.f32 0.0, %v7043
  %v7045 = vpop.f32.mrf.mxu0
  %7046 = vmatprep.mubr.bf16.mxu0 0
  %7047 = vmatmul.mubr.bf16.gmra.mxu0 %v6701
  %v7048 = vpop.f32.mrf.mxu0
  %v7049 = vadd.f32 0.0, %v7048
  %v7050 = vpop.f32.mrf.mxu0
  %v7051 = vpop.f32.mrf.mxu0
  %v7052 = vadd.f32 0.0, %v7051
  %v7053 = vpop.f32.mrf.mxu0
  %7054 = vdwg.mxu0
  %v7055 = vld [vmem:[%s8] sm:$0x1]
  %v7056 = vld [vmem:[%s9] sm:$0x1]
  %v7057 = vadd.f32 %v6801, %v6804
  %v7058 = vadd.f32 %v7057, %v6809
  %v7059 = vadd.f32 %v7058, %v6812
  %v7060 = vadd.f32 %v7059, %v6817
  %v7061 = vadd.f32 %v7060, %v6820
  %v7062 = vadd.f32 %v7061, %v6825
  %v7063 = vadd.f32 %v7062, %v6828
  %v7064 = vadd.f32 %v7063, %v6833
  %v7065 = vadd.f32 %v7064, %v6836
  %v7066 = vadd.f32 %v7065, %v6841
  %v7067 = vadd.f32 %v7066, %v6844
  %v7068 = vadd.f32 %v7067, %v6849
  %v7069 = vadd.f32 %v7068, %v6852
  %v7070 = vadd.f32 %v7069, %v6857
  %v7071 = vadd.f32 %v7070, %v6860
  %v7072 = vadd.f32 %v7071, %v6865
  %v7073 = vadd.f32 %v7072, %v6868
  %v7074 = vadd.f32 %v7073, %v6873
  %v7075 = vadd.f32 %v7074, %v6876
  %v7076 = vadd.f32 %v7075, %v6881
  %v7077 = vadd.f32 %v7076, %v6884
  %v7078 = vadd.f32 %v7077, %v6889
  %v7079 = vadd.f32 %v7078, %v6892
  %v7080 = vadd.f32 %v7079, %v6897
  %v7081 = vadd.f32 %v7080, %v6900
  %v7082 = vadd.f32 %v7081, %v6905
  %v7083 = vadd.f32 %v7082, %v6908
  %v7084 = vadd.f32 %v7083, %v6913
  %v7085 = vadd.f32 %v7084, %v6916
  %v7086 = vadd.f32 %v7085, %v6921
  %v7087 = vadd.f32 %v7086, %v6924
  %v7088 = vadd.f32 %v7087, %v6929
  %v7089 = vadd.f32 %v7088, %v6932
  %v7090 = vadd.f32 %v7089, %v6937
  %v7091 = vadd.f32 %v7090, %v6940
  %v7092 = vadd.f32 %v7091, %v6945
  %v7093 = vadd.f32 %v7092, %v6948
  %v7094 = vadd.f32 %v7093, %v6953
  %v7095 = vadd.f32 %v7094, %v6956
  %v7096 = vadd.f32 %v7095, %v6961
  %v7097 = vadd.f32 %v7096, %v6964
  %v7098 = vadd.f32 %v7097, %v6969
  %v7099 = vadd.f32 %v7098, %v6972
  %v7100 = vadd.f32 %v7099, %v6977
  %v7101 = vadd.f32 %v7100, %v6980
  %v7102 = vadd.f32 %v7101, %v6985
  %v7103 = vadd.f32 %v7102, %v6988
  %v7104 = vadd.f32 %v7103, %v6993
  %v7105 = vadd.f32 %v7104, %v6996
  %v7106 = vadd.f32 %v7105, %v7001
  %v7107 = vadd.f32 %v7106, %v7004
  %v7108 = vadd.f32 %v7107, %v7009
  %v7109 = vadd.f32 %v7108, %v7012
  %v7110 = vadd.f32 %v7109, %v7017
  %v7111 = vadd.f32 %v7110, %v7020
  %v7112 = vadd.f32 %v7111, %v7025
  %v7113 = vadd.f32 %v7112, %v7028
  %v7114 = vadd.f32 %v7113, %v7033
  %v7115 = vadd.f32 %v7114, %v7036
  %v7116 = vadd.f32 %v7115, %v7041
  %v7117 = vadd.f32 %v7116, %v7044
  %v7118 = vadd.f32 %v7117, %v7049
  %v7119 = vadd.f32 %v7118, %v7052
  %v7120 = vrot.slane %v7119, 4
  %v7121 = vadd.f32 %v7119, %v7120
  %v7122 = vrot.slane %v7121, 2
  %v7123 = vadd.f32 %v7121, %v7122
  %v7124 = vrot.slane %v7123, 1
  %v7125 = vadd.f32 %v7123, %v7124
  %v7126 = vmul.f32 %v6801, %v6801
  %v7127 = vmul.f32 %v6804, %v6804
  %v7128 = vmul.f32 %v6809, %v6809
  %v7129 = vmul.f32 %v6812, %v6812
  %v7130 = vmul.f32 %v6817, %v6817
  %v7131 = vmul.f32 %v6820, %v6820
  %v7132 = vmul.f32 %v6825, %v6825
  %v7133 = vmul.f32 %v6828, %v6828
  %v7134 = vmul.f32 %v6833, %v6833
  %v7135 = vmul.f32 %v6836, %v6836
  %v7136 = vmul.f32 %v6841, %v6841
  %v7137 = vmul.f32 %v6844, %v6844
  %v7138 = vmul.f32 %v6849, %v6849
  %v7139 = vmul.f32 %v6852, %v6852
  %v7140 = vmul.f32 %v6857, %v6857
  %v7141 = vmul.f32 %v6860, %v6860
  %v7142 = vmul.f32 %v6865, %v6865
  %v7143 = vmul.f32 %v6868, %v6868
  %v7144 = vmul.f32 %v6873, %v6873
  %v7145 = vmul.f32 %v6876, %v6876
  %v7146 = vmul.f32 %v6881, %v6881
  %v7147 = vmul.f32 %v6884, %v6884
  %v7148 = vmul.f32 %v6889, %v6889
  %v7149 = vmul.f32 %v6892, %v6892
  %v7150 = vmul.f32 %v6897, %v6897
  %v7151 = vmul.f32 %v6900, %v6900
  %v7152 = vmul.f32 %v6905, %v6905
  %v7153 = vmul.f32 %v6908, %v6908
  %v7154 = vmul.f32 %v6913, %v6913
  %v7155 = vmul.f32 %v6916, %v6916
  %v7156 = vmul.f32 %v6921, %v6921
  %v7157 = vmul.f32 %v6924, %v6924
  %v7158 = vmul.f32 %v6929, %v6929
  %v7159 = vmul.f32 %v6932, %v6932
  %v7160 = vmul.f32 %v6937, %v6937
  %v7161 = vmul.f32 %v6940, %v6940
  %v7162 = vmul.f32 %v6945, %v6945
  %v7163 = vmul.f32 %v6948, %v6948
  %v7164 = vmul.f32 %v6953, %v6953
  %v7165 = vmul.f32 %v6956, %v6956
  %v7166 = vmul.f32 %v6961, %v6961
  %v7167 = vmul.f32 %v6964, %v6964
  %v7168 = vmul.f32 %v6969, %v6969
  %v7169 = vmul.f32 %v6972, %v6972
  %v7170 = vmul.f32 %v6977, %v6977
  %v7171 = vmul.f32 %v6980, %v6980
  %v7172 = vmul.f32 %v6985, %v6985
  %v7173 = vmul.f32 %v6988, %v6988
  %v7174 = vmul.f32 %v6993, %v6993
  %v7175 = vmul.f32 %v6996, %v6996
  %v7176 = vmul.f32 %v7001, %v7001
  %v7177 = vmul.f32 %v7004, %v7004
  %v7178 = vmul.f32 %v7009, %v7009
  %v7179 = vmul.f32 %v7012, %v7012
  %v7180 = vmul.f32 %v7017, %v7017
  %v7181 = vmul.f32 %v7020, %v7020
  %v7182 = vmul.f32 %v7025, %v7025
  %v7183 = vmul.f32 %v7028, %v7028
  %v7184 = vmul.f32 %v7033, %v7033
  %v7185 = vmul.f32 %v7036, %v7036
  %v7186 = vmul.f32 %v7041, %v7041
  %v7187 = vmul.f32 %v7044, %v7044
  %v7188 = vmul.f32 %v7049, %v7049
  %v7189 = vmul.f32 %v7052, %v7052
  %v7190 = vadd.f32 %v7126, %v7127
  %v7191 = vadd.f32 %v7190, %v7128
  %v7192 = vadd.f32 %v7191, %v7129
  %v7193 = vadd.f32 %v7192, %v7130
  %v7194 = vadd.f32 %v7193, %v7131
  %v7195 = vadd.f32 %v7194, %v7132
  %v7196 = vadd.f32 %v7195, %v7133
  %v7197 = vadd.f32 %v7196, %v7134
  %v7198 = vadd.f32 %v7197, %v7135
  %v7199 = vadd.f32 %v7198, %v7136
  %v7200 = vadd.f32 %v7199, %v7137
  %v7201 = vadd.f32 %v7200, %v7138
  %v7202 = vadd.f32 %v7201, %v7139
  %v7203 = vadd.f32 %v7202, %v7140
  %v7204 = vadd.f32 %v7203, %v7141
  %v7205 = vadd.f32 %v7204, %v7142
  %v7206 = vadd.f32 %v7205, %v7143
  %v7207 = vadd.f32 %v7206, %v7144
  %v7208 = vadd.f32 %v7207, %v7145
  %v7209 = vadd.f32 %v7208, %v7146
  %v7210 = vadd.f32 %v7209, %v7147
  %v7211 = vadd.f32 %v7210, %v7148
  %v7212 = vadd.f32 %v7211, %v7149
  %v7213 = vadd.f32 %v7212, %v7150
  %v7214 = vadd.f32 %v7213, %v7151
  %v7215 = vadd.f32 %v7214, %v7152
  %v7216 = vadd.f32 %v7215, %v7153
  %v7217 = vadd.f32 %v7216, %v7154
  %v7218 = vadd.f32 %v7217, %v7155
  %v7219 = vadd.f32 %v7218, %v7156
  %v7220 = vadd.f32 %v7219, %v7157
  %v7221 = vadd.f32 %v7220, %v7158
  %v7222 = vadd.f32 %v7221, %v7159
  %v7223 = vadd.f32 %v7222, %v7160
  %v7224 = vadd.f32 %v7223, %v7161
  %v7225 = vadd.f32 %v7224, %v7162
  %v7226 = vadd.f32 %v7225, %v7163
  %v7227 = vadd.f32 %v7226, %v7164
  %v7228 = vadd.f32 %v7227, %v7165
  %v7229 = vadd.f32 %v7228, %v7166
  %v7230 = vadd.f32 %v7229, %v7167
  %v7231 = vadd.f32 %v7230, %v7168
  %v7232 = vadd.f32 %v7231, %v7169
  %v7233 = vadd.f32 %v7232, %v7170
  %v7234 = vadd.f32 %v7233, %v7171
  %v7235 = vadd.f32 %v7234, %v7172
  %v7236 = vadd.f32 %v7235, %v7173
  %v7237 = vadd.f32 %v7236, %v7174
  %v7238 = vadd.f32 %v7237, %v7175
  %v7239 = vadd.f32 %v7238, %v7176
  %v7240 = vadd.f32 %v7239, %v7177
  %v7241 = vadd.f32 %v7240, %v7178
  %v7242 = vadd.f32 %v7241, %v7179
  %v7243 = vadd.f32 %v7242, %v7180
  %v7244 = vadd.f32 %v7243, %v7181
  %v7245 = vadd.f32 %v7244, %v7182
  %v7246 = vadd.f32 %v7245, %v7183
  %v7247 = vadd.f32 %v7246, %v7184
  %v7248 = vadd.f32 %v7247, %v7185
  %v7249 = vadd.f32 %v7248, %v7186
  %v7250 = vadd.f32 %v7249, %v7187
  %v7251 = vadd.f32 %v7250, %v7188
  %v7252 = vadd.f32 %v7251, %v7189
  %v7253 = vrot.slane %v7252, 4
  %v7254 = vadd.f32 %v7252, %v7253
  %v7255 = vrot.slane %v7254, 2
  %v7256 = vadd.f32 %v7254, %v7255
  %v7257 = vrot.slane %v7256, 1
  %v7258 = vadd.f32 %v7256, %v7257
  %v7259 = vmul.f32 %v7125, 0.001953125
  %v7260 = vmul.f32 %v7258, 0.001953125
  %v7261 = vmul.f32 %v7259, %v7259
  %v7262 = vsub.f32 %v7260, %v7261
  %v7263 = vmax.f32 %v7262, 0.0
  %v7264 = vadd.f32 %v7263, 1e-05
  %v7265 = vrsqrt.pop %v7264
  %v7266 = vmul.f32 %v7055, %v7265
  %v7267 = vmul.f32 %v7259, %v7266
  %v7268 = vsub.f32 %v7056, %v7267
  %v7270 = vlaneseq
  %v7271 = vshrl.u32 %v7270, 7
  %v7272 = vsub.s32 0, %v7271
  %v7273 = vrot.slane %v7266, %v7272
  %v7275 = vmul.f32 %v6801, %v7273
  %v7276 = vmul.f32 %v6804, %v7273
  %v7277 = vmul.f32 %v6809, %v7273
  %v7278 = vmul.f32 %v6812, %v7273
  %v7279 = vmul.f32 %v6817, %v7273
  %v7280 = vmul.f32 %v6820, %v7273
  %v7281 = vmul.f32 %v6825, %v7273
  %v7282 = vmul.f32 %v6828, %v7273
  %v7283 = vmul.f32 %v6833, %v7273
  %v7284 = vmul.f32 %v6836, %v7273
  %v7285 = vmul.f32 %v6841, %v7273
  %v7286 = vmul.f32 %v6844, %v7273
  %v7287 = vmul.f32 %v6849, %v7273
  %v7288 = vmul.f32 %v6852, %v7273
  %v7289 = vmul.f32 %v6857, %v7273
  %v7290 = vmul.f32 %v6860, %v7273
  %v7291 = vmul.f32 %v6865, %v7273
  %v7292 = vmul.f32 %v6868, %v7273
  %v7293 = vmul.f32 %v6873, %v7273
  %v7294 = vmul.f32 %v6876, %v7273
  %v7295 = vmul.f32 %v6881, %v7273
  %v7296 = vmul.f32 %v6884, %v7273
  %v7297 = vmul.f32 %v6889, %v7273
  %v7298 = vmul.f32 %v6892, %v7273
  %v7299 = vmul.f32 %v6897, %v7273
  %v7300 = vmul.f32 %v6900, %v7273
  %v7301 = vmul.f32 %v6905, %v7273
  %v7302 = vmul.f32 %v6908, %v7273
  %v7303 = vmul.f32 %v6913, %v7273
  %v7304 = vmul.f32 %v6916, %v7273
  %v7305 = vmul.f32 %v6921, %v7273
  %v7306 = vmul.f32 %v6924, %v7273
  %v7307 = vmul.f32 %v6929, %v7273
  %v7308 = vmul.f32 %v6932, %v7273
  %v7309 = vmul.f32 %v6937, %v7273
  %v7310 = vmul.f32 %v6940, %v7273
  %v7311 = vmul.f32 %v6945, %v7273
  %v7312 = vmul.f32 %v6948, %v7273
  %v7313 = vmul.f32 %v6953, %v7273
  %v7314 = vmul.f32 %v6956, %v7273
  %v7315 = vmul.f32 %v6961, %v7273
  %v7316 = vmul.f32 %v6964, %v7273
  %v7317 = vmul.f32 %v6969, %v7273
  %v7318 = vmul.f32 %v6972, %v7273
  %v7319 = vmul.f32 %v6977, %v7273
  %v7320 = vmul.f32 %v6980, %v7273
  %v7321 = vmul.f32 %v6985, %v7273
  %v7322 = vmul.f32 %v6988, %v7273
  %v7323 = vmul.f32 %v6993, %v7273
  %v7324 = vmul.f32 %v6996, %v7273
  %v7325 = vmul.f32 %v7001, %v7273
  %v7326 = vmul.f32 %v7004, %v7273
  %v7327 = vmul.f32 %v7009, %v7273
  %v7328 = vmul.f32 %v7012, %v7273
  %v7329 = vmul.f32 %v7017, %v7273
  %v7330 = vmul.f32 %v7020, %v7273
  %v7331 = vmul.f32 %v7025, %v7273
  %v7332 = vmul.f32 %v7028, %v7273
  %v7333 = vmul.f32 %v7033, %v7273
  %v7334 = vmul.f32 %v7036, %v7273
  %v7335 = vmul.f32 %v7041, %v7273
  %v7336 = vmul.f32 %v7044, %v7273
  %v7337 = vmul.f32 %v7049, %v7273
  %v7338 = vmul.f32 %v7052, %v7273
  %v7340 = vlaneseq
  %v7341 = vshrl.u32 %v7340, 7
  %v7342 = vsub.s32 0, %v7341
  %v7343 = vrot.slane %v7268, %v7342
  %v7345 = vadd.f32 %v7275, %v7343
  %v7346 = vadd.f32 %v7276, %v7343
  %v7347 = vadd.f32 %v7277, %v7343
  %v7348 = vadd.f32 %v7278, %v7343
  %v7349 = vadd.f32 %v7279, %v7343
  %v7350 = vadd.f32 %v7280, %v7343
  %v7351 = vadd.f32 %v7281, %v7343
  %v7352 = vadd.f32 %v7282, %v7343
  %v7353 = vadd.f32 %v7283, %v7343
  %v7354 = vadd.f32 %v7284, %v7343
  %v7355 = vadd.f32 %v7285, %v7343
  %v7356 = vadd.f32 %v7286, %v7343
  %v7357 = vadd.f32 %v7287, %v7343
  %v7358 = vadd.f32 %v7288, %v7343
  %v7359 = vadd.f32 %v7289, %v7343
  %v7360 = vadd.f32 %v7290, %v7343
  %v7361 = vadd.f32 %v7291, %v7343
  %v7362 = vadd.f32 %v7292, %v7343
  %v7363 = vadd.f32 %v7293, %v7343
  %v7364 = vadd.f32 %v7294, %v7343
  %v7365 = vadd.f32 %v7295, %v7343
  %v7366 = vadd.f32 %v7296, %v7343
  %v7367 = vadd.f32 %v7297, %v7343
  %v7368 = vadd.f32 %v7298, %v7343
  %v7369 = vadd.f32 %v7299, %v7343
  %v7370 = vadd.f32 %v7300, %v7343
  %v7371 = vadd.f32 %v7301, %v7343
  %v7372 = vadd.f32 %v7302, %v7343
  %v7373 = vadd.f32 %v7303, %v7343
  %v7374 = vadd.f32 %v7304, %v7343
  %v7375 = vadd.f32 %v7305, %v7343
  %v7376 = vadd.f32 %v7306, %v7343
  %v7377 = vadd.f32 %v7307, %v7343
  %v7378 = vadd.f32 %v7308, %v7343
  %v7379 = vadd.f32 %v7309, %v7343
  %v7380 = vadd.f32 %v7310, %v7343
  %v7381 = vadd.f32 %v7311, %v7343
  %v7382 = vadd.f32 %v7312, %v7343
  %v7383 = vadd.f32 %v7313, %v7343
  %v7384 = vadd.f32 %v7314, %v7343
  %v7385 = vadd.f32 %v7315, %v7343
  %v7386 = vadd.f32 %v7316, %v7343
  %v7387 = vadd.f32 %v7317, %v7343
  %v7388 = vadd.f32 %v7318, %v7343
  %v7389 = vadd.f32 %v7319, %v7343
  %v7390 = vadd.f32 %v7320, %v7343
  %v7391 = vadd.f32 %v7321, %v7343
  %v7392 = vadd.f32 %v7322, %v7343
  %v7393 = vadd.f32 %v7323, %v7343
  %v7394 = vadd.f32 %v7324, %v7343
  %v7395 = vadd.f32 %v7325, %v7343
  %v7396 = vadd.f32 %v7326, %v7343
  %v7397 = vadd.f32 %v7327, %v7343
  %v7398 = vadd.f32 %v7328, %v7343
  %v7399 = vadd.f32 %v7329, %v7343
  %v7400 = vadd.f32 %v7330, %v7343
  %v7401 = vadd.f32 %v7331, %v7343
  %v7402 = vadd.f32 %v7332, %v7343
  %v7403 = vadd.f32 %v7333, %v7343
  %v7404 = vadd.f32 %v7334, %v7343
  %v7405 = vadd.f32 %v7335, %v7343
  %v7406 = vadd.f32 %v7336, %v7343
  %v7407 = vadd.f32 %v7337, %v7343
  %v7408 = vadd.f32 %v7338, %v7343
  %v7409 = vld [vmem:[%s0] sm:$0xff]
  %v7410 = vld [vmem:[%s0 + $0x8] sm:$0xff]
  %v7411 = vld [vmem:[%s0 + $0x10] sm:$0xff]
  %v7412 = vld [vmem:[%s0 + $0x18] sm:$0xff]
  %v7413 = vld [vmem:[%s0 + $0x20] sm:$0xff]
  %v7414 = vld [vmem:[%s0 + $0x28] sm:$0xff]
  %v7415 = vld [vmem:[%s0 + $0x30] sm:$0xff]
  %v7416 = vld [vmem:[%s0 + $0x38] sm:$0xff]
  %v7417 = vld [vmem:[%s0 + $0x40] sm:$0xff]
  %v7418 = vld [vmem:[%s0 + $0x48] sm:$0xff]
  %v7419 = vld [vmem:[%s0 + $0x50] sm:$0xff]
  %v7420 = vld [vmem:[%s0 + $0x58] sm:$0xff]
  %v7421 = vld [vmem:[%s0 + $0x60] sm:$0xff]
  %v7422 = vld [vmem:[%s0 + $0x68] sm:$0xff]
  %v7423 = vld [vmem:[%s0 + $0x70] sm:$0xff]
  %v7424 = vld [vmem:[%s0 + $0x78] sm:$0xff]
  %v7425 = vld [vmem:[%s0 + $0x80] sm:$0xff]
  %v7426 = vld [vmem:[%s0 + $0x88] sm:$0xff]
  %v7427 = vld [vmem:[%s0 + $0x90] sm:$0xff]
  %v7428 = vld [vmem:[%s0 + $0x98] sm:$0xff]
  %v7429 = vld [vmem:[%s0 + $0xa0] sm:$0xff]
  %v7430 = vld [vmem:[%s0 + $0xa8] sm:$0xff]
  %v7431 = vld [vmem:[%s0 + $0xb0] sm:$0xff]
  %v7432 = vld [vmem:[%s0 + $0xb8] sm:$0xff]
  %v7433 = vld [vmem:[%s0 + $0xc0] sm:$0xff]
  %v7434 = vld [vmem:[%s0 + $0xc8] sm:$0xff]
  %v7435 = vld [vmem:[%s0 + $0xd0] sm:$0xff]
  %v7436 = vld [vmem:[%s0 + $0xd8] sm:$0xff]
  %v7437 = vld [vmem:[%s0 + $0xe0] sm:$0xff]
  %v7438 = vld [vmem:[%s0 + $0xe8] sm:$0xff]
  %v7439 = vld [vmem:[%s0 + $0xf0] sm:$0xff]
  %v7440 = vld [vmem:[%s0 + $0xf8] sm:$0xff]
  %v7441 = vld [vmem:[%s0 + $0x100] sm:$0xff]
  %v7442 = vld [vmem:[%s0 + $0x108] sm:$0xff]
  %v7443 = vld [vmem:[%s0 + $0x110] sm:$0xff]
  %v7444 = vld [vmem:[%s0 + $0x118] sm:$0xff]
  %v7445 = vld [vmem:[%s0 + $0x120] sm:$0xff]
  %v7446 = vld [vmem:[%s0 + $0x128] sm:$0xff]
  %v7447 = vld [vmem:[%s0 + $0x130] sm:$0xff]
  %v7448 = vld [vmem:[%s0 + $0x138] sm:$0xff]
  %v7449 = vld [vmem:[%s0 + $0x140] sm:$0xff]
  %v7450 = vld [vmem:[%s0 + $0x148] sm:$0xff]
  %v7451 = vld [vmem:[%s0 + $0x150] sm:$0xff]
  %v7452 = vld [vmem:[%s0 + $0x158] sm:$0xff]
  %v7453 = vld [vmem:[%s0 + $0x160] sm:$0xff]
  %v7454 = vld [vmem:[%s0 + $0x168] sm:$0xff]
  %v7455 = vld [vmem:[%s0 + $0x170] sm:$0xff]
  %v7456 = vld [vmem:[%s0 + $0x178] sm:$0xff]
  %v7457 = vld [vmem:[%s0 + $0x180] sm:$0xff]
  %v7458 = vld [vmem:[%s0 + $0x188] sm:$0xff]
  %v7459 = vld [vmem:[%s0 + $0x190] sm:$0xff]
  %v7460 = vld [vmem:[%s0 + $0x198] sm:$0xff]
  %v7461 = vld [vmem:[%s0 + $0x1a0] sm:$0xff]
  %v7462 = vld [vmem:[%s0 + $0x1a8] sm:$0xff]
  %v7463 = vld [vmem:[%s0 + $0x1b0] sm:$0xff]
  %v7464 = vld [vmem:[%s0 + $0x1b8] sm:$0xff]
  %v7465 = vld [vmem:[%s0 + $0x1c0] sm:$0xff]
  %v7466 = vld [vmem:[%s0 + $0x1c8] sm:$0xff]
  %v7467 = vld [vmem:[%s0 + $0x1d0] sm:$0xff]
  %v7468 = vld [vmem:[%s0 + $0x1d8] sm:$0xff]
  %v7469 = vld [vmem:[%s0 + $0x1e0] sm:$0xff]
  %v7470 = vld [vmem:[%s0 + $0x1e8] sm:$0xff]
  %v7471 = vld [vmem:[%s0 + $0x1f0] sm:$0xff]
  %v7472 = vld [vmem:[%s0 + $0x1f8] sm:$0xff]
  %v7473 = vadd.f32 %v7345, %v7409
  %v7474 = vadd.f32 %v7346, %v7410
  %v7475 = vadd.f32 %v7347, %v7411
  %v7476 = vadd.f32 %v7348, %v7412
  %v7477 = vadd.f32 %v7349, %v7413
  %v7478 = vadd.f32 %v7350, %v7414
  %v7479 = vadd.f32 %v7351, %v7415
  %v7480 = vadd.f32 %v7352, %v7416
  %v7481 = vadd.f32 %v7353, %v7417
  %v7482 = vadd.f32 %v7354, %v7418
  %v7483 = vadd.f32 %v7355, %v7419
  %v7484 = vadd.f32 %v7356, %v7420
  %v7485 = vadd.f32 %v7357, %v7421
  %v7486 = vadd.f32 %v7358, %v7422
  %v7487 = vadd.f32 %v7359, %v7423
  %v7488 = vadd.f32 %v7360, %v7424
  %v7489 = vadd.f32 %v7361, %v7425
  %v7490 = vadd.f32 %v7362, %v7426
  %v7491 = vadd.f32 %v7363, %v7427
  %v7492 = vadd.f32 %v7364, %v7428
  %v7493 = vadd.f32 %v7365, %v7429
  %v7494 = vadd.f32 %v7366, %v7430
  %v7495 = vadd.f32 %v7367, %v7431
  %v7496 = vadd.f32 %v7368, %v7432
  %v7497 = vadd.f32 %v7369, %v7433
  %v7498 = vadd.f32 %v7370, %v7434
  %v7499 = vadd.f32 %v7371, %v7435
  %v7500 = vadd.f32 %v7372, %v7436
  %v7501 = vadd.f32 %v7373, %v7437
  %v7502 = vadd.f32 %v7374, %v7438
  %v7503 = vadd.f32 %v7375, %v7439
  %v7504 = vadd.f32 %v7376, %v7440
  %v7505 = vadd.f32 %v7377, %v7441
  %v7506 = vadd.f32 %v7378, %v7442
  %v7507 = vadd.f32 %v7379, %v7443
  %v7508 = vadd.f32 %v7380, %v7444
  %v7509 = vadd.f32 %v7381, %v7445
  %v7510 = vadd.f32 %v7382, %v7446
  %v7511 = vadd.f32 %v7383, %v7447
  %v7512 = vadd.f32 %v7384, %v7448
  %v7513 = vadd.f32 %v7385, %v7449
  %v7514 = vadd.f32 %v7386, %v7450
  %v7515 = vadd.f32 %v7387, %v7451
  %v7516 = vadd.f32 %v7388, %v7452
  %v7517 = vadd.f32 %v7389, %v7453
  %v7518 = vadd.f32 %v7390, %v7454
  %v7519 = vadd.f32 %v7391, %v7455
  %v7520 = vadd.f32 %v7392, %v7456
  %v7521 = vadd.f32 %v7393, %v7457
  %v7522 = vadd.f32 %v7394, %v7458
  %v7523 = vadd.f32 %v7395, %v7459
  %v7524 = vadd.f32 %v7396, %v7460
  %v7525 = vadd.f32 %v7397, %v7461
  %v7526 = vadd.f32 %v7398, %v7462
  %v7527 = vadd.f32 %v7399, %v7463
  %v7528 = vadd.f32 %v7400, %v7464
  %v7529 = vadd.f32 %v7401, %v7465
  %v7530 = vadd.f32 %v7402, %v7466
  %v7531 = vadd.f32 %v7403, %v7467
  %v7532 = vadd.f32 %v7404, %v7468
  %v7533 = vadd.f32 %v7405, %v7469
  %v7534 = vadd.f32 %v7406, %v7470
  %v7535 = vadd.f32 %v7407, %v7471
  %v7536 = vadd.f32 %v7408, %v7472
  %v7537 = vmax.f32 %v7473, 0.0
  %v7538 = vmax.f32 %v7474, 0.0
  %v7539 = vmax.f32 %v7475, 0.0
  %v7540 = vmax.f32 %v7476, 0.0
  %v7541 = vmax.f32 %v7477, 0.0
  %v7542 = vmax.f32 %v7478, 0.0
  %v7543 = vmax.f32 %v7479, 0.0
  %v7544 = vmax.f32 %v7480, 0.0
  %v7545 = vmax.f32 %v7481, 0.0
  %v7546 = vmax.f32 %v7482, 0.0
  %v7547 = vmax.f32 %v7483, 0.0
  %v7548 = vmax.f32 %v7484, 0.0
  %v7549 = vmax.f32 %v7485, 0.0
  %v7550 = vmax.f32 %v7486, 0.0
  %v7551 = vmax.f32 %v7487, 0.0
  %v7552 = vmax.f32 %v7488, 0.0
  %v7553 = vmax.f32 %v7489, 0.0
  %v7554 = vmax.f32 %v7490, 0.0
  %v7555 = vmax.f32 %v7491, 0.0
  %v7556 = vmax.f32 %v7492, 0.0
  %v7557 = vmax.f32 %v7493, 0.0
  %v7558 = vmax.f32 %v7494, 0.0
  %v7559 = vmax.f32 %v7495, 0.0
  %v7560 = vmax.f32 %v7496, 0.0
  %v7561 = vmax.f32 %v7497, 0.0
  %v7562 = vmax.f32 %v7498, 0.0
  %v7563 = vmax.f32 %v7499, 0.0
  %v7564 = vmax.f32 %v7500, 0.0
  %v7565 = vmax.f32 %v7501, 0.0
  %v7566 = vmax.f32 %v7502, 0.0
  %v7567 = vmax.f32 %v7503, 0.0
  %v7568 = vmax.f32 %v7504, 0.0
  %v7569 = vmax.f32 %v7505, 0.0
  %v7570 = vmax.f32 %v7506, 0.0
  %v7571 = vmax.f32 %v7507, 0.0
  %v7572 = vmax.f32 %v7508, 0.0
  %v7573 = vmax.f32 %v7509, 0.0
  %v7574 = vmax.f32 %v7510, 0.0
  %v7575 = vmax.f32 %v7511, 0.0
  %v7576 = vmax.f32 %v7512, 0.0
  %v7577 = vmax.f32 %v7513, 0.0
  %v7578 = vmax.f32 %v7514, 0.0
  %v7579 = vmax.f32 %v7515, 0.0
  %v7580 = vmax.f32 %v7516, 0.0
  %v7581 = vmax.f32 %v7517, 0.0
  %v7582 = vmax.f32 %v7518, 0.0
  %v7583 = vmax.f32 %v7519, 0.0
  %v7584 = vmax.f32 %v7520, 0.0
  %v7585 = vmax.f32 %v7521, 0.0
  %v7586 = vmax.f32 %v7522, 0.0
  %v7587 = vmax.f32 %v7523, 0.0
  %v7588 = vmax.f32 %v7524, 0.0
  %v7589 = vmax.f32 %v7525, 0.0
  %v7590 = vmax.f32 %v7526, 0.0
  %v7591 = vmax.f32 %v7527, 0.0
  %v7592 = vmax.f32 %v7528, 0.0
  %v7593 = vmax.f32 %v7529, 0.0
  %v7594 = vmax.f32 %v7530, 0.0
  %v7595 = vmax.f32 %v7531, 0.0
  %v7596 = vmax.f32 %v7532, 0.0
  %v7597 = vmax.f32 %v7533, 0.0
  %v7598 = vmax.f32 %v7534, 0.0
  %v7599 = vmax.f32 %v7535, 0.0
  %v7600 = vmax.f32 %v7536, 0.0
  %7601 = vst [vmem:[%s10] sm:$0xff] %v7537
  %7602 = vst [vmem:[%s10 + $0x8] sm:$0xff] %v7538
  %7603 = vst [vmem:[%s10 + $0x10] sm:$0xff] %v7539
  %7604 = vst [vmem:[%s10 + $0x18] sm:$0xff] %v7540
  %7605 = vst [vmem:[%s10 + $0x20] sm:$0xff] %v7541
  %7606 = vst [vmem:[%s10 + $0x28] sm:$0xff] %v7542
  %7607 = vst [vmem:[%s10 + $0x30] sm:$0xff] %v7543
  %7608 = vst [vmem:[%s10 + $0x38] sm:$0xff] %v7544
  %7609 = vst [vmem:[%s10 + $0x40] sm:$0xff] %v7545
  %7610 = vst [vmem:[%s10 + $0x48] sm:$0xff] %v7546
  %7611 = vst [vmem:[%s10 + $0x50] sm:$0xff] %v7547
  %7612 = vst [vmem:[%s10 + $0x58] sm:$0xff] %v7548
  %7613 = vst [vmem:[%s10 + $0x60] sm:$0xff] %v7549
  %7614 = vst [vmem:[%s10 + $0x68] sm:$0xff] %v7550
  %7615 = vst [vmem:[%s10 + $0x70] sm:$0xff] %v7551
  %7616 = vst [vmem:[%s10 + $0x78] sm:$0xff] %v7552
  %7617 = vst [vmem:[%s10 + $0x80] sm:$0xff] %v7553
  %7618 = vst [vmem:[%s10 + $0x88] sm:$0xff] %v7554
  %7619 = vst [vmem:[%s10 + $0x90] sm:$0xff] %v7555
  %7620 = vst [vmem:[%s10 + $0x98] sm:$0xff] %v7556
  %7621 = vst [vmem:[%s10 + $0xa0] sm:$0xff] %v7557
  %7622 = vst [vmem:[%s10 + $0xa8] sm:$0xff] %v7558
  %7623 = vst [vmem:[%s10 + $0xb0] sm:$0xff] %v7559
  %7624 = vst [vmem:[%s10 + $0xb8] sm:$0xff] %v7560
  %7625 = vst [vmem:[%s10 + $0xc0] sm:$0xff] %v7561
  %7626 = vst [vmem:[%s10 + $0xc8] sm:$0xff] %v7562
  %7627 = vst [vmem:[%s10 + $0xd0] sm:$0xff] %v7563
  %7628 = vst [vmem:[%s10 + $0xd8] sm:$0xff] %v7564
  %7629 = vst [vmem:[%s10 + $0xe0] sm:$0xff] %v7565
  %7630 = vst [vmem:[%s10 + $0xe8] sm:$0xff] %v7566
  %7631 = vst [vmem:[%s10 + $0xf0] sm:$0xff] %v7567
  %7632 = vst [vmem:[%s10 + $0xf8] sm:$0xff] %v7568
  %7633 = vst [vmem:[%s10 + $0x100] sm:$0xff] %v7569
  %7634 = vst [vmem:[%s10 + $0x108] sm:$0xff] %v7570
  %7635 = vst [vmem:[%s10 + $0x110] sm:$0xff] %v7571
  %7636 = vst [vmem:[%s10 + $0x118] sm:$0xff] %v7572
  %7637 = vst [vmem:[%s10 + $0x120] sm:$0xff] %v7573
  %7638 = vst [vmem:[%s10 + $0x128] sm:$0xff] %v7574
  %7639 = vst [vmem:[%s10 + $0x130] sm:$0xff] %v7575
  %7640 = vst [vmem:[%s10 + $0x138] sm:$0xff] %v7576
  %7641 = vst [vmem:[%s10 + $0x140] sm:$0xff] %v7577
  %7642 = vst [vmem:[%s10 + $0x148] sm:$0xff] %v7578
  %7643 = vst [vmem:[%s10 + $0x150] sm:$0xff] %v7579
  %7644 = vst [vmem:[%s10 + $0x158] sm:$0xff] %v7580
  %7645 = vst [vmem:[%s10 + $0x160] sm:$0xff] %v7581
  %7646 = vst [vmem:[%s10 + $0x168] sm:$0xff] %v7582
  %7647 = vst [vmem:[%s10 + $0x170] sm:$0xff] %v7583
  %7648 = vst [vmem:[%s10 + $0x178] sm:$0xff] %v7584
  %7649 = vst [vmem:[%s10 + $0x180] sm:$0xff] %v7585
  %7650 = vst [vmem:[%s10 + $0x188] sm:$0xff] %v7586
  %7651 = vst [vmem:[%s10 + $0x190] sm:$0xff] %v7587
  %7652 = vst [vmem:[%s10 + $0x198] sm:$0xff] %v7588
  %7653 = vst [vmem:[%s10 + $0x1a0] sm:$0xff] %v7589
  %7654 = vst [vmem:[%s10 + $0x1a8] sm:$0xff] %v7590
  %7655 = vst [vmem:[%s10 + $0x1b0] sm:$0xff] %v7591
  %7656 = vst [vmem:[%s10 + $0x1b8] sm:$0xff] %v7592
  %7657 = vst [vmem:[%s10 + $0x1c0] sm:$0xff] %v7593
  %7658 = vst [vmem:[%s10 + $0x1c8] sm:$0xff] %v7594
  %7659 = vst [vmem:[%s10 + $0x1d0] sm:$0xff] %v7595
  %7660 = vst [vmem:[%s10 + $0x1d8] sm:$0xff] %v7596
  %7661 = vst [vmem:[%s10 + $0x1e0] sm:$0xff] %v7597
  %7662 = vst [vmem:[%s10 + $0x1e8] sm:$0xff] %v7598
  %7663 = vst [vmem:[%s10 + $0x1f0] sm:$0xff] %v7599
  %7664 = vst [vmem:[%s10 + $0x1f8] sm:$0xff] %v7600
  // Predicated region
  $region42: #{bottleneck_forward.1} parent=0 // pred_check
    _
  $region43: #{bottleneck_forward.1} parent=0 // pred_check_branch
    %7666 = sbr.rel (0) target = $region45
  $region44: #{bottleneck_forward.1} parent=0 // pred_region
    _
  $region45: #{bottleneck_forward.1} parent=0 // pred_fallthru
    _
  // Predicated region
  $region46: #{bottleneck_forward.1} parent=0 // pred_check
    _
  $region47: #{bottleneck_forward.1} parent=0 // pred_check_branch
    %7668 = sbr.rel (0) target = $region49
  $region48: #{bottleneck_forward.1} parent=0 // pred_region
    _
  $region49: #{bottleneck_forward.1} parent=0 // pred_fallthru
    _

</llo_original>
